<compile_context>
chip_gen: v6e
topology: v6e:2x2x1
jax: 0.10.0
libtpu: 0.0.40
codegen_flags: <defaults>
</compile_context>

<pallas_src>
import math

import numpy as np
import jax
import jax.numpy as jnp
from jax import lax
from jax.experimental import pallas as pl
from jax.experimental.pallas import tpu as pltpu

BN_EPS = 1e-5

# ---- model config (small, consistent with the MobileNet constructor) ----
CHANNELS = [[8], [16], [32, 32]]       # init block + 2 stages of DwsConvBlocks
FIRST_STAGE_STRIDE = False
IN_CHANNELS = 3
IN_SIZE = 28                           # 28 -> 14 (init s2) -> 14 (stage1 s1) -> 7 (stage2 s2)
NUM_CLASSES = 10
BATCH = 2

# ---- kernel layout constants ----
CPAD = 128                             # every channel axis is padded to one full lane tile
K0 = 9 * IN_CHANNELS                   # 27 : init-conv im2col contraction
K0P = 32                               # padded to a multiple of 8

H1 = IN_SIZE // 2                      # 14 : feature map after init conv (stride 2)
HP1 = H1 + 2                           # 16 : with spatial zero-padding baked in
R1 = BATCH * HP1 * HP1                 # 512 rows in the padded-flattened 16x16 space
CNT1 = float(BATCH * H1 * H1)          # 392 valid (non-padding) rows

H2 = H1 // 2                           # 7  : after the stride-2 DwsConvBlock
HP2 = H2 + 2                           # 9
R2 = BATCH * HP2 * HP2                 # 162
CNT2 = float(BATCH * H2 * H2)          # 98

MARG1 = 24                             # scratch margin rows (>= HP1 + 1 = 17)
MARG2 = 16                             # scratch margin rows (>= HP2 + 1 = 10)
BUF1_ROWS = MARG1 + R1 + MARG1         # 560
BUF2_ROWS = MARG2 + R2 + MARG2         # 194
OUT_ROWS = 8                           # sublane-padded logits rows (first BATCH are real)


def _vmem_spec():
    return pl.BlockSpec(memory_space=pltpu.MemorySpace.VMEM)


# --------------------------- the fused Pallas kernel ---------------------------

def _mobilenet_kernel(patches_ref, w_init_ref, valid1_ref, valid2_ref, s2c_ref, pool_ref,
                      wdw1_ref, wpw1_ref, wdw2_ref, wpw2_ref, wdw3_ref, wpw3_ref,
                      fcw_ref, fcb_ref,
                      out_ref,
                      buf1, buf2):
    # Activations live in VMEM scratch as (rows, 128) slabs; rows are (n, h_padded, w_padded)
    # flattened, with zero border rows (= conv zero-padding) and zero margin rows so that a 3x3
    # depthwise tap is just a shifted row-slice.  Zero everything once so the margins stay zero.
    buf1[...] = jnp.zeros_like(buf1)
    buf2[...] = jnp.zeros_like(buf2)

    valid1 = valid1_ref[...]            # (R1, 1) 1.0 on real rows, 0.0 on padding rows
    valid2 = valid2_ref[...]            # (R2, 1)

    def bn_relu_mask(acc, valid, count):
        # Training-mode BatchNorm (biased variance over the `count` valid rows), then ReLU,
        # then re-zero the padding rows so they keep acting as conv zero-padding.
        inv_n = 1.0 / count
        mean = jnp.sum(acc * valid, axis=0, keepdims=True) * inv_n
        centered = acc - mean
        diff = centered * valid
        var = jnp.sum(diff * diff, axis=0, keepdims=True) * inv_n
        y = centered * lax.rsqrt(var + BN_EPS)
        return jnp.maximum(y, 0.0) * valid

    def dw3x3(buf, margin, rows, wrow, wdw_ref):
        # 3x3 depthwise conv (stride 1, pad 1) as 9 shifted row-slices of the scratch buffer.
        acc = None
        k = 0
        for dy in (-1, 0, 1):
            for dx in (-1, 0, 1):
                tap = buf[pl.ds(margin + dy * wrow + dx, rows), :]
                t = tap * wdw_ref[pl.ds(k, 1), :]
                acc = t if acc is None else acc + t
                k += 1
        return acc

    # ---- features.init_block: 3x3 s2 conv (pre-im2col'd, lane-dense) + BN + ReLU ----
    acc = jnp.dot(patches_ref[...], w_init_ref[...], preferred_element_type=jnp.float32)
    buf1[pl.ds(MARG1, R1), :] = bn_relu_mask(acc, valid1, CNT1)

    # ---- stage1.unit1: dw3x3 s1 + BN + ReLU ; pw1x1 + BN + ReLU ----
    y = bn_relu_mask(dw3x3(buf1, MARG1, R1, HP1, wdw1_ref), valid1, CNT1)
    acc = jnp.dot(y, wpw1_ref[...], preferred_element_type=jnp.float32)
    buf1[pl.ds(MARG1, R1), :] = bn_relu_mask(acc, valid1, CNT1)

    # ---- stage2.unit1: dw3x3 s2 + BN + ReLU ; pw1x1 + BN + ReLU ----
    # A stride-2 depthwise conv == the stride-1 depthwise conv subsampled at the odd padded
    # coordinates; the subsample is a row gather done as a matmul with a 0/1 selection matrix.
    dw_full = dw3x3(buf1, MARG1, R1, HP1, wdw2_ref)                       # (R1, 128)
    qidx = lax.broadcasted_iota(jnp.int32, (R2, R1), 1)
    gsel = (qidx == s2c_ref[...]).astype(jnp.float32)                     # (R2, R1)
    dw_sub = jnp.dot(gsel, dw_full, preferred_element_type=jnp.float32)   # (R2, 128)
    y = bn_relu_mask(dw_sub, valid2, CNT2)
    acc = jnp.dot(y, wpw2_ref[...], preferred_element_type=jnp.float32)
    buf2[pl.ds(MARG2, R2), :] = bn_relu_mask(acc, valid2, CNT2)

    # ---- stage2.unit2: dw3x3 s1 + BN + ReLU ; pw1x1 + BN + ReLU ----
    y = bn_relu_mask(dw3x3(buf2, MARG2, R2, HP2, wdw3_ref), valid2, CNT2)
    acc = jnp.dot(y, wpw3_ref[...], preferred_element_type=jnp.float32)
    x = bn_relu_mask(acc, valid2, CNT2)                                   # (R2, 128)

    # ---- features.final_pool (7x7 avg) fused with the output Linear ----
    bidx = lax.broadcasted_iota(jnp.int32, (OUT_ROWS, R2), 0)
    pmat = jnp.where(bidx == pool_ref[...], 1.0 / float(H2 * H2), 0.0)    # (8, R2)
    pooled = jnp.dot(pmat, x, preferred_element_type=jnp.float32)         # (8, 128)
    # TODO(synk): the reference applies nn.BatchNorm1d (last_bn) to a 4-D tensor here, which
    # raises in PyTorch; it is skipped and pooled features go straight to the classifier.
    out_ref[...] = (jnp.dot(pooled, fcw_ref[...], preferred_element_type=jnp.float32)
                    + fcb_ref[...])


_mobilenet_call = pl.pallas_call(
    _mobilenet_kernel,
    out_shape=jax.ShapeDtypeStruct((OUT_ROWS, CPAD), jnp.float32),
    in_specs=[_vmem_spec()] * 14,
    out_specs=_vmem_spec(),
    scratch_shapes=[
        pltpu.VMEM((BUF1_ROWS, CPAD), jnp.float32),
        pltpu.VMEM((BUF2_ROWS, CPAD), jnp.float32),
    ],
)


# --------------------------- host-side constants & weight packing ---------------------------

def _row_constants():
    """Validity masks / index maps for the padded-flattened row spaces (computed once)."""
    v1 = np.zeros((R1, 1), np.float32)
    for n in range(BATCH):
        for h in range(1, H1 + 1):
            for w in range(1, H1 + 1):
                v1[n * HP1 * HP1 + h * HP1 + w, 0] = 1.0

    v2 = np.zeros((R2, 1), np.float32)
    s2c = np.full((R2, 1), -1_000_000, np.int32)   # never matches a column index
    pid = np.zeros((1, R2), np.int32)
    for n in range(BATCH):
        for h in range(HP2):
            for w in range(HP2):
                p = n * HP2 * HP2 + h * HP2 + w
                pid[0, p] = n
                if 1 <= h <= H2 and 1 <= w <= H2:
                    v2[p, 0] = 1.0
                    # centre of the stride-2 tap window in the 16x16 padded row space
                    s2c[p, 0] = n * HP1 * HP1 + (2 * h - 1) * HP1 + (2 * w - 1)
    return jnp.asarray(v1), jnp.asarray(v2), jnp.asarray(s2c), jnp.asarray(pid)


def _pad2d(a, rows, cols):
    r, c = a.shape
    return jnp.pad(a, ((0, rows - r), (0, cols - c)))


def pack_params(params):
    """Pad / reshape weights into the lane-dense layouts the kernel expects (done once)."""
    v1, v2, s2c, pid = _row_constants()
    packed = {'valid1': v1, 'valid2': v2, 's2c': s2c, 'pool_id': pid}

    c0 = CHANNELS[0][0]
    packed['w_init'] = _pad2d(params['init_w'].reshape(K0, c0), K0P, CPAD)

    units = [u for stage in params['stages'] for u in stage]
    assert len(units) == 3
    assert [u['stride'] for u in units] == [1, 2, 1]
    for idx, u in enumerate(units, start=1):
        cin = u['dw_w'].shape[-1]
        packed[f'wdw{idx}'] = _pad2d(u['dw_w'].reshape(9, cin), 9, CPAD)
        packed[f'wpw{idx}'] = _pad2d(u['pw_w'], CPAD, CPAD)

    packed['fc_w'] = _pad2d(params['fc_w'], CPAD, CPAD)
    packed['fc_b'] = _pad2d(params['fc_b'].reshape(1, NUM_CLASSES), 1, CPAD)
    return packed


# --------------------------- parameters (same init as the PyTorch module) ---------------------------

def _kaiming_normal(key, shape, fan):
    return math.sqrt(2.0 / fan) * jax.random.normal(key, shape, dtype=jnp.float32)


def init_params(key):
    keys = jax.random.split(key, 64)
    ki = iter(range(64))
    params = {}

    c0 = CHANNELS[0][0]
    # init_block conv: kaiming fan_out = Cout * 3 * 3; stored HWIO
    params['init_w'] = _kaiming_normal(keys[next(ki)], (3, 3, IN_CHANNELS, c0), c0 * 9)

    in_c = c0
    stages = []
    for i, channels_per_stage in enumerate(CHANNELS[1:]):
        units = []
        for j, out_c in enumerate(channels_per_stage):
            stride = 2 if (j == 0 and (i != 0 or FIRST_STAGE_STRIDE)) else 1
            # dw conv: kaiming fan_in = (Cin/groups) * 9 = 9; stored (3,3,C)
            dw_w = _kaiming_normal(keys[next(ki)], (3, 3, in_c), 9)
            # pw conv: kaiming fan_out = Cout * 1 * 1; stored (Cin, Cout)
            pw_w = _kaiming_normal(keys[next(ki)], (in_c, out_c), out_c)
            units.append({'dw_w': dw_w, 'pw_w': pw_w, 'stride': stride})
            in_c = out_c
        stages.append(units)
    params['stages'] = stages

    # output Linear: kaiming fan_out = num_classes, bias = 0; stored (in, out)
    params['fc_w'] = _kaiming_normal(keys[next(ki)], (in_c, NUM_CLASSES), NUM_CLASSES)
    params['fc_b'] = jnp.zeros((NUM_CLASSES,), jnp.float32)
    return params


# --------------------------- forward ---------------------------

@jax.jit
def mobilenet_forward(x_nchw, packed):
    # PyTorch-style NCHW input -> NHWC, then im2col for the stride-2 3x3 init conv, laid out on
    # the 16x16 *padded* output grid so the kernel's row layout is uniform (tiny, fused XLA glue).
    x = jnp.transpose(x_nchw, (0, 2, 3, 1)).astype(jnp.float32)
    xp = jnp.pad(x, ((0, 0), (1, 1), (1, 1), (0, 0)))
    taps = [xp[:, ky:ky + 2 * H1:2, kx:kx + 2 * H1:2, :]
            for ky in range(3) for kx in range(3)]
    patches = jnp.concatenate(taps, axis=-1)                       # (N, 14, 14, 27)
    patches = jnp.pad(patches, ((0, 0), (1, 1), (1, 1), (0, K0P - K0)))
    patches = patches.reshape(R1, K0P)                             # (512, 32)

    out = _mobilenet_call(
        patches, packed['w_init'], packed['valid1'], packed['valid2'],
        packed['s2c'], packed['pool_id'],
        packed['wdw1'], packed['wpw1'], packed['wdw2'], packed['wpw2'],
        packed['wdw3'], packed['wpw3'], packed['fc_w'], packed['fc_b'])
    return out[:BATCH, :NUM_CLASSES]


if __name__ == "__main__":
    key = jax.random.PRNGKey(0)
    k_x, k_p = jax.random.split(key)

    x = jax.random.normal(k_x, (BATCH, IN_CHANNELS, IN_SIZE, IN_SIZE), dtype=jnp.float32)
    params = init_params(k_p)
    packed = pack_params(params)

    out = mobilenet_forward(x, packed)
    out = jax.block_until_ready(out)

    assert out.shape == (BATCH, NUM_CLASSES), out.shape
    assert bool(jnp.all(jnp.isfinite(out)))
    print("KERNEL_OK")
</pallas_src>

<mosaic_0001>
module attributes {stable_mosaic.version = 11 : i64} {
  func.func @_mobilenet_kernel(%arg0: memref<512x32xf32, #tpu.memory_space<vmem>>, %arg1: memref<32x128xf32, #tpu.memory_space<vmem>>, %arg2: memref<512x1xf32, #tpu.memory_space<vmem>>, %arg3: memref<162x1xf32, #tpu.memory_space<vmem>>, %arg4: memref<162x1xi32, #tpu.memory_space<vmem>>, %arg5: memref<1x162xi32, #tpu.memory_space<vmem>>, %arg6: memref<9x128xf32, #tpu.memory_space<vmem>>, %arg7: memref<128x128xf32, #tpu.memory_space<vmem>>, %arg8: memref<9x128xf32, #tpu.memory_space<vmem>>, %arg9: memref<128x128xf32, #tpu.memory_space<vmem>>, %arg10: memref<9x128xf32, #tpu.memory_space<vmem>>, %arg11: memref<128x128xf32, #tpu.memory_space<vmem>>, %arg12: memref<128x128xf32, #tpu.memory_space<vmem>>, %arg13: memref<1x128xf32, #tpu.memory_space<vmem>>, %arg14: memref<8x128xf32, #tpu.memory_space<vmem>>, %arg15: memref<560x128xf32, #tpu.memory_space<vmem>>, %arg16: memref<194x128xf32, #tpu.memory_space<vmem>>) attributes {dimension_semantics = [], scalar_prefetch = 0 : i64, scratch_operands = 2 : i64, tpu.core_type = #tpu.core_type<tc>} {
    %cst = arith.constant 0.000000e+00 : f32
    %0 = vector.broadcast %cst : f32 to vector<560x128xf32>
    %c0 = arith.constant 0 : index
    %c0_0 = arith.constant 0 : index
    %1 = vector.load %arg15[%c0, %c0_0] : memref<560x128xf32, #tpu.memory_space<vmem>>, vector<560x128xf32>
    tpu.vector_store %arg15[%c0, %c0_0], %0 {strides = array<i32>} : memref<560x128xf32, #tpu.memory_space<vmem>>, vector<560x128xf32>,
    %cst_1 = arith.constant 0.000000e+00 : f32
    %2 = vector.broadcast %cst_1 : f32 to vector<194x128xf32>
    %c0_2 = arith.constant 0 : index
    %c0_3 = arith.constant 0 : index
    %3 = vector.load %arg16[%c0_2, %c0_3] : memref<194x128xf32, #tpu.memory_space<vmem>>, vector<194x128xf32>
    tpu.vector_store %arg16[%c0_2, %c0_3], %2 {strides = array<i32>} : memref<194x128xf32, #tpu.memory_space<vmem>>, vector<194x128xf32>,
    %c0_4 = arith.constant 0 : index
    %c0_5 = arith.constant 0 : index
    %4 = vector.load %arg2[%c0_4, %c0_5] : memref<512x1xf32, #tpu.memory_space<vmem>>, vector<512x1xf32>
    %c0_6 = arith.constant 0 : index
    %c0_7 = arith.constant 0 : index
    %5 = vector.load %arg3[%c0_6, %c0_7] : memref<162x1xf32, #tpu.memory_space<vmem>>, vector<162x1xf32>
    %c0_8 = arith.constant 0 : index
    %c0_9 = arith.constant 0 : index
    %6 = vector.load %arg0[%c0_8, %c0_9] : memref<512x32xf32, #tpu.memory_space<vmem>>, vector<512x32xf32>
    %c0_10 = arith.constant 0 : index
    %c0_11 = arith.constant 0 : index
    %7 = vector.load %arg1[%c0_10, %c0_11] : memref<32x128xf32, #tpu.memory_space<vmem>>, vector<32x128xf32>
    %cst_12 = arith.constant dense<0.000000e+00> : vector<512x128xf32>
    %8 = tpu.matmul %6, %7, %cst_12 {dimension_numbers = #tpu.dot_dimension_numbers<[1], [0], [0], [1], [0, 0, 1, 1], [], []>} : vector<512x32xf32>, vector<32x128xf32>, vector<512x128xf32> -> vector<512x128xf32>
    %9 = vector.broadcast %4 : vector<512x1xf32> to vector<512x128xf32>
    %10 = arith.mulf %8, %9 : vector<512x128xf32>
    %cst_13 = arith.constant dense<0.000000e+00> : vector<128xf32>
    %11 = vector.multi_reduction <add>, %10, %cst_13 [0] : vector<512x128xf32> to vector<128xf32>
    %12 = vector.shape_cast %11 : vector<128xf32> to vector<1x128xf32>
    %cst_14 = arith.constant 0.00255102036 : f32
    %13 = vector.broadcast %cst_14 : f32 to vector<1x128xf32>
    %14 = arith.mulf %12, %13 : vector<1x128xf32>
    %15 = vector.broadcast %14 : vector<1x128xf32> to vector<512x128xf32>
    %16 = arith.subf %8, %15 : vector<512x128xf32>
    %17 = vector.broadcast %4 : vector<512x1xf32> to vector<512x128xf32>
    %18 = arith.mulf %16, %17 : vector<512x128xf32>
    %19 = arith.mulf %18, %18 : vector<512x128xf32>
    %cst_15 = arith.constant dense<0.000000e+00> : vector<128xf32>
    %20 = vector.multi_reduction <add>, %19, %cst_15 [0] : vector<512x128xf32> to vector<128xf32>
    %21 = vector.shape_cast %20 : vector<128xf32> to vector<1x128xf32>
    %cst_16 = arith.constant 0.00255102036 : f32
    %22 = vector.broadcast %cst_16 : f32 to vector<1x128xf32>
    %23 = arith.mulf %21, %22 : vector<1x128xf32>
    %cst_17 = arith.constant 9.99999974E-6 : f32
    %24 = vector.broadcast %cst_17 : f32 to vector<1x128xf32>
    %25 = arith.addf %23, %24 : vector<1x128xf32>
    %26 = math.rsqrt %25 : vector<1x128xf32>
    %27 = vector.broadcast %26 : vector<1x128xf32> to vector<512x128xf32>
    %28 = arith.mulf %16, %27 : vector<512x128xf32>
    %cst_18 = arith.constant 0.000000e+00 : f32
    %29 = vector.broadcast %cst_18 : f32 to vector<512x128xf32>
    %30 = arith.maximumf %28, %29 : vector<512x128xf32>
    %31 = vector.broadcast %4 : vector<512x1xf32> to vector<512x128xf32>
    %32 = arith.mulf %30, %31 : vector<512x128xf32>
    %c24 = arith.constant 24 : index
    %c0_19 = arith.constant 0 : index
    %33 = vector.load %arg15[%c24, %c0_19] : memref<560x128xf32, #tpu.memory_space<vmem>>, vector<512x128xf32>
    tpu.vector_store %arg15[%c24, %c0_19], %32 {strides = array<i32>} : memref<560x128xf32, #tpu.memory_space<vmem>>, vector<512x128xf32>,
    %c7 = arith.constant 7 : index
    %c0_20 = arith.constant 0 : index
    %34 = vector.load %arg15[%c7, %c0_20] : memref<560x128xf32, #tpu.memory_space<vmem>>, vector<512x128xf32>
    %c0_21 = arith.constant 0 : index
    %c0_22 = arith.constant 0 : index
    %35 = vector.load %arg6[%c0_21, %c0_22] : memref<9x128xf32, #tpu.memory_space<vmem>>, vector<1x128xf32>
    %36 = vector.broadcast %35 : vector<1x128xf32> to vector<512x128xf32>
    %37 = arith.mulf %34, %36 : vector<512x128xf32>
    %c8 = arith.constant 8 : index
    %c0_23 = arith.constant 0 : index
    %38 = vector.load %arg15[%c8, %c0_23] : memref<560x128xf32, #tpu.memory_space<vmem>>, vector<512x128xf32>
    %c1 = arith.constant 1 : index
    %c0_24 = arith.constant 0 : index
    %39 = vector.load %arg6[%c1, %c0_24] : memref<9x128xf32, #tpu.memory_space<vmem>>, vector<1x128xf32>
    %40 = vector.broadcast %39 : vector<1x128xf32> to vector<512x128xf32>
    %41 = arith.mulf %38, %40 : vector<512x128xf32>
    %42 = arith.addf %37, %41 : vector<512x128xf32>
    %c9 = arith.constant 9 : index
    %c0_25 = arith.constant 0 : index
    %43 = vector.load %arg15[%c9, %c0_25] : memref<560x128xf32, #tpu.memory_space<vmem>>, vector<512x128xf32>
    %c2 = arith.constant 2 : index
    %c0_26 = arith.constant 0 : index
    %44 = vector.load %arg6[%c2, %c0_26] : memref<9x128xf32, #tpu.memory_space<vmem>>, vector<1x128xf32>
    %45 = vector.broadcast %44 : vector<1x128xf32> to vector<512x128xf32>
    %46 = arith.mulf %43, %45 : vector<512x128xf32>
    %47 = arith.addf %42, %46 : vector<512x128xf32>
    %c23 = arith.constant 23 : index
    %c0_27 = arith.constant 0 : index
    %48 = vector.load %arg15[%c23, %c0_27] : memref<560x128xf32, #tpu.memory_space<vmem>>, vector<512x128xf32>
    %c3 = arith.constant 3 : index
    %c0_28 = arith.constant 0 : index
    %49 = vector.load %arg6[%c3, %c0_28] : memref<9x128xf32, #tpu.memory_space<vmem>>, vector<1x128xf32>
    %50 = vector.broadcast %49 : vector<1x128xf32> to vector<512x128xf32>
    %51 = arith.mulf %48, %50 : vector<512x128xf32>
    %52 = arith.addf %47, %51 : vector<512x128xf32>
    %c24_29 = arith.constant 24 : index
    %c0_30 = arith.constant 0 : index
    %53 = vector.load %arg15[%c24_29, %c0_30] : memref<560x128xf32, #tpu.memory_space<vmem>>, vector<512x128xf32>
    %c4 = arith.constant 4 : index
    %c0_31 = arith.constant 0 : index
    %54 = vector.load %arg6[%c4, %c0_31] : memref<9x128xf32, #tpu.memory_space<vmem>>, vector<1x128xf32>
    %55 = vector.broadcast %54 : vector<1x128xf32> to vector<512x128xf32>
    %56 = arith.mulf %53, %55 : vector<512x128xf32>
    %57 = arith.addf %52, %56 : vector<512x128xf32>
    %c25 = arith.constant 25 : index
    %c0_32 = arith.constant 0 : index
    %58 = vector.load %arg15[%c25, %c0_32] : memref<560x128xf32, #tpu.memory_space<vmem>>, vector<512x128xf32>
    %c5 = arith.constant 5 : index
    %c0_33 = arith.constant 0 : index
    %59 = vector.load %arg6[%c5, %c0_33] : memref<9x128xf32, #tpu.memory_space<vmem>>, vector<1x128xf32>
    %60 = vector.broadcast %59 : vector<1x128xf32> to vector<512x128xf32>
    %61 = arith.mulf %58, %60 : vector<512x128xf32>
    %62 = arith.addf %57, %61 : vector<512x128xf32>
    %c39 = arith.constant 39 : index
    %c0_34 = arith.constant 0 : index
    %63 = vector.load %arg15[%c39, %c0_34] : memref<560x128xf32, #tpu.memory_space<vmem>>, vector<512x128xf32>
    %c6 = arith.constant 6 : index
    %c0_35 = arith.constant 0 : index
    %64 = vector.load %arg6[%c6, %c0_35] : memref<9x128xf32, #tpu.memory_space<vmem>>, vector<1x128xf32>
    %65 = vector.broadcast %64 : vector<1x128xf32> to vector<512x128xf32>
    %66 = arith.mulf %63, %65 : vector<512x128xf32>
    %67 = arith.addf %62, %66 : vector<512x128xf32>
    %c40 = arith.constant 40 : index
    %c0_36 = arith.constant 0 : index
    %68 = vector.load %arg15[%c40, %c0_36] : memref<560x128xf32, #tpu.memory_space<vmem>>, vector<512x128xf32>
    %c7_37 = arith.constant 7 : index
    %c0_38 = arith.constant 0 : index
    %69 = vector.load %arg6[%c7_37, %c0_38] : memref<9x128xf32, #tpu.memory_space<vmem>>, vector<1x128xf32>
    %70 = vector.broadcast %69 : vector<1x128xf32> to vector<512x128xf32>
    %71 = arith.mulf %68, %70 : vector<512x128xf32>
    %72 = arith.addf %67, %71 : vector<512x128xf32>
    %c41 = arith.constant 41 : index
    %c0_39 = arith.constant 0 : index
    %73 = vector.load %arg15[%c41, %c0_39] : memref<560x128xf32, #tpu.memory_space<vmem>>, vector<512x128xf32>
    %c8_40 = arith.constant 8 : index
    %c0_41 = arith.constant 0 : index
    %74 = vector.load %arg6[%c8_40, %c0_41] : memref<9x128xf32, #tpu.memory_space<vmem>>, vector<1x128xf32>
    %75 = vector.broadcast %74 : vector<1x128xf32> to vector<512x128xf32>
    %76 = arith.mulf %73, %75 : vector<512x128xf32>
    %77 = arith.addf %72, %76 : vector<512x128xf32>
    %78 = vector.broadcast %4 : vector<512x1xf32> to vector<512x128xf32>
    %79 = arith.mulf %77, %78 : vector<512x128xf32>
    %cst_42 = arith.constant dense<0.000000e+00> : vector<128xf32>
    %80 = vector.multi_reduction <add>, %79, %cst_42 [0] : vector<512x128xf32> to vector<128xf32>
    %81 = vector.shape_cast %80 : vector<128xf32> to vector<1x128xf32>
    %cst_43 = arith.constant 0.00255102036 : f32
    %82 = vector.broadcast %cst_43 : f32 to vector<1x128xf32>
    %83 = arith.mulf %81, %82 : vector<1x128xf32>
    %84 = vector.broadcast %83 : vector<1x128xf32> to vector<512x128xf32>
    %85 = arith.subf %77, %84 : vector<512x128xf32>
    %86 = vector.broadcast %4 : vector<512x1xf32> to vector<512x128xf32>
    %87 = arith.mulf %85, %86 : vector<512x128xf32>
    %88 = arith.mulf %87, %87 : vector<512x128xf32>
    %cst_44 = arith.constant dense<0.000000e+00> : vector<128xf32>
    %89 = vector.multi_reduction <add>, %88, %cst_44 [0] : vector<512x128xf32> to vector<128xf32>
    %90 = vector.shape_cast %89 : vector<128xf32> to vector<1x128xf32>
    %cst_45 = arith.constant 0.00255102036 : f32
    %91 = vector.broadcast %cst_45 : f32 to vector<1x128xf32>
    %92 = arith.mulf %90, %91 : vector<1x128xf32>
    %cst_46 = arith.constant 9.99999974E-6 : f32
    %93 = vector.broadcast %cst_46 : f32 to vector<1x128xf32>
    %94 = arith.addf %92, %93 : vector<1x128xf32>
    %95 = math.rsqrt %94 : vector<1x128xf32>
    %96 = vector.broadcast %95 : vector<1x128xf32> to vector<512x128xf32>
    %97 = arith.mulf %85, %96 : vector<512x128xf32>
    %cst_47 = arith.constant 0.000000e+00 : f32
    %98 = vector.broadcast %cst_47 : f32 to vector<512x128xf32>
    %99 = arith.maximumf %97, %98 : vector<512x128xf32>
    %100 = vector.broadcast %4 : vector<512x1xf32> to vector<512x128xf32>
    %101 = arith.mulf %99, %100 : vector<512x128xf32>
    %c0_48 = arith.constant 0 : index
    %c0_49 = arith.constant 0 : index
    %102 = vector.load %arg7[%c0_48, %c0_49] : memref<128x128xf32, #tpu.memory_space<vmem>>, vector<128x128xf32>
    %cst_50 = arith.constant dense<0.000000e+00> : vector<512x128xf32>
    %103 = tpu.matmul %101, %102, %cst_50 {dimension_numbers = #tpu.dot_dimension_numbers<[1], [0], [0], [1], [0, 0, 1, 1], [], []>} : vector<512x128xf32>, vector<128x128xf32>, vector<512x128xf32> -> vector<512x128xf32>
    %104 = vector.broadcast %4 : vector<512x1xf32> to vector<512x128xf32>
    %105 = arith.mulf %103, %104 : vector<512x128xf32>
    %cst_51 = arith.constant dense<0.000000e+00> : vector<128xf32>
    %106 = vector.multi_reduction <add>, %105, %cst_51 [0] : vector<512x128xf32> to vector<128xf32>
    %107 = vector.shape_cast %106 : vector<128xf32> to vector<1x128xf32>
    %cst_52 = arith.constant 0.00255102036 : f32
    %108 = vector.broadcast %cst_52 : f32 to vector<1x128xf32>
    %109 = arith.mulf %107, %108 : vector<1x128xf32>
    %110 = vector.broadcast %109 : vector<1x128xf32> to vector<512x128xf32>
    %111 = arith.subf %103, %110 : vector<512x128xf32>
    %112 = vector.broadcast %4 : vector<512x1xf32> to vector<512x128xf32>
    %113 = arith.mulf %111, %112 : vector<512x128xf32>
    %114 = arith.mulf %113, %113 : vector<512x128xf32>
    %cst_53 = arith.constant dense<0.000000e+00> : vector<128xf32>
    %115 = vector.multi_reduction <add>, %114, %cst_53 [0] : vector<512x128xf32> to vector<128xf32>
    %116 = vector.shape_cast %115 : vector<128xf32> to vector<1x128xf32>
    %cst_54 = arith.constant 0.00255102036 : f32
    %117 = vector.broadcast %cst_54 : f32 to vector<1x128xf32>
    %118 = arith.mulf %116, %117 : vector<1x128xf32>
    %cst_55 = arith.constant 9.99999974E-6 : f32
    %119 = vector.broadcast %cst_55 : f32 to vector<1x128xf32>
    %120 = arith.addf %118, %119 : vector<1x128xf32>
    %121 = math.rsqrt %120 : vector<1x128xf32>
    %122 = vector.broadcast %121 : vector<1x128xf32> to vector<512x128xf32>
    %123 = arith.mulf %111, %122 : vector<512x128xf32>
    %cst_56 = arith.constant 0.000000e+00 : f32
    %124 = vector.broadcast %cst_56 : f32 to vector<512x128xf32>
    %125 = arith.maximumf %123, %124 : vector<512x128xf32>
    %126 = vector.broadcast %4 : vector<512x1xf32> to vector<512x128xf32>
    %127 = arith.mulf %125, %126 : vector<512x128xf32>
    %c24_57 = arith.constant 24 : index
    %c0_58 = arith.constant 0 : index
    %128 = vector.load %arg15[%c24_57, %c0_58] : memref<560x128xf32, #tpu.memory_space<vmem>>, vector<512x128xf32>
    tpu.vector_store %arg15[%c24_57, %c0_58], %127 {strides = array<i32>} : memref<560x128xf32, #tpu.memory_space<vmem>>, vector<512x128xf32>,
    %c7_59 = arith.constant 7 : index
    %c0_60 = arith.constant 0 : index
    %129 = vector.load %arg15[%c7_59, %c0_60] : memref<560x128xf32, #tpu.memory_space<vmem>>, vector<512x128xf32>
    %c0_61 = arith.constant 0 : index
    %c0_62 = arith.constant 0 : index
    %130 = vector.load %arg8[%c0_61, %c0_62] : memref<9x128xf32, #tpu.memory_space<vmem>>, vector<1x128xf32>
    %131 = vector.broadcast %130 : vector<1x128xf32> to vector<512x128xf32>
    %132 = arith.mulf %129, %131 : vector<512x128xf32>
    %c8_63 = arith.constant 8 : index
    %c0_64 = arith.constant 0 : index
    %133 = vector.load %arg15[%c8_63, %c0_64] : memref<560x128xf32, #tpu.memory_space<vmem>>, vector<512x128xf32>
    %c1_65 = arith.constant 1 : index
    %c0_66 = arith.constant 0 : index
    %134 = vector.load %arg8[%c1_65, %c0_66] : memref<9x128xf32, #tpu.memory_space<vmem>>, vector<1x128xf32>
    %135 = vector.broadcast %134 : vector<1x128xf32> to vector<512x128xf32>
    %136 = arith.mulf %133, %135 : vector<512x128xf32>
    %137 = arith.addf %132, %136 : vector<512x128xf32>
    %c9_67 = arith.constant 9 : index
    %c0_68 = arith.constant 0 : index
    %138 = vector.load %arg15[%c9_67, %c0_68] : memref<560x128xf32, #tpu.memory_space<vmem>>, vector<512x128xf32>
    %c2_69 = arith.constant 2 : index
    %c0_70 = arith.constant 0 : index
    %139 = vector.load %arg8[%c2_69, %c0_70] : memref<9x128xf32, #tpu.memory_space<vmem>>, vector<1x128xf32>
    %140 = vector.broadcast %139 : vector<1x128xf32> to vector<512x128xf32>
    %141 = arith.mulf %138, %140 : vector<512x128xf32>
    %142 = arith.addf %137, %141 : vector<512x128xf32>
    %c23_71 = arith.constant 23 : index
    %c0_72 = arith.constant 0 : index
    %143 = vector.load %arg15[%c23_71, %c0_72] : memref<560x128xf32, #tpu.memory_space<vmem>>, vector<512x128xf32>
    %c3_73 = arith.constant 3 : index
    %c0_74 = arith.constant 0 : index
    %144 = vector.load %arg8[%c3_73, %c0_74] : memref<9x128xf32, #tpu.memory_space<vmem>>, vector<1x128xf32>
    %145 = vector.broadcast %144 : vector<1x128xf32> to vector<512x128xf32>
    %146 = arith.mulf %143, %145 : vector<512x128xf32>
    %147 = arith.addf %142, %146 : vector<512x128xf32>
    %c24_75 = arith.constant 24 : index
    %c0_76 = arith.constant 0 : index
    %148 = vector.load %arg15[%c24_75, %c0_76] : memref<560x128xf32, #tpu.memory_space<vmem>>, vector<512x128xf32>
    %c4_77 = arith.constant 4 : index
    %c0_78 = arith.constant 0 : index
    %149 = vector.load %arg8[%c4_77, %c0_78] : memref<9x128xf32, #tpu.memory_space<vmem>>, vector<1x128xf32>
    %150 = vector.broadcast %149 : vector<1x128xf32> to vector<512x128xf32>
    %151 = arith.mulf %148, %150 : vector<512x128xf32>
    %152 = arith.addf %147, %151 : vector<512x128xf32>
    %c25_79 = arith.constant 25 : index
    %c0_80 = arith.constant 0 : index
    %153 = vector.load %arg15[%c25_79, %c0_80] : memref<560x128xf32, #tpu.memory_space<vmem>>, vector<512x128xf32>
    %c5_81 = arith.constant 5 : index
    %c0_82 = arith.constant 0 : index
    %154 = vector.load %arg8[%c5_81, %c0_82] : memref<9x128xf32, #tpu.memory_space<vmem>>, vector<1x128xf32>
    %155 = vector.broadcast %154 : vector<1x128xf32> to vector<512x128xf32>
    %156 = arith.mulf %153, %155 : vector<512x128xf32>
    %157 = arith.addf %152, %156 : vector<512x128xf32>
    %c39_83 = arith.constant 39 : index
    %c0_84 = arith.constant 0 : index
    %158 = vector.load %arg15[%c39_83, %c0_84] : memref<560x128xf32, #tpu.memory_space<vmem>>, vector<512x128xf32>
    %c6_85 = arith.constant 6 : index
    %c0_86 = arith.constant 0 : index
    %159 = vector.load %arg8[%c6_85, %c0_86] : memref<9x128xf32, #tpu.memory_space<vmem>>, vector<1x128xf32>
    %160 = vector.broadcast %159 : vector<1x128xf32> to vector<512x128xf32>
    %161 = arith.mulf %158, %160 : vector<512x128xf32>
    %162 = arith.addf %157, %161 : vector<512x128xf32>
    %c40_87 = arith.constant 40 : index
    %c0_88 = arith.constant 0 : index
    %163 = vector.load %arg15[%c40_87, %c0_88] : memref<560x128xf32, #tpu.memory_space<vmem>>, vector<512x128xf32>
    %c7_89 = arith.constant 7 : index
    %c0_90 = arith.constant 0 : index
    %164 = vector.load %arg8[%c7_89, %c0_90] : memref<9x128xf32, #tpu.memory_space<vmem>>, vector<1x128xf32>
    %165 = vector.broadcast %164 : vector<1x128xf32> to vector<512x128xf32>
    %166 = arith.mulf %163, %165 : vector<512x128xf32>
    %167 = arith.addf %162, %166 : vector<512x128xf32>
    %c41_91 = arith.constant 41 : index
    %c0_92 = arith.constant 0 : index
    %168 = vector.load %arg15[%c41_91, %c0_92] : memref<560x128xf32, #tpu.memory_space<vmem>>, vector<512x128xf32>
    %c8_93 = arith.constant 8 : index
    %c0_94 = arith.constant 0 : index
    %169 = vector.load %arg8[%c8_93, %c0_94] : memref<9x128xf32, #tpu.memory_space<vmem>>, vector<1x128xf32>
    %170 = vector.broadcast %169 : vector<1x128xf32> to vector<512x128xf32>
    %171 = arith.mulf %168, %170 : vector<512x128xf32>
    %172 = arith.addf %167, %171 : vector<512x128xf32>
    %173 = tpu.iota {dimensions = array<i32: 1>} : vector<162x512xi32>
    %c0_95 = arith.constant 0 : index
    %c0_96 = arith.constant 0 : index
    %174 = vector.load %arg4[%c0_95, %c0_96] : memref<162x1xi32, #tpu.memory_space<vmem>>, vector<162x1xi32>
    %175 = vector.broadcast %174 : vector<162x1xi32> to vector<162x512xi32>
    %176 = arith.cmpi eq, %173, %175 : vector<162x512xi32>
    %177 = arith.extui %176 : vector<162x512xi1> to vector<162x512xi32>
    %178 = arith.sitofp %177 : vector<162x512xi32> to vector<162x512xf32>
    %cst_97 = arith.constant dense<0.000000e+00> : vector<162x128xf32>
    %179 = tpu.matmul %178, %172, %cst_97 {dimension_numbers = #tpu.dot_dimension_numbers<[1], [0], [0], [1], [0, 0, 1, 1], [], []>} : vector<162x512xf32>, vector<512x128xf32>, vector<162x128xf32> -> vector<162x128xf32>
    %180 = vector.broadcast %5 : vector<162x1xf32> to vector<162x128xf32>
    %181 = arith.mulf %179, %180 : vector<162x128xf32>
    %cst_98 = arith.constant dense<0.000000e+00> : vector<128xf32>
    %182 = vector.multi_reduction <add>, %181, %cst_98 [0] : vector<162x128xf32> to vector<128xf32>
    %183 = vector.shape_cast %182 : vector<128xf32> to vector<1x128xf32>
    %cst_99 = arith.constant 0.0102040814 : f32
    %184 = vector.broadcast %cst_99 : f32 to vector<1x128xf32>
    %185 = arith.mulf %183, %184 : vector<1x128xf32>
    %186 = vector.broadcast %185 : vector<1x128xf32> to vector<162x128xf32>
    %187 = arith.subf %179, %186 : vector<162x128xf32>
    %188 = vector.broadcast %5 : vector<162x1xf32> to vector<162x128xf32>
    %189 = arith.mulf %187, %188 : vector<162x128xf32>
    %190 = arith.mulf %189, %189 : vector<162x128xf32>
    %cst_100 = arith.constant dense<0.000000e+00> : vector<128xf32>
    %191 = vector.multi_reduction <add>, %190, %cst_100 [0] : vector<162x128xf32> to vector<128xf32>
    %192 = vector.shape_cast %191 : vector<128xf32> to vector<1x128xf32>
    %cst_101 = arith.constant 0.0102040814 : f32
    %193 = vector.broadcast %cst_101 : f32 to vector<1x128xf32>
    %194 = arith.mulf %192, %193 : vector<1x128xf32>
    %cst_102 = arith.constant 9.99999974E-6 : f32
    %195 = vector.broadcast %cst_102 : f32 to vector<1x128xf32>
    %196 = arith.addf %194, %195 : vector<1x128xf32>
    %197 = math.rsqrt %196 : vector<1x128xf32>
    %198 = vector.broadcast %197 : vector<1x128xf32> to vector<162x128xf32>
    %199 = arith.mulf %187, %198 : vector<162x128xf32>
    %cst_103 = arith.constant 0.000000e+00 : f32
    %200 = vector.broadcast %cst_103 : f32 to vector<162x128xf32>
    %201 = arith.maximumf %199, %200 : vector<162x128xf32>
    %202 = vector.broadcast %5 : vector<162x1xf32> to vector<162x128xf32>
    %203 = arith.mulf %201, %202 : vector<162x128xf32>
    %c0_104 = arith.constant 0 : index
    %c0_105 = arith.constant 0 : index
    %204 = vector.load %arg9[%c0_104, %c0_105] : memref<128x128xf32, #tpu.memory_space<vmem>>, vector<128x128xf32>
    %cst_106 = arith.constant dense<0.000000e+00> : vector<162x128xf32>
    %205 = tpu.matmul %203, %204, %cst_106 {dimension_numbers = #tpu.dot_dimension_numbers<[1], [0], [0], [1], [0, 0, 1, 1], [], []>} : vector<162x128xf32>, vector<128x128xf32>, vector<162x128xf32> -> vector<162x128xf32>
    %206 = vector.broadcast %5 : vector<162x1xf32> to vector<162x128xf32>
    %207 = arith.mulf %205, %206 : vector<162x128xf32>
    %cst_107 = arith.constant dense<0.000000e+00> : vector<128xf32>
    %208 = vector.multi_reduction <add>, %207, %cst_107 [0] : vector<162x128xf32> to vector<128xf32>
    %209 = vector.shape_cast %208 : vector<128xf32> to vector<1x128xf32>
    %cst_108 = arith.constant 0.0102040814 : f32
    %210 = vector.broadcast %cst_108 : f32 to vector<1x128xf32>
    %211 = arith.mulf %209, %210 : vector<1x128xf32>
    %212 = vector.broadcast %211 : vector<1x128xf32> to vector<162x128xf32>
    %213 = arith.subf %205, %212 : vector<162x128xf32>
    %214 = vector.broadcast %5 : vector<162x1xf32> to vector<162x128xf32>
    %215 = arith.mulf %213, %214 : vector<162x128xf32>
    %216 = arith.mulf %215, %215 : vector<162x128xf32>
    %cst_109 = arith.constant dense<0.000000e+00> : vector<128xf32>
    %217 = vector.multi_reduction <add>, %216, %cst_109 [0] : vector<162x128xf32> to vector<128xf32>
    %218 = vector.shape_cast %217 : vector<128xf32> to vector<1x128xf32>
    %cst_110 = arith.constant 0.0102040814 : f32
    %219 = vector.broadcast %cst_110 : f32 to vector<1x128xf32>
    %220 = arith.mulf %218, %219 : vector<1x128xf32>
    %cst_111 = arith.constant 9.99999974E-6 : f32
    %221 = vector.broadcast %cst_111 : f32 to vector<1x128xf32>
    %222 = arith.addf %220, %221 : vector<1x128xf32>
    %223 = math.rsqrt %222 : vector<1x128xf32>
    %224 = vector.broadcast %223 : vector<1x128xf32> to vector<162x128xf32>
    %225 = arith.mulf %213, %224 : vector<162x128xf32>
    %cst_112 = arith.constant 0.000000e+00 : f32
    %226 = vector.broadcast %cst_112 : f32 to vector<162x128xf32>
    %227 = arith.maximumf %225, %226 : vector<162x128xf32>
    %228 = vector.broadcast %5 : vector<162x1xf32> to vector<162x128xf32>
    %229 = arith.mulf %227, %228 : vector<162x128xf32>
    %c16 = arith.constant 16 : index
    %c0_113 = arith.constant 0 : index
    %230 = vector.load %arg16[%c16, %c0_113] : memref<194x128xf32, #tpu.memory_space<vmem>>, vector<162x128xf32>
    tpu.vector_store %arg16[%c16, %c0_113], %229 {strides = array<i32>} : memref<194x128xf32, #tpu.memory_space<vmem>>, vector<162x128xf32>,
    %c6_114 = arith.constant 6 : index
    %c0_115 = arith.constant 0 : index
    %231 = vector.load %arg16[%c6_114, %c0_115] : memref<194x128xf32, #tpu.memory_space<vmem>>, vector<162x128xf32>
    %c0_116 = arith.constant 0 : index
    %c0_117 = arith.constant 0 : index
    %232 = vector.load %arg10[%c0_116, %c0_117] : memref<9x128xf32, #tpu.memory_space<vmem>>, vector<1x128xf32>
    %233 = vector.broadcast %232 : vector<1x128xf32> to vector<162x128xf32>
    %234 = arith.mulf %231, %233 : vector<162x128xf32>
    %c7_118 = arith.constant 7 : index
    %c0_119 = arith.constant 0 : index
    %235 = vector.load %arg16[%c7_118, %c0_119] : memref<194x128xf32, #tpu.memory_space<vmem>>, vector<162x128xf32>
    %c1_120 = arith.constant 1 : index
    %c0_121 = arith.constant 0 : index
    %236 = vector.load %arg10[%c1_120, %c0_121] : memref<9x128xf32, #tpu.memory_space<vmem>>, vector<1x128xf32>
    %237 = vector.broadcast %236 : vector<1x128xf32> to vector<162x128xf32>
    %238 = arith.mulf %235, %237 : vector<162x128xf32>
    %239 = arith.addf %234, %238 : vector<162x128xf32>
    %c8_122 = arith.constant 8 : index
    %c0_123 = arith.constant 0 : index
    %240 = vector.load %arg16[%c8_122, %c0_123] : memref<194x128xf32, #tpu.memory_space<vmem>>, vector<162x128xf32>
    %c2_124 = arith.constant 2 : index
    %c0_125 = arith.constant 0 : index
    %241 = vector.load %arg10[%c2_124, %c0_125] : memref<9x128xf32, #tpu.memory_space<vmem>>, vector<1x128xf32>
    %242 = vector.broadcast %241 : vector<1x128xf32> to vector<162x128xf32>
    %243 = arith.mulf %240, %242 : vector<162x128xf32>
    %244 = arith.addf %239, %243 : vector<162x128xf32>
    %c15 = arith.constant 15 : index
    %c0_126 = arith.constant 0 : index
    %245 = vector.load %arg16[%c15, %c0_126] : memref<194x128xf32, #tpu.memory_space<vmem>>, vector<162x128xf32>
    %c3_127 = arith.constant 3 : index
    %c0_128 = arith.constant 0 : index
    %246 = vector.load %arg10[%c3_127, %c0_128] : memref<9x128xf32, #tpu.memory_space<vmem>>, vector<1x128xf32>
    %247 = vector.broadcast %246 : vector<1x128xf32> to vector<162x128xf32>
    %248 = arith.mulf %245, %247 : vector<162x128xf32>
    %249 = arith.addf %244, %248 : vector<162x128xf32>
    %c16_129 = arith.constant 16 : index
    %c0_130 = arith.constant 0 : index
    %250 = vector.load %arg16[%c16_129, %c0_130] : memref<194x128xf32, #tpu.memory_space<vmem>>, vector<162x128xf32>
    %c4_131 = arith.constant 4 : index
    %c0_132 = arith.constant 0 : index
    %251 = vector.load %arg10[%c4_131, %c0_132] : memref<9x128xf32, #tpu.memory_space<vmem>>, vector<1x128xf32>
    %252 = vector.broadcast %251 : vector<1x128xf32> to vector<162x128xf32>
    %253 = arith.mulf %250, %252 : vector<162x128xf32>
    %254 = arith.addf %249, %253 : vector<162x128xf32>
    %c17 = arith.constant 17 : index
    %c0_133 = arith.constant 0 : index
    %255 = vector.load %arg16[%c17, %c0_133] : memref<194x128xf32, #tpu.memory_space<vmem>>, vector<162x128xf32>
    %c5_134 = arith.constant 5 : index
    %c0_135 = arith.constant 0 : index
    %256 = vector.load %arg10[%c5_134, %c0_135] : memref<9x128xf32, #tpu.memory_space<vmem>>, vector<1x128xf32>
    %257 = vector.broadcast %256 : vector<1x128xf32> to vector<162x128xf32>
    %258 = arith.mulf %255, %257 : vector<162x128xf32>
    %259 = arith.addf %254, %258 : vector<162x128xf32>
    %c24_136 = arith.constant 24 : index
    %c0_137 = arith.constant 0 : index
    %260 = vector.load %arg16[%c24_136, %c0_137] : memref<194x128xf32, #tpu.memory_space<vmem>>, vector<162x128xf32>
    %c6_138 = arith.constant 6 : index
    %c0_139 = arith.constant 0 : index
    %261 = vector.load %arg10[%c6_138, %c0_139] : memref<9x128xf32, #tpu.memory_space<vmem>>, vector<1x128xf32>
    %262 = vector.broadcast %261 : vector<1x128xf32> to vector<162x128xf32>
    %263 = arith.mulf %260, %262 : vector<162x128xf32>
    %264 = arith.addf %259, %263 : vector<162x128xf32>
    %c25_140 = arith.constant 25 : index
    %c0_141 = arith.constant 0 : index
    %265 = vector.load %arg16[%c25_140, %c0_141] : memref<194x128xf32, #tpu.memory_space<vmem>>, vector<162x128xf32>
    %c7_142 = arith.constant 7 : index
    %c0_143 = arith.constant 0 : index
    %266 = vector.load %arg10[%c7_142, %c0_143] : memref<9x128xf32, #tpu.memory_space<vmem>>, vector<1x128xf32>
    %267 = vector.broadcast %266 : vector<1x128xf32> to vector<162x128xf32>
    %268 = arith.mulf %265, %267 : vector<162x128xf32>
    %269 = arith.addf %264, %268 : vector<162x128xf32>
    %c26 = arith.constant 26 : index
    %c0_144 = arith.constant 0 : index
    %270 = vector.load %arg16[%c26, %c0_144] : memref<194x128xf32, #tpu.memory_space<vmem>>, vector<162x128xf32>
    %c8_145 = arith.constant 8 : index
    %c0_146 = arith.constant 0 : index
    %271 = vector.load %arg10[%c8_145, %c0_146] : memref<9x128xf32, #tpu.memory_space<vmem>>, vector<1x128xf32>
    %272 = vector.broadcast %271 : vector<1x128xf32> to vector<162x128xf32>
    %273 = arith.mulf %270, %272 : vector<162x128xf32>
    %274 = arith.addf %269, %273 : vector<162x128xf32>
    %275 = vector.broadcast %5 : vector<162x1xf32> to vector<162x128xf32>
    %276 = arith.mulf %274, %275 : vector<162x128xf32>
    %cst_147 = arith.constant dense<0.000000e+00> : vector<128xf32>
    %277 = vector.multi_reduction <add>, %276, %cst_147 [0] : vector<162x128xf32> to vector<128xf32>
    %278 = vector.shape_cast %277 : vector<128xf32> to vector<1x128xf32>
    %cst_148 = arith.constant 0.0102040814 : f32
    %279 = vector.broadcast %cst_148 : f32 to vector<1x128xf32>
    %280 = arith.mulf %278, %279 : vector<1x128xf32>
    %281 = vector.broadcast %280 : vector<1x128xf32> to vector<162x128xf32>
    %282 = arith.subf %274, %281 : vector<162x128xf32>
    %283 = vector.broadcast %5 : vector<162x1xf32> to vector<162x128xf32>
    %284 = arith.mulf %282, %283 : vector<162x128xf32>
    %285 = arith.mulf %284, %284 : vector<162x128xf32>
    %cst_149 = arith.constant dense<0.000000e+00> : vector<128xf32>
    %286 = vector.multi_reduction <add>, %285, %cst_149 [0] : vector<162x128xf32> to vector<128xf32>
    %287 = vector.shape_cast %286 : vector<128xf32> to vector<1x128xf32>
    %cst_150 = arith.constant 0.0102040814 : f32
    %288 = vector.broadcast %cst_150 : f32 to vector<1x128xf32>
    %289 = arith.mulf %287, %288 : vector<1x128xf32>
    %cst_151 = arith.constant 9.99999974E-6 : f32
    %290 = vector.broadcast %cst_151 : f32 to vector<1x128xf32>
    %291 = arith.addf %289, %290 : vector<1x128xf32>
    %292 = math.rsqrt %291 : vector<1x128xf32>
    %293 = vector.broadcast %292 : vector<1x128xf32> to vector<162x128xf32>
    %294 = arith.mulf %282, %293 : vector<162x128xf32>
    %cst_152 = arith.constant 0.000000e+00 : f32
    %295 = vector.broadcast %cst_152 : f32 to vector<162x128xf32>
    %296 = arith.maximumf %294, %295 : vector<162x128xf32>
    %297 = vector.broadcast %5 : vector<162x1xf32> to vector<162x128xf32>
    %298 = arith.mulf %296, %297 : vector<162x128xf32>
    %c0_153 = arith.constant 0 : index
    %c0_154 = arith.constant 0 : index
    %299 = vector.load %arg11[%c0_153, %c0_154] : memref<128x128xf32, #tpu.memory_space<vmem>>, vector<128x128xf32>
    %cst_155 = arith.constant dense<0.000000e+00> : vector<162x128xf32>
    %300 = tpu.matmul %298, %299, %cst_155 {dimension_numbers = #tpu.dot_dimension_numbers<[1], [0], [0], [1], [0, 0, 1, 1], [], []>} : vector<162x128xf32>, vector<128x128xf32>, vector<162x128xf32> -> vector<162x128xf32>
    %301 = vector.broadcast %5 : vector<162x1xf32> to vector<162x128xf32>
    %302 = arith.mulf %300, %301 : vector<162x128xf32>
    %cst_156 = arith.constant dense<0.000000e+00> : vector<128xf32>
    %303 = vector.multi_reduction <add>, %302, %cst_156 [0] : vector<162x128xf32> to vector<128xf32>
    %304 = vector.shape_cast %303 : vector<128xf32> to vector<1x128xf32>
    %cst_157 = arith.constant 0.0102040814 : f32
    %305 = vector.broadcast %cst_157 : f32 to vector<1x128xf32>
    %306 = arith.mulf %304, %305 : vector<1x128xf32>
    %307 = vector.broadcast %306 : vector<1x128xf32> to vector<162x128xf32>
    %308 = arith.subf %300, %307 : vector<162x128xf32>
    %309 = vector.broadcast %5 : vector<162x1xf32> to vector<162x128xf32>
    %310 = arith.mulf %308, %309 : vector<162x128xf32>
    %311 = arith.mulf %310, %310 : vector<162x128xf32>
    %cst_158 = arith.constant dense<0.000000e+00> : vector<128xf32>
    %312 = vector.multi_reduction <add>, %311, %cst_158 [0] : vector<162x128xf32> to vector<128xf32>
    %313 = vector.shape_cast %312 : vector<128xf32> to vector<1x128xf32>
    %cst_159 = arith.constant 0.0102040814 : f32
    %314 = vector.broadcast %cst_159 : f32 to vector<1x128xf32>
    %315 = arith.mulf %313, %314 : vector<1x128xf32>
    %cst_160 = arith.constant 9.99999974E-6 : f32
    %316 = vector.broadcast %cst_160 : f32 to vector<1x128xf32>
    %317 = arith.addf %315, %316 : vector<1x128xf32>
    %318 = math.rsqrt %317 : vector<1x128xf32>
    %319 = vector.broadcast %318 : vector<1x128xf32> to vector<162x128xf32>
    %320 = arith.mulf %308, %319 : vector<162x128xf32>
    %cst_161 = arith.constant 0.000000e+00 : f32
    %321 = vector.broadcast %cst_161 : f32 to vector<162x128xf32>
    %322 = arith.maximumf %320, %321 : vector<162x128xf32>
    %323 = vector.broadcast %5 : vector<162x1xf32> to vector<162x128xf32>
    %324 = arith.mulf %322, %323 : vector<162x128xf32>
    %325 = tpu.iota {dimensions = array<i32: 0>} : vector<8x162xi32>
    %c0_162 = arith.constant 0 : index
    %c0_163 = arith.constant 0 : index
    %326 = vector.load %arg5[%c0_162, %c0_163] : memref<1x162xi32, #tpu.memory_space<vmem>>, vector<1x162xi32>
    %327 = vector.broadcast %326 : vector<1x162xi32> to vector<8x162xi32>
    %328 = arith.cmpi eq, %325, %327 : vector<8x162xi32>
    %cst_164 = arith.constant 0.0204081628 : f32
    %cst_165 = arith.constant 0.000000e+00 : f32
    %329 = vector.broadcast %cst_164 : f32 to vector<8x162xf32>
    %330 = vector.broadcast %cst_165 : f32 to vector<8x162xf32>
    %331 = arith.select %328, %329, %330 : vector<8x162xi1>, vector<8x162xf32>
    %cst_166 = arith.constant dense<0.000000e+00> : vector<8x128xf32>
    %332 = tpu.matmul %331, %324, %cst_166 {dimension_numbers = #tpu.dot_dimension_numbers<[1], [0], [0], [1], [0, 0, 1, 1], [], []>} : vector<8x162xf32>, vector<162x128xf32>, vector<8x128xf32> -> vector<8x128xf32>
    %c0_167 = arith.constant 0 : index
    %c0_168 = arith.constant 0 : index
    %333 = vector.load %arg12[%c0_167, %c0_168] : memref<128x128xf32, #tpu.memory_space<vmem>>, vector<128x128xf32>
    %cst_169 = arith.constant dense<0.000000e+00> : vector<8x128xf32>
    %334 = tpu.matmul %332, %333, %cst_169 {dimension_numbers = #tpu.dot_dimension_numbers<[1], [0], [0], [1], [0, 0, 1, 1], [], []>} : vector<8x128xf32>, vector<128x128xf32>, vector<8x128xf32> -> vector<8x128xf32>
    %c0_170 = arith.constant 0 : index
    %c0_171 = arith.constant 0 : index
    %335 = vector.load %arg13[%c0_170, %c0_171] : memref<1x128xf32, #tpu.memory_space<vmem>>, vector<1x128xf32>
    %336 = vector.broadcast %335 : vector<1x128xf32> to vector<8x128xf32>
    %337 = arith.addf %334, %336 : vector<8x128xf32>
    %c0_172 = arith.constant 0 : index
    %c0_173 = arith.constant 0 : index
    %338 = vector.load %arg14[%c0_172, %c0_173] : memref<8x128xf32, #tpu.memory_space<vmem>>, vector<8x128xf32>
    tpu.vector_store %arg14[%c0_172, %c0_173], %337 {strides = array<i32>} : memref<8x128xf32, #tpu.memory_space<vmem>>, vector<8x128xf32>,
    return
  }
}

</mosaic_0001>

<llo_original>
// kernel: mobilenet_forward.1
$region0: #{mobilenet_forward.1}
  #allocation0 [shape = 'u32[]', space=smem, size = 0x4, offset = 0x4, fixed_abs, tag = 'smem constant byte address 0x4 - core index']
  #allocation1 [shape = 'u32[144,128]{1,0:T(1,128)}', space=vmem, size = 0x12000, scoped, tag = 'internal scratch']
  #allocation2 [shape = 'f32[560,128]{1,0:T(8,128)}', space=vmem, size = 0x46000, scoped, tag = 'scratch operand']
  #allocation3 [shape = 'f32[194,128]{1,0:T(8,128)}', space=vmem, size = 0x19000, scoped, tag = 'scratch operand']
  %s0 = inlined_call_operand.vmem [shape: f32[512,32], index: 0, kind: input, shape index: {}]
  %s1 = inlined_call_operand.vmem [shape: f32[32,128], index: 1, kind: input, shape index: {}]
  %s2 = inlined_call_operand.vmem [shape: f32[512,1], index: 2, kind: input, shape index: {}]
  %s3 = inlined_call_operand.vmem [shape: f32[162,1], index: 3, kind: input, shape index: {}]
  %s4 = inlined_call_operand.vmem [shape: s32[162,1], index: 4, kind: input, shape index: {}]
  %s5 = inlined_call_operand.vmem [shape: s32[1,162], index: 5, kind: input, shape index: {}]
  %s6 = inlined_call_operand.vmem [shape: f32[9,128], index: 6, kind: input, shape index: {}]
  %s7 = inlined_call_operand.vmem [shape: f32[128,128], index: 7, kind: input, shape index: {}]
  %s8 = inlined_call_operand.vmem [shape: f32[9,128], index: 8, kind: input, shape index: {}]
  %s9 = inlined_call_operand.vmem [shape: f32[128,128], index: 9, kind: input, shape index: {}]
  %s10 = inlined_call_operand.vmem [shape: f32[9,128], index: 10, kind: input, shape index: {}]
  %s11 = inlined_call_operand.vmem [shape: f32[128,128], index: 11, kind: input, shape index: {}]
  %s12 = inlined_call_operand.vmem [shape: f32[128,128], index: 12, kind: input, shape index: {}]
  %s13 = inlined_call_operand.vmem [shape: f32[1,128], index: 13, kind: input, shape index: {}]
  %s14 = inlined_call_operand.vmem [shape: f32[8,128], index: 14, kind: output, shape index: {}]
  %s15 = sld [smem:[#allocation0]]
  $region66: #{mobilenet_forward.1} parent=0
    _
  %s17 = ssub.s32 1, %s15
  %s18 = scalar_select 0, %s17, %s15
  // Predicated region
  $region2: #{mobilenet_forward.1} parent=0 // pred_check
    _
  $region3: #{mobilenet_forward.1} parent=0 // pred_check_branch
    %20 = sbr.rel (0) target = $region5
  $region4: #{mobilenet_forward.1} parent=0 // pred_region
    _
  $region5: #{mobilenet_forward.1} parent=0 // pred_fallthru
    _
  // Predicated region
  $region6: #{mobilenet_forward.1} parent=0 // pred_check
    _
  $region7: #{mobilenet_forward.1} parent=0 // pred_check_branch
    %22 = sbr.rel (0) target = $region9
  $region8: #{mobilenet_forward.1} parent=0 // pred_region
    _
  $region9: #{mobilenet_forward.1} parent=0 // pred_fallthru
    _
  // Predicated region
  $region10: #{mobilenet_forward.1} parent=0 // pred_check
    _
  $region11: #{mobilenet_forward.1} parent=0 // pred_check_branch
    %24 = sbr.rel (0) target = $region13
  $region12: #{mobilenet_forward.1} parent=0 // pred_region
    _
  $region13: #{mobilenet_forward.1} parent=0 // pred_fallthru
    _
  // Predicated region
  $region14: #{mobilenet_forward.1} parent=0 // pred_check
    _
  $region15: #{mobilenet_forward.1} parent=0 // pred_check_branch
    %26 = sbr.rel (0) target = $region17
  $region16: #{mobilenet_forward.1} parent=0 // pred_region
    _
  $region17: #{mobilenet_forward.1} parent=0 // pred_fallthru
    _
  // Predicated region
  $region18: #{mobilenet_forward.1} parent=0 // pred_check
    _
  $region19: #{mobilenet_forward.1} parent=0 // pred_check_branch
    %28 = sbr.rel (0) target = $region21
  $region20: #{mobilenet_forward.1} parent=0 // pred_region
    _
  $region21: #{mobilenet_forward.1} parent=0 // pred_fallthru
    _
  // Predicated region
  $region22: #{mobilenet_forward.1} parent=0 // pred_check
    _
  $region23: #{mobilenet_forward.1} parent=0 // pred_check_branch
    %30 = sbr.rel (0) target = $region25
  $region24: #{mobilenet_forward.1} parent=0 // pred_region
    _
  $region25: #{mobilenet_forward.1} parent=0 // pred_fallthru
    _
  // Predicated region
  $region26: #{mobilenet_forward.1} parent=0 // pred_check
    _
  $region27: #{mobilenet_forward.1} parent=0 // pred_check_branch
    %32 = sbr.rel (0) target = $region29
  $region28: #{mobilenet_forward.1} parent=0 // pred_region
    _
  $region29: #{mobilenet_forward.1} parent=0 // pred_fallthru
    _
  // Predicated region
  $region30: #{mobilenet_forward.1} parent=0 // pred_check
    _
  $region31: #{mobilenet_forward.1} parent=0 // pred_check_branch
    %34 = sbr.rel (0) target = $region33
  $region32: #{mobilenet_forward.1} parent=0 // pred_region
    _
  $region33: #{mobilenet_forward.1} parent=0 // pred_fallthru
    _
  // Predicated region
  $region34: #{mobilenet_forward.1} parent=0 // pred_check
    _
  $region35: #{mobilenet_forward.1} parent=0 // pred_check_branch
    %36 = sbr.rel (0) target = $region37
  $region36: #{mobilenet_forward.1} parent=0 // pred_region
    _
  $region37: #{mobilenet_forward.1} parent=0 // pred_fallthru
    _
  // Predicated region
  $region38: #{mobilenet_forward.1} parent=0 // pred_check
    _
  $region39: #{mobilenet_forward.1} parent=0 // pred_check_branch
    %38 = sbr.rel (0) target = $region41
  $region40: #{mobilenet_forward.1} parent=0 // pred_region
    _
  $region41: #{mobilenet_forward.1} parent=0 // pred_fallthru
    _
  // Predicated region
  $region42: #{mobilenet_forward.1} parent=0 // pred_check
    _
  $region43: #{mobilenet_forward.1} parent=0 // pred_check_branch
    %40 = sbr.rel (0) target = $region45
  $region44: #{mobilenet_forward.1} parent=0 // pred_region
    _
  $region45: #{mobilenet_forward.1} parent=0 // pred_fallthru
    _
  // Predicated region
  $region46: #{mobilenet_forward.1} parent=0 // pred_check
    _
  $region47: #{mobilenet_forward.1} parent=0 // pred_check_branch
    %42 = sbr.rel (0) target = $region49
  $region48: #{mobilenet_forward.1} parent=0 // pred_region
    _
  $region49: #{mobilenet_forward.1} parent=0 // pred_fallthru
    _
  // Predicated region
  $region50: #{mobilenet_forward.1} parent=0 // pred_check
    _
  $region51: #{mobilenet_forward.1} parent=0 // pred_check_branch
    %44 = sbr.rel (0) target = $region53
  $region52: #{mobilenet_forward.1} parent=0 // pred_region
    _
  $region53: #{mobilenet_forward.1} parent=0 // pred_fallthru
    _
  // Predicated region
  $region54: #{mobilenet_forward.1} parent=0 // pred_check
    _
  $region55: #{mobilenet_forward.1} parent=0 // pred_check_branch
    %46 = sbr.rel (0) target = $region57
  $region56: #{mobilenet_forward.1} parent=0 // pred_region
    _
  $region57: #{mobilenet_forward.1} parent=0 // pred_fallthru
    _
  %47 = vst [vmem:[#allocation2] sm:$0xff] 0.0
  %48 = vst [vmem:[#allocation2 + $0x8] sm:$0xff] 0.0
  %49 = vst [vmem:[#allocation2 + $0x10] sm:$0xff] 0.0
  %50 = vst [vmem:[#allocation2 + $0x18] sm:$0xff] 0.0
  %51 = vst [vmem:[#allocation2 + $0x20] sm:$0xff] 0.0
  %52 = vst [vmem:[#allocation2 + $0x28] sm:$0xff] 0.0
  %53 = vst [vmem:[#allocation2 + $0x30] sm:$0xff] 0.0
  %54 = vst [vmem:[#allocation2 + $0x38] sm:$0xff] 0.0
  %55 = vst [vmem:[#allocation2 + $0x40] sm:$0xff] 0.0
  %56 = vst [vmem:[#allocation2 + $0x48] sm:$0xff] 0.0
  %57 = vst [vmem:[#allocation2 + $0x50] sm:$0xff] 0.0
  %58 = vst [vmem:[#allocation2 + $0x58] sm:$0xff] 0.0
  %59 = vst [vmem:[#allocation2 + $0x60] sm:$0xff] 0.0
  %60 = vst [vmem:[#allocation2 + $0x68] sm:$0xff] 0.0
  %61 = vst [vmem:[#allocation2 + $0x70] sm:$0xff] 0.0
  %62 = vst [vmem:[#allocation2 + $0x78] sm:$0xff] 0.0
  %63 = vst [vmem:[#allocation2 + $0x80] sm:$0xff] 0.0
  %64 = vst [vmem:[#allocation2 + $0x88] sm:$0xff] 0.0
  %65 = vst [vmem:[#allocation2 + $0x90] sm:$0xff] 0.0
  %66 = vst [vmem:[#allocation2 + $0x98] sm:$0xff] 0.0
  %67 = vst [vmem:[#allocation2 + $0xa0] sm:$0xff] 0.0
  %68 = vst [vmem:[#allocation2 + $0xa8] sm:$0xff] 0.0
  %69 = vst [vmem:[#allocation2 + $0xb0] sm:$0xff] 0.0
  %70 = vst [vmem:[#allocation2 + $0xb8] sm:$0xff] 0.0
  %71 = vst [vmem:[#allocation2 + $0xc0] sm:$0xff] 0.0
  %72 = vst [vmem:[#allocation2 + $0xc8] sm:$0xff] 0.0
  %73 = vst [vmem:[#allocation2 + $0xd0] sm:$0xff] 0.0
  %74 = vst [vmem:[#allocation2 + $0xd8] sm:$0xff] 0.0
  %75 = vst [vmem:[#allocation2 + $0xe0] sm:$0xff] 0.0
  %76 = vst [vmem:[#allocation2 + $0xe8] sm:$0xff] 0.0
  %77 = vst [vmem:[#allocation2 + $0xf0] sm:$0xff] 0.0
  %78 = vst [vmem:[#allocation2 + $0xf8] sm:$0xff] 0.0
  %79 = vst [vmem:[#allocation2 + $0x100] sm:$0xff] 0.0
  %80 = vst [vmem:[#allocation2 + $0x108] sm:$0xff] 0.0
  %81 = vst [vmem:[#allocation2 + $0x110] sm:$0xff] 0.0
  %82 = vst [vmem:[#allocation2 + $0x118] sm:$0xff] 0.0
  %83 = vst [vmem:[#allocation2 + $0x120] sm:$0xff] 0.0
  %84 = vst [vmem:[#allocation2 + $0x128] sm:$0xff] 0.0
  %85 = vst [vmem:[#allocation2 + $0x130] sm:$0xff] 0.0
  %86 = vst [vmem:[#allocation2 + $0x138] sm:$0xff] 0.0
  %87 = vst [vmem:[#allocation2 + $0x140] sm:$0xff] 0.0
  %88 = vst [vmem:[#allocation2 + $0x148] sm:$0xff] 0.0
  %89 = vst [vmem:[#allocation2 + $0x150] sm:$0xff] 0.0
  %90 = vst [vmem:[#allocation2 + $0x158] sm:$0xff] 0.0
  %91 = vst [vmem:[#allocation2 + $0x160] sm:$0xff] 0.0
  %92 = vst [vmem:[#allocation2 + $0x168] sm:$0xff] 0.0
  %93 = vst [vmem:[#allocation2 + $0x170] sm:$0xff] 0.0
  %94 = vst [vmem:[#allocation2 + $0x178] sm:$0xff] 0.0
  %95 = vst [vmem:[#allocation2 + $0x180] sm:$0xff] 0.0
  %96 = vst [vmem:[#allocation2 + $0x188] sm:$0xff] 0.0
  %97 = vst [vmem:[#allocation2 + $0x190] sm:$0xff] 0.0
  %98 = vst [vmem:[#allocation2 + $0x198] sm:$0xff] 0.0
  %99 = vst [vmem:[#allocation2 + $0x1a0] sm:$0xff] 0.0
  %100 = vst [vmem:[#allocation2 + $0x1a8] sm:$0xff] 0.0
  %101 = vst [vmem:[#allocation2 + $0x1b0] sm:$0xff] 0.0
  %102 = vst [vmem:[#allocation2 + $0x1b8] sm:$0xff] 0.0
  %103 = vst [vmem:[#allocation2 + $0x1c0] sm:$0xff] 0.0
  %104 = vst [vmem:[#allocation2 + $0x1c8] sm:$0xff] 0.0
  %105 = vst [vmem:[#allocation2 + $0x1d0] sm:$0xff] 0.0
  %106 = vst [vmem:[#allocation2 + $0x1d8] sm:$0xff] 0.0
  %107 = vst [vmem:[#allocation2 + $0x1e0] sm:$0xff] 0.0
  %108 = vst [vmem:[#allocation2 + $0x1e8] sm:$0xff] 0.0
  %109 = vst [vmem:[#allocation2 + $0x1f0] sm:$0xff] 0.0
  %110 = vst [vmem:[#allocation2 + $0x1f8] sm:$0xff] 0.0
  %111 = vst [vmem:[#allocation2 + $0x200] sm:$0xff] 0.0
  %112 = vst [vmem:[#allocation2 + $0x208] sm:$0xff] 0.0
  %113 = vst [vmem:[#allocation2 + $0x210] sm:$0xff] 0.0
  %114 = vst [vmem:[#allocation2 + $0x218] sm:$0xff] 0.0
  %115 = vst [vmem:[#allocation2 + $0x220] sm:$0xff] 0.0
  %116 = vst [vmem:[#allocation2 + $0x228] sm:$0xff] 0.0
  %117 = vst [vmem:[#allocation3] sm:$0xff] 0.0
  %118 = vst [vmem:[#allocation3 + $0x8] sm:$0xff] 0.0
  %119 = vst [vmem:[#allocation3 + $0x10] sm:$0xff] 0.0
  %120 = vst [vmem:[#allocation3 + $0x18] sm:$0xff] 0.0
  %121 = vst [vmem:[#allocation3 + $0x20] sm:$0xff] 0.0
  %122 = vst [vmem:[#allocation3 + $0x28] sm:$0xff] 0.0
  %123 = vst [vmem:[#allocation3 + $0x30] sm:$0xff] 0.0
  %124 = vst [vmem:[#allocation3 + $0x38] sm:$0xff] 0.0
  %125 = vst [vmem:[#allocation3 + $0x40] sm:$0xff] 0.0
  %126 = vst [vmem:[#allocation3 + $0x48] sm:$0xff] 0.0
  %127 = vst [vmem:[#allocation3 + $0x50] sm:$0xff] 0.0
  %128 = vst [vmem:[#allocation3 + $0x58] sm:$0xff] 0.0
  %129 = vst [vmem:[#allocation3 + $0x60] sm:$0xff] 0.0
  %130 = vst [vmem:[#allocation3 + $0x68] sm:$0xff] 0.0
  %131 = vst [vmem:[#allocation3 + $0x70] sm:$0xff] 0.0
  %132 = vst [vmem:[#allocation3 + $0x78] sm:$0xff] 0.0
  %133 = vst [vmem:[#allocation3 + $0x80] sm:$0xff] 0.0
  %134 = vst [vmem:[#allocation3 + $0x88] sm:$0xff] 0.0
  %135 = vst [vmem:[#allocation3 + $0x90] sm:$0xff] 0.0
  %136 = vst [vmem:[#allocation3 + $0x98] sm:$0xff] 0.0
  %137 = vst [vmem:[#allocation3 + $0xa0] sm:$0xff] 0.0
  %138 = vst [vmem:[#allocation3 + $0xa8] sm:$0xff] 0.0
  %139 = vst [vmem:[#allocation3 + $0xb0] sm:$0xff] 0.0
  %140 = vst [vmem:[#allocation3 + $0xb8] sm:$0xff] 0.0
  %141 = vst [vmem:[#allocation3 + $0xc0] sm:$0x3] 0.0
  %v142 = vld [vmem:[%s2] sm:$0xff]
  %v143 = vld [vmem:[%s2 + $0x8] sm:$0xff]
  %v144 = vld [vmem:[%s2 + $0x10] sm:$0xff]
  %v145 = vld [vmem:[%s2 + $0x18] sm:$0xff]
  %v146 = vld [vmem:[%s2 + $0x20] sm:$0xff]
  %v147 = vld [vmem:[%s2 + $0x28] sm:$0xff]
  %v148 = vld [vmem:[%s2 + $0x30] sm:$0xff]
  %v149 = vld [vmem:[%s2 + $0x38] sm:$0xff]
  %v150 = vld [vmem:[%s2 + $0x40] sm:$0xff]
  %v151 = vld [vmem:[%s2 + $0x48] sm:$0xff]
  %v152 = vld [vmem:[%s2 + $0x50] sm:$0xff]
  %v153 = vld [vmem:[%s2 + $0x58] sm:$0xff]
  %v154 = vld [vmem:[%s2 + $0x60] sm:$0xff]
  %v155 = vld [vmem:[%s2 + $0x68] sm:$0xff]
  %v156 = vld [vmem:[%s2 + $0x70] sm:$0xff]
  %v157 = vld [vmem:[%s2 + $0x78] sm:$0xff]
  %v158 = vld [vmem:[%s2 + $0x80] sm:$0xff]
  %v159 = vld [vmem:[%s2 + $0x88] sm:$0xff]
  %v160 = vld [vmem:[%s2 + $0x90] sm:$0xff]
  %v161 = vld [vmem:[%s2 + $0x98] sm:$0xff]
  %v162 = vld [vmem:[%s2 + $0xa0] sm:$0xff]
  %v163 = vld [vmem:[%s2 + $0xa8] sm:$0xff]
  %v164 = vld [vmem:[%s2 + $0xb0] sm:$0xff]
  %v165 = vld [vmem:[%s2 + $0xb8] sm:$0xff]
  %v166 = vld [vmem:[%s2 + $0xc0] sm:$0xff]
  %v167 = vld [vmem:[%s2 + $0xc8] sm:$0xff]
  %v168 = vld [vmem:[%s2 + $0xd0] sm:$0xff]
  %v169 = vld [vmem:[%s2 + $0xd8] sm:$0xff]
  %v170 = vld [vmem:[%s2 + $0xe0] sm:$0xff]
  %v171 = vld [vmem:[%s2 + $0xe8] sm:$0xff]
  %v172 = vld [vmem:[%s2 + $0xf0] sm:$0xff]
  %v173 = vld [vmem:[%s2 + $0xf8] sm:$0xff]
  %v174 = vld [vmem:[%s2 + $0x100] sm:$0xff]
  %v175 = vld [vmem:[%s2 + $0x108] sm:$0xff]
  %v176 = vld [vmem:[%s2 + $0x110] sm:$0xff]
  %v177 = vld [vmem:[%s2 + $0x118] sm:$0xff]
  %v178 = vld [vmem:[%s2 + $0x120] sm:$0xff]
  %v179 = vld [vmem:[%s2 + $0x128] sm:$0xff]
  %v180 = vld [vmem:[%s2 + $0x130] sm:$0xff]
  %v181 = vld [vmem:[%s2 + $0x138] sm:$0xff]
  %v182 = vld [vmem:[%s2 + $0x140] sm:$0xff]
  %v183 = vld [vmem:[%s2 + $0x148] sm:$0xff]
  %v184 = vld [vmem:[%s2 + $0x150] sm:$0xff]
  %v185 = vld [vmem:[%s2 + $0x158] sm:$0xff]
  %v186 = vld [vmem:[%s2 + $0x160] sm:$0xff]
  %v187 = vld [vmem:[%s2 + $0x168] sm:$0xff]
  %v188 = vld [vmem:[%s2 + $0x170] sm:$0xff]
  %v189 = vld [vmem:[%s2 + $0x178] sm:$0xff]
  %v190 = vld [vmem:[%s2 + $0x180] sm:$0xff]
  %v191 = vld [vmem:[%s2 + $0x188] sm:$0xff]
  %v192 = vld [vmem:[%s2 + $0x190] sm:$0xff]
  %v193 = vld [vmem:[%s2 + $0x198] sm:$0xff]
  %v194 = vld [vmem:[%s2 + $0x1a0] sm:$0xff]
  %v195 = vld [vmem:[%s2 + $0x1a8] sm:$0xff]
  %v196 = vld [vmem:[%s2 + $0x1b0] sm:$0xff]
  %v197 = vld [vmem:[%s2 + $0x1b8] sm:$0xff]
  %v198 = vld [vmem:[%s2 + $0x1c0] sm:$0xff]
  %v199 = vld [vmem:[%s2 + $0x1c8] sm:$0xff]
  %v200 = vld [vmem:[%s2 + $0x1d0] sm:$0xff]
  %v201 = vld [vmem:[%s2 + $0x1d8] sm:$0xff]
  %v202 = vld [vmem:[%s2 + $0x1e0] sm:$0xff]
  %v203 = vld [vmem:[%s2 + $0x1e8] sm:$0xff]
  %v204 = vld [vmem:[%s2 + $0x1f0] sm:$0xff]
  %v205 = vld [vmem:[%s2 + $0x1f8] sm:$0xff]
  %v206 = vld [vmem:[%s3] sm:$0xff]
  %v207 = vld [vmem:[%s3 + $0x8] sm:$0xff]
  %v208 = vld [vmem:[%s3 + $0x10] sm:$0xff]
  %v209 = vld [vmem:[%s3 + $0x18] sm:$0xff]
  %v210 = vld [vmem:[%s3 + $0x20] sm:$0xff]
  %v211 = vld [vmem:[%s3 + $0x28] sm:$0xff]
  %v212 = vld [vmem:[%s3 + $0x30] sm:$0xff]
  %v213 = vld [vmem:[%s3 + $0x38] sm:$0xff]
  %v214 = vld [vmem:[%s3 + $0x40] sm:$0xff]
  %v215 = vld [vmem:[%s3 + $0x48] sm:$0xff]
  %v216 = vld [vmem:[%s3 + $0x50] sm:$0xff]
  %v217 = vld [vmem:[%s3 + $0x58] sm:$0xff]
  %v218 = vld [vmem:[%s3 + $0x60] sm:$0xff]
  %v219 = vld [vmem:[%s3 + $0x68] sm:$0xff]
  %v220 = vld [vmem:[%s3 + $0x70] sm:$0xff]
  %v221 = vld [vmem:[%s3 + $0x78] sm:$0xff]
  %v222 = vld [vmem:[%s3 + $0x80] sm:$0xff]
  %v223 = vld [vmem:[%s3 + $0x88] sm:$0xff]
  %v224 = vld [vmem:[%s3 + $0x90] sm:$0xff]
  %v225 = vld [vmem:[%s3 + $0x98] sm:$0xff]
  %v226 = vld [vmem:[%s3 + $0xa0] sm:$0x3]
  %v227 = vld [vmem:[%s0] sm:$0xff]
  %v228 = vld [vmem:[%s0 + $0x8] sm:$0xff]
  %v229 = vld [vmem:[%s0 + $0x10] sm:$0xff]
  %v230 = vld [vmem:[%s0 + $0x18] sm:$0xff]
  %v231 = vld [vmem:[%s0 + $0x20] sm:$0xff]
  %v232 = vld [vmem:[%s0 + $0x28] sm:$0xff]
  %v233 = vld [vmem:[%s0 + $0x30] sm:$0xff]
  %v234 = vld [vmem:[%s0 + $0x38] sm:$0xff]
  %v235 = vld [vmem:[%s0 + $0x40] sm:$0xff]
  %v236 = vld [vmem:[%s0 + $0x48] sm:$0xff]
  %v237 = vld [vmem:[%s0 + $0x50] sm:$0xff]
  %v238 = vld [vmem:[%s0 + $0x58] sm:$0xff]
  %v239 = vld [vmem:[%s0 + $0x60] sm:$0xff]
  %v240 = vld [vmem:[%s0 + $0x68] sm:$0xff]
  %v241 = vld [vmem:[%s0 + $0x70] sm:$0xff]
  %v242 = vld [vmem:[%s0 + $0x78] sm:$0xff]
  %v243 = vld [vmem:[%s0 + $0x80] sm:$0xff]
  %v244 = vld [vmem:[%s0 + $0x88] sm:$0xff]
  %v245 = vld [vmem:[%s0 + $0x90] sm:$0xff]
  %v246 = vld [vmem:[%s0 + $0x98] sm:$0xff]
  %v247 = vld [vmem:[%s0 + $0xa0] sm:$0xff]
  %v248 = vld [vmem:[%s0 + $0xa8] sm:$0xff]
  %v249 = vld [vmem:[%s0 + $0xb0] sm:$0xff]
  %v250 = vld [vmem:[%s0 + $0xb8] sm:$0xff]
  %v251 = vld [vmem:[%s0 + $0xc0] sm:$0xff]
  %v252 = vld [vmem:[%s0 + $0xc8] sm:$0xff]
  %v253 = vld [vmem:[%s0 + $0xd0] sm:$0xff]
  %v254 = vld [vmem:[%s0 + $0xd8] sm:$0xff]
  %v255 = vld [vmem:[%s0 + $0xe0] sm:$0xff]
  %v256 = vld [vmem:[%s0 + $0xe8] sm:$0xff]
  %v257 = vld [vmem:[%s0 + $0xf0] sm:$0xff]
  %v258 = vld [vmem:[%s0 + $0xf8] sm:$0xff]
  %v259 = vld [vmem:[%s0 + $0x100] sm:$0xff]
  %v260 = vld [vmem:[%s0 + $0x108] sm:$0xff]
  %v261 = vld [vmem:[%s0 + $0x110] sm:$0xff]
  %v262 = vld [vmem:[%s0 + $0x118] sm:$0xff]
  %v263 = vld [vmem:[%s0 + $0x120] sm:$0xff]
  %v264 = vld [vmem:[%s0 + $0x128] sm:$0xff]
  %v265 = vld [vmem:[%s0 + $0x130] sm:$0xff]
  %v266 = vld [vmem:[%s0 + $0x138] sm:$0xff]
  %v267 = vld [vmem:[%s0 + $0x140] sm:$0xff]
  %v268 = vld [vmem:[%s0 + $0x148] sm:$0xff]
  %v269 = vld [vmem:[%s0 + $0x150] sm:$0xff]
  %v270 = vld [vmem:[%s0 + $0x158] sm:$0xff]
  %v271 = vld [vmem:[%s0 + $0x160] sm:$0xff]
  %v272 = vld [vmem:[%s0 + $0x168] sm:$0xff]
  %v273 = vld [vmem:[%s0 + $0x170] sm:$0xff]
  %v274 = vld [vmem:[%s0 + $0x178] sm:$0xff]
  %v275 = vld [vmem:[%s0 + $0x180] sm:$0xff]
  %v276 = vld [vmem:[%s0 + $0x188] sm:$0xff]
  %v277 = vld [vmem:[%s0 + $0x190] sm:$0xff]
  %v278 = vld [vmem:[%s0 + $0x198] sm:$0xff]
  %v279 = vld [vmem:[%s0 + $0x1a0] sm:$0xff]
  %v280 = vld [vmem:[%s0 + $0x1a8] sm:$0xff]
  %v281 = vld [vmem:[%s0 + $0x1b0] sm:$0xff]
  %v282 = vld [vmem:[%s0 + $0x1b8] sm:$0xff]
  %v283 = vld [vmem:[%s0 + $0x1c0] sm:$0xff]
  %v284 = vld [vmem:[%s0 + $0x1c8] sm:$0xff]
  %v285 = vld [vmem:[%s0 + $0x1d0] sm:$0xff]
  %v286 = vld [vmem:[%s0 + $0x1d8] sm:$0xff]
  %v287 = vld [vmem:[%s0 + $0x1e0] sm:$0xff]
  %v288 = vld [vmem:[%s0 + $0x1e8] sm:$0xff]
  %v289 = vld [vmem:[%s0 + $0x1f0] sm:$0xff]
  %v290 = vld [vmem:[%s0 + $0x1f8] sm:$0xff]
  %v291 = vld [vmem:[%s1] sm:$0xff]
  %v292 = vld [vmem:[%s1 + $0x8] sm:$0xff]
  %v293 = vld [vmem:[%s1 + $0x10] sm:$0xff]
  %v294 = vld [vmem:[%s1 + $0x18] sm:$0xff]
  %vm295 = vcmask 261120
  %v297 = vsel %vm295, %v227, 0
  %v300 = vsel %vm295, %v228, 0
  %v303 = vsel %vm295, %v229, 0
  %v306 = vsel %vm295, %v230, 0
  %v309 = vsel %vm295, %v231, 0
  %v312 = vsel %vm295, %v232, 0
  %v315 = vsel %vm295, %v233, 0
  %v318 = vsel %vm295, %v234, 0
  %v321 = vsel %vm295, %v235, 0
  %v324 = vsel %vm295, %v236, 0
  %v327 = vsel %vm295, %v237, 0
  %v330 = vsel %vm295, %v238, 0
  %v333 = vsel %vm295, %v239, 0
  %v336 = vsel %vm295, %v240, 0
  %v339 = vsel %vm295, %v241, 0
  %v342 = vsel %vm295, %v242, 0
  %v345 = vsel %vm295, %v243, 0
  %v348 = vsel %vm295, %v244, 0
  %v351 = vsel %vm295, %v245, 0
  %v354 = vsel %vm295, %v246, 0
  %v357 = vsel %vm295, %v247, 0
  %v360 = vsel %vm295, %v248, 0
  %v363 = vsel %vm295, %v249, 0
  %v366 = vsel %vm295, %v250, 0
  %v369 = vsel %vm295, %v251, 0
  %v372 = vsel %vm295, %v252, 0
  %v375 = vsel %vm295, %v253, 0
  %v378 = vsel %vm295, %v254, 0
  %v381 = vsel %vm295, %v255, 0
  %v384 = vsel %vm295, %v256, 0
  %v387 = vsel %vm295, %v257, 0
  %v390 = vsel %vm295, %v258, 0
  %v393 = vsel %vm295, %v259, 0
  %v396 = vsel %vm295, %v260, 0
  %v399 = vsel %vm295, %v261, 0
  %v402 = vsel %vm295, %v262, 0
  %v405 = vsel %vm295, %v263, 0
  %v408 = vsel %vm295, %v264, 0
  %v411 = vsel %vm295, %v265, 0
  %v414 = vsel %vm295, %v266, 0
  %v417 = vsel %vm295, %v267, 0
  %v420 = vsel %vm295, %v268, 0
  %v423 = vsel %vm295, %v269, 0
  %v426 = vsel %vm295, %v270, 0
  %v429 = vsel %vm295, %v271, 0
  %v432 = vsel %vm295, %v272, 0
  %v435 = vsel %vm295, %v273, 0
  %v438 = vsel %vm295, %v274, 0
  %v441 = vsel %vm295, %v275, 0
  %v444 = vsel %vm295, %v276, 0
  %v447 = vsel %vm295, %v277, 0
  %v450 = vsel %vm295, %v278, 0
  %v453 = vsel %vm295, %v279, 0
  %v456 = vsel %vm295, %v280, 0
  %v459 = vsel %vm295, %v281, 0
  %v462 = vsel %vm295, %v282, 0
  %v465 = vsel %vm295, %v283, 0
  %v468 = vsel %vm295, %v284, 0
  %v471 = vsel %vm295, %v285, 0
  %v474 = vsel %vm295, %v286, 0
  %v477 = vsel %vm295, %v287, 0
  %v480 = vsel %vm295, %v288, 0
  %v483 = vsel %vm295, %v289, 0
  %v486 = vsel %vm295, %v290, 0
  %488 = vmatprep.subr.mxu0 0.0
  %489 = vmatpush1.msra.mxu0 0.0
  %490 = vmatprep.subr.mxu0 0.0
  %491 = vmatpush1.msra.mxu0 0.0
  %492 = vmatprep.subr.mxu0 0.0
  %493 = vmatpush1.msra.mxu0 0.0
  %494 = vmatprep.subr.mxu0 0.0
  %495 = vmatpush1.msra.mxu0 0.0
  %496 = vmatprep.subr.mxu0 0.0
  %497 = vmatpush1.msra.mxu0 0.0
  %498 = vmatprep.subr.mxu0 0.0
  %499 = vmatpush1.msra.mxu0 0.0
  %500 = vmatprep.subr.mxu0 0.0
  %501 = vmatpush1.msra.mxu0 0.0
  %502 = vmatprep.subr.mxu0 0.0
  %503 = vmatpush1.msra.mxu0 0.0
  %504 = vmatprep.subr.mxu0 0.0
  %505 = vmatpush1.msra.mxu0 0.0
  %506 = vmatprep.subr.mxu0 0.0
  %507 = vmatpush1.msra.mxu0 0.0
  %508 = vmatprep.subr.mxu0 0.0
  %509 = vmatpush1.msra.mxu0 0.0
  %510 = vmatprep.subr.mxu0 0.0
  %511 = vmatpush1.msra.mxu0 0.0
  %512 = vmatprep.subr.mxu0 0.0
  %513 = vmatpush1.msra.mxu0 %v294
  %514 = vmatprep.subr.mxu0 0.0
  %515 = vmatpush1.msra.mxu0 %v293
  %516 = vmatprep.subr.mxu0 0.0
  %517 = vmatpush1.msra.mxu0 %v292
  %518 = vmatprep.subr.mxu0 0.0
  %519 = vmatpush1.msra.mxu0 %v291
  %520 = vmatprep.subr.mxu0 0.0
  %521 = vmatpush2.msra.mxu0 0.0
  %522 = vmatprep.subr.mxu0 0.0
  %523 = vmatpush2.msra.mxu0 0.0
  %524 = vmatprep.subr.mxu0 0.0
  %525 = vmatpush2.msra.mxu0 0.0
  %526 = vmatprep.subr.mxu0 0.0
  %527 = vmatpush2.msra.mxu0 0.0
  %528 = vmatprep.subr.mxu0 0.0
  %529 = vmatpush2.msra.mxu0 0.0
  %530 = vmatprep.subr.mxu0 0.0
  %531 = vmatpush2.msra.mxu0 0.0
  %532 = vmatprep.subr.mxu0 0.0
  %533 = vmatpush2.msra.mxu0 0.0
  %534 = vmatprep.subr.mxu0 0.0
  %535 = vmatpush2.msra.mxu0 0.0
  %536 = vmatprep.subr.mxu0 0.0
  %537 = vmatpush2.msra.mxu0 0.0
  %538 = vmatprep.subr.mxu0 0.0
  %539 = vmatpush2.msra.mxu0 0.0
  %540 = vmatprep.subr.mxu0 0.0
  %541 = vmatpush2.msra.mxu0 0.0
  %542 = vmatprep.subr.mxu0 0.0
  %543 = vmatpush2.msra.mxu0 0.0
  %544 = vmatprep.subr.mxu0 0.0
  %545 = vmatpush2.msra.mxu0 0.0
  %546 = vmatprep.subr.mxu0 0.0
  %547 = vmatpush2.msra.mxu0 0.0
  %548 = vmatprep.subr.mxu0 0.0
  %549 = vmatpush2.msra.mxu0 0.0
  %550 = vmatprep.subr.mxu0 0.0
  %551 = vmatpush2.msra.mxu0 0.0
  %552 = vmatprep.mubr.f32.mxu0 0.0
  %553 = vmatmul.mubr.f32.gmra.mxu0 %v297
  %v554 = vpop.f32.mrf.mxu0
  %v555 = vadd.f32 0.0, %v554
  %v556 = vpop.f32.mrf.mxu0
  %557 = vmatprep.mubr.f32.mxu0 0.0
  %558 = vmatmul.mubr.f32.gmra.mxu0 %v300
  %v559 = vpop.f32.mrf.mxu0
  %v560 = vadd.f32 0.0, %v559
  %v561 = vpop.f32.mrf.mxu0
  %562 = vmatprep.mubr.f32.mxu0 0.0
  %563 = vmatmul.mubr.f32.gmra.mxu0 %v303
  %v564 = vpop.f32.mrf.mxu0
  %v565 = vadd.f32 0.0, %v564
  %v566 = vpop.f32.mrf.mxu0
  %567 = vmatprep.mubr.f32.mxu0 0.0
  %568 = vmatmul.mubr.f32.gmra.mxu0 %v306
  %v569 = vpop.f32.mrf.mxu0
  %v570 = vadd.f32 0.0, %v569
  %v571 = vpop.f32.mrf.mxu0
  %572 = vmatprep.mubr.f32.mxu0 0.0
  %573 = vmatmul.mubr.f32.gmra.mxu0 %v309
  %v574 = vpop.f32.mrf.mxu0
  %v575 = vadd.f32 0.0, %v574
  %v576 = vpop.f32.mrf.mxu0
  %577 = vmatprep.mubr.f32.mxu0 0.0
  %578 = vmatmul.mubr.f32.gmra.mxu0 %v312
  %v579 = vpop.f32.mrf.mxu0
  %v580 = vadd.f32 0.0, %v579
  %v581 = vpop.f32.mrf.mxu0
  %582 = vmatprep.mubr.f32.mxu0 0.0
  %583 = vmatmul.mubr.f32.gmra.mxu0 %v315
  %v584 = vpop.f32.mrf.mxu0
  %v585 = vadd.f32 0.0, %v584
  %v586 = vpop.f32.mrf.mxu0
  %587 = vmatprep.mubr.f32.mxu0 0.0
  %588 = vmatmul.mubr.f32.gmra.mxu0 %v318
  %v589 = vpop.f32.mrf.mxu0
  %v590 = vadd.f32 0.0, %v589
  %v591 = vpop.f32.mrf.mxu0
  %592 = vmatprep.mubr.f32.mxu0 0.0
  %593 = vmatmul.mubr.f32.gmra.mxu0 %v321
  %v594 = vpop.f32.mrf.mxu0
  %v595 = vadd.f32 0.0, %v594
  %v596 = vpop.f32.mrf.mxu0
  %597 = vmatprep.mubr.f32.mxu0 0.0
  %598 = vmatmul.mubr.f32.gmra.mxu0 %v324
  %v599 = vpop.f32.mrf.mxu0
  %v600 = vadd.f32 0.0, %v599
  %v601 = vpop.f32.mrf.mxu0
  %602 = vmatprep.mubr.f32.mxu0 0.0
  %603 = vmatmul.mubr.f32.gmra.mxu0 %v327
  %v604 = vpop.f32.mrf.mxu0
  %v605 = vadd.f32 0.0, %v604
  %v606 = vpop.f32.mrf.mxu0
  %607 = vmatprep.mubr.f32.mxu0 0.0
  %608 = vmatmul.mubr.f32.gmra.mxu0 %v330
  %v609 = vpop.f32.mrf.mxu0
  %v610 = vadd.f32 0.0, %v609
  %v611 = vpop.f32.mrf.mxu0
  %612 = vmatprep.mubr.f32.mxu0 0.0
  %613 = vmatmul.mubr.f32.gmra.mxu0 %v333
  %v614 = vpop.f32.mrf.mxu0
  %v615 = vadd.f32 0.0, %v614
  %v616 = vpop.f32.mrf.mxu0
  %617 = vmatprep.mubr.f32.mxu0 0.0
  %618 = vmatmul.mubr.f32.gmra.mxu0 %v336
  %v619 = vpop.f32.mrf.mxu0
  %v620 = vadd.f32 0.0, %v619
  %v621 = vpop.f32.mrf.mxu0
  %622 = vmatprep.mubr.f32.mxu0 0.0
  %623 = vmatmul.mubr.f32.gmra.mxu0 %v339
  %v624 = vpop.f32.mrf.mxu0
  %v625 = vadd.f32 0.0, %v624
  %v626 = vpop.f32.mrf.mxu0
  %627 = vmatprep.mubr.f32.mxu0 0.0
  %628 = vmatmul.mubr.f32.gmra.mxu0 %v342
  %v629 = vpop.f32.mrf.mxu0
  %v630 = vadd.f32 0.0, %v629
  %v631 = vpop.f32.mrf.mxu0
  %632 = vmatprep.mubr.f32.mxu0 0.0
  %633 = vmatmul.mubr.f32.gmra.mxu0 %v345
  %v634 = vpop.f32.mrf.mxu0
  %v635 = vadd.f32 0.0, %v634
  %v636 = vpop.f32.mrf.mxu0
  %637 = vmatprep.mubr.f32.mxu0 0.0
  %638 = vmatmul.mubr.f32.gmra.mxu0 %v348
  %v639 = vpop.f32.mrf.mxu0
  %v640 = vadd.f32 0.0, %v639
  %v641 = vpop.f32.mrf.mxu0
  %642 = vmatprep.mubr.f32.mxu0 0.0
  %643 = vmatmul.mubr.f32.gmra.mxu0 %v351
  %v644 = vpop.f32.mrf.mxu0
  %v645 = vadd.f32 0.0, %v644
  %v646 = vpop.f32.mrf.mxu0
  %647 = vmatprep.mubr.f32.mxu0 0.0
  %648 = vmatmul.mubr.f32.gmra.mxu0 %v354
  %v649 = vpop.f32.mrf.mxu0
  %v650 = vadd.f32 0.0, %v649
  %v651 = vpop.f32.mrf.mxu0
  %652 = vmatprep.mubr.f32.mxu0 0.0
  %653 = vmatmul.mubr.f32.gmra.mxu0 %v357
  %v654 = vpop.f32.mrf.mxu0
  %v655 = vadd.f32 0.0, %v654
  %v656 = vpop.f32.mrf.mxu0
  %657 = vmatprep.mubr.f32.mxu0 0.0
  %658 = vmatmul.mubr.f32.gmra.mxu0 %v360
  %v659 = vpop.f32.mrf.mxu0
  %v660 = vadd.f32 0.0, %v659
  %v661 = vpop.f32.mrf.mxu0
  %662 = vmatprep.mubr.f32.mxu0 0.0
  %663 = vmatmul.mubr.f32.gmra.mxu0 %v363
  %v664 = vpop.f32.mrf.mxu0
  %v665 = vadd.f32 0.0, %v664
  %v666 = vpop.f32.mrf.mxu0
  %667 = vmatprep.mubr.f32.mxu0 0.0
  %668 = vmatmul.mubr.f32.gmra.mxu0 %v366
  %v669 = vpop.f32.mrf.mxu0
  %v670 = vadd.f32 0.0, %v669
  %v671 = vpop.f32.mrf.mxu0
  %672 = vmatprep.mubr.f32.mxu0 0.0
  %673 = vmatmul.mubr.f32.gmra.mxu0 %v369
  %v674 = vpop.f32.mrf.mxu0
  %v675 = vadd.f32 0.0, %v674
  %v676 = vpop.f32.mrf.mxu0
  %677 = vmatprep.mubr.f32.mxu0 0.0
  %678 = vmatmul.mubr.f32.gmra.mxu0 %v372
  %v679 = vpop.f32.mrf.mxu0
  %v680 = vadd.f32 0.0, %v679
  %v681 = vpop.f32.mrf.mxu0
  %682 = vmatprep.mubr.f32.mxu0 0.0
  %683 = vmatmul.mubr.f32.gmra.mxu0 %v375
  %v684 = vpop.f32.mrf.mxu0
  %v685 = vadd.f32 0.0, %v684
  %v686 = vpop.f32.mrf.mxu0
  %687 = vmatprep.mubr.f32.mxu0 0.0
  %688 = vmatmul.mubr.f32.gmra.mxu0 %v378
  %v689 = vpop.f32.mrf.mxu0
  %v690 = vadd.f32 0.0, %v689
  %v691 = vpop.f32.mrf.mxu0
  %692 = vmatprep.mubr.f32.mxu0 0.0
  %693 = vmatmul.mubr.f32.gmra.mxu0 %v381
  %v694 = vpop.f32.mrf.mxu0
  %v695 = vadd.f32 0.0, %v694
  %v696 = vpop.f32.mrf.mxu0
  %697 = vmatprep.mubr.f32.mxu0 0.0
  %698 = vmatmul.mubr.f32.gmra.mxu0 %v384
  %v699 = vpop.f32.mrf.mxu0
  %v700 = vadd.f32 0.0, %v699
  %v701 = vpop.f32.mrf.mxu0
  %702 = vmatprep.mubr.f32.mxu0 0.0
  %703 = vmatmul.mubr.f32.gmra.mxu0 %v387
  %v704 = vpop.f32.mrf.mxu0
  %v705 = vadd.f32 0.0, %v704
  %v706 = vpop.f32.mrf.mxu0
  %707 = vmatprep.mubr.f32.mxu0 0.0
  %708 = vmatmul.mubr.f32.gmra.mxu0 %v390
  %v709 = vpop.f32.mrf.mxu0
  %v710 = vadd.f32 0.0, %v709
  %v711 = vpop.f32.mrf.mxu0
  %712 = vmatprep.mubr.f32.mxu0 0.0
  %713 = vmatmul.mubr.f32.gmra.mxu0 %v393
  %v714 = vpop.f32.mrf.mxu0
  %v715 = vadd.f32 0.0, %v714
  %v716 = vpop.f32.mrf.mxu0
  %717 = vmatprep.mubr.f32.mxu0 0.0
  %718 = vmatmul.mubr.f32.gmra.mxu0 %v396
  %v719 = vpop.f32.mrf.mxu0
  %v720 = vadd.f32 0.0, %v719
  %v721 = vpop.f32.mrf.mxu0
  %722 = vmatprep.mubr.f32.mxu0 0.0
  %723 = vmatmul.mubr.f32.gmra.mxu0 %v399
  %v724 = vpop.f32.mrf.mxu0
  %v725 = vadd.f32 0.0, %v724
  %v726 = vpop.f32.mrf.mxu0
  %727 = vmatprep.mubr.f32.mxu0 0.0
  %728 = vmatmul.mubr.f32.gmra.mxu0 %v402
  %v729 = vpop.f32.mrf.mxu0
  %v730 = vadd.f32 0.0, %v729
  %v731 = vpop.f32.mrf.mxu0
  %732 = vmatprep.mubr.f32.mxu0 0.0
  %733 = vmatmul.mubr.f32.gmra.mxu0 %v405
  %v734 = vpop.f32.mrf.mxu0
  %v735 = vadd.f32 0.0, %v734
  %v736 = vpop.f32.mrf.mxu0
  %737 = vmatprep.mubr.f32.mxu0 0.0
  %738 = vmatmul.mubr.f32.gmra.mxu0 %v408
  %v739 = vpop.f32.mrf.mxu0
  %v740 = vadd.f32 0.0, %v739
  %v741 = vpop.f32.mrf.mxu0
  %742 = vmatprep.mubr.f32.mxu0 0.0
  %743 = vmatmul.mubr.f32.gmra.mxu0 %v411
  %v744 = vpop.f32.mrf.mxu0
  %v745 = vadd.f32 0.0, %v744
  %v746 = vpop.f32.mrf.mxu0
  %747 = vmatprep.mubr.f32.mxu0 0.0
  %748 = vmatmul.mubr.f32.gmra.mxu0 %v414
  %v749 = vpop.f32.mrf.mxu0
  %v750 = vadd.f32 0.0, %v749
  %v751 = vpop.f32.mrf.mxu0
  %752 = vmatprep.mubr.f32.mxu0 0.0
  %753 = vmatmul.mubr.f32.gmra.mxu0 %v417
  %v754 = vpop.f32.mrf.mxu0
  %v755 = vadd.f32 0.0, %v754
  %v756 = vpop.f32.mrf.mxu0
  %757 = vmatprep.mubr.f32.mxu0 0.0
  %758 = vmatmul.mubr.f32.gmra.mxu0 %v420
  %v759 = vpop.f32.mrf.mxu0
  %v760 = vadd.f32 0.0, %v759
  %v761 = vpop.f32.mrf.mxu0
  %762 = vmatprep.mubr.f32.mxu0 0.0
  %763 = vmatmul.mubr.f32.gmra.mxu0 %v423
  %v764 = vpop.f32.mrf.mxu0
  %v765 = vadd.f32 0.0, %v764
  %v766 = vpop.f32.mrf.mxu0
  %767 = vmatprep.mubr.f32.mxu0 0.0
  %768 = vmatmul.mubr.f32.gmra.mxu0 %v426
  %v769 = vpop.f32.mrf.mxu0
  %v770 = vadd.f32 0.0, %v769
  %v771 = vpop.f32.mrf.mxu0
  %772 = vmatprep.mubr.f32.mxu0 0.0
  %773 = vmatmul.mubr.f32.gmra.mxu0 %v429
  %v774 = vpop.f32.mrf.mxu0
  %v775 = vadd.f32 0.0, %v774
  %v776 = vpop.f32.mrf.mxu0
  %777 = vmatprep.mubr.f32.mxu0 0.0
  %778 = vmatmul.mubr.f32.gmra.mxu0 %v432
  %v779 = vpop.f32.mrf.mxu0
  %v780 = vadd.f32 0.0, %v779
  %v781 = vpop.f32.mrf.mxu0
  %782 = vmatprep.mubr.f32.mxu0 0.0
  %783 = vmatmul.mubr.f32.gmra.mxu0 %v435
  %v784 = vpop.f32.mrf.mxu0
  %v785 = vadd.f32 0.0, %v784
  %v786 = vpop.f32.mrf.mxu0
  %787 = vmatprep.mubr.f32.mxu0 0.0
  %788 = vmatmul.mubr.f32.gmra.mxu0 %v438
  %v789 = vpop.f32.mrf.mxu0
  %v790 = vadd.f32 0.0, %v789
  %v791 = vpop.f32.mrf.mxu0
  %792 = vmatprep.mubr.f32.mxu0 0.0
  %793 = vmatmul.mubr.f32.gmra.mxu0 %v441
  %v794 = vpop.f32.mrf.mxu0
  %v795 = vadd.f32 0.0, %v794
  %v796 = vpop.f32.mrf.mxu0
  %797 = vmatprep.mubr.f32.mxu0 0.0
  %798 = vmatmul.mubr.f32.gmra.mxu0 %v444
  %v799 = vpop.f32.mrf.mxu0
  %v800 = vadd.f32 0.0, %v799
  %v801 = vpop.f32.mrf.mxu0
  %802 = vmatprep.mubr.f32.mxu0 0.0
  %803 = vmatmul.mubr.f32.gmra.mxu0 %v447
  %v804 = vpop.f32.mrf.mxu0
  %v805 = vadd.f32 0.0, %v804
  %v806 = vpop.f32.mrf.mxu0
  %807 = vmatprep.mubr.f32.mxu0 0.0
  %808 = vmatmul.mubr.f32.gmra.mxu0 %v450
  %v809 = vpop.f32.mrf.mxu0
  %v810 = vadd.f32 0.0, %v809
  %v811 = vpop.f32.mrf.mxu0
  %812 = vmatprep.mubr.f32.mxu0 0.0
  %813 = vmatmul.mubr.f32.gmra.mxu0 %v453
  %v814 = vpop.f32.mrf.mxu0
  %v815 = vadd.f32 0.0, %v814
  %v816 = vpop.f32.mrf.mxu0
  %817 = vmatprep.mubr.f32.mxu0 0.0
  %818 = vmatmul.mubr.f32.gmra.mxu0 %v456
  %v819 = vpop.f32.mrf.mxu0
  %v820 = vadd.f32 0.0, %v819
  %v821 = vpop.f32.mrf.mxu0
  %822 = vmatprep.mubr.f32.mxu0 0.0
  %823 = vmatmul.mubr.f32.gmra.mxu0 %v459
  %v824 = vpop.f32.mrf.mxu0
  %v825 = vadd.f32 0.0, %v824
  %v826 = vpop.f32.mrf.mxu0
  %827 = vmatprep.mubr.f32.mxu0 0.0
  %828 = vmatmul.mubr.f32.gmra.mxu0 %v462
  %v829 = vpop.f32.mrf.mxu0
  %v830 = vadd.f32 0.0, %v829
  %v831 = vpop.f32.mrf.mxu0
  %832 = vmatprep.mubr.f32.mxu0 0.0
  %833 = vmatmul.mubr.f32.gmra.mxu0 %v465
  %v834 = vpop.f32.mrf.mxu0
  %v835 = vadd.f32 0.0, %v834
  %v836 = vpop.f32.mrf.mxu0
  %837 = vmatprep.mubr.f32.mxu0 0.0
  %838 = vmatmul.mubr.f32.gmra.mxu0 %v468
  %v839 = vpop.f32.mrf.mxu0
  %v840 = vadd.f32 0.0, %v839
  %v841 = vpop.f32.mrf.mxu0
  %842 = vmatprep.mubr.f32.mxu0 0.0
  %843 = vmatmul.mubr.f32.gmra.mxu0 %v471
  %v844 = vpop.f32.mrf.mxu0
  %v845 = vadd.f32 0.0, %v844
  %v846 = vpop.f32.mrf.mxu0
  %847 = vmatprep.mubr.f32.mxu0 0.0
  %848 = vmatmul.mubr.f32.gmra.mxu0 %v474
  %v849 = vpop.f32.mrf.mxu0
  %v850 = vadd.f32 0.0, %v849
  %v851 = vpop.f32.mrf.mxu0
  %852 = vmatprep.mubr.f32.mxu0 0.0
  %853 = vmatmul.mubr.f32.gmra.mxu0 %v477
  %v854 = vpop.f32.mrf.mxu0
  %v855 = vadd.f32 0.0, %v854
  %v856 = vpop.f32.mrf.mxu0
  %857 = vmatprep.mubr.f32.mxu0 0.0
  %858 = vmatmul.mubr.f32.gmra.mxu0 %v480
  %v859 = vpop.f32.mrf.mxu0
  %v860 = vadd.f32 0.0, %v859
  %v861 = vpop.f32.mrf.mxu0
  %862 = vmatprep.mubr.f32.mxu0 0.0
  %863 = vmatmul.mubr.f32.gmra.mxu0 %v483
  %v864 = vpop.f32.mrf.mxu0
  %v865 = vadd.f32 0.0, %v864
  %v866 = vpop.f32.mrf.mxu0
  %867 = vmatprep.mubr.f32.mxu0 0.0
  %868 = vmatmul.mubr.f32.gmra.mxu0 %v486
  %v869 = vpop.f32.mrf.mxu0
  %v870 = vadd.f32 0.0, %v869
  %v871 = vpop.f32.mrf.mxu0
  %872 = vdwg.mxu0
  %874 = vset.pattern.permute.xlu0 0
  %875 = vperm.xlu0 %874, %v142
  %v876 = vpop.permute.xlu0 %875
  %879 = vset.pattern.permute.xlu0 0
  %880 = vperm.xlu0 %879, %v143
  %v881 = vpop.permute.xlu0 %880
  %884 = vset.pattern.permute.xlu0 0
  %885 = vperm.xlu0 %884, %v144
  %v886 = vpop.permute.xlu0 %885
  %889 = vset.pattern.permute.xlu0 0
  %890 = vperm.xlu0 %889, %v145
  %v891 = vpop.permute.xlu0 %890
  %894 = vset.pattern.permute.xlu0 0
  %895 = vperm.xlu0 %894, %v146
  %v896 = vpop.permute.xlu0 %895
  %899 = vset.pattern.permute.xlu0 0
  %900 = vperm.xlu0 %899, %v147
  %v901 = vpop.permute.xlu0 %900
  %904 = vset.pattern.permute.xlu0 0
  %905 = vperm.xlu0 %904, %v148
  %v906 = vpop.permute.xlu0 %905
  %909 = vset.pattern.permute.xlu0 0
  %910 = vperm.xlu0 %909, %v149
  %v911 = vpop.permute.xlu0 %910
  %914 = vset.pattern.permute.xlu0 0
  %915 = vperm.xlu0 %914, %v150
  %v916 = vpop.permute.xlu0 %915
  %919 = vset.pattern.permute.xlu0 0
  %920 = vperm.xlu0 %919, %v151
  %v921 = vpop.permute.xlu0 %920
  %924 = vset.pattern.permute.xlu0 0
  %925 = vperm.xlu0 %924, %v152
  %v926 = vpop.permute.xlu0 %925
  %929 = vset.pattern.permute.xlu0 0
  %930 = vperm.xlu0 %929, %v153
  %v931 = vpop.permute.xlu0 %930
  %934 = vset.pattern.permute.xlu0 0
  %935 = vperm.xlu0 %934, %v154
  %v936 = vpop.permute.xlu0 %935
  %939 = vset.pattern.permute.xlu0 0
  %940 = vperm.xlu0 %939, %v155
  %v941 = vpop.permute.xlu0 %940
  %944 = vset.pattern.permute.xlu0 0
  %945 = vperm.xlu0 %944, %v156
  %v946 = vpop.permute.xlu0 %945
  %949 = vset.pattern.permute.xlu0 0
  %950 = vperm.xlu0 %949, %v157
  %v951 = vpop.permute.xlu0 %950
  %954 = vset.pattern.permute.xlu0 0
  %955 = vperm.xlu0 %954, %v158
  %v956 = vpop.permute.xlu0 %955
  %959 = vset.pattern.permute.xlu0 0
  %960 = vperm.xlu0 %959, %v159
  %v961 = vpop.permute.xlu0 %960
  %964 = vset.pattern.permute.xlu0 0
  %965 = vperm.xlu0 %964, %v160
  %v966 = vpop.permute.xlu0 %965
  %969 = vset.pattern.permute.xlu0 0
  %970 = vperm.xlu0 %969, %v161
  %v971 = vpop.permute.xlu0 %970
  %974 = vset.pattern.permute.xlu0 0
  %975 = vperm.xlu0 %974, %v162
  %v976 = vpop.permute.xlu0 %975
  %979 = vset.pattern.permute.xlu0 0
  %980 = vperm.xlu0 %979, %v163
  %v981 = vpop.permute.xlu0 %980
  %984 = vset.pattern.permute.xlu0 0
  %985 = vperm.xlu0 %984, %v164
  %v986 = vpop.permute.xlu0 %985
  %989 = vset.pattern.permute.xlu0 0
  %990 = vperm.xlu0 %989, %v165
  %v991 = vpop.permute.xlu0 %990
  %994 = vset.pattern.permute.xlu0 0
  %995 = vperm.xlu0 %994, %v166
  %v996 = vpop.permute.xlu0 %995
  %999 = vset.pattern.permute.xlu0 0
  %1000 = vperm.xlu0 %999, %v167
  %v1001 = vpop.permute.xlu0 %1000
  %1004 = vset.pattern.permute.xlu0 0
  %1005 = vperm.xlu0 %1004, %v168
  %v1006 = vpop.permute.xlu0 %1005
  %1009 = vset.pattern.permute.xlu0 0
  %1010 = vperm.xlu0 %1009, %v169
  %v1011 = vpop.permute.xlu0 %1010
  %1014 = vset.pattern.permute.xlu0 0
  %1015 = vperm.xlu0 %1014, %v170
  %v1016 = vpop.permute.xlu0 %1015
  %1019 = vset.pattern.permute.xlu0 0
  %1020 = vperm.xlu0 %1019, %v171
  %v1021 = vpop.permute.xlu0 %1020
  %1024 = vset.pattern.permute.xlu0 0
  %1025 = vperm.xlu0 %1024, %v172
  %v1026 = vpop.permute.xlu0 %1025
  %1029 = vset.pattern.permute.xlu0 0
  %1030 = vperm.xlu0 %1029, %v173
  %v1031 = vpop.permute.xlu0 %1030
  %1034 = vset.pattern.permute.xlu0 0
  %1035 = vperm.xlu0 %1034, %v174
  %v1036 = vpop.permute.xlu0 %1035
  %1039 = vset.pattern.permute.xlu0 0
  %1040 = vperm.xlu0 %1039, %v175
  %v1041 = vpop.permute.xlu0 %1040
  %1044 = vset.pattern.permute.xlu0 0
  %1045 = vperm.xlu0 %1044, %v176
  %v1046 = vpop.permute.xlu0 %1045
  %1049 = vset.pattern.permute.xlu0 0
  %1050 = vperm.xlu0 %1049, %v177
  %v1051 = vpop.permute.xlu0 %1050
  %1054 = vset.pattern.permute.xlu0 0
  %1055 = vperm.xlu0 %1054, %v178
  %v1056 = vpop.permute.xlu0 %1055
  %1059 = vset.pattern.permute.xlu0 0
  %1060 = vperm.xlu0 %1059, %v179
  %v1061 = vpop.permute.xlu0 %1060
  %1064 = vset.pattern.permute.xlu0 0
  %1065 = vperm.xlu0 %1064, %v180
  %v1066 = vpop.permute.xlu0 %1065
  %1069 = vset.pattern.permute.xlu0 0
  %1070 = vperm.xlu0 %1069, %v181
  %v1071 = vpop.permute.xlu0 %1070
  %1074 = vset.pattern.permute.xlu0 0
  %1075 = vperm.xlu0 %1074, %v182
  %v1076 = vpop.permute.xlu0 %1075
  %1079 = vset.pattern.permute.xlu0 0
  %1080 = vperm.xlu0 %1079, %v183
  %v1081 = vpop.permute.xlu0 %1080
  %1084 = vset.pattern.permute.xlu0 0
  %1085 = vperm.xlu0 %1084, %v184
  %v1086 = vpop.permute.xlu0 %1085
  %1089 = vset.pattern.permute.xlu0 0
  %1090 = vperm.xlu0 %1089, %v185
  %v1091 = vpop.permute.xlu0 %1090
  %1094 = vset.pattern.permute.xlu0 0
  %1095 = vperm.xlu0 %1094, %v186
  %v1096 = vpop.permute.xlu0 %1095
  %1099 = vset.pattern.permute.xlu0 0
  %1100 = vperm.xlu0 %1099, %v187
  %v1101 = vpop.permute.xlu0 %1100
  %1104 = vset.pattern.permute.xlu0 0
  %1105 = vperm.xlu0 %1104, %v188
  %v1106 = vpop.permute.xlu0 %1105
  %1109 = vset.pattern.permute.xlu0 0
  %1110 = vperm.xlu0 %1109, %v189
  %v1111 = vpop.permute.xlu0 %1110
  %1114 = vset.pattern.permute.xlu0 0
  %1115 = vperm.xlu0 %1114, %v190
  %v1116 = vpop.permute.xlu0 %1115
  %1119 = vset.pattern.permute.xlu0 0
  %1120 = vperm.xlu0 %1119, %v191
  %v1121 = vpop.permute.xlu0 %1120
  %1124 = vset.pattern.permute.xlu0 0
  %1125 = vperm.xlu0 %1124, %v192
  %v1126 = vpop.permute.xlu0 %1125
  %1129 = vset.pattern.permute.xlu0 0
  %1130 = vperm.xlu0 %1129, %v193
  %v1131 = vpop.permute.xlu0 %1130
  %1134 = vset.pattern.permute.xlu0 0
  %1135 = vperm.xlu0 %1134, %v194
  %v1136 = vpop.permute.xlu0 %1135
  %1139 = vset.pattern.permute.xlu0 0
  %1140 = vperm.xlu0 %1139, %v195
  %v1141 = vpop.permute.xlu0 %1140
  %1144 = vset.pattern.permute.xlu0 0
  %1145 = vperm.xlu0 %1144, %v196
  %v1146 = vpop.permute.xlu0 %1145
  %1149 = vset.pattern.permute.xlu0 0
  %1150 = vperm.xlu0 %1149, %v197
  %v1151 = vpop.permute.xlu0 %1150
  %1154 = vset.pattern.permute.xlu0 0
  %1155 = vperm.xlu0 %1154, %v198
  %v1156 = vpop.permute.xlu0 %1155
  %1159 = vset.pattern.permute.xlu0 0
  %1160 = vperm.xlu0 %1159, %v199
  %v1161 = vpop.permute.xlu0 %1160
  %1164 = vset.pattern.permute.xlu0 0
  %1165 = vperm.xlu0 %1164, %v200
  %v1166 = vpop.permute.xlu0 %1165
  %1169 = vset.pattern.permute.xlu0 0
  %1170 = vperm.xlu0 %1169, %v201
  %v1171 = vpop.permute.xlu0 %1170
  %1174 = vset.pattern.permute.xlu0 0
  %1175 = vperm.xlu0 %1174, %v202
  %v1176 = vpop.permute.xlu0 %1175
  %1179 = vset.pattern.permute.xlu0 0
  %1180 = vperm.xlu0 %1179, %v203
  %v1181 = vpop.permute.xlu0 %1180
  %1184 = vset.pattern.permute.xlu0 0
  %1185 = vperm.xlu0 %1184, %v204
  %v1186 = vpop.permute.xlu0 %1185
  %1189 = vset.pattern.permute.xlu0 0
  %1190 = vperm.xlu0 %1189, %v205
  %v1191 = vpop.permute.xlu0 %1190
  %v1193 = vmul.f32 %v555, %v876
  %v1194 = vmul.f32 %v560, %v881
  %v1195 = vmul.f32 %v565, %v886
  %v1196 = vmul.f32 %v570, %v891
  %v1197 = vmul.f32 %v575, %v896
  %v1198 = vmul.f32 %v580, %v901
  %v1199 = vmul.f32 %v585, %v906
  %v1200 = vmul.f32 %v590, %v911
  %v1201 = vmul.f32 %v595, %v916
  %v1202 = vmul.f32 %v600, %v921
  %v1203 = vmul.f32 %v605, %v926
  %v1204 = vmul.f32 %v610, %v931
  %v1205 = vmul.f32 %v615, %v936
  %v1206 = vmul.f32 %v620, %v941
  %v1207 = vmul.f32 %v625, %v946
  %v1208 = vmul.f32 %v630, %v951
  %v1209 = vmul.f32 %v635, %v956
  %v1210 = vmul.f32 %v640, %v961
  %v1211 = vmul.f32 %v645, %v966
  %v1212 = vmul.f32 %v650, %v971
  %v1213 = vmul.f32 %v655, %v976
  %v1214 = vmul.f32 %v660, %v981
  %v1215 = vmul.f32 %v665, %v986
  %v1216 = vmul.f32 %v670, %v991
  %v1217 = vmul.f32 %v675, %v996
  %v1218 = vmul.f32 %v680, %v1001
  %v1219 = vmul.f32 %v685, %v1006
  %v1220 = vmul.f32 %v690, %v1011
  %v1221 = vmul.f32 %v695, %v1016
  %v1222 = vmul.f32 %v700, %v1021
  %v1223 = vmul.f32 %v705, %v1026
  %v1224 = vmul.f32 %v710, %v1031
  %v1225 = vmul.f32 %v715, %v1036
  %v1226 = vmul.f32 %v720, %v1041
  %v1227 = vmul.f32 %v725, %v1046
  %v1228 = vmul.f32 %v730, %v1051
  %v1229 = vmul.f32 %v735, %v1056
  %v1230 = vmul.f32 %v740, %v1061
  %v1231 = vmul.f32 %v745, %v1066
  %v1232 = vmul.f32 %v750, %v1071
  %v1233 = vmul.f32 %v755, %v1076
  %v1234 = vmul.f32 %v760, %v1081
  %v1235 = vmul.f32 %v765, %v1086
  %v1236 = vmul.f32 %v770, %v1091
  %v1237 = vmul.f32 %v775, %v1096
  %v1238 = vmul.f32 %v780, %v1101
  %v1239 = vmul.f32 %v785, %v1106
  %v1240 = vmul.f32 %v790, %v1111
  %v1241 = vmul.f32 %v795, %v1116
  %v1242 = vmul.f32 %v800, %v1121
  %v1243 = vmul.f32 %v805, %v1126
  %v1244 = vmul.f32 %v810, %v1131
  %v1245 = vmul.f32 %v815, %v1136
  %v1246 = vmul.f32 %v820, %v1141
  %v1247 = vmul.f32 %v825, %v1146
  %v1248 = vmul.f32 %v830, %v1151
  %v1249 = vmul.f32 %v835, %v1156
  %v1250 = vmul.f32 %v840, %v1161
  %v1251 = vmul.f32 %v845, %v1166
  %v1252 = vmul.f32 %v850, %v1171
  %v1253 = vmul.f32 %v855, %v1176
  %v1254 = vmul.f32 %v860, %v1181
  %v1255 = vmul.f32 %v865, %v1186
  %v1256 = vmul.f32 %v870, %v1191
  %v1257 = vadd.f32 %v1193, %v1194
  %v1258 = vadd.f32 %v1257, %v1195
  %v1259 = vadd.f32 %v1258, %v1196
  %v1260 = vadd.f32 %v1259, %v1197
  %v1261 = vadd.f32 %v1260, %v1198
  %v1262 = vadd.f32 %v1261, %v1199
  %v1263 = vadd.f32 %v1262, %v1200
  %v1264 = vadd.f32 %v1263, %v1201
  %v1265 = vadd.f32 %v1264, %v1202
  %v1266 = vadd.f32 %v1265, %v1203
  %v1267 = vadd.f32 %v1266, %v1204
  %v1268 = vadd.f32 %v1267, %v1205
  %v1269 = vadd.f32 %v1268, %v1206
  %v1270 = vadd.f32 %v1269, %v1207
  %v1271 = vadd.f32 %v1270, %v1208
  %v1272 = vadd.f32 %v1271, %v1209
  %v1273 = vadd.f32 %v1272, %v1210
  %v1274 = vadd.f32 %v1273, %v1211
  %v1275 = vadd.f32 %v1274, %v1212
  %v1276 = vadd.f32 %v1275, %v1213
  %v1277 = vadd.f32 %v1276, %v1214
  %v1278 = vadd.f32 %v1277, %v1215
  %v1279 = vadd.f32 %v1278, %v1216
  %v1280 = vadd.f32 %v1279, %v1217
  %v1281 = vadd.f32 %v1280, %v1218
  %v1282 = vadd.f32 %v1281, %v1219
  %v1283 = vadd.f32 %v1282, %v1220
  %v1284 = vadd.f32 %v1283, %v1221
  %v1285 = vadd.f32 %v1284, %v1222
  %v1286 = vadd.f32 %v1285, %v1223
  %v1287 = vadd.f32 %v1286, %v1224
  %v1288 = vadd.f32 %v1287, %v1225
  %v1289 = vadd.f32 %v1288, %v1226
  %v1290 = vadd.f32 %v1289, %v1227
  %v1291 = vadd.f32 %v1290, %v1228
  %v1292 = vadd.f32 %v1291, %v1229
  %v1293 = vadd.f32 %v1292, %v1230
  %v1294 = vadd.f32 %v1293, %v1231
  %v1295 = vadd.f32 %v1294, %v1232
  %v1296 = vadd.f32 %v1295, %v1233
  %v1297 = vadd.f32 %v1296, %v1234
  %v1298 = vadd.f32 %v1297, %v1235
  %v1299 = vadd.f32 %v1298, %v1236
  %v1300 = vadd.f32 %v1299, %v1237
  %v1301 = vadd.f32 %v1300, %v1238
  %v1302 = vadd.f32 %v1301, %v1239
  %v1303 = vadd.f32 %v1302, %v1240
  %v1304 = vadd.f32 %v1303, %v1241
  %v1305 = vadd.f32 %v1304, %v1242
  %v1306 = vadd.f32 %v1305, %v1243
  %v1307 = vadd.f32 %v1306, %v1244
  %v1308 = vadd.f32 %v1307, %v1245
  %v1309 = vadd.f32 %v1308, %v1246
  %v1310 = vadd.f32 %v1309, %v1247
  %v1311 = vadd.f32 %v1310, %v1248
  %v1312 = vadd.f32 %v1311, %v1249
  %v1313 = vadd.f32 %v1312, %v1250
  %v1314 = vadd.f32 %v1313, %v1251
  %v1315 = vadd.f32 %v1314, %v1252
  %v1316 = vadd.f32 %v1315, %v1253
  %v1317 = vadd.f32 %v1316, %v1254
  %v1318 = vadd.f32 %v1317, %v1255
  %v1319 = vadd.f32 %v1318, %v1256
  %v1320 = vrot.slane %v1319, 4
  %v1321 = vadd.f32 %v1319, %v1320
  %v1322 = vrot.slane %v1321, 2
  %v1323 = vadd.f32 %v1321, %v1322
  %v1324 = vrot.slane %v1323, 1
  %v1325 = vadd.f32 %v1323, %v1324
  %v1326 = vmul.f32 %v1325, 0.0025510204
  %v1327 = vsub.f32 %v555, %v1326
  %v1328 = vsub.f32 %v560, %v1326
  %v1329 = vsub.f32 %v565, %v1326
  %v1330 = vsub.f32 %v570, %v1326
  %v1331 = vsub.f32 %v575, %v1326
  %v1332 = vsub.f32 %v580, %v1326
  %v1333 = vsub.f32 %v585, %v1326
  %v1334 = vsub.f32 %v590, %v1326
  %v1335 = vsub.f32 %v595, %v1326
  %v1336 = vsub.f32 %v600, %v1326
  %v1337 = vsub.f32 %v605, %v1326
  %v1338 = vsub.f32 %v610, %v1326
  %v1339 = vsub.f32 %v615, %v1326
  %v1340 = vsub.f32 %v620, %v1326
  %v1341 = vsub.f32 %v625, %v1326
  %v1342 = vsub.f32 %v630, %v1326
  %v1343 = vsub.f32 %v635, %v1326
  %v1344 = vsub.f32 %v640, %v1326
  %v1345 = vsub.f32 %v645, %v1326
  %v1346 = vsub.f32 %v650, %v1326
  %v1347 = vsub.f32 %v655, %v1326
  %v1348 = vsub.f32 %v660, %v1326
  %v1349 = vsub.f32 %v665, %v1326
  %v1350 = vsub.f32 %v670, %v1326
  %v1351 = vsub.f32 %v675, %v1326
  %v1352 = vsub.f32 %v680, %v1326
  %v1353 = vsub.f32 %v685, %v1326
  %v1354 = vsub.f32 %v690, %v1326
  %v1355 = vsub.f32 %v695, %v1326
  %v1356 = vsub.f32 %v700, %v1326
  %v1357 = vsub.f32 %v705, %v1326
  %v1358 = vsub.f32 %v710, %v1326
  %v1359 = vsub.f32 %v715, %v1326
  %v1360 = vsub.f32 %v720, %v1326
  %v1361 = vsub.f32 %v725, %v1326
  %v1362 = vsub.f32 %v730, %v1326
  %v1363 = vsub.f32 %v735, %v1326
  %v1364 = vsub.f32 %v740, %v1326
  %v1365 = vsub.f32 %v745, %v1326
  %v1366 = vsub.f32 %v750, %v1326
  %v1367 = vsub.f32 %v755, %v1326
  %v1368 = vsub.f32 %v760, %v1326
  %v1369 = vsub.f32 %v765, %v1326
  %v1370 = vsub.f32 %v770, %v1326
  %v1371 = vsub.f32 %v775, %v1326
  %v1372 = vsub.f32 %v780, %v1326
  %v1373 = vsub.f32 %v785, %v1326
  %v1374 = vsub.f32 %v790, %v1326
  %v1375 = vsub.f32 %v795, %v1326
  %v1376 = vsub.f32 %v800, %v1326
  %v1377 = vsub.f32 %v805, %v1326
  %v1378 = vsub.f32 %v810, %v1326
  %v1379 = vsub.f32 %v815, %v1326
  %v1380 = vsub.f32 %v820, %v1326
  %v1381 = vsub.f32 %v825, %v1326
  %v1382 = vsub.f32 %v830, %v1326
  %v1383 = vsub.f32 %v835, %v1326
  %v1384 = vsub.f32 %v840, %v1326
  %v1385 = vsub.f32 %v845, %v1326
  %v1386 = vsub.f32 %v850, %v1326
  %v1387 = vsub.f32 %v855, %v1326
  %v1388 = vsub.f32 %v860, %v1326
  %v1389 = vsub.f32 %v865, %v1326
  %v1390 = vsub.f32 %v870, %v1326
  %v1391 = vmul.f32 %v1327, %v876
  %v1392 = vmul.f32 %v1328, %v881
  %v1393 = vmul.f32 %v1329, %v886
  %v1394 = vmul.f32 %v1330, %v891
  %v1395 = vmul.f32 %v1331, %v896
  %v1396 = vmul.f32 %v1332, %v901
  %v1397 = vmul.f32 %v1333, %v906
  %v1398 = vmul.f32 %v1334, %v911
  %v1399 = vmul.f32 %v1335, %v916
  %v1400 = vmul.f32 %v1336, %v921
  %v1401 = vmul.f32 %v1337, %v926
  %v1402 = vmul.f32 %v1338, %v931
  %v1403 = vmul.f32 %v1339, %v936
  %v1404 = vmul.f32 %v1340, %v941
  %v1405 = vmul.f32 %v1341, %v946
  %v1406 = vmul.f32 %v1342, %v951
  %v1407 = vmul.f32 %v1343, %v956
  %v1408 = vmul.f32 %v1344, %v961
  %v1409 = vmul.f32 %v1345, %v966
  %v1410 = vmul.f32 %v1346, %v971
  %v1411 = vmul.f32 %v1347, %v976
  %v1412 = vmul.f32 %v1348, %v981
  %v1413 = vmul.f32 %v1349, %v986
  %v1414 = vmul.f32 %v1350, %v991
  %v1415 = vmul.f32 %v1351, %v996
  %v1416 = vmul.f32 %v1352, %v1001
  %v1417 = vmul.f32 %v1353, %v1006
  %v1418 = vmul.f32 %v1354, %v1011
  %v1419 = vmul.f32 %v1355, %v1016
  %v1420 = vmul.f32 %v1356, %v1021
  %v1421 = vmul.f32 %v1357, %v1026
  %v1422 = vmul.f32 %v1358, %v1031
  %v1423 = vmul.f32 %v1359, %v1036
  %v1424 = vmul.f32 %v1360, %v1041
  %v1425 = vmul.f32 %v1361, %v1046
  %v1426 = vmul.f32 %v1362, %v1051
  %v1427 = vmul.f32 %v1363, %v1056
  %v1428 = vmul.f32 %v1364, %v1061
  %v1429 = vmul.f32 %v1365, %v1066
  %v1430 = vmul.f32 %v1366, %v1071
  %v1431 = vmul.f32 %v1367, %v1076
  %v1432 = vmul.f32 %v1368, %v1081
  %v1433 = vmul.f32 %v1369, %v1086
  %v1434 = vmul.f32 %v1370, %v1091
  %v1435 = vmul.f32 %v1371, %v1096
  %v1436 = vmul.f32 %v1372, %v1101
  %v1437 = vmul.f32 %v1373, %v1106
  %v1438 = vmul.f32 %v1374, %v1111
  %v1439 = vmul.f32 %v1375, %v1116
  %v1440 = vmul.f32 %v1376, %v1121
  %v1441 = vmul.f32 %v1377, %v1126
  %v1442 = vmul.f32 %v1378, %v1131
  %v1443 = vmul.f32 %v1379, %v1136
  %v1444 = vmul.f32 %v1380, %v1141
  %v1445 = vmul.f32 %v1381, %v1146
  %v1446 = vmul.f32 %v1382, %v1151
  %v1447 = vmul.f32 %v1383, %v1156
  %v1448 = vmul.f32 %v1384, %v1161
  %v1449 = vmul.f32 %v1385, %v1166
  %v1450 = vmul.f32 %v1386, %v1171
  %v1451 = vmul.f32 %v1387, %v1176
  %v1452 = vmul.f32 %v1388, %v1181
  %v1453 = vmul.f32 %v1389, %v1186
  %v1454 = vmul.f32 %v1390, %v1191
  %v1455 = vmul.f32 %v1391, %v1391
  %v1456 = vmul.f32 %v1392, %v1392
  %v1457 = vmul.f32 %v1393, %v1393
  %v1458 = vmul.f32 %v1394, %v1394
  %v1459 = vmul.f32 %v1395, %v1395
  %v1460 = vmul.f32 %v1396, %v1396
  %v1461 = vmul.f32 %v1397, %v1397
  %v1462 = vmul.f32 %v1398, %v1398
  %v1463 = vmul.f32 %v1399, %v1399
  %v1464 = vmul.f32 %v1400, %v1400
  %v1465 = vmul.f32 %v1401, %v1401
  %v1466 = vmul.f32 %v1402, %v1402
  %v1467 = vmul.f32 %v1403, %v1403
  %v1468 = vmul.f32 %v1404, %v1404
  %v1469 = vmul.f32 %v1405, %v1405
  %v1470 = vmul.f32 %v1406, %v1406
  %v1471 = vmul.f32 %v1407, %v1407
  %v1472 = vmul.f32 %v1408, %v1408
  %v1473 = vmul.f32 %v1409, %v1409
  %v1474 = vmul.f32 %v1410, %v1410
  %v1475 = vmul.f32 %v1411, %v1411
  %v1476 = vmul.f32 %v1412, %v1412
  %v1477 = vmul.f32 %v1413, %v1413
  %v1478 = vmul.f32 %v1414, %v1414
  %v1479 = vmul.f32 %v1415, %v1415
  %v1480 = vmul.f32 %v1416, %v1416
  %v1481 = vmul.f32 %v1417, %v1417
  %v1482 = vmul.f32 %v1418, %v1418
  %v1483 = vmul.f32 %v1419, %v1419
  %v1484 = vmul.f32 %v1420, %v1420
  %v1485 = vmul.f32 %v1421, %v1421
  %v1486 = vmul.f32 %v1422, %v1422
  %v1487 = vmul.f32 %v1423, %v1423
  %v1488 = vmul.f32 %v1424, %v1424
  %v1489 = vmul.f32 %v1425, %v1425
  %v1490 = vmul.f32 %v1426, %v1426
  %v1491 = vmul.f32 %v1427, %v1427
  %v1492 = vmul.f32 %v1428, %v1428
  %v1493 = vmul.f32 %v1429, %v1429
  %v1494 = vmul.f32 %v1430, %v1430
  %v1495 = vmul.f32 %v1431, %v1431
  %v1496 = vmul.f32 %v1432, %v1432
  %v1497 = vmul.f32 %v1433, %v1433
  %v1498 = vmul.f32 %v1434, %v1434
  %v1499 = vmul.f32 %v1435, %v1435
  %v1500 = vmul.f32 %v1436, %v1436
  %v1501 = vmul.f32 %v1437, %v1437
  %v1502 = vmul.f32 %v1438, %v1438
  %v1503 = vmul.f32 %v1439, %v1439
  %v1504 = vmul.f32 %v1440, %v1440
  %v1505 = vmul.f32 %v1441, %v1441
  %v1506 = vmul.f32 %v1442, %v1442
  %v1507 = vmul.f32 %v1443, %v1443
  %v1508 = vmul.f32 %v1444, %v1444
  %v1509 = vmul.f32 %v1445, %v1445
  %v1510 = vmul.f32 %v1446, %v1446
  %v1511 = vmul.f32 %v1447, %v1447
  %v1512 = vmul.f32 %v1448, %v1448
  %v1513 = vmul.f32 %v1449, %v1449
  %v1514 = vmul.f32 %v1450, %v1450
  %v1515 = vmul.f32 %v1451, %v1451
  %v1516 = vmul.f32 %v1452, %v1452
  %v1517 = vmul.f32 %v1453, %v1453
  %v1518 = vmul.f32 %v1454, %v1454
  %v1519 = vadd.f32 %v1455, %v1456
  %v1520 = vadd.f32 %v1519, %v1457
  %v1521 = vadd.f32 %v1520, %v1458
  %v1522 = vadd.f32 %v1521, %v1459
  %v1523 = vadd.f32 %v1522, %v1460
  %v1524 = vadd.f32 %v1523, %v1461
  %v1525 = vadd.f32 %v1524, %v1462
  %v1526 = vadd.f32 %v1525, %v1463
  %v1527 = vadd.f32 %v1526, %v1464
  %v1528 = vadd.f32 %v1527, %v1465
  %v1529 = vadd.f32 %v1528, %v1466
  %v1530 = vadd.f32 %v1529, %v1467
  %v1531 = vadd.f32 %v1530, %v1468
  %v1532 = vadd.f32 %v1531, %v1469
  %v1533 = vadd.f32 %v1532, %v1470
  %v1534 = vadd.f32 %v1533, %v1471
  %v1535 = vadd.f32 %v1534, %v1472
  %v1536 = vadd.f32 %v1535, %v1473
  %v1537 = vadd.f32 %v1536, %v1474
  %v1538 = vadd.f32 %v1537, %v1475
  %v1539 = vadd.f32 %v1538, %v1476
  %v1540 = vadd.f32 %v1539, %v1477
  %v1541 = vadd.f32 %v1540, %v1478
  %v1542 = vadd.f32 %v1541, %v1479
  %v1543 = vadd.f32 %v1542, %v1480
  %v1544 = vadd.f32 %v1543, %v1481
  %v1545 = vadd.f32 %v1544, %v1482
  %v1546 = vadd.f32 %v1545, %v1483
  %v1547 = vadd.f32 %v1546, %v1484
  %v1548 = vadd.f32 %v1547, %v1485
  %v1549 = vadd.f32 %v1548, %v1486
  %v1550 = vadd.f32 %v1549, %v1487
  %v1551 = vadd.f32 %v1550, %v1488
  %v1552 = vadd.f32 %v1551, %v1489
  %v1553 = vadd.f32 %v1552, %v1490
  %v1554 = vadd.f32 %v1553, %v1491
  %v1555 = vadd.f32 %v1554, %v1492
  %v1556 = vadd.f32 %v1555, %v1493
  %v1557 = vadd.f32 %v1556, %v1494
  %v1558 = vadd.f32 %v1557, %v1495
  %v1559 = vadd.f32 %v1558, %v1496
  %v1560 = vadd.f32 %v1559, %v1497
  %v1561 = vadd.f32 %v1560, %v1498
  %v1562 = vadd.f32 %v1561, %v1499
  %v1563 = vadd.f32 %v1562, %v1500
  %v1564 = vadd.f32 %v1563, %v1501
  %v1565 = vadd.f32 %v1564, %v1502
  %v1566 = vadd.f32 %v1565, %v1503
  %v1567 = vadd.f32 %v1566, %v1504
  %v1568 = vadd.f32 %v1567, %v1505
  %v1569 = vadd.f32 %v1568, %v1506
  %v1570 = vadd.f32 %v1569, %v1507
  %v1571 = vadd.f32 %v1570, %v1508
  %v1572 = vadd.f32 %v1571, %v1509
  %v1573 = vadd.f32 %v1572, %v1510
  %v1574 = vadd.f32 %v1573, %v1511
  %v1575 = vadd.f32 %v1574, %v1512
  %v1576 = vadd.f32 %v1575, %v1513
  %v1577 = vadd.f32 %v1576, %v1514
  %v1578 = vadd.f32 %v1577, %v1515
  %v1579 = vadd.f32 %v1578, %v1516
  %v1580 = vadd.f32 %v1579, %v1517
  %v1581 = vadd.f32 %v1580, %v1518
  %v1582 = vrot.slane %v1581, 4
  %v1583 = vadd.f32 %v1581, %v1582
  %v1584 = vrot.slane %v1583, 2
  %v1585 = vadd.f32 %v1583, %v1584
  %v1586 = vrot.slane %v1585, 1
  %v1587 = vadd.f32 %v1585, %v1586
  %v1588 = vmul.f32 %v1587, 0.0025510204
  %v1589 = vadd.f32 %v1588, 1e-05
  %v1590 = vrsqrt.pop %v1589
  %v1591 = vmul.f32 %v1327, %v1590
  %v1592 = vmul.f32 %v1328, %v1590
  %v1593 = vmul.f32 %v1329, %v1590
  %v1594 = vmul.f32 %v1330, %v1590
  %v1595 = vmul.f32 %v1331, %v1590
  %v1596 = vmul.f32 %v1332, %v1590
  %v1597 = vmul.f32 %v1333, %v1590
  %v1598 = vmul.f32 %v1334, %v1590
  %v1599 = vmul.f32 %v1335, %v1590
  %v1600 = vmul.f32 %v1336, %v1590
  %v1601 = vmul.f32 %v1337, %v1590
  %v1602 = vmul.f32 %v1338, %v1590
  %v1603 = vmul.f32 %v1339, %v1590
  %v1604 = vmul.f32 %v1340, %v1590
  %v1605 = vmul.f32 %v1341, %v1590
  %v1606 = vmul.f32 %v1342, %v1590
  %v1607 = vmul.f32 %v1343, %v1590
  %v1608 = vmul.f32 %v1344, %v1590
  %v1609 = vmul.f32 %v1345, %v1590
  %v1610 = vmul.f32 %v1346, %v1590
  %v1611 = vmul.f32 %v1347, %v1590
  %v1612 = vmul.f32 %v1348, %v1590
  %v1613 = vmul.f32 %v1349, %v1590
  %v1614 = vmul.f32 %v1350, %v1590
  %v1615 = vmul.f32 %v1351, %v1590
  %v1616 = vmul.f32 %v1352, %v1590
  %v1617 = vmul.f32 %v1353, %v1590
  %v1618 = vmul.f32 %v1354, %v1590
  %v1619 = vmul.f32 %v1355, %v1590
  %v1620 = vmul.f32 %v1356, %v1590
  %v1621 = vmul.f32 %v1357, %v1590
  %v1622 = vmul.f32 %v1358, %v1590
  %v1623 = vmul.f32 %v1359, %v1590
  %v1624 = vmul.f32 %v1360, %v1590
  %v1625 = vmul.f32 %v1361, %v1590
  %v1626 = vmul.f32 %v1362, %v1590
  %v1627 = vmul.f32 %v1363, %v1590
  %v1628 = vmul.f32 %v1364, %v1590
  %v1629 = vmul.f32 %v1365, %v1590
  %v1630 = vmul.f32 %v1366, %v1590
  %v1631 = vmul.f32 %v1367, %v1590
  %v1632 = vmul.f32 %v1368, %v1590
  %v1633 = vmul.f32 %v1369, %v1590
  %v1634 = vmul.f32 %v1370, %v1590
  %v1635 = vmul.f32 %v1371, %v1590
  %v1636 = vmul.f32 %v1372, %v1590
  %v1637 = vmul.f32 %v1373, %v1590
  %v1638 = vmul.f32 %v1374, %v1590
  %v1639 = vmul.f32 %v1375, %v1590
  %v1640 = vmul.f32 %v1376, %v1590
  %v1641 = vmul.f32 %v1377, %v1590
  %v1642 = vmul.f32 %v1378, %v1590
  %v1643 = vmul.f32 %v1379, %v1590
  %v1644 = vmul.f32 %v1380, %v1590
  %v1645 = vmul.f32 %v1381, %v1590
  %v1646 = vmul.f32 %v1382, %v1590
  %v1647 = vmul.f32 %v1383, %v1590
  %v1648 = vmul.f32 %v1384, %v1590
  %v1649 = vmul.f32 %v1385, %v1590
  %v1650 = vmul.f32 %v1386, %v1590
  %v1651 = vmul.f32 %v1387, %v1590
  %v1652 = vmul.f32 %v1388, %v1590
  %v1653 = vmul.f32 %v1389, %v1590
  %v1654 = vmul.f32 %v1390, %v1590
  %v1655 = vmax.f32 %v1591, 0.0
  %v1656 = vmax.f32 %v1592, 0.0
  %v1657 = vmax.f32 %v1593, 0.0
  %v1658 = vmax.f32 %v1594, 0.0
  %v1659 = vmax.f32 %v1595, 0.0
  %v1660 = vmax.f32 %v1596, 0.0
  %v1661 = vmax.f32 %v1597, 0.0
  %v1662 = vmax.f32 %v1598, 0.0
  %v1663 = vmax.f32 %v1599, 0.0
  %v1664 = vmax.f32 %v1600, 0.0
  %v1665 = vmax.f32 %v1601, 0.0
  %v1666 = vmax.f32 %v1602, 0.0
  %v1667 = vmax.f32 %v1603, 0.0
  %v1668 = vmax.f32 %v1604, 0.0
  %v1669 = vmax.f32 %v1605, 0.0
  %v1670 = vmax.f32 %v1606, 0.0
  %v1671 = vmax.f32 %v1607, 0.0
  %v1672 = vmax.f32 %v1608, 0.0
  %v1673 = vmax.f32 %v1609, 0.0
  %v1674 = vmax.f32 %v1610, 0.0
  %v1675 = vmax.f32 %v1611, 0.0
  %v1676 = vmax.f32 %v1612, 0.0
  %v1677 = vmax.f32 %v1613, 0.0
  %v1678 = vmax.f32 %v1614, 0.0
  %v1679 = vmax.f32 %v1615, 0.0
  %v1680 = vmax.f32 %v1616, 0.0
  %v1681 = vmax.f32 %v1617, 0.0
  %v1682 = vmax.f32 %v1618, 0.0
  %v1683 = vmax.f32 %v1619, 0.0
  %v1684 = vmax.f32 %v1620, 0.0
  %v1685 = vmax.f32 %v1621, 0.0
  %v1686 = vmax.f32 %v1622, 0.0
  %v1687 = vmax.f32 %v1623, 0.0
  %v1688 = vmax.f32 %v1624, 0.0
  %v1689 = vmax.f32 %v1625, 0.0
  %v1690 = vmax.f32 %v1626, 0.0
  %v1691 = vmax.f32 %v1627, 0.0
  %v1692 = vmax.f32 %v1628, 0.0
  %v1693 = vmax.f32 %v1629, 0.0
  %v1694 = vmax.f32 %v1630, 0.0
  %v1695 = vmax.f32 %v1631, 0.0
  %v1696 = vmax.f32 %v1632, 0.0
  %v1697 = vmax.f32 %v1633, 0.0
  %v1698 = vmax.f32 %v1634, 0.0
  %v1699 = vmax.f32 %v1635, 0.0
  %v1700 = vmax.f32 %v1636, 0.0
  %v1701 = vmax.f32 %v1637, 0.0
  %v1702 = vmax.f32 %v1638, 0.0
  %v1703 = vmax.f32 %v1639, 0.0
  %v1704 = vmax.f32 %v1640, 0.0
  %v1705 = vmax.f32 %v1641, 0.0
  %v1706 = vmax.f32 %v1642, 0.0
  %v1707 = vmax.f32 %v1643, 0.0
  %v1708 = vmax.f32 %v1644, 0.0
  %v1709 = vmax.f32 %v1645, 0.0
  %v1710 = vmax.f32 %v1646, 0.0
  %v1711 = vmax.f32 %v1647, 0.0
  %v1712 = vmax.f32 %v1648, 0.0
  %v1713 = vmax.f32 %v1649, 0.0
  %v1714 = vmax.f32 %v1650, 0.0
  %v1715 = vmax.f32 %v1651, 0.0
  %v1716 = vmax.f32 %v1652, 0.0
  %v1717 = vmax.f32 %v1653, 0.0
  %v1718 = vmax.f32 %v1654, 0.0
  %v1719 = vmul.f32 %v1655, %v876
  %v1720 = vmul.f32 %v1656, %v881
  %v1721 = vmul.f32 %v1657, %v886
  %v1722 = vmul.f32 %v1658, %v891
  %v1723 = vmul.f32 %v1659, %v896
  %v1724 = vmul.f32 %v1660, %v901
  %v1725 = vmul.f32 %v1661, %v906
  %v1726 = vmul.f32 %v1662, %v911
  %v1727 = vmul.f32 %v1663, %v916
  %v1728 = vmul.f32 %v1664, %v921
  %v1729 = vmul.f32 %v1665, %v926
  %v1730 = vmul.f32 %v1666, %v931
  %v1731 = vmul.f32 %v1667, %v936
  %v1732 = vmul.f32 %v1668, %v941
  %v1733 = vmul.f32 %v1669, %v946
  %v1734 = vmul.f32 %v1670, %v951
  %v1735 = vmul.f32 %v1671, %v956
  %v1736 = vmul.f32 %v1672, %v961
  %v1737 = vmul.f32 %v1673, %v966
  %v1738 = vmul.f32 %v1674, %v971
  %v1739 = vmul.f32 %v1675, %v976
  %v1740 = vmul.f32 %v1676, %v981
  %v1741 = vmul.f32 %v1677, %v986
  %v1742 = vmul.f32 %v1678, %v991
  %v1743 = vmul.f32 %v1679, %v996
  %v1744 = vmul.f32 %v1680, %v1001
  %v1745 = vmul.f32 %v1681, %v1006
  %v1746 = vmul.f32 %v1682, %v1011
  %v1747 = vmul.f32 %v1683, %v1016
  %v1748 = vmul.f32 %v1684, %v1021
  %v1749 = vmul.f32 %v1685, %v1026
  %v1750 = vmul.f32 %v1686, %v1031
  %v1751 = vmul.f32 %v1687, %v1036
  %v1752 = vmul.f32 %v1688, %v1041
  %v1753 = vmul.f32 %v1689, %v1046
  %v1754 = vmul.f32 %v1690, %v1051
  %v1755 = vmul.f32 %v1691, %v1056
  %v1756 = vmul.f32 %v1692, %v1061
  %v1757 = vmul.f32 %v1693, %v1066
  %v1758 = vmul.f32 %v1694, %v1071
  %v1759 = vmul.f32 %v1695, %v1076
  %v1760 = vmul.f32 %v1696, %v1081
  %v1761 = vmul.f32 %v1697, %v1086
  %v1762 = vmul.f32 %v1698, %v1091
  %v1763 = vmul.f32 %v1699, %v1096
  %v1764 = vmul.f32 %v1700, %v1101
  %v1765 = vmul.f32 %v1701, %v1106
  %v1766 = vmul.f32 %v1702, %v1111
  %v1767 = vmul.f32 %v1703, %v1116
  %v1768 = vmul.f32 %v1704, %v1121
  %v1769 = vmul.f32 %v1705, %v1126
  %v1770 = vmul.f32 %v1706, %v1131
  %v1771 = vmul.f32 %v1707, %v1136
  %v1772 = vmul.f32 %v1708, %v1141
  %v1773 = vmul.f32 %v1709, %v1146
  %v1774 = vmul.f32 %v1710, %v1151
  %v1775 = vmul.f32 %v1711, %v1156
  %v1776 = vmul.f32 %v1712, %v1161
  %v1777 = vmul.f32 %v1713, %v1166
  %v1778 = vmul.f32 %v1714, %v1171
  %v1779 = vmul.f32 %v1715, %v1176
  %v1780 = vmul.f32 %v1716, %v1181
  %v1781 = vmul.f32 %v1717, %v1186
  %v1782 = vmul.f32 %v1718, %v1191
  %1783 = vst [vmem:[#allocation2 + $0x18] sm:$0xff] %v1719
  %1784 = vst [vmem:[#allocation2 + $0x20] sm:$0xff] %v1720
  %1785 = vst [vmem:[#allocation2 + $0x28] sm:$0xff] %v1721
  %1786 = vst [vmem:[#allocation2 + $0x30] sm:$0xff] %v1722
  %1787 = vst [vmem:[#allocation2 + $0x38] sm:$0xff] %v1723
  %1788 = vst [vmem:[#allocation2 + $0x40] sm:$0xff] %v1724
  %1789 = vst [vmem:[#allocation2 + $0x48] sm:$0xff] %v1725
  %1790 = vst [vmem:[#allocation2 + $0x50] sm:$0xff] %v1726
  %1791 = vst [vmem:[#allocation2 + $0x58] sm:$0xff] %v1727
  %1792 = vst [vmem:[#allocation2 + $0x60] sm:$0xff] %v1728
  %1793 = vst [vmem:[#allocation2 + $0x68] sm:$0xff] %v1729
  %1794 = vst [vmem:[#allocation2 + $0x70] sm:$0xff] %v1730
  %1795 = vst [vmem:[#allocation2 + $0x78] sm:$0xff] %v1731
  %1796 = vst [vmem:[#allocation2 + $0x80] sm:$0xff] %v1732
  %1797 = vst [vmem:[#allocation2 + $0x88] sm:$0xff] %v1733
  %1798 = vst [vmem:[#allocation2 + $0x90] sm:$0xff] %v1734
  %1799 = vst [vmem:[#allocation2 + $0x98] sm:$0xff] %v1735
  %1800 = vst [vmem:[#allocation2 + $0xa0] sm:$0xff] %v1736
  %1801 = vst [vmem:[#allocation2 + $0xa8] sm:$0xff] %v1737
  %1802 = vst [vmem:[#allocation2 + $0xb0] sm:$0xff] %v1738
  %1803 = vst [vmem:[#allocation2 + $0xb8] sm:$0xff] %v1739
  %1804 = vst [vmem:[#allocation2 + $0xc0] sm:$0xff] %v1740
  %1805 = vst [vmem:[#allocation2 + $0xc8] sm:$0xff] %v1741
  %1806 = vst [vmem:[#allocation2 + $0xd0] sm:$0xff] %v1742
  %1807 = vst [vmem:[#allocation2 + $0xd8] sm:$0xff] %v1743
  %1808 = vst [vmem:[#allocation2 + $0xe0] sm:$0xff] %v1744
  %1809 = vst [vmem:[#allocation2 + $0xe8] sm:$0xff] %v1745
  %1810 = vst [vmem:[#allocation2 + $0xf0] sm:$0xff] %v1746
  %1811 = vst [vmem:[#allocation2 + $0xf8] sm:$0xff] %v1747
  %1812 = vst [vmem:[#allocation2 + $0x100] sm:$0xff] %v1748
  %1813 = vst [vmem:[#allocation2 + $0x108] sm:$0xff] %v1749
  %1814 = vst [vmem:[#allocation2 + $0x110] sm:$0xff] %v1750
  %1815 = vst [vmem:[#allocation2 + $0x118] sm:$0xff] %v1751
  %1816 = vst [vmem:[#allocation2 + $0x120] sm:$0xff] %v1752
  %1817 = vst [vmem:[#allocation2 + $0x128] sm:$0xff] %v1753
  %1818 = vst [vmem:[#allocation2 + $0x130] sm:$0xff] %v1754
  %1819 = vst [vmem:[#allocation2 + $0x138] sm:$0xff] %v1755
  %1820 = vst [vmem:[#allocation2 + $0x140] sm:$0xff] %v1756
  %1821 = vst [vmem:[#allocation2 + $0x148] sm:$0xff] %v1757
  %1822 = vst [vmem:[#allocation2 + $0x150] sm:$0xff] %v1758
  %1823 = vst [vmem:[#allocation2 + $0x158] sm:$0xff] %v1759
  %1824 = vst [vmem:[#allocation2 + $0x160] sm:$0xff] %v1760
  %1825 = vst [vmem:[#allocation2 + $0x168] sm:$0xff] %v1761
  %1826 = vst [vmem:[#allocation2 + $0x170] sm:$0xff] %v1762
  %1827 = vst [vmem:[#allocation2 + $0x178] sm:$0xff] %v1763
  %1828 = vst [vmem:[#allocation2 + $0x180] sm:$0xff] %v1764
  %1829 = vst [vmem:[#allocation2 + $0x188] sm:$0xff] %v1765
  %1830 = vst [vmem:[#allocation2 + $0x190] sm:$0xff] %v1766
  %1831 = vst [vmem:[#allocation2 + $0x198] sm:$0xff] %v1767
  %1832 = vst [vmem:[#allocation2 + $0x1a0] sm:$0xff] %v1768
  %1833 = vst [vmem:[#allocation2 + $0x1a8] sm:$0xff] %v1769
  %1834 = vst [vmem:[#allocation2 + $0x1b0] sm:$0xff] %v1770
  %1835 = vst [vmem:[#allocation2 + $0x1b8] sm:$0xff] %v1771
  %1836 = vst [vmem:[#allocation2 + $0x1c0] sm:$0xff] %v1772
  %1837 = vst [vmem:[#allocation2 + $0x1c8] sm:$0xff] %v1773
  %1838 = vst [vmem:[#allocation2 + $0x1d0] sm:$0xff] %v1774
  %1839 = vst [vmem:[#allocation2 + $0x1d8] sm:$0xff] %v1775
  %1840 = vst [vmem:[#allocation2 + $0x1e0] sm:$0xff] %v1776
  %1841 = vst [vmem:[#allocation2 + $0x1e8] sm:$0xff] %v1777
  %1842 = vst [vmem:[#allocation2 + $0x1f0] sm:$0xff] %v1778
  %1843 = vst [vmem:[#allocation2 + $0x1f8] sm:$0xff] %v1779
  %1844 = vst [vmem:[#allocation2 + $0x200] sm:$0xff] %v1780
  %1845 = vst [vmem:[#allocation2 + $0x208] sm:$0xff] %v1781
  %1846 = vst [vmem:[#allocation2 + $0x210] sm:$0xff] %v1782
  %v1847 = vld [vmem:[#allocation2 + $0x7] sm:$0xff]
  %v1848 = vld [vmem:[#allocation2 + $0xf] sm:$0xff]
  %v1849 = vld [vmem:[#allocation2 + $0x17] sm:$0xff]
  %v1850 = vld [vmem:[#allocation2 + $0x1f] sm:$0xff]
  %v1851 = vld [vmem:[#allocation2 + $0x27] sm:$0xff]
  %v1852 = vld [vmem:[#allocation2 + $0x2f] sm:$0xff]
  %v1853 = vld [vmem:[#allocation2 + $0x37] sm:$0xff]
  %v1854 = vld [vmem:[#allocation2 + $0x3f] sm:$0xff]
  %v1855 = vld [vmem:[#allocation2 + $0x47] sm:$0xff]
  %v1856 = vld [vmem:[#allocation2 + $0x4f] sm:$0xff]
  %v1857 = vld [vmem:[#allocation2 + $0x57] sm:$0xff]
  %v1858 = vld [vmem:[#allocation2 + $0x5f] sm:$0xff]
  %v1859 = vld [vmem:[#allocation2 + $0x67] sm:$0xff]
  %v1860 = vld [vmem:[#allocation2 + $0x6f] sm:$0xff]
  %v1861 = vld [vmem:[#allocation2 + $0x77] sm:$0xff]
  %v1862 = vld [vmem:[#allocation2 + $0x7f] sm:$0xff]
  %v1863 = vld [vmem:[#allocation2 + $0x87] sm:$0xff]
  %v1864 = vld [vmem:[#allocation2 + $0x8f] sm:$0xff]
  %v1865 = vld [vmem:[#allocation2 + $0x97] sm:$0xff]
  %v1866 = vld [vmem:[#allocation2 + $0x9f] sm:$0xff]
  %v1867 = vld [vmem:[#allocation2 + $0xa7] sm:$0xff]
  %v1868 = vld [vmem:[#allocation2 + $0xaf] sm:$0xff]
  %v1869 = vld [vmem:[#allocation2 + $0xb7] sm:$0xff]
  %v1870 = vld [vmem:[#allocation2 + $0xbf] sm:$0xff]
  %v1871 = vld [vmem:[#allocation2 + $0xc7] sm:$0xff]
  %v1872 = vld [vmem:[#allocation2 + $0xcf] sm:$0xff]
  %v1873 = vld [vmem:[#allocation2 + $0xd7] sm:$0xff]
  %v1874 = vld [vmem:[#allocation2 + $0xdf] sm:$0xff]
  %v1875 = vld [vmem:[#allocation2 + $0xe7] sm:$0xff]
  %v1876 = vld [vmem:[#allocation2 + $0xef] sm:$0xff]
  %v1877 = vld [vmem:[#allocation2 + $0xf7] sm:$0xff]
  %v1878 = vld [vmem:[#allocation2 + $0xff] sm:$0xff]
  %v1879 = vld [vmem:[#allocation2 + $0x107] sm:$0xff]
  %v1880 = vld [vmem:[#allocation2 + $0x10f] sm:$0xff]
  %v1881 = vld [vmem:[#allocation2 + $0x117] sm:$0xff]
  %v1882 = vld [vmem:[#allocation2 + $0x11f] sm:$0xff]
  %v1883 = vld [vmem:[#allocation2 + $0x127] sm:$0xff]
  %v1884 = vld [vmem:[#allocation2 + $0x12f] sm:$0xff]
  %v1885 = vld [vmem:[#allocation2 + $0x137] sm:$0xff]
  %v1886 = vld [vmem:[#allocation2 + $0x13f] sm:$0xff]
  %v1887 = vld [vmem:[#allocation2 + $0x147] sm:$0xff]
  %v1888 = vld [vmem:[#allocation2 + $0x14f] sm:$0xff]
  %v1889 = vld [vmem:[#allocation2 + $0x157] sm:$0xff]
  %v1890 = vld [vmem:[#allocation2 + $0x15f] sm:$0xff]
  %v1891 = vld [vmem:[#allocation2 + $0x167] sm:$0xff]
  %v1892 = vld [vmem:[#allocation2 + $0x16f] sm:$0xff]
  %v1893 = vld [vmem:[#allocation2 + $0x177] sm:$0xff]
  %v1894 = vld [vmem:[#allocation2 + $0x17f] sm:$0xff]
  %v1895 = vld [vmem:[#allocation2 + $0x187] sm:$0xff]
  %v1896 = vld [vmem:[#allocation2 + $0x18f] sm:$0xff]
  %v1897 = vld [vmem:[#allocation2 + $0x197] sm:$0xff]
  %v1898 = vld [vmem:[#allocation2 + $0x19f] sm:$0xff]
  %v1899 = vld [vmem:[#allocation2 + $0x1a7] sm:$0xff]
  %v1900 = vld [vmem:[#allocation2 + $0x1af] sm:$0xff]
  %v1901 = vld [vmem:[#allocation2 + $0x1b7] sm:$0xff]
  %v1902 = vld [vmem:[#allocation2 + $0x1bf] sm:$0xff]
  %v1903 = vld [vmem:[#allocation2 + $0x1c7] sm:$0xff]
  %v1904 = vld [vmem:[#allocation2 + $0x1cf] sm:$0xff]
  %v1905 = vld [vmem:[#allocation2 + $0x1d7] sm:$0xff]
  %v1906 = vld [vmem:[#allocation2 + $0x1df] sm:$0xff]
  %v1907 = vld [vmem:[#allocation2 + $0x1e7] sm:$0xff]
  %v1908 = vld [vmem:[#allocation2 + $0x1ef] sm:$0xff]
  %v1909 = vld [vmem:[#allocation2 + $0x1f7] sm:$0xff]
  %v1910 = vld [vmem:[#allocation2 + $0x1ff] sm:$0xff]
  %v1911 = vld [vmem:[%s6] sm:$0x1]
  %v1912 = vlaneseq
  %v1913 = vshrl.u32 %v1912, 7
  %v1914 = vsub.s32 0, %v1913
  %v1915 = vrot.slane %v1911, %v1914
  %v1916 = vmul.f32 %v1847, %v1915
  %v1917 = vmul.f32 %v1848, %v1915
  %v1918 = vmul.f32 %v1849, %v1915
  %v1919 = vmul.f32 %v1850, %v1915
  %v1920 = vmul.f32 %v1851, %v1915
  %v1921 = vmul.f32 %v1852, %v1915
  %v1922 = vmul.f32 %v1853, %v1915
  %v1923 = vmul.f32 %v1854, %v1915
  %v1924 = vmul.f32 %v1855, %v1915
  %v1925 = vmul.f32 %v1856, %v1915
  %v1926 = vmul.f32 %v1857, %v1915
  %v1927 = vmul.f32 %v1858, %v1915
  %v1928 = vmul.f32 %v1859, %v1915
  %v1929 = vmul.f32 %v1860, %v1915
  %v1930 = vmul.f32 %v1861, %v1915
  %v1931 = vmul.f32 %v1862, %v1915
  %v1932 = vmul.f32 %v1863, %v1915
  %v1933 = vmul.f32 %v1864, %v1915
  %v1934 = vmul.f32 %v1865, %v1915
  %v1935 = vmul.f32 %v1866, %v1915
  %v1936 = vmul.f32 %v1867, %v1915
  %v1937 = vmul.f32 %v1868, %v1915
  %v1938 = vmul.f32 %v1869, %v1915
  %v1939 = vmul.f32 %v1870, %v1915
  %v1940 = vmul.f32 %v1871, %v1915
  %v1941 = vmul.f32 %v1872, %v1915
  %v1942 = vmul.f32 %v1873, %v1915
  %v1943 = vmul.f32 %v1874, %v1915
  %v1944 = vmul.f32 %v1875, %v1915
  %v1945 = vmul.f32 %v1876, %v1915
  %v1946 = vmul.f32 %v1877, %v1915
  %v1947 = vmul.f32 %v1878, %v1915
  %v1948 = vmul.f32 %v1879, %v1915
  %v1949 = vmul.f32 %v1880, %v1915
  %v1950 = vmul.f32 %v1881, %v1915
  %v1951 = vmul.f32 %v1882, %v1915
  %v1952 = vmul.f32 %v1883, %v1915
  %v1953 = vmul.f32 %v1884, %v1915
  %v1954 = vmul.f32 %v1885, %v1915
  %v1955 = vmul.f32 %v1886, %v1915
  %v1956 = vmul.f32 %v1887, %v1915
  %v1957 = vmul.f32 %v1888, %v1915
  %v1958 = vmul.f32 %v1889, %v1915
  %v1959 = vmul.f32 %v1890, %v1915
  %v1960 = vmul.f32 %v1891, %v1915
  %v1961 = vmul.f32 %v1892, %v1915
  %v1962 = vmul.f32 %v1893, %v1915
  %v1963 = vmul.f32 %v1894, %v1915
  %v1964 = vmul.f32 %v1895, %v1915
  %v1965 = vmul.f32 %v1896, %v1915
  %v1966 = vmul.f32 %v1897, %v1915
  %v1967 = vmul.f32 %v1898, %v1915
  %v1968 = vmul.f32 %v1899, %v1915
  %v1969 = vmul.f32 %v1900, %v1915
  %v1970 = vmul.f32 %v1901, %v1915
  %v1971 = vmul.f32 %v1902, %v1915
  %v1972 = vmul.f32 %v1903, %v1915
  %v1973 = vmul.f32 %v1904, %v1915
  %v1974 = vmul.f32 %v1905, %v1915
  %v1975 = vmul.f32 %v1906, %v1915
  %v1976 = vmul.f32 %v1907, %v1915
  %v1977 = vmul.f32 %v1908, %v1915
  %v1978 = vmul.f32 %v1909, %v1915
  %v1979 = vmul.f32 %v1910, %v1915
  %v1980 = vld [vmem:[#allocation2 + $0x8] sm:$0xff]
  %v1981 = vld [vmem:[#allocation2 + $0x10] sm:$0xff]
  %v1982 = vld [vmem:[#allocation2 + $0x18] sm:$0xff]
  %v1983 = vld [vmem:[#allocation2 + $0x20] sm:$0xff]
  %v1984 = vld [vmem:[#allocation2 + $0x28] sm:$0xff]
  %v1985 = vld [vmem:[#allocation2 + $0x30] sm:$0xff]
  %v1986 = vld [vmem:[#allocation2 + $0x38] sm:$0xff]
  %v1987 = vld [vmem:[#allocation2 + $0x40] sm:$0xff]
  %v1988 = vld [vmem:[#allocation2 + $0x48] sm:$0xff]
  %v1989 = vld [vmem:[#allocation2 + $0x50] sm:$0xff]
  %v1990 = vld [vmem:[#allocation2 + $0x58] sm:$0xff]
  %v1991 = vld [vmem:[#allocation2 + $0x60] sm:$0xff]
  %v1992 = vld [vmem:[#allocation2 + $0x68] sm:$0xff]
  %v1993 = vld [vmem:[#allocation2 + $0x70] sm:$0xff]
  %v1994 = vld [vmem:[#allocation2 + $0x78] sm:$0xff]
  %v1995 = vld [vmem:[#allocation2 + $0x80] sm:$0xff]
  %v1996 = vld [vmem:[#allocation2 + $0x88] sm:$0xff]
  %v1997 = vld [vmem:[#allocation2 + $0x90] sm:$0xff]
  %v1998 = vld [vmem:[#allocation2 + $0x98] sm:$0xff]
  %v1999 = vld [vmem:[#allocation2 + $0xa0] sm:$0xff]
  %v2000 = vld [vmem:[#allocation2 + $0xa8] sm:$0xff]
  %v2001 = vld [vmem:[#allocation2 + $0xb0] sm:$0xff]
  %v2002 = vld [vmem:[#allocation2 + $0xb8] sm:$0xff]
  %v2003 = vld [vmem:[#allocation2 + $0xc0] sm:$0xff]
  %v2004 = vld [vmem:[#allocation2 + $0xc8] sm:$0xff]
  %v2005 = vld [vmem:[#allocation2 + $0xd0] sm:$0xff]
  %v2006 = vld [vmem:[#allocation2 + $0xd8] sm:$0xff]
  %v2007 = vld [vmem:[#allocation2 + $0xe0] sm:$0xff]
  %v2008 = vld [vmem:[#allocation2 + $0xe8] sm:$0xff]
  %v2009 = vld [vmem:[#allocation2 + $0xf0] sm:$0xff]
  %v2010 = vld [vmem:[#allocation2 + $0xf8] sm:$0xff]
  %v2011 = vld [vmem:[#allocation2 + $0x100] sm:$0xff]
  %v2012 = vld [vmem:[#allocation2 + $0x108] sm:$0xff]
  %v2013 = vld [vmem:[#allocation2 + $0x110] sm:$0xff]
  %v2014 = vld [vmem:[#allocation2 + $0x118] sm:$0xff]
  %v2015 = vld [vmem:[#allocation2 + $0x120] sm:$0xff]
  %v2016 = vld [vmem:[#allocation2 + $0x128] sm:$0xff]
  %v2017 = vld [vmem:[#allocation2 + $0x130] sm:$0xff]
  %v2018 = vld [vmem:[#allocation2 + $0x138] sm:$0xff]
  %v2019 = vld [vmem:[#allocation2 + $0x140] sm:$0xff]
  %v2020 = vld [vmem:[#allocation2 + $0x148] sm:$0xff]
  %v2021 = vld [vmem:[#allocation2 + $0x150] sm:$0xff]
  %v2022 = vld [vmem:[#allocation2 + $0x158] sm:$0xff]
  %v2023 = vld [vmem:[#allocation2 + $0x160] sm:$0xff]
  %v2024 = vld [vmem:[#allocation2 + $0x168] sm:$0xff]
  %v2025 = vld [vmem:[#allocation2 + $0x170] sm:$0xff]
  %v2026 = vld [vmem:[#allocation2 + $0x178] sm:$0xff]
  %v2027 = vld [vmem:[#allocation2 + $0x180] sm:$0xff]
  %v2028 = vld [vmem:[#allocation2 + $0x188] sm:$0xff]
  %v2029 = vld [vmem:[#allocation2 + $0x190] sm:$0xff]
  %v2030 = vld [vmem:[#allocation2 + $0x198] sm:$0xff]
  %v2031 = vld [vmem:[#allocation2 + $0x1a0] sm:$0xff]
  %v2032 = vld [vmem:[#allocation2 + $0x1a8] sm:$0xff]
  %v2033 = vld [vmem:[#allocation2 + $0x1b0] sm:$0xff]
  %v2034 = vld [vmem:[#allocation2 + $0x1b8] sm:$0xff]
  %v2035 = vld [vmem:[#allocation2 + $0x1c0] sm:$0xff]
  %v2036 = vld [vmem:[#allocation2 + $0x1c8] sm:$0xff]
  %v2037 = vld [vmem:[#allocation2 + $0x1d0] sm:$0xff]
  %v2038 = vld [vmem:[#allocation2 + $0x1d8] sm:$0xff]
  %v2039 = vld [vmem:[#allocation2 + $0x1e0] sm:$0xff]
  %v2040 = vld [vmem:[#allocation2 + $0x1e8] sm:$0xff]
  %v2041 = vld [vmem:[#allocation2 + $0x1f0] sm:$0xff]
  %v2042 = vld [vmem:[#allocation2 + $0x1f8] sm:$0xff]
  %v2043 = vld [vmem:[#allocation2 + $0x200] sm:$0xff]
  %v2044 = vld [vmem:[%s6 + $0x1] sm:$0x1]
  %v2045 = vlaneseq
  %v2046 = vshrl.u32 %v2045, 7
  %v2047 = vsub.s32 0, %v2046
  %v2048 = vrot.slane %v2044, %v2047
  %v2049 = vmul.f32 %v1980, %v2048
  %v2050 = vmul.f32 %v1981, %v2048
  %v2051 = vmul.f32 %v1982, %v2048
  %v2052 = vmul.f32 %v1983, %v2048
  %v2053 = vmul.f32 %v1984, %v2048
  %v2054 = vmul.f32 %v1985, %v2048
  %v2055 = vmul.f32 %v1986, %v2048
  %v2056 = vmul.f32 %v1987, %v2048
  %v2057 = vmul.f32 %v1988, %v2048
  %v2058 = vmul.f32 %v1989, %v2048
  %v2059 = vmul.f32 %v1990, %v2048
  %v2060 = vmul.f32 %v1991, %v2048
  %v2061 = vmul.f32 %v1992, %v2048
  %v2062 = vmul.f32 %v1993, %v2048
  %v2063 = vmul.f32 %v1994, %v2048
  %v2064 = vmul.f32 %v1995, %v2048
  %v2065 = vmul.f32 %v1996, %v2048
  %v2066 = vmul.f32 %v1997, %v2048
  %v2067 = vmul.f32 %v1998, %v2048
  %v2068 = vmul.f32 %v1999, %v2048
  %v2069 = vmul.f32 %v2000, %v2048
  %v2070 = vmul.f32 %v2001, %v2048
  %v2071 = vmul.f32 %v2002, %v2048
  %v2072 = vmul.f32 %v2003, %v2048
  %v2073 = vmul.f32 %v2004, %v2048
  %v2074 = vmul.f32 %v2005, %v2048
  %v2075 = vmul.f32 %v2006, %v2048
  %v2076 = vmul.f32 %v2007, %v2048
  %v2077 = vmul.f32 %v2008, %v2048
  %v2078 = vmul.f32 %v2009, %v2048
  %v2079 = vmul.f32 %v2010, %v2048
  %v2080 = vmul.f32 %v2011, %v2048
  %v2081 = vmul.f32 %v2012, %v2048
  %v2082 = vmul.f32 %v2013, %v2048
  %v2083 = vmul.f32 %v2014, %v2048
  %v2084 = vmul.f32 %v2015, %v2048
  %v2085 = vmul.f32 %v2016, %v2048
  %v2086 = vmul.f32 %v2017, %v2048
  %v2087 = vmul.f32 %v2018, %v2048
  %v2088 = vmul.f32 %v2019, %v2048
  %v2089 = vmul.f32 %v2020, %v2048
  %v2090 = vmul.f32 %v2021, %v2048
  %v2091 = vmul.f32 %v2022, %v2048
  %v2092 = vmul.f32 %v2023, %v2048
  %v2093 = vmul.f32 %v2024, %v2048
  %v2094 = vmul.f32 %v2025, %v2048
  %v2095 = vmul.f32 %v2026, %v2048
  %v2096 = vmul.f32 %v2027, %v2048
  %v2097 = vmul.f32 %v2028, %v2048
  %v2098 = vmul.f32 %v2029, %v2048
  %v2099 = vmul.f32 %v2030, %v2048
  %v2100 = vmul.f32 %v2031, %v2048
  %v2101 = vmul.f32 %v2032, %v2048
  %v2102 = vmul.f32 %v2033, %v2048
  %v2103 = vmul.f32 %v2034, %v2048
  %v2104 = vmul.f32 %v2035, %v2048
  %v2105 = vmul.f32 %v2036, %v2048
  %v2106 = vmul.f32 %v2037, %v2048
  %v2107 = vmul.f32 %v2038, %v2048
  %v2108 = vmul.f32 %v2039, %v2048
  %v2109 = vmul.f32 %v2040, %v2048
  %v2110 = vmul.f32 %v2041, %v2048
  %v2111 = vmul.f32 %v2042, %v2048
  %v2112 = vmul.f32 %v2043, %v2048
  %v2113 = vadd.f32 %v1916, %v2049
  %v2114 = vadd.f32 %v1917, %v2050
  %v2115 = vadd.f32 %v1918, %v2051
  %v2116 = vadd.f32 %v1919, %v2052
  %v2117 = vadd.f32 %v1920, %v2053
  %v2118 = vadd.f32 %v1921, %v2054
  %v2119 = vadd.f32 %v1922, %v2055
  %v2120 = vadd.f32 %v1923, %v2056
  %v2121 = vadd.f32 %v1924, %v2057
  %v2122 = vadd.f32 %v1925, %v2058
  %v2123 = vadd.f32 %v1926, %v2059
  %v2124 = vadd.f32 %v1927, %v2060
  %v2125 = vadd.f32 %v1928, %v2061
  %v2126 = vadd.f32 %v1929, %v2062
  %v2127 = vadd.f32 %v1930, %v2063
  %v2128 = vadd.f32 %v1931, %v2064
  %v2129 = vadd.f32 %v1932, %v2065
  %v2130 = vadd.f32 %v1933, %v2066
  %v2131 = vadd.f32 %v1934, %v2067
  %v2132 = vadd.f32 %v1935, %v2068
  %v2133 = vadd.f32 %v1936, %v2069
  %v2134 = vadd.f32 %v1937, %v2070
  %v2135 = vadd.f32 %v1938, %v2071
  %v2136 = vadd.f32 %v1939, %v2072
  %v2137 = vadd.f32 %v1940, %v2073
  %v2138 = vadd.f32 %v1941, %v2074
  %v2139 = vadd.f32 %v1942, %v2075
  %v2140 = vadd.f32 %v1943, %v2076
  %v2141 = vadd.f32 %v1944, %v2077
  %v2142 = vadd.f32 %v1945, %v2078
  %v2143 = vadd.f32 %v1946, %v2079
  %v2144 = vadd.f32 %v1947, %v2080
  %v2145 = vadd.f32 %v1948, %v2081
  %v2146 = vadd.f32 %v1949, %v2082
  %v2147 = vadd.f32 %v1950, %v2083
  %v2148 = vadd.f32 %v1951, %v2084
  %v2149 = vadd.f32 %v1952, %v2085
  %v2150 = vadd.f32 %v1953, %v2086
  %v2151 = vadd.f32 %v1954, %v2087
  %v2152 = vadd.f32 %v1955, %v2088
  %v2153 = vadd.f32 %v1956, %v2089
  %v2154 = vadd.f32 %v1957, %v2090
  %v2155 = vadd.f32 %v1958, %v2091
  %v2156 = vadd.f32 %v1959, %v2092
  %v2157 = vadd.f32 %v1960, %v2093
  %v2158 = vadd.f32 %v1961, %v2094
  %v2159 = vadd.f32 %v1962, %v2095
  %v2160 = vadd.f32 %v1963, %v2096
  %v2161 = vadd.f32 %v1964, %v2097
  %v2162 = vadd.f32 %v1965, %v2098
  %v2163 = vadd.f32 %v1966, %v2099
  %v2164 = vadd.f32 %v1967, %v2100
  %v2165 = vadd.f32 %v1968, %v2101
  %v2166 = vadd.f32 %v1969, %v2102
  %v2167 = vadd.f32 %v1970, %v2103
  %v2168 = vadd.f32 %v1971, %v2104
  %v2169 = vadd.f32 %v1972, %v2105
  %v2170 = vadd.f32 %v1973, %v2106
  %v2171 = vadd.f32 %v1974, %v2107
  %v2172 = vadd.f32 %v1975, %v2108
  %v2173 = vadd.f32 %v1976, %v2109
  %v2174 = vadd.f32 %v1977, %v2110
  %v2175 = vadd.f32 %v1978, %v2111
  %v2176 = vadd.f32 %v1979, %v2112
  %v2177 = vld [vmem:[#allocation2 + $0x9] sm:$0xff]
  %v2178 = vld [vmem:[#allocation2 + $0x11] sm:$0xff]
  %v2179 = vld [vmem:[#allocation2 + $0x19] sm:$0xff]
  %v2180 = vld [vmem:[#allocation2 + $0x21] sm:$0xff]
  %v2181 = vld [vmem:[#allocation2 + $0x29] sm:$0xff]
  %v2182 = vld [vmem:[#allocation2 + $0x31] sm:$0xff]
  %v2183 = vld [vmem:[#allocation2 + $0x39] sm:$0xff]
  %v2184 = vld [vmem:[#allocation2 + $0x41] sm:$0xff]
  %v2185 = vld [vmem:[#allocation2 + $0x49] sm:$0xff]
  %v2186 = vld [vmem:[#allocation2 + $0x51] sm:$0xff]
  %v2187 = vld [vmem:[#allocation2 + $0x59] sm:$0xff]
  %v2188 = vld [vmem:[#allocation2 + $0x61] sm:$0xff]
  %v2189 = vld [vmem:[#allocation2 + $0x69] sm:$0xff]
  %v2190 = vld [vmem:[#allocation2 + $0x71] sm:$0xff]
  %v2191 = vld [vmem:[#allocation2 + $0x79] sm:$0xff]
  %v2192 = vld [vmem:[#allocation2 + $0x81] sm:$0xff]
  %v2193 = vld [vmem:[#allocation2 + $0x89] sm:$0xff]
  %v2194 = vld [vmem:[#allocation2 + $0x91] sm:$0xff]
  %v2195 = vld [vmem:[#allocation2 + $0x99] sm:$0xff]
  %v2196 = vld [vmem:[#allocation2 + $0xa1] sm:$0xff]
  %v2197 = vld [vmem:[#allocation2 + $0xa9] sm:$0xff]
  %v2198 = vld [vmem:[#allocation2 + $0xb1] sm:$0xff]
  %v2199 = vld [vmem:[#allocation2 + $0xb9] sm:$0xff]
  %v2200 = vld [vmem:[#allocation2 + $0xc1] sm:$0xff]
  %v2201 = vld [vmem:[#allocation2 + $0xc9] sm:$0xff]
  %v2202 = vld [vmem:[#allocation2 + $0xd1] sm:$0xff]
  %v2203 = vld [vmem:[#allocation2 + $0xd9] sm:$0xff]
  %v2204 = vld [vmem:[#allocation2 + $0xe1] sm:$0xff]
  %v2205 = vld [vmem:[#allocation2 + $0xe9] sm:$0xff]
  %v2206 = vld [vmem:[#allocation2 + $0xf1] sm:$0xff]
  %v2207 = vld [vmem:[#allocation2 + $0xf9] sm:$0xff]
  %v2208 = vld [vmem:[#allocation2 + $0x101] sm:$0xff]
  %v2209 = vld [vmem:[#allocation2 + $0x109] sm:$0xff]
  %v2210 = vld [vmem:[#allocation2 + $0x111] sm:$0xff]
  %v2211 = vld [vmem:[#allocation2 + $0x119] sm:$0xff]
  %v2212 = vld [vmem:[#allocation2 + $0x121] sm:$0xff]
  %v2213 = vld [vmem:[#allocation2 + $0x129] sm:$0xff]
  %v2214 = vld [vmem:[#allocation2 + $0x131] sm:$0xff]
  %v2215 = vld [vmem:[#allocation2 + $0x139] sm:$0xff]
  %v2216 = vld [vmem:[#allocation2 + $0x141] sm:$0xff]
  %v2217 = vld [vmem:[#allocation2 + $0x149] sm:$0xff]
  %v2218 = vld [vmem:[#allocation2 + $0x151] sm:$0xff]
  %v2219 = vld [vmem:[#allocation2 + $0x159] sm:$0xff]
  %v2220 = vld [vmem:[#allocation2 + $0x161] sm:$0xff]
  %v2221 = vld [vmem:[#allocation2 + $0x169] sm:$0xff]
  %v2222 = vld [vmem:[#allocation2 + $0x171] sm:$0xff]
  %v2223 = vld [vmem:[#allocation2 + $0x179] sm:$0xff]
  %v2224 = vld [vmem:[#allocation2 + $0x181] sm:$0xff]
  %v2225 = vld [vmem:[#allocation2 + $0x189] sm:$0xff]
  %v2226 = vld [vmem:[#allocation2 + $0x191] sm:$0xff]
  %v2227 = vld [vmem:[#allocation2 + $0x199] sm:$0xff]
  %v2228 = vld [vmem:[#allocation2 + $0x1a1] sm:$0xff]
  %v2229 = vld [vmem:[#allocation2 + $0x1a9] sm:$0xff]
  %v2230 = vld [vmem:[#allocation2 + $0x1b1] sm:$0xff]
  %v2231 = vld [vmem:[#allocation2 + $0x1b9] sm:$0xff]
  %v2232 = vld [vmem:[#allocation2 + $0x1c1] sm:$0xff]
  %v2233 = vld [vmem:[#allocation2 + $0x1c9] sm:$0xff]
  %v2234 = vld [vmem:[#allocation2 + $0x1d1] sm:$0xff]
  %v2235 = vld [vmem:[#allocation2 + $0x1d9] sm:$0xff]
  %v2236 = vld [vmem:[#allocation2 + $0x1e1] sm:$0xff]
  %v2237 = vld [vmem:[#allocation2 + $0x1e9] sm:$0xff]
  %v2238 = vld [vmem:[#allocation2 + $0x1f1] sm:$0xff]
  %v2239 = vld [vmem:[#allocation2 + $0x1f9] sm:$0xff]
  %v2240 = vld [vmem:[#allocation2 + $0x201] sm:$0xff]
  %v2241 = vld [vmem:[%s6 + $0x2] sm:$0x1]
  %v2242 = vlaneseq
  %v2243 = vshrl.u32 %v2242, 7
  %v2244 = vsub.s32 0, %v2243
  %v2245 = vrot.slane %v2241, %v2244
  %v2246 = vmul.f32 %v2177, %v2245
  %v2247 = vmul.f32 %v2178, %v2245
  %v2248 = vmul.f32 %v2179, %v2245
  %v2249 = vmul.f32 %v2180, %v2245
  %v2250 = vmul.f32 %v2181, %v2245
  %v2251 = vmul.f32 %v2182, %v2245
  %v2252 = vmul.f32 %v2183, %v2245
  %v2253 = vmul.f32 %v2184, %v2245
  %v2254 = vmul.f32 %v2185, %v2245
  %v2255 = vmul.f32 %v2186, %v2245
  %v2256 = vmul.f32 %v2187, %v2245
  %v2257 = vmul.f32 %v2188, %v2245
  %v2258 = vmul.f32 %v2189, %v2245
  %v2259 = vmul.f32 %v2190, %v2245
  %v2260 = vmul.f32 %v2191, %v2245
  %v2261 = vmul.f32 %v2192, %v2245
  %v2262 = vmul.f32 %v2193, %v2245
  %v2263 = vmul.f32 %v2194, %v2245
  %v2264 = vmul.f32 %v2195, %v2245
  %v2265 = vmul.f32 %v2196, %v2245
  %v2266 = vmul.f32 %v2197, %v2245
  %v2267 = vmul.f32 %v2198, %v2245
  %v2268 = vmul.f32 %v2199, %v2245
  %v2269 = vmul.f32 %v2200, %v2245
  %v2270 = vmul.f32 %v2201, %v2245
  %v2271 = vmul.f32 %v2202, %v2245
  %v2272 = vmul.f32 %v2203, %v2245
  %v2273 = vmul.f32 %v2204, %v2245
  %v2274 = vmul.f32 %v2205, %v2245
  %v2275 = vmul.f32 %v2206, %v2245
  %v2276 = vmul.f32 %v2207, %v2245
  %v2277 = vmul.f32 %v2208, %v2245
  %v2278 = vmul.f32 %v2209, %v2245
  %v2279 = vmul.f32 %v2210, %v2245
  %v2280 = vmul.f32 %v2211, %v2245
  %v2281 = vmul.f32 %v2212, %v2245
  %v2282 = vmul.f32 %v2213, %v2245
  %v2283 = vmul.f32 %v2214, %v2245
  %v2284 = vmul.f32 %v2215, %v2245
  %v2285 = vmul.f32 %v2216, %v2245
  %v2286 = vmul.f32 %v2217, %v2245
  %v2287 = vmul.f32 %v2218, %v2245
  %v2288 = vmul.f32 %v2219, %v2245
  %v2289 = vmul.f32 %v2220, %v2245
  %v2290 = vmul.f32 %v2221, %v2245
  %v2291 = vmul.f32 %v2222, %v2245
  %v2292 = vmul.f32 %v2223, %v2245
  %v2293 = vmul.f32 %v2224, %v2245
  %v2294 = vmul.f32 %v2225, %v2245
  %v2295 = vmul.f32 %v2226, %v2245
  %v2296 = vmul.f32 %v2227, %v2245
  %v2297 = vmul.f32 %v2228, %v2245
  %v2298 = vmul.f32 %v2229, %v2245
  %v2299 = vmul.f32 %v2230, %v2245
  %v2300 = vmul.f32 %v2231, %v2245
  %v2301 = vmul.f32 %v2232, %v2245
  %v2302 = vmul.f32 %v2233, %v2245
  %v2303 = vmul.f32 %v2234, %v2245
  %v2304 = vmul.f32 %v2235, %v2245
  %v2305 = vmul.f32 %v2236, %v2245
  %v2306 = vmul.f32 %v2237, %v2245
  %v2307 = vmul.f32 %v2238, %v2245
  %v2308 = vmul.f32 %v2239, %v2245
  %v2309 = vmul.f32 %v2240, %v2245
  %v2310 = vadd.f32 %v2113, %v2246
  %v2311 = vadd.f32 %v2114, %v2247
  %v2312 = vadd.f32 %v2115, %v2248
  %v2313 = vadd.f32 %v2116, %v2249
  %v2314 = vadd.f32 %v2117, %v2250
  %v2315 = vadd.f32 %v2118, %v2251
  %v2316 = vadd.f32 %v2119, %v2252
  %v2317 = vadd.f32 %v2120, %v2253
  %v2318 = vadd.f32 %v2121, %v2254
  %v2319 = vadd.f32 %v2122, %v2255
  %v2320 = vadd.f32 %v2123, %v2256
  %v2321 = vadd.f32 %v2124, %v2257
  %v2322 = vadd.f32 %v2125, %v2258
  %v2323 = vadd.f32 %v2126, %v2259
  %v2324 = vadd.f32 %v2127, %v2260
  %v2325 = vadd.f32 %v2128, %v2261
  %v2326 = vadd.f32 %v2129, %v2262
  %v2327 = vadd.f32 %v2130, %v2263
  %v2328 = vadd.f32 %v2131, %v2264
  %v2329 = vadd.f32 %v2132, %v2265
  %v2330 = vadd.f32 %v2133, %v2266
  %v2331 = vadd.f32 %v2134, %v2267
  %v2332 = vadd.f32 %v2135, %v2268
  %v2333 = vadd.f32 %v2136, %v2269
  %v2334 = vadd.f32 %v2137, %v2270
  %v2335 = vadd.f32 %v2138, %v2271
  %v2336 = vadd.f32 %v2139, %v2272
  %v2337 = vadd.f32 %v2140, %v2273
  %v2338 = vadd.f32 %v2141, %v2274
  %v2339 = vadd.f32 %v2142, %v2275
  %v2340 = vadd.f32 %v2143, %v2276
  %v2341 = vadd.f32 %v2144, %v2277
  %v2342 = vadd.f32 %v2145, %v2278
  %v2343 = vadd.f32 %v2146, %v2279
  %v2344 = vadd.f32 %v2147, %v2280
  %v2345 = vadd.f32 %v2148, %v2281
  %v2346 = vadd.f32 %v2149, %v2282
  %v2347 = vadd.f32 %v2150, %v2283
  %v2348 = vadd.f32 %v2151, %v2284
  %v2349 = vadd.f32 %v2152, %v2285
  %v2350 = vadd.f32 %v2153, %v2286
  %v2351 = vadd.f32 %v2154, %v2287
  %v2352 = vadd.f32 %v2155, %v2288
  %v2353 = vadd.f32 %v2156, %v2289
  %v2354 = vadd.f32 %v2157, %v2290
  %v2355 = vadd.f32 %v2158, %v2291
  %v2356 = vadd.f32 %v2159, %v2292
  %v2357 = vadd.f32 %v2160, %v2293
  %v2358 = vadd.f32 %v2161, %v2294
  %v2359 = vadd.f32 %v2162, %v2295
  %v2360 = vadd.f32 %v2163, %v2296
  %v2361 = vadd.f32 %v2164, %v2297
  %v2362 = vadd.f32 %v2165, %v2298
  %v2363 = vadd.f32 %v2166, %v2299
  %v2364 = vadd.f32 %v2167, %v2300
  %v2365 = vadd.f32 %v2168, %v2301
  %v2366 = vadd.f32 %v2169, %v2302
  %v2367 = vadd.f32 %v2170, %v2303
  %v2368 = vadd.f32 %v2171, %v2304
  %v2369 = vadd.f32 %v2172, %v2305
  %v2370 = vadd.f32 %v2173, %v2306
  %v2371 = vadd.f32 %v2174, %v2307
  %v2372 = vadd.f32 %v2175, %v2308
  %v2373 = vadd.f32 %v2176, %v2309
  %v2374 = vld [vmem:[#allocation2 + $0x207] sm:$0xff]
  %v2375 = vld [vmem:[#allocation2 + $0x20f] sm:$0xff]
  %v2376 = vld [vmem:[%s6 + $0x3] sm:$0x1]
  %v2377 = vlaneseq
  %v2378 = vshrl.u32 %v2377, 7
  %v2379 = vsub.s32 0, %v2378
  %v2380 = vrot.slane %v2376, %v2379
  %v2381 = vmul.f32 %v1849, %v2380
  %v2382 = vmul.f32 %v1850, %v2380
  %v2383 = vmul.f32 %v1851, %v2380
  %v2384 = vmul.f32 %v1852, %v2380
  %v2385 = vmul.f32 %v1853, %v2380
  %v2386 = vmul.f32 %v1854, %v2380
  %v2387 = vmul.f32 %v1855, %v2380
  %v2388 = vmul.f32 %v1856, %v2380
  %v2389 = vmul.f32 %v1857, %v2380
  %v2390 = vmul.f32 %v1858, %v2380
  %v2391 = vmul.f32 %v1859, %v2380
  %v2392 = vmul.f32 %v1860, %v2380
  %v2393 = vmul.f32 %v1861, %v2380
  %v2394 = vmul.f32 %v1862, %v2380
  %v2395 = vmul.f32 %v1863, %v2380
  %v2396 = vmul.f32 %v1864, %v2380
  %v2397 = vmul.f32 %v1865, %v2380
  %v2398 = vmul.f32 %v1866, %v2380
  %v2399 = vmul.f32 %v1867, %v2380
  %v2400 = vmul.f32 %v1868, %v2380
  %v2401 = vmul.f32 %v1869, %v2380
  %v2402 = vmul.f32 %v1870, %v2380
  %v2403 = vmul.f32 %v1871, %v2380
  %v2404 = vmul.f32 %v1872, %v2380
  %v2405 = vmul.f32 %v1873, %v2380
  %v2406 = vmul.f32 %v1874, %v2380
  %v2407 = vmul.f32 %v1875, %v2380
  %v2408 = vmul.f32 %v1876, %v2380
  %v2409 = vmul.f32 %v1877, %v2380
  %v2410 = vmul.f32 %v1878, %v2380
  %v2411 = vmul.f32 %v1879, %v2380
  %v2412 = vmul.f32 %v1880, %v2380
  %v2413 = vmul.f32 %v1881, %v2380
  %v2414 = vmul.f32 %v1882, %v2380
  %v2415 = vmul.f32 %v1883, %v2380
  %v2416 = vmul.f32 %v1884, %v2380
  %v2417 = vmul.f32 %v1885, %v2380
  %v2418 = vmul.f32 %v1886, %v2380
  %v2419 = vmul.f32 %v1887, %v2380
  %v2420 = vmul.f32 %v1888, %v2380
  %v2421 = vmul.f32 %v1889, %v2380
  %v2422 = vmul.f32 %v1890, %v2380
  %v2423 = vmul.f32 %v1891, %v2380
  %v2424 = vmul.f32 %v1892, %v2380
  %v2425 = vmul.f32 %v1893, %v2380
  %v2426 = vmul.f32 %v1894, %v2380
  %v2427 = vmul.f32 %v1895, %v2380
  %v2428 = vmul.f32 %v1896, %v2380
  %v2429 = vmul.f32 %v1897, %v2380
  %v2430 = vmul.f32 %v1898, %v2380
  %v2431 = vmul.f32 %v1899, %v2380
  %v2432 = vmul.f32 %v1900, %v2380
  %v2433 = vmul.f32 %v1901, %v2380
  %v2434 = vmul.f32 %v1902, %v2380
  %v2435 = vmul.f32 %v1903, %v2380
  %v2436 = vmul.f32 %v1904, %v2380
  %v2437 = vmul.f32 %v1905, %v2380
  %v2438 = vmul.f32 %v1906, %v2380
  %v2439 = vmul.f32 %v1907, %v2380
  %v2440 = vmul.f32 %v1908, %v2380
  %v2441 = vmul.f32 %v1909, %v2380
  %v2442 = vmul.f32 %v1910, %v2380
  %v2443 = vmul.f32 %v2374, %v2380
  %v2444 = vmul.f32 %v2375, %v2380
  %v2445 = vadd.f32 %v2310, %v2381
  %v2446 = vadd.f32 %v2311, %v2382
  %v2447 = vadd.f32 %v2312, %v2383
  %v2448 = vadd.f32 %v2313, %v2384
  %v2449 = vadd.f32 %v2314, %v2385
  %v2450 = vadd.f32 %v2315, %v2386
  %v2451 = vadd.f32 %v2316, %v2387
  %v2452 = vadd.f32 %v2317, %v2388
  %v2453 = vadd.f32 %v2318, %v2389
  %v2454 = vadd.f32 %v2319, %v2390
  %v2455 = vadd.f32 %v2320, %v2391
  %v2456 = vadd.f32 %v2321, %v2392
  %v2457 = vadd.f32 %v2322, %v2393
  %v2458 = vadd.f32 %v2323, %v2394
  %v2459 = vadd.f32 %v2324, %v2395
  %v2460 = vadd.f32 %v2325, %v2396
  %v2461 = vadd.f32 %v2326, %v2397
  %v2462 = vadd.f32 %v2327, %v2398
  %v2463 = vadd.f32 %v2328, %v2399
  %v2464 = vadd.f32 %v2329, %v2400
  %v2465 = vadd.f32 %v2330, %v2401
  %v2466 = vadd.f32 %v2331, %v2402
  %v2467 = vadd.f32 %v2332, %v2403
  %v2468 = vadd.f32 %v2333, %v2404
  %v2469 = vadd.f32 %v2334, %v2405
  %v2470 = vadd.f32 %v2335, %v2406
  %v2471 = vadd.f32 %v2336, %v2407
  %v2472 = vadd.f32 %v2337, %v2408
  %v2473 = vadd.f32 %v2338, %v2409
  %v2474 = vadd.f32 %v2339, %v2410
  %v2475 = vadd.f32 %v2340, %v2411
  %v2476 = vadd.f32 %v2341, %v2412
  %v2477 = vadd.f32 %v2342, %v2413
  %v2478 = vadd.f32 %v2343, %v2414
  %v2479 = vadd.f32 %v2344, %v2415
  %v2480 = vadd.f32 %v2345, %v2416
  %v2481 = vadd.f32 %v2346, %v2417
  %v2482 = vadd.f32 %v2347, %v2418
  %v2483 = vadd.f32 %v2348, %v2419
  %v2484 = vadd.f32 %v2349, %v2420
  %v2485 = vadd.f32 %v2350, %v2421
  %v2486 = vadd.f32 %v2351, %v2422
  %v2487 = vadd.f32 %v2352, %v2423
  %v2488 = vadd.f32 %v2353, %v2424
  %v2489 = vadd.f32 %v2354, %v2425
  %v2490 = vadd.f32 %v2355, %v2426
  %v2491 = vadd.f32 %v2356, %v2427
  %v2492 = vadd.f32 %v2357, %v2428
  %v2493 = vadd.f32 %v2358, %v2429
  %v2494 = vadd.f32 %v2359, %v2430
  %v2495 = vadd.f32 %v2360, %v2431
  %v2496 = vadd.f32 %v2361, %v2432
  %v2497 = vadd.f32 %v2362, %v2433
  %v2498 = vadd.f32 %v2363, %v2434
  %v2499 = vadd.f32 %v2364, %v2435
  %v2500 = vadd.f32 %v2365, %v2436
  %v2501 = vadd.f32 %v2366, %v2437
  %v2502 = vadd.f32 %v2367, %v2438
  %v2503 = vadd.f32 %v2368, %v2439
  %v2504 = vadd.f32 %v2369, %v2440
  %v2505 = vadd.f32 %v2370, %v2441
  %v2506 = vadd.f32 %v2371, %v2442
  %v2507 = vadd.f32 %v2372, %v2443
  %v2508 = vadd.f32 %v2373, %v2444
  %v2509 = vld [vmem:[#allocation2 + $0x208] sm:$0xff]
  %v2510 = vld [vmem:[#allocation2 + $0x210] sm:$0xff]
  %v2511 = vld [vmem:[%s6 + $0x4] sm:$0x1]
  %v2512 = vlaneseq
  %v2513 = vshrl.u32 %v2512, 7
  %v2514 = vsub.s32 0, %v2513
  %v2515 = vrot.slane %v2511, %v2514
  %v2516 = vmul.f32 %v1982, %v2515
  %v2517 = vmul.f32 %v1983, %v2515
  %v2518 = vmul.f32 %v1984, %v2515
  %v2519 = vmul.f32 %v1985, %v2515
  %v2520 = vmul.f32 %v1986, %v2515
  %v2521 = vmul.f32 %v1987, %v2515
  %v2522 = vmul.f32 %v1988, %v2515
  %v2523 = vmul.f32 %v1989, %v2515
  %v2524 = vmul.f32 %v1990, %v2515
  %v2525 = vmul.f32 %v1991, %v2515
  %v2526 = vmul.f32 %v1992, %v2515
  %v2527 = vmul.f32 %v1993, %v2515
  %v2528 = vmul.f32 %v1994, %v2515
  %v2529 = vmul.f32 %v1995, %v2515
  %v2530 = vmul.f32 %v1996, %v2515
  %v2531 = vmul.f32 %v1997, %v2515
  %v2532 = vmul.f32 %v1998, %v2515
  %v2533 = vmul.f32 %v1999, %v2515
  %v2534 = vmul.f32 %v2000, %v2515
  %v2535 = vmul.f32 %v2001, %v2515
  %v2536 = vmul.f32 %v2002, %v2515
  %v2537 = vmul.f32 %v2003, %v2515
  %v2538 = vmul.f32 %v2004, %v2515
  %v2539 = vmul.f32 %v2005, %v2515
  %v2540 = vmul.f32 %v2006, %v2515
  %v2541 = vmul.f32 %v2007, %v2515
  %v2542 = vmul.f32 %v2008, %v2515
  %v2543 = vmul.f32 %v2009, %v2515
  %v2544 = vmul.f32 %v2010, %v2515
  %v2545 = vmul.f32 %v2011, %v2515
  %v2546 = vmul.f32 %v2012, %v2515
  %v2547 = vmul.f32 %v2013, %v2515
  %v2548 = vmul.f32 %v2014, %v2515
  %v2549 = vmul.f32 %v2015, %v2515
  %v2550 = vmul.f32 %v2016, %v2515
  %v2551 = vmul.f32 %v2017, %v2515
  %v2552 = vmul.f32 %v2018, %v2515
  %v2553 = vmul.f32 %v2019, %v2515
  %v2554 = vmul.f32 %v2020, %v2515
  %v2555 = vmul.f32 %v2021, %v2515
  %v2556 = vmul.f32 %v2022, %v2515
  %v2557 = vmul.f32 %v2023, %v2515
  %v2558 = vmul.f32 %v2024, %v2515
  %v2559 = vmul.f32 %v2025, %v2515
  %v2560 = vmul.f32 %v2026, %v2515
  %v2561 = vmul.f32 %v2027, %v2515
  %v2562 = vmul.f32 %v2028, %v2515
  %v2563 = vmul.f32 %v2029, %v2515
  %v2564 = vmul.f32 %v2030, %v2515
  %v2565 = vmul.f32 %v2031, %v2515
  %v2566 = vmul.f32 %v2032, %v2515
  %v2567 = vmul.f32 %v2033, %v2515
  %v2568 = vmul.f32 %v2034, %v2515
  %v2569 = vmul.f32 %v2035, %v2515
  %v2570 = vmul.f32 %v2036, %v2515
  %v2571 = vmul.f32 %v2037, %v2515
  %v2572 = vmul.f32 %v2038, %v2515
  %v2573 = vmul.f32 %v2039, %v2515
  %v2574 = vmul.f32 %v2040, %v2515
  %v2575 = vmul.f32 %v2041, %v2515
  %v2576 = vmul.f32 %v2042, %v2515
  %v2577 = vmul.f32 %v2043, %v2515
  %v2578 = vmul.f32 %v2509, %v2515
  %v2579 = vmul.f32 %v2510, %v2515
  %v2580 = vadd.f32 %v2445, %v2516
  %v2581 = vadd.f32 %v2446, %v2517
  %v2582 = vadd.f32 %v2447, %v2518
  %v2583 = vadd.f32 %v2448, %v2519
  %v2584 = vadd.f32 %v2449, %v2520
  %v2585 = vadd.f32 %v2450, %v2521
  %v2586 = vadd.f32 %v2451, %v2522
  %v2587 = vadd.f32 %v2452, %v2523
  %v2588 = vadd.f32 %v2453, %v2524
  %v2589 = vadd.f32 %v2454, %v2525
  %v2590 = vadd.f32 %v2455, %v2526
  %v2591 = vadd.f32 %v2456, %v2527
  %v2592 = vadd.f32 %v2457, %v2528
  %v2593 = vadd.f32 %v2458, %v2529
  %v2594 = vadd.f32 %v2459, %v2530
  %v2595 = vadd.f32 %v2460, %v2531
  %v2596 = vadd.f32 %v2461, %v2532
  %v2597 = vadd.f32 %v2462, %v2533
  %v2598 = vadd.f32 %v2463, %v2534
  %v2599 = vadd.f32 %v2464, %v2535
  %v2600 = vadd.f32 %v2465, %v2536
  %v2601 = vadd.f32 %v2466, %v2537
  %v2602 = vadd.f32 %v2467, %v2538
  %v2603 = vadd.f32 %v2468, %v2539
  %v2604 = vadd.f32 %v2469, %v2540
  %v2605 = vadd.f32 %v2470, %v2541
  %v2606 = vadd.f32 %v2471, %v2542
  %v2607 = vadd.f32 %v2472, %v2543
  %v2608 = vadd.f32 %v2473, %v2544
  %v2609 = vadd.f32 %v2474, %v2545
  %v2610 = vadd.f32 %v2475, %v2546
  %v2611 = vadd.f32 %v2476, %v2547
  %v2612 = vadd.f32 %v2477, %v2548
  %v2613 = vadd.f32 %v2478, %v2549
  %v2614 = vadd.f32 %v2479, %v2550
  %v2615 = vadd.f32 %v2480, %v2551
  %v2616 = vadd.f32 %v2481, %v2552
  %v2617 = vadd.f32 %v2482, %v2553
  %v2618 = vadd.f32 %v2483, %v2554
  %v2619 = vadd.f32 %v2484, %v2555
  %v2620 = vadd.f32 %v2485, %v2556
  %v2621 = vadd.f32 %v2486, %v2557
  %v2622 = vadd.f32 %v2487, %v2558
  %v2623 = vadd.f32 %v2488, %v2559
  %v2624 = vadd.f32 %v2489, %v2560
  %v2625 = vadd.f32 %v2490, %v2561
  %v2626 = vadd.f32 %v2491, %v2562
  %v2627 = vadd.f32 %v2492, %v2563
  %v2628 = vadd.f32 %v2493, %v2564
  %v2629 = vadd.f32 %v2494, %v2565
  %v2630 = vadd.f32 %v2495, %v2566
  %v2631 = vadd.f32 %v2496, %v2567
  %v2632 = vadd.f32 %v2497, %v2568
  %v2633 = vadd.f32 %v2498, %v2569
  %v2634 = vadd.f32 %v2499, %v2570
  %v2635 = vadd.f32 %v2500, %v2571
  %v2636 = vadd.f32 %v2501, %v2572
  %v2637 = vadd.f32 %v2502, %v2573
  %v2638 = vadd.f32 %v2503, %v2574
  %v2639 = vadd.f32 %v2504, %v2575
  %v2640 = vadd.f32 %v2505, %v2576
  %v2641 = vadd.f32 %v2506, %v2577
  %v2642 = vadd.f32 %v2507, %v2578
  %v2643 = vadd.f32 %v2508, %v2579
  %v2644 = vld [vmem:[#allocation2 + $0x209] sm:$0xff]
  %v2645 = vld [vmem:[#allocation2 + $0x211] sm:$0xff]
  %v2646 = vld [vmem:[%s6 + $0x5] sm:$0x1]
  %v2647 = vlaneseq
  %v2648 = vshrl.u32 %v2647, 7
  %v2649 = vsub.s32 0, %v2648
  %v2650 = vrot.slane %v2646, %v2649
  %v2651 = vmul.f32 %v2179, %v2650
  %v2652 = vmul.f32 %v2180, %v2650
  %v2653 = vmul.f32 %v2181, %v2650
  %v2654 = vmul.f32 %v2182, %v2650
  %v2655 = vmul.f32 %v2183, %v2650
  %v2656 = vmul.f32 %v2184, %v2650
  %v2657 = vmul.f32 %v2185, %v2650
  %v2658 = vmul.f32 %v2186, %v2650
  %v2659 = vmul.f32 %v2187, %v2650
  %v2660 = vmul.f32 %v2188, %v2650
  %v2661 = vmul.f32 %v2189, %v2650
  %v2662 = vmul.f32 %v2190, %v2650
  %v2663 = vmul.f32 %v2191, %v2650
  %v2664 = vmul.f32 %v2192, %v2650
  %v2665 = vmul.f32 %v2193, %v2650
  %v2666 = vmul.f32 %v2194, %v2650
  %v2667 = vmul.f32 %v2195, %v2650
  %v2668 = vmul.f32 %v2196, %v2650
  %v2669 = vmul.f32 %v2197, %v2650
  %v2670 = vmul.f32 %v2198, %v2650
  %v2671 = vmul.f32 %v2199, %v2650
  %v2672 = vmul.f32 %v2200, %v2650
  %v2673 = vmul.f32 %v2201, %v2650
  %v2674 = vmul.f32 %v2202, %v2650
  %v2675 = vmul.f32 %v2203, %v2650
  %v2676 = vmul.f32 %v2204, %v2650
  %v2677 = vmul.f32 %v2205, %v2650
  %v2678 = vmul.f32 %v2206, %v2650
  %v2679 = vmul.f32 %v2207, %v2650
  %v2680 = vmul.f32 %v2208, %v2650
  %v2681 = vmul.f32 %v2209, %v2650
  %v2682 = vmul.f32 %v2210, %v2650
  %v2683 = vmul.f32 %v2211, %v2650
  %v2684 = vmul.f32 %v2212, %v2650
  %v2685 = vmul.f32 %v2213, %v2650
  %v2686 = vmul.f32 %v2214, %v2650
  %v2687 = vmul.f32 %v2215, %v2650
  %v2688 = vmul.f32 %v2216, %v2650
  %v2689 = vmul.f32 %v2217, %v2650
  %v2690 = vmul.f32 %v2218, %v2650
  %v2691 = vmul.f32 %v2219, %v2650
  %v2692 = vmul.f32 %v2220, %v2650
  %v2693 = vmul.f32 %v2221, %v2650
  %v2694 = vmul.f32 %v2222, %v2650
  %v2695 = vmul.f32 %v2223, %v2650
  %v2696 = vmul.f32 %v2224, %v2650
  %v2697 = vmul.f32 %v2225, %v2650
  %v2698 = vmul.f32 %v2226, %v2650
  %v2699 = vmul.f32 %v2227, %v2650
  %v2700 = vmul.f32 %v2228, %v2650
  %v2701 = vmul.f32 %v2229, %v2650
  %v2702 = vmul.f32 %v2230, %v2650
  %v2703 = vmul.f32 %v2231, %v2650
  %v2704 = vmul.f32 %v2232, %v2650
  %v2705 = vmul.f32 %v2233, %v2650
  %v2706 = vmul.f32 %v2234, %v2650
  %v2707 = vmul.f32 %v2235, %v2650
  %v2708 = vmul.f32 %v2236, %v2650
  %v2709 = vmul.f32 %v2237, %v2650
  %v2710 = vmul.f32 %v2238, %v2650
  %v2711 = vmul.f32 %v2239, %v2650
  %v2712 = vmul.f32 %v2240, %v2650
  %v2713 = vmul.f32 %v2644, %v2650
  %v2714 = vmul.f32 %v2645, %v2650
  %v2715 = vadd.f32 %v2580, %v2651
  %v2716 = vadd.f32 %v2581, %v2652
  %v2717 = vadd.f32 %v2582, %v2653
  %v2718 = vadd.f32 %v2583, %v2654
  %v2719 = vadd.f32 %v2584, %v2655
  %v2720 = vadd.f32 %v2585, %v2656
  %v2721 = vadd.f32 %v2586, %v2657
  %v2722 = vadd.f32 %v2587, %v2658
  %v2723 = vadd.f32 %v2588, %v2659
  %v2724 = vadd.f32 %v2589, %v2660
  %v2725 = vadd.f32 %v2590, %v2661
  %v2726 = vadd.f32 %v2591, %v2662
  %v2727 = vadd.f32 %v2592, %v2663
  %v2728 = vadd.f32 %v2593, %v2664
  %v2729 = vadd.f32 %v2594, %v2665
  %v2730 = vadd.f32 %v2595, %v2666
  %v2731 = vadd.f32 %v2596, %v2667
  %v2732 = vadd.f32 %v2597, %v2668
  %v2733 = vadd.f32 %v2598, %v2669
  %v2734 = vadd.f32 %v2599, %v2670
  %v2735 = vadd.f32 %v2600, %v2671
  %v2736 = vadd.f32 %v2601, %v2672
  %v2737 = vadd.f32 %v2602, %v2673
  %v2738 = vadd.f32 %v2603, %v2674
  %v2739 = vadd.f32 %v2604, %v2675
  %v2740 = vadd.f32 %v2605, %v2676
  %v2741 = vadd.f32 %v2606, %v2677
  %v2742 = vadd.f32 %v2607, %v2678
  %v2743 = vadd.f32 %v2608, %v2679
  %v2744 = vadd.f32 %v2609, %v2680
  %v2745 = vadd.f32 %v2610, %v2681
  %v2746 = vadd.f32 %v2611, %v2682
  %v2747 = vadd.f32 %v2612, %v2683
  %v2748 = vadd.f32 %v2613, %v2684
  %v2749 = vadd.f32 %v2614, %v2685
  %v2750 = vadd.f32 %v2615, %v2686
  %v2751 = vadd.f32 %v2616, %v2687
  %v2752 = vadd.f32 %v2617, %v2688
  %v2753 = vadd.f32 %v2618, %v2689
  %v2754 = vadd.f32 %v2619, %v2690
  %v2755 = vadd.f32 %v2620, %v2691
  %v2756 = vadd.f32 %v2621, %v2692
  %v2757 = vadd.f32 %v2622, %v2693
  %v2758 = vadd.f32 %v2623, %v2694
  %v2759 = vadd.f32 %v2624, %v2695
  %v2760 = vadd.f32 %v2625, %v2696
  %v2761 = vadd.f32 %v2626, %v2697
  %v2762 = vadd.f32 %v2627, %v2698
  %v2763 = vadd.f32 %v2628, %v2699
  %v2764 = vadd.f32 %v2629, %v2700
  %v2765 = vadd.f32 %v2630, %v2701
  %v2766 = vadd.f32 %v2631, %v2702
  %v2767 = vadd.f32 %v2632, %v2703
  %v2768 = vadd.f32 %v2633, %v2704
  %v2769 = vadd.f32 %v2634, %v2705
  %v2770 = vadd.f32 %v2635, %v2706
  %v2771 = vadd.f32 %v2636, %v2707
  %v2772 = vadd.f32 %v2637, %v2708
  %v2773 = vadd.f32 %v2638, %v2709
  %v2774 = vadd.f32 %v2639, %v2710
  %v2775 = vadd.f32 %v2640, %v2711
  %v2776 = vadd.f32 %v2641, %v2712
  %v2777 = vadd.f32 %v2642, %v2713
  %v2778 = vadd.f32 %v2643, %v2714
  %v2779 = vld [vmem:[#allocation2 + $0x217] sm:$0xff]
  %v2780 = vld [vmem:[#allocation2 + $0x21f] sm:$0xff]
  %v2781 = vld [vmem:[%s6 + $0x6] sm:$0x1]
  %v2782 = vlaneseq
  %v2783 = vshrl.u32 %v2782, 7
  %v2784 = vsub.s32 0, %v2783
  %v2785 = vrot.slane %v2781, %v2784
  %v2786 = vmul.f32 %v1851, %v2785
  %v2787 = vmul.f32 %v1852, %v2785
  %v2788 = vmul.f32 %v1853, %v2785
  %v2789 = vmul.f32 %v1854, %v2785
  %v2790 = vmul.f32 %v1855, %v2785
  %v2791 = vmul.f32 %v1856, %v2785
  %v2792 = vmul.f32 %v1857, %v2785
  %v2793 = vmul.f32 %v1858, %v2785
  %v2794 = vmul.f32 %v1859, %v2785
  %v2795 = vmul.f32 %v1860, %v2785
  %v2796 = vmul.f32 %v1861, %v2785
  %v2797 = vmul.f32 %v1862, %v2785
  %v2798 = vmul.f32 %v1863, %v2785
  %v2799 = vmul.f32 %v1864, %v2785
  %v2800 = vmul.f32 %v1865, %v2785
  %v2801 = vmul.f32 %v1866, %v2785
  %v2802 = vmul.f32 %v1867, %v2785
  %v2803 = vmul.f32 %v1868, %v2785
  %v2804 = vmul.f32 %v1869, %v2785
  %v2805 = vmul.f32 %v1870, %v2785
  %v2806 = vmul.f32 %v1871, %v2785
  %v2807 = vmul.f32 %v1872, %v2785
  %v2808 = vmul.f32 %v1873, %v2785
  %v2809 = vmul.f32 %v1874, %v2785
  %v2810 = vmul.f32 %v1875, %v2785
  %v2811 = vmul.f32 %v1876, %v2785
  %v2812 = vmul.f32 %v1877, %v2785
  %v2813 = vmul.f32 %v1878, %v2785
  %v2814 = vmul.f32 %v1879, %v2785
  %v2815 = vmul.f32 %v1880, %v2785
  %v2816 = vmul.f32 %v1881, %v2785
  %v2817 = vmul.f32 %v1882, %v2785
  %v2818 = vmul.f32 %v1883, %v2785
  %v2819 = vmul.f32 %v1884, %v2785
  %v2820 = vmul.f32 %v1885, %v2785
  %v2821 = vmul.f32 %v1886, %v2785
  %v2822 = vmul.f32 %v1887, %v2785
  %v2823 = vmul.f32 %v1888, %v2785
  %v2824 = vmul.f32 %v1889, %v2785
  %v2825 = vmul.f32 %v1890, %v2785
  %v2826 = vmul.f32 %v1891, %v2785
  %v2827 = vmul.f32 %v1892, %v2785
  %v2828 = vmul.f32 %v1893, %v2785
  %v2829 = vmul.f32 %v1894, %v2785
  %v2830 = vmul.f32 %v1895, %v2785
  %v2831 = vmul.f32 %v1896, %v2785
  %v2832 = vmul.f32 %v1897, %v2785
  %v2833 = vmul.f32 %v1898, %v2785
  %v2834 = vmul.f32 %v1899, %v2785
  %v2835 = vmul.f32 %v1900, %v2785
  %v2836 = vmul.f32 %v1901, %v2785
  %v2837 = vmul.f32 %v1902, %v2785
  %v2838 = vmul.f32 %v1903, %v2785
  %v2839 = vmul.f32 %v1904, %v2785
  %v2840 = vmul.f32 %v1905, %v2785
  %v2841 = vmul.f32 %v1906, %v2785
  %v2842 = vmul.f32 %v1907, %v2785
  %v2843 = vmul.f32 %v1908, %v2785
  %v2844 = vmul.f32 %v1909, %v2785
  %v2845 = vmul.f32 %v1910, %v2785
  %v2846 = vmul.f32 %v2374, %v2785
  %v2847 = vmul.f32 %v2375, %v2785
  %v2848 = vmul.f32 %v2779, %v2785
  %v2849 = vmul.f32 %v2780, %v2785
  %v2850 = vadd.f32 %v2715, %v2786
  %v2851 = vadd.f32 %v2716, %v2787
  %v2852 = vadd.f32 %v2717, %v2788
  %v2853 = vadd.f32 %v2718, %v2789
  %v2854 = vadd.f32 %v2719, %v2790
  %v2855 = vadd.f32 %v2720, %v2791
  %v2856 = vadd.f32 %v2721, %v2792
  %v2857 = vadd.f32 %v2722, %v2793
  %v2858 = vadd.f32 %v2723, %v2794
  %v2859 = vadd.f32 %v2724, %v2795
  %v2860 = vadd.f32 %v2725, %v2796
  %v2861 = vadd.f32 %v2726, %v2797
  %v2862 = vadd.f32 %v2727, %v2798
  %v2863 = vadd.f32 %v2728, %v2799
  %v2864 = vadd.f32 %v2729, %v2800
  %v2865 = vadd.f32 %v2730, %v2801
  %v2866 = vadd.f32 %v2731, %v2802
  %v2867 = vadd.f32 %v2732, %v2803
  %v2868 = vadd.f32 %v2733, %v2804
  %v2869 = vadd.f32 %v2734, %v2805
  %v2870 = vadd.f32 %v2735, %v2806
  %v2871 = vadd.f32 %v2736, %v2807
  %v2872 = vadd.f32 %v2737, %v2808
  %v2873 = vadd.f32 %v2738, %v2809
  %v2874 = vadd.f32 %v2739, %v2810
  %v2875 = vadd.f32 %v2740, %v2811
  %v2876 = vadd.f32 %v2741, %v2812
  %v2877 = vadd.f32 %v2742, %v2813
  %v2878 = vadd.f32 %v2743, %v2814
  %v2879 = vadd.f32 %v2744, %v2815
  %v2880 = vadd.f32 %v2745, %v2816
  %v2881 = vadd.f32 %v2746, %v2817
  %v2882 = vadd.f32 %v2747, %v2818
  %v2883 = vadd.f32 %v2748, %v2819
  %v2884 = vadd.f32 %v2749, %v2820
  %v2885 = vadd.f32 %v2750, %v2821
  %v2886 = vadd.f32 %v2751, %v2822
  %v2887 = vadd.f32 %v2752, %v2823
  %v2888 = vadd.f32 %v2753, %v2824
  %v2889 = vadd.f32 %v2754, %v2825
  %v2890 = vadd.f32 %v2755, %v2826
  %v2891 = vadd.f32 %v2756, %v2827
  %v2892 = vadd.f32 %v2757, %v2828
  %v2893 = vadd.f32 %v2758, %v2829
  %v2894 = vadd.f32 %v2759, %v2830
  %v2895 = vadd.f32 %v2760, %v2831
  %v2896 = vadd.f32 %v2761, %v2832
  %v2897 = vadd.f32 %v2762, %v2833
  %v2898 = vadd.f32 %v2763, %v2834
  %v2899 = vadd.f32 %v2764, %v2835
  %v2900 = vadd.f32 %v2765, %v2836
  %v2901 = vadd.f32 %v2766, %v2837
  %v2902 = vadd.f32 %v2767, %v2838
  %v2903 = vadd.f32 %v2768, %v2839
  %v2904 = vadd.f32 %v2769, %v2840
  %v2905 = vadd.f32 %v2770, %v2841
  %v2906 = vadd.f32 %v2771, %v2842
  %v2907 = vadd.f32 %v2772, %v2843
  %v2908 = vadd.f32 %v2773, %v2844
  %v2909 = vadd.f32 %v2774, %v2845
  %v2910 = vadd.f32 %v2775, %v2846
  %v2911 = vadd.f32 %v2776, %v2847
  %v2912 = vadd.f32 %v2777, %v2848
  %v2913 = vadd.f32 %v2778, %v2849
  %v2914 = vld [vmem:[#allocation2 + $0x218] sm:$0xff]
  %v2915 = vld [vmem:[#allocation2 + $0x220] sm:$0xff]
  %v2916 = vld [vmem:[%s6 + $0x7] sm:$0x1]
  %v2917 = vlaneseq
  %v2918 = vshrl.u32 %v2917, 7
  %v2919 = vsub.s32 0, %v2918
  %v2920 = vrot.slane %v2916, %v2919
  %v2921 = vmul.f32 %v1984, %v2920
  %v2922 = vmul.f32 %v1985, %v2920
  %v2923 = vmul.f32 %v1986, %v2920
  %v2924 = vmul.f32 %v1987, %v2920
  %v2925 = vmul.f32 %v1988, %v2920
  %v2926 = vmul.f32 %v1989, %v2920
  %v2927 = vmul.f32 %v1990, %v2920
  %v2928 = vmul.f32 %v1991, %v2920
  %v2929 = vmul.f32 %v1992, %v2920
  %v2930 = vmul.f32 %v1993, %v2920
  %v2931 = vmul.f32 %v1994, %v2920
  %v2932 = vmul.f32 %v1995, %v2920
  %v2933 = vmul.f32 %v1996, %v2920
  %v2934 = vmul.f32 %v1997, %v2920
  %v2935 = vmul.f32 %v1998, %v2920
  %v2936 = vmul.f32 %v1999, %v2920
  %v2937 = vmul.f32 %v2000, %v2920
  %v2938 = vmul.f32 %v2001, %v2920
  %v2939 = vmul.f32 %v2002, %v2920
  %v2940 = vmul.f32 %v2003, %v2920
  %v2941 = vmul.f32 %v2004, %v2920
  %v2942 = vmul.f32 %v2005, %v2920
  %v2943 = vmul.f32 %v2006, %v2920
  %v2944 = vmul.f32 %v2007, %v2920
  %v2945 = vmul.f32 %v2008, %v2920
  %v2946 = vmul.f32 %v2009, %v2920
  %v2947 = vmul.f32 %v2010, %v2920
  %v2948 = vmul.f32 %v2011, %v2920
  %v2949 = vmul.f32 %v2012, %v2920
  %v2950 = vmul.f32 %v2013, %v2920
  %v2951 = vmul.f32 %v2014, %v2920
  %v2952 = vmul.f32 %v2015, %v2920
  %v2953 = vmul.f32 %v2016, %v2920
  %v2954 = vmul.f32 %v2017, %v2920
  %v2955 = vmul.f32 %v2018, %v2920
  %v2956 = vmul.f32 %v2019, %v2920
  %v2957 = vmul.f32 %v2020, %v2920
  %v2958 = vmul.f32 %v2021, %v2920
  %v2959 = vmul.f32 %v2022, %v2920
  %v2960 = vmul.f32 %v2023, %v2920
  %v2961 = vmul.f32 %v2024, %v2920
  %v2962 = vmul.f32 %v2025, %v2920
  %v2963 = vmul.f32 %v2026, %v2920
  %v2964 = vmul.f32 %v2027, %v2920
  %v2965 = vmul.f32 %v2028, %v2920
  %v2966 = vmul.f32 %v2029, %v2920
  %v2967 = vmul.f32 %v2030, %v2920
  %v2968 = vmul.f32 %v2031, %v2920
  %v2969 = vmul.f32 %v2032, %v2920
  %v2970 = vmul.f32 %v2033, %v2920
  %v2971 = vmul.f32 %v2034, %v2920
  %v2972 = vmul.f32 %v2035, %v2920
  %v2973 = vmul.f32 %v2036, %v2920
  %v2974 = vmul.f32 %v2037, %v2920
  %v2975 = vmul.f32 %v2038, %v2920
  %v2976 = vmul.f32 %v2039, %v2920
  %v2977 = vmul.f32 %v2040, %v2920
  %v2978 = vmul.f32 %v2041, %v2920
  %v2979 = vmul.f32 %v2042, %v2920
  %v2980 = vmul.f32 %v2043, %v2920
  %v2981 = vmul.f32 %v2509, %v2920
  %v2982 = vmul.f32 %v2510, %v2920
  %v2983 = vmul.f32 %v2914, %v2920
  %v2984 = vmul.f32 %v2915, %v2920
  %v2985 = vadd.f32 %v2850, %v2921
  %v2986 = vadd.f32 %v2851, %v2922
  %v2987 = vadd.f32 %v2852, %v2923
  %v2988 = vadd.f32 %v2853, %v2924
  %v2989 = vadd.f32 %v2854, %v2925
  %v2990 = vadd.f32 %v2855, %v2926
  %v2991 = vadd.f32 %v2856, %v2927
  %v2992 = vadd.f32 %v2857, %v2928
  %v2993 = vadd.f32 %v2858, %v2929
  %v2994 = vadd.f32 %v2859, %v2930
  %v2995 = vadd.f32 %v2860, %v2931
  %v2996 = vadd.f32 %v2861, %v2932
  %v2997 = vadd.f32 %v2862, %v2933
  %v2998 = vadd.f32 %v2863, %v2934
  %v2999 = vadd.f32 %v2864, %v2935
  %v3000 = vadd.f32 %v2865, %v2936
  %v3001 = vadd.f32 %v2866, %v2937
  %v3002 = vadd.f32 %v2867, %v2938
  %v3003 = vadd.f32 %v2868, %v2939
  %v3004 = vadd.f32 %v2869, %v2940
  %v3005 = vadd.f32 %v2870, %v2941
  %v3006 = vadd.f32 %v2871, %v2942
  %v3007 = vadd.f32 %v2872, %v2943
  %v3008 = vadd.f32 %v2873, %v2944
  %v3009 = vadd.f32 %v2874, %v2945
  %v3010 = vadd.f32 %v2875, %v2946
  %v3011 = vadd.f32 %v2876, %v2947
  %v3012 = vadd.f32 %v2877, %v2948
  %v3013 = vadd.f32 %v2878, %v2949
  %v3014 = vadd.f32 %v2879, %v2950
  %v3015 = vadd.f32 %v2880, %v2951
  %v3016 = vadd.f32 %v2881, %v2952
  %v3017 = vadd.f32 %v2882, %v2953
  %v3018 = vadd.f32 %v2883, %v2954
  %v3019 = vadd.f32 %v2884, %v2955
  %v3020 = vadd.f32 %v2885, %v2956
  %v3021 = vadd.f32 %v2886, %v2957
  %v3022 = vadd.f32 %v2887, %v2958
  %v3023 = vadd.f32 %v2888, %v2959
  %v3024 = vadd.f32 %v2889, %v2960
  %v3025 = vadd.f32 %v2890, %v2961
  %v3026 = vadd.f32 %v2891, %v2962
  %v3027 = vadd.f32 %v2892, %v2963
  %v3028 = vadd.f32 %v2893, %v2964
  %v3029 = vadd.f32 %v2894, %v2965
  %v3030 = vadd.f32 %v2895, %v2966
  %v3031 = vadd.f32 %v2896, %v2967
  %v3032 = vadd.f32 %v2897, %v2968
  %v3033 = vadd.f32 %v2898, %v2969
  %v3034 = vadd.f32 %v2899, %v2970
  %v3035 = vadd.f32 %v2900, %v2971
  %v3036 = vadd.f32 %v2901, %v2972
  %v3037 = vadd.f32 %v2902, %v2973
  %v3038 = vadd.f32 %v2903, %v2974
  %v3039 = vadd.f32 %v2904, %v2975
  %v3040 = vadd.f32 %v2905, %v2976
  %v3041 = vadd.f32 %v2906, %v2977
  %v3042 = vadd.f32 %v2907, %v2978
  %v3043 = vadd.f32 %v2908, %v2979
  %v3044 = vadd.f32 %v2909, %v2980
  %v3045 = vadd.f32 %v2910, %v2981
  %v3046 = vadd.f32 %v2911, %v2982
  %v3047 = vadd.f32 %v2912, %v2983
  %v3048 = vadd.f32 %v2913, %v2984
  %v3049 = vld [vmem:[#allocation2 + $0x219] sm:$0xff]
  %v3050 = vld [vmem:[#allocation2 + $0x221] sm:$0xff]
  %v3051 = vld [vmem:[%s6 + $0x8] sm:$0x1]
  %v3052 = vlaneseq
  %v3053 = vshrl.u32 %v3052, 7
  %v3054 = vsub.s32 0, %v3053
  %v3055 = vrot.slane %v3051, %v3054
  %v3056 = vmul.f32 %v2181, %v3055
  %v3057 = vmul.f32 %v2182, %v3055
  %v3058 = vmul.f32 %v2183, %v3055
  %v3059 = vmul.f32 %v2184, %v3055
  %v3060 = vmul.f32 %v2185, %v3055
  %v3061 = vmul.f32 %v2186, %v3055
  %v3062 = vmul.f32 %v2187, %v3055
  %v3063 = vmul.f32 %v2188, %v3055
  %v3064 = vmul.f32 %v2189, %v3055
  %v3065 = vmul.f32 %v2190, %v3055
  %v3066 = vmul.f32 %v2191, %v3055
  %v3067 = vmul.f32 %v2192, %v3055
  %v3068 = vmul.f32 %v2193, %v3055
  %v3069 = vmul.f32 %v2194, %v3055
  %v3070 = vmul.f32 %v2195, %v3055
  %v3071 = vmul.f32 %v2196, %v3055
  %v3072 = vmul.f32 %v2197, %v3055
  %v3073 = vmul.f32 %v2198, %v3055
  %v3074 = vmul.f32 %v2199, %v3055
  %v3075 = vmul.f32 %v2200, %v3055
  %v3076 = vmul.f32 %v2201, %v3055
  %v3077 = vmul.f32 %v2202, %v3055
  %v3078 = vmul.f32 %v2203, %v3055
  %v3079 = vmul.f32 %v2204, %v3055
  %v3080 = vmul.f32 %v2205, %v3055
  %v3081 = vmul.f32 %v2206, %v3055
  %v3082 = vmul.f32 %v2207, %v3055
  %v3083 = vmul.f32 %v2208, %v3055
  %v3084 = vmul.f32 %v2209, %v3055
  %v3085 = vmul.f32 %v2210, %v3055
  %v3086 = vmul.f32 %v2211, %v3055
  %v3087 = vmul.f32 %v2212, %v3055
  %v3088 = vmul.f32 %v2213, %v3055
  %v3089 = vmul.f32 %v2214, %v3055
  %v3090 = vmul.f32 %v2215, %v3055
  %v3091 = vmul.f32 %v2216, %v3055
  %v3092 = vmul.f32 %v2217, %v3055
  %v3093 = vmul.f32 %v2218, %v3055
  %v3094 = vmul.f32 %v2219, %v3055
  %v3095 = vmul.f32 %v2220, %v3055
  %v3096 = vmul.f32 %v2221, %v3055
  %v3097 = vmul.f32 %v2222, %v3055
  %v3098 = vmul.f32 %v2223, %v3055
  %v3099 = vmul.f32 %v2224, %v3055
  %v3100 = vmul.f32 %v2225, %v3055
  %v3101 = vmul.f32 %v2226, %v3055
  %v3102 = vmul.f32 %v2227, %v3055
  %v3103 = vmul.f32 %v2228, %v3055
  %v3104 = vmul.f32 %v2229, %v3055
  %v3105 = vmul.f32 %v2230, %v3055
  %v3106 = vmul.f32 %v2231, %v3055
  %v3107 = vmul.f32 %v2232, %v3055
  %v3108 = vmul.f32 %v2233, %v3055
  %v3109 = vmul.f32 %v2234, %v3055
  %v3110 = vmul.f32 %v2235, %v3055
  %v3111 = vmul.f32 %v2236, %v3055
  %v3112 = vmul.f32 %v2237, %v3055
  %v3113 = vmul.f32 %v2238, %v3055
  %v3114 = vmul.f32 %v2239, %v3055
  %v3115 = vmul.f32 %v2240, %v3055
  %v3116 = vmul.f32 %v2644, %v3055
  %v3117 = vmul.f32 %v2645, %v3055
  %v3118 = vmul.f32 %v3049, %v3055
  %v3119 = vmul.f32 %v3050, %v3055
  %v3120 = vadd.f32 %v2985, %v3056
  %v3121 = vadd.f32 %v2986, %v3057
  %v3122 = vadd.f32 %v2987, %v3058
  %v3123 = vadd.f32 %v2988, %v3059
  %v3124 = vadd.f32 %v2989, %v3060
  %v3125 = vadd.f32 %v2990, %v3061
  %v3126 = vadd.f32 %v2991, %v3062
  %v3127 = vadd.f32 %v2992, %v3063
  %v3128 = vadd.f32 %v2993, %v3064
  %v3129 = vadd.f32 %v2994, %v3065
  %v3130 = vadd.f32 %v2995, %v3066
  %v3131 = vadd.f32 %v2996, %v3067
  %v3132 = vadd.f32 %v2997, %v3068
  %v3133 = vadd.f32 %v2998, %v3069
  %v3134 = vadd.f32 %v2999, %v3070
  %v3135 = vadd.f32 %v3000, %v3071
  %v3136 = vadd.f32 %v3001, %v3072
  %v3137 = vadd.f32 %v3002, %v3073
  %v3138 = vadd.f32 %v3003, %v3074
  %v3139 = vadd.f32 %v3004, %v3075
  %v3140 = vadd.f32 %v3005, %v3076
  %v3141 = vadd.f32 %v3006, %v3077
  %v3142 = vadd.f32 %v3007, %v3078
  %v3143 = vadd.f32 %v3008, %v3079
  %v3144 = vadd.f32 %v3009, %v3080
  %v3145 = vadd.f32 %v3010, %v3081
  %v3146 = vadd.f32 %v3011, %v3082
  %v3147 = vadd.f32 %v3012, %v3083
  %v3148 = vadd.f32 %v3013, %v3084
  %v3149 = vadd.f32 %v3014, %v3085
  %v3150 = vadd.f32 %v3015, %v3086
  %v3151 = vadd.f32 %v3016, %v3087
  %v3152 = vadd.f32 %v3017, %v3088
  %v3153 = vadd.f32 %v3018, %v3089
  %v3154 = vadd.f32 %v3019, %v3090
  %v3155 = vadd.f32 %v3020, %v3091
  %v3156 = vadd.f32 %v3021, %v3092
  %v3157 = vadd.f32 %v3022, %v3093
  %v3158 = vadd.f32 %v3023, %v3094
  %v3159 = vadd.f32 %v3024, %v3095
  %v3160 = vadd.f32 %v3025, %v3096
  %v3161 = vadd.f32 %v3026, %v3097
  %v3162 = vadd.f32 %v3027, %v3098
  %v3163 = vadd.f32 %v3028, %v3099
  %v3164 = vadd.f32 %v3029, %v3100
  %v3165 = vadd.f32 %v3030, %v3101
  %v3166 = vadd.f32 %v3031, %v3102
  %v3167 = vadd.f32 %v3032, %v3103
  %v3168 = vadd.f32 %v3033, %v3104
  %v3169 = vadd.f32 %v3034, %v3105
  %v3170 = vadd.f32 %v3035, %v3106
  %v3171 = vadd.f32 %v3036, %v3107
  %v3172 = vadd.f32 %v3037, %v3108
  %v3173 = vadd.f32 %v3038, %v3109
  %v3174 = vadd.f32 %v3039, %v3110
  %v3175 = vadd.f32 %v3040, %v3111
  %v3176 = vadd.f32 %v3041, %v3112
  %v3177 = vadd.f32 %v3042, %v3113
  %v3178 = vadd.f32 %v3043, %v3114
  %v3179 = vadd.f32 %v3044, %v3115
  %v3180 = vadd.f32 %v3045, %v3116
  %v3181 = vadd.f32 %v3046, %v3117
  %v3182 = vadd.f32 %v3047, %v3118
  %v3183 = vadd.f32 %v3048, %v3119
  %v3184 = vmul.f32 %v3120, %v876
  %v3185 = vmul.f32 %v3121, %v881
  %v3186 = vmul.f32 %v3122, %v886
  %v3187 = vmul.f32 %v3123, %v891
  %v3188 = vmul.f32 %v3124, %v896
  %v3189 = vmul.f32 %v3125, %v901
  %v3190 = vmul.f32 %v3126, %v906
  %v3191 = vmul.f32 %v3127, %v911
  %v3192 = vmul.f32 %v3128, %v916
  %v3193 = vmul.f32 %v3129, %v921
  %v3194 = vmul.f32 %v3130, %v926
  %v3195 = vmul.f32 %v3131, %v931
  %v3196 = vmul.f32 %v3132, %v936
  %v3197 = vmul.f32 %v3133, %v941
  %v3198 = vmul.f32 %v3134, %v946
  %v3199 = vmul.f32 %v3135, %v951
  %v3200 = vmul.f32 %v3136, %v956
  %v3201 = vmul.f32 %v3137, %v961
  %v3202 = vmul.f32 %v3138, %v966
  %v3203 = vmul.f32 %v3139, %v971
  %v3204 = vmul.f32 %v3140, %v976
  %v3205 = vmul.f32 %v3141, %v981
  %v3206 = vmul.f32 %v3142, %v986
  %v3207 = vmul.f32 %v3143, %v991
  %v3208 = vmul.f32 %v3144, %v996
  %v3209 = vmul.f32 %v3145, %v1001
  %v3210 = vmul.f32 %v3146, %v1006
  %v3211 = vmul.f32 %v3147, %v1011
  %v3212 = vmul.f32 %v3148, %v1016
  %v3213 = vmul.f32 %v3149, %v1021
  %v3214 = vmul.f32 %v3150, %v1026
  %v3215 = vmul.f32 %v3151, %v1031
  %v3216 = vmul.f32 %v3152, %v1036
  %v3217 = vmul.f32 %v3153, %v1041
  %v3218 = vmul.f32 %v3154, %v1046
  %v3219 = vmul.f32 %v3155, %v1051
  %v3220 = vmul.f32 %v3156, %v1056
  %v3221 = vmul.f32 %v3157, %v1061
  %v3222 = vmul.f32 %v3158, %v1066
  %v3223 = vmul.f32 %v3159, %v1071
  %v3224 = vmul.f32 %v3160, %v1076
  %v3225 = vmul.f32 %v3161, %v1081
  %v3226 = vmul.f32 %v3162, %v1086
  %v3227 = vmul.f32 %v3163, %v1091
  %v3228 = vmul.f32 %v3164, %v1096
  %v3229 = vmul.f32 %v3165, %v1101
  %v3230 = vmul.f32 %v3166, %v1106
  %v3231 = vmul.f32 %v3167, %v1111
  %v3232 = vmul.f32 %v3168, %v1116
  %v3233 = vmul.f32 %v3169, %v1121
  %v3234 = vmul.f32 %v3170, %v1126
  %v3235 = vmul.f32 %v3171, %v1131
  %v3236 = vmul.f32 %v3172, %v1136
  %v3237 = vmul.f32 %v3173, %v1141
  %v3238 = vmul.f32 %v3174, %v1146
  %v3239 = vmul.f32 %v3175, %v1151
  %v3240 = vmul.f32 %v3176, %v1156
  %v3241 = vmul.f32 %v3177, %v1161
  %v3242 = vmul.f32 %v3178, %v1166
  %v3243 = vmul.f32 %v3179, %v1171
  %v3244 = vmul.f32 %v3180, %v1176
  %v3245 = vmul.f32 %v3181, %v1181
  %v3246 = vmul.f32 %v3182, %v1186
  %v3247 = vmul.f32 %v3183, %v1191
  %v3248 = vadd.f32 %v3184, %v3185
  %v3249 = vadd.f32 %v3248, %v3186
  %v3250 = vadd.f32 %v3249, %v3187
  %v3251 = vadd.f32 %v3250, %v3188
  %v3252 = vadd.f32 %v3251, %v3189
  %v3253 = vadd.f32 %v3252, %v3190
  %v3254 = vadd.f32 %v3253, %v3191
  %v3255 = vadd.f32 %v3254, %v3192
  %v3256 = vadd.f32 %v3255, %v3193
  %v3257 = vadd.f32 %v3256, %v3194
  %v3258 = vadd.f32 %v3257, %v3195
  %v3259 = vadd.f32 %v3258, %v3196
  %v3260 = vadd.f32 %v3259, %v3197
  %v3261 = vadd.f32 %v3260, %v3198
  %v3262 = vadd.f32 %v3261, %v3199
  %v3263 = vadd.f32 %v3262, %v3200
  %v3264 = vadd.f32 %v3263, %v3201
  %v3265 = vadd.f32 %v3264, %v3202
  %v3266 = vadd.f32 %v3265, %v3203
  %v3267 = vadd.f32 %v3266, %v3204
  %v3268 = vadd.f32 %v3267, %v3205
  %v3269 = vadd.f32 %v3268, %v3206
  %v3270 = vadd.f32 %v3269, %v3207
  %v3271 = vadd.f32 %v3270, %v3208
  %v3272 = vadd.f32 %v3271, %v3209
  %v3273 = vadd.f32 %v3272, %v3210
  %v3274 = vadd.f32 %v3273, %v3211
  %v3275 = vadd.f32 %v3274, %v3212
  %v3276 = vadd.f32 %v3275, %v3213
  %v3277 = vadd.f32 %v3276, %v3214
  %v3278 = vadd.f32 %v3277, %v3215
  %v3279 = vadd.f32 %v3278, %v3216
  %v3280 = vadd.f32 %v3279, %v3217
  %v3281 = vadd.f32 %v3280, %v3218
  %v3282 = vadd.f32 %v3281, %v3219
  %v3283 = vadd.f32 %v3282, %v3220
  %v3284 = vadd.f32 %v3283, %v3221
  %v3285 = vadd.f32 %v3284, %v3222
  %v3286 = vadd.f32 %v3285, %v3223
  %v3287 = vadd.f32 %v3286, %v3224
  %v3288 = vadd.f32 %v3287, %v3225
  %v3289 = vadd.f32 %v3288, %v3226
  %v3290 = vadd.f32 %v3289, %v3227
  %v3291 = vadd.f32 %v3290, %v3228
  %v3292 = vadd.f32 %v3291, %v3229
  %v3293 = vadd.f32 %v3292, %v3230
  %v3294 = vadd.f32 %v3293, %v3231
  %v3295 = vadd.f32 %v3294, %v3232
  %v3296 = vadd.f32 %v3295, %v3233
  %v3297 = vadd.f32 %v3296, %v3234
  %v3298 = vadd.f32 %v3297, %v3235
  %v3299 = vadd.f32 %v3298, %v3236
  %v3300 = vadd.f32 %v3299, %v3237
  %v3301 = vadd.f32 %v3300, %v3238
  %v3302 = vadd.f32 %v3301, %v3239
  %v3303 = vadd.f32 %v3302, %v3240
  %v3304 = vadd.f32 %v3303, %v3241
  %v3305 = vadd.f32 %v3304, %v3242
  %v3306 = vadd.f32 %v3305, %v3243
  %v3307 = vadd.f32 %v3306, %v3244
  %v3308 = vadd.f32 %v3307, %v3245
  %v3309 = vadd.f32 %v3308, %v3246
  %v3310 = vadd.f32 %v3309, %v3247
  %v3311 = vrot.slane %v3310, 4
  %v3312 = vadd.f32 %v3310, %v3311
  %v3313 = vrot.slane %v3312, 2
  %v3314 = vadd.f32 %v3312, %v3313
  %v3315 = vrot.slane %v3314, 1
  %v3316 = vadd.f32 %v3314, %v3315
  %v3317 = vmul.f32 %v3316, 0.0025510204
  %v3318 = vsub.f32 %v3120, %v3317
  %v3319 = vsub.f32 %v3121, %v3317
  %v3320 = vsub.f32 %v3122, %v3317
  %v3321 = vsub.f32 %v3123, %v3317
  %v3322 = vsub.f32 %v3124, %v3317
  %v3323 = vsub.f32 %v3125, %v3317
  %v3324 = vsub.f32 %v3126, %v3317
  %v3325 = vsub.f32 %v3127, %v3317
  %v3326 = vsub.f32 %v3128, %v3317
  %v3327 = vsub.f32 %v3129, %v3317
  %v3328 = vsub.f32 %v3130, %v3317
  %v3329 = vsub.f32 %v3131, %v3317
  %v3330 = vsub.f32 %v3132, %v3317
  %v3331 = vsub.f32 %v3133, %v3317
  %v3332 = vsub.f32 %v3134, %v3317
  %v3333 = vsub.f32 %v3135, %v3317
  %v3334 = vsub.f32 %v3136, %v3317
  %v3335 = vsub.f32 %v3137, %v3317
  %v3336 = vsub.f32 %v3138, %v3317
  %v3337 = vsub.f32 %v3139, %v3317
  %v3338 = vsub.f32 %v3140, %v3317
  %v3339 = vsub.f32 %v3141, %v3317
  %v3340 = vsub.f32 %v3142, %v3317
  %v3341 = vsub.f32 %v3143, %v3317
  %v3342 = vsub.f32 %v3144, %v3317
  %v3343 = vsub.f32 %v3145, %v3317
  %v3344 = vsub.f32 %v3146, %v3317
  %v3345 = vsub.f32 %v3147, %v3317
  %v3346 = vsub.f32 %v3148, %v3317
  %v3347 = vsub.f32 %v3149, %v3317
  %v3348 = vsub.f32 %v3150, %v3317
  %v3349 = vsub.f32 %v3151, %v3317
  %v3350 = vsub.f32 %v3152, %v3317
  %v3351 = vsub.f32 %v3153, %v3317
  %v3352 = vsub.f32 %v3154, %v3317
  %v3353 = vsub.f32 %v3155, %v3317
  %v3354 = vsub.f32 %v3156, %v3317
  %v3355 = vsub.f32 %v3157, %v3317
  %v3356 = vsub.f32 %v3158, %v3317
  %v3357 = vsub.f32 %v3159, %v3317
  %v3358 = vsub.f32 %v3160, %v3317
  %v3359 = vsub.f32 %v3161, %v3317
  %v3360 = vsub.f32 %v3162, %v3317
  %v3361 = vsub.f32 %v3163, %v3317
  %v3362 = vsub.f32 %v3164, %v3317
  %v3363 = vsub.f32 %v3165, %v3317
  %v3364 = vsub.f32 %v3166, %v3317
  %v3365 = vsub.f32 %v3167, %v3317
  %v3366 = vsub.f32 %v3168, %v3317
  %v3367 = vsub.f32 %v3169, %v3317
  %v3368 = vsub.f32 %v3170, %v3317
  %v3369 = vsub.f32 %v3171, %v3317
  %v3370 = vsub.f32 %v3172, %v3317
  %v3371 = vsub.f32 %v3173, %v3317
  %v3372 = vsub.f32 %v3174, %v3317
  %v3373 = vsub.f32 %v3175, %v3317
  %v3374 = vsub.f32 %v3176, %v3317
  %v3375 = vsub.f32 %v3177, %v3317
  %v3376 = vsub.f32 %v3178, %v3317
  %v3377 = vsub.f32 %v3179, %v3317
  %v3378 = vsub.f32 %v3180, %v3317
  %v3379 = vsub.f32 %v3181, %v3317
  %v3380 = vsub.f32 %v3182, %v3317
  %v3381 = vsub.f32 %v3183, %v3317
  %v3382 = vmul.f32 %v3318, %v876
  %v3383 = vmul.f32 %v3319, %v881
  %v3384 = vmul.f32 %v3320, %v886
  %v3385 = vmul.f32 %v3321, %v891
  %v3386 = vmul.f32 %v3322, %v896
  %v3387 = vmul.f32 %v3323, %v901
  %v3388 = vmul.f32 %v3324, %v906
  %v3389 = vmul.f32 %v3325, %v911
  %v3390 = vmul.f32 %v3326, %v916
  %v3391 = vmul.f32 %v3327, %v921
  %v3392 = vmul.f32 %v3328, %v926
  %v3393 = vmul.f32 %v3329, %v931
  %v3394 = vmul.f32 %v3330, %v936
  %v3395 = vmul.f32 %v3331, %v941
  %v3396 = vmul.f32 %v3332, %v946
  %v3397 = vmul.f32 %v3333, %v951
  %v3398 = vmul.f32 %v3334, %v956
  %v3399 = vmul.f32 %v3335, %v961
  %v3400 = vmul.f32 %v3336, %v966
  %v3401 = vmul.f32 %v3337, %v971
  %v3402 = vmul.f32 %v3338, %v976
  %v3403 = vmul.f32 %v3339, %v981
  %v3404 = vmul.f32 %v3340, %v986
  %v3405 = vmul.f32 %v3341, %v991
  %v3406 = vmul.f32 %v3342, %v996
  %v3407 = vmul.f32 %v3343, %v1001
  %v3408 = vmul.f32 %v3344, %v1006
  %v3409 = vmul.f32 %v3345, %v1011
  %v3410 = vmul.f32 %v3346, %v1016
  %v3411 = vmul.f32 %v3347, %v1021
  %v3412 = vmul.f32 %v3348, %v1026
  %v3413 = vmul.f32 %v3349, %v1031
  %v3414 = vmul.f32 %v3350, %v1036
  %v3415 = vmul.f32 %v3351, %v1041
  %v3416 = vmul.f32 %v3352, %v1046
  %v3417 = vmul.f32 %v3353, %v1051
  %v3418 = vmul.f32 %v3354, %v1056
  %v3419 = vmul.f32 %v3355, %v1061
  %v3420 = vmul.f32 %v3356, %v1066
  %v3421 = vmul.f32 %v3357, %v1071
  %v3422 = vmul.f32 %v3358, %v1076
  %v3423 = vmul.f32 %v3359, %v1081
  %v3424 = vmul.f32 %v3360, %v1086
  %v3425 = vmul.f32 %v3361, %v1091
  %v3426 = vmul.f32 %v3362, %v1096
  %v3427 = vmul.f32 %v3363, %v1101
  %v3428 = vmul.f32 %v3364, %v1106
  %v3429 = vmul.f32 %v3365, %v1111
  %v3430 = vmul.f32 %v3366, %v1116
  %v3431 = vmul.f32 %v3367, %v1121
  %v3432 = vmul.f32 %v3368, %v1126
  %v3433 = vmul.f32 %v3369, %v1131
  %v3434 = vmul.f32 %v3370, %v1136
  %v3435 = vmul.f32 %v3371, %v1141
  %v3436 = vmul.f32 %v3372, %v1146
  %v3437 = vmul.f32 %v3373, %v1151
  %v3438 = vmul.f32 %v3374, %v1156
  %v3439 = vmul.f32 %v3375, %v1161
  %v3440 = vmul.f32 %v3376, %v1166
  %v3441 = vmul.f32 %v3377, %v1171
  %v3442 = vmul.f32 %v3378, %v1176
  %v3443 = vmul.f32 %v3379, %v1181
  %v3444 = vmul.f32 %v3380, %v1186
  %v3445 = vmul.f32 %v3381, %v1191
  %v3446 = vmul.f32 %v3382, %v3382
  %v3447 = vmul.f32 %v3383, %v3383
  %v3448 = vmul.f32 %v3384, %v3384
  %v3449 = vmul.f32 %v3385, %v3385
  %v3450 = vmul.f32 %v3386, %v3386
  %v3451 = vmul.f32 %v3387, %v3387
  %v3452 = vmul.f32 %v3388, %v3388
  %v3453 = vmul.f32 %v3389, %v3389
  %v3454 = vmul.f32 %v3390, %v3390
  %v3455 = vmul.f32 %v3391, %v3391
  %v3456 = vmul.f32 %v3392, %v3392
  %v3457 = vmul.f32 %v3393, %v3393
  %v3458 = vmul.f32 %v3394, %v3394
  %v3459 = vmul.f32 %v3395, %v3395
  %v3460 = vmul.f32 %v3396, %v3396
  %v3461 = vmul.f32 %v3397, %v3397
  %v3462 = vmul.f32 %v3398, %v3398
  %v3463 = vmul.f32 %v3399, %v3399
  %v3464 = vmul.f32 %v3400, %v3400
  %v3465 = vmul.f32 %v3401, %v3401
  %v3466 = vmul.f32 %v3402, %v3402
  %v3467 = vmul.f32 %v3403, %v3403
  %v3468 = vmul.f32 %v3404, %v3404
  %v3469 = vmul.f32 %v3405, %v3405
  %v3470 = vmul.f32 %v3406, %v3406
  %v3471 = vmul.f32 %v3407, %v3407
  %v3472 = vmul.f32 %v3408, %v3408
  %v3473 = vmul.f32 %v3409, %v3409
  %v3474 = vmul.f32 %v3410, %v3410
  %v3475 = vmul.f32 %v3411, %v3411
  %v3476 = vmul.f32 %v3412, %v3412
  %v3477 = vmul.f32 %v3413, %v3413
  %v3478 = vmul.f32 %v3414, %v3414
  %v3479 = vmul.f32 %v3415, %v3415
  %v3480 = vmul.f32 %v3416, %v3416
  %v3481 = vmul.f32 %v3417, %v3417
  %v3482 = vmul.f32 %v3418, %v3418
  %v3483 = vmul.f32 %v3419, %v3419
  %v3484 = vmul.f32 %v3420, %v3420
  %v3485 = vmul.f32 %v3421, %v3421
  %v3486 = vmul.f32 %v3422, %v3422
  %v3487 = vmul.f32 %v3423, %v3423
  %v3488 = vmul.f32 %v3424, %v3424
  %v3489 = vmul.f32 %v3425, %v3425
  %v3490 = vmul.f32 %v3426, %v3426
  %v3491 = vmul.f32 %v3427, %v3427
  %v3492 = vmul.f32 %v3428, %v3428
  %v3493 = vmul.f32 %v3429, %v3429
  %v3494 = vmul.f32 %v3430, %v3430
  %v3495 = vmul.f32 %v3431, %v3431
  %v3496 = vmul.f32 %v3432, %v3432
  %v3497 = vmul.f32 %v3433, %v3433
  %v3498 = vmul.f32 %v3434, %v3434
  %v3499 = vmul.f32 %v3435, %v3435
  %v3500 = vmul.f32 %v3436, %v3436
  %v3501 = vmul.f32 %v3437, %v3437
  %v3502 = vmul.f32 %v3438, %v3438
  %v3503 = vmul.f32 %v3439, %v3439
  %v3504 = vmul.f32 %v3440, %v3440
  %v3505 = vmul.f32 %v3441, %v3441
  %v3506 = vmul.f32 %v3442, %v3442
  %v3507 = vmul.f32 %v3443, %v3443
  %v3508 = vmul.f32 %v3444, %v3444
  %v3509 = vmul.f32 %v3445, %v3445
  %v3510 = vadd.f32 %v3446, %v3447
  %v3511 = vadd.f32 %v3510, %v3448
  %v3512 = vadd.f32 %v3511, %v3449
  %v3513 = vadd.f32 %v3512, %v3450
  %v3514 = vadd.f32 %v3513, %v3451
  %v3515 = vadd.f32 %v3514, %v3452
  %v3516 = vadd.f32 %v3515, %v3453
  %v3517 = vadd.f32 %v3516, %v3454
  %v3518 = vadd.f32 %v3517, %v3455
  %v3519 = vadd.f32 %v3518, %v3456
  %v3520 = vadd.f32 %v3519, %v3457
  %v3521 = vadd.f32 %v3520, %v3458
  %v3522 = vadd.f32 %v3521, %v3459
  %v3523 = vadd.f32 %v3522, %v3460
  %v3524 = vadd.f32 %v3523, %v3461
  %v3525 = vadd.f32 %v3524, %v3462
  %v3526 = vadd.f32 %v3525, %v3463
  %v3527 = vadd.f32 %v3526, %v3464
  %v3528 = vadd.f32 %v3527, %v3465
  %v3529 = vadd.f32 %v3528, %v3466
  %v3530 = vadd.f32 %v3529, %v3467
  %v3531 = vadd.f32 %v3530, %v3468
  %v3532 = vadd.f32 %v3531, %v3469
  %v3533 = vadd.f32 %v3532, %v3470
  %v3534 = vadd.f32 %v3533, %v3471
  %v3535 = vadd.f32 %v3534, %v3472
  %v3536 = vadd.f32 %v3535, %v3473
  %v3537 = vadd.f32 %v3536, %v3474
  %v3538 = vadd.f32 %v3537, %v3475
  %v3539 = vadd.f32 %v3538, %v3476
  %v3540 = vadd.f32 %v3539, %v3477
  %v3541 = vadd.f32 %v3540, %v3478
  %v3542 = vadd.f32 %v3541, %v3479
  %v3543 = vadd.f32 %v3542, %v3480
  %v3544 = vadd.f32 %v3543, %v3481
  %v3545 = vadd.f32 %v3544, %v3482
  %v3546 = vadd.f32 %v3545, %v3483
  %v3547 = vadd.f32 %v3546, %v3484
  %v3548 = vadd.f32 %v3547, %v3485
  %v3549 = vadd.f32 %v3548, %v3486
  %v3550 = vadd.f32 %v3549, %v3487
  %v3551 = vadd.f32 %v3550, %v3488
  %v3552 = vadd.f32 %v3551, %v3489
  %v3553 = vadd.f32 %v3552, %v3490
  %v3554 = vadd.f32 %v3553, %v3491
  %v3555 = vadd.f32 %v3554, %v3492
  %v3556 = vadd.f32 %v3555, %v3493
  %v3557 = vadd.f32 %v3556, %v3494
  %v3558 = vadd.f32 %v3557, %v3495
  %v3559 = vadd.f32 %v3558, %v3496
  %v3560 = vadd.f32 %v3559, %v3497
  %v3561 = vadd.f32 %v3560, %v3498
  %v3562 = vadd.f32 %v3561, %v3499
  %v3563 = vadd.f32 %v3562, %v3500
  %v3564 = vadd.f32 %v3563, %v3501
  %v3565 = vadd.f32 %v3564, %v3502
  %v3566 = vadd.f32 %v3565, %v3503
  %v3567 = vadd.f32 %v3566, %v3504
  %v3568 = vadd.f32 %v3567, %v3505
  %v3569 = vadd.f32 %v3568, %v3506
  %v3570 = vadd.f32 %v3569, %v3507
  %v3571 = vadd.f32 %v3570, %v3508
  %v3572 = vadd.f32 %v3571, %v3509
  %v3573 = vrot.slane %v3572, 4
  %v3574 = vadd.f32 %v3572, %v3573
  %v3575 = vrot.slane %v3574, 2
  %v3576 = vadd.f32 %v3574, %v3575
  %v3577 = vrot.slane %v3576, 1
  %v3578 = vadd.f32 %v3576, %v3577
  %v3579 = vmul.f32 %v3578, 0.0025510204
  %v3580 = vadd.f32 %v3579, 1e-05
  %v3581 = vrsqrt.pop %v3580
  %v3582 = vmul.f32 %v3318, %v3581
  %v3583 = vmul.f32 %v3319, %v3581
  %v3584 = vmul.f32 %v3320, %v3581
  %v3585 = vmul.f32 %v3321, %v3581
  %v3586 = vmul.f32 %v3322, %v3581
  %v3587 = vmul.f32 %v3323, %v3581
  %v3588 = vmul.f32 %v3324, %v3581
  %v3589 = vmul.f32 %v3325, %v3581
  %v3590 = vmul.f32 %v3326, %v3581
  %v3591 = vmul.f32 %v3327, %v3581
  %v3592 = vmul.f32 %v3328, %v3581
  %v3593 = vmul.f32 %v3329, %v3581
  %v3594 = vmul.f32 %v3330, %v3581
  %v3595 = vmul.f32 %v3331, %v3581
  %v3596 = vmul.f32 %v3332, %v3581
  %v3597 = vmul.f32 %v3333, %v3581
  %v3598 = vmul.f32 %v3334, %v3581
  %v3599 = vmul.f32 %v3335, %v3581
  %v3600 = vmul.f32 %v3336, %v3581
  %v3601 = vmul.f32 %v3337, %v3581
  %v3602 = vmul.f32 %v3338, %v3581
  %v3603 = vmul.f32 %v3339, %v3581
  %v3604 = vmul.f32 %v3340, %v3581
  %v3605 = vmul.f32 %v3341, %v3581
  %v3606 = vmul.f32 %v3342, %v3581
  %v3607 = vmul.f32 %v3343, %v3581
  %v3608 = vmul.f32 %v3344, %v3581
  %v3609 = vmul.f32 %v3345, %v3581
  %v3610 = vmul.f32 %v3346, %v3581
  %v3611 = vmul.f32 %v3347, %v3581
  %v3612 = vmul.f32 %v3348, %v3581
  %v3613 = vmul.f32 %v3349, %v3581
  %v3614 = vmul.f32 %v3350, %v3581
  %v3615 = vmul.f32 %v3351, %v3581
  %v3616 = vmul.f32 %v3352, %v3581
  %v3617 = vmul.f32 %v3353, %v3581
  %v3618 = vmul.f32 %v3354, %v3581
  %v3619 = vmul.f32 %v3355, %v3581
  %v3620 = vmul.f32 %v3356, %v3581
  %v3621 = vmul.f32 %v3357, %v3581
  %v3622 = vmul.f32 %v3358, %v3581
  %v3623 = vmul.f32 %v3359, %v3581
  %v3624 = vmul.f32 %v3360, %v3581
  %v3625 = vmul.f32 %v3361, %v3581
  %v3626 = vmul.f32 %v3362, %v3581
  %v3627 = vmul.f32 %v3363, %v3581
  %v3628 = vmul.f32 %v3364, %v3581
  %v3629 = vmul.f32 %v3365, %v3581
  %v3630 = vmul.f32 %v3366, %v3581
  %v3631 = vmul.f32 %v3367, %v3581
  %v3632 = vmul.f32 %v3368, %v3581
  %v3633 = vmul.f32 %v3369, %v3581
  %v3634 = vmul.f32 %v3370, %v3581
  %v3635 = vmul.f32 %v3371, %v3581
  %v3636 = vmul.f32 %v3372, %v3581
  %v3637 = vmul.f32 %v3373, %v3581
  %v3638 = vmul.f32 %v3374, %v3581
  %v3639 = vmul.f32 %v3375, %v3581
  %v3640 = vmul.f32 %v3376, %v3581
  %v3641 = vmul.f32 %v3377, %v3581
  %v3642 = vmul.f32 %v3378, %v3581
  %v3643 = vmul.f32 %v3379, %v3581
  %v3644 = vmul.f32 %v3380, %v3581
  %v3645 = vmul.f32 %v3381, %v3581
  %v3646 = vmax.f32 %v3582, 0.0
  %v3647 = vmax.f32 %v3583, 0.0
  %v3648 = vmax.f32 %v3584, 0.0
  %v3649 = vmax.f32 %v3585, 0.0
  %v3650 = vmax.f32 %v3586, 0.0
  %v3651 = vmax.f32 %v3587, 0.0
  %v3652 = vmax.f32 %v3588, 0.0
  %v3653 = vmax.f32 %v3589, 0.0
  %v3654 = vmax.f32 %v3590, 0.0
  %v3655 = vmax.f32 %v3591, 0.0
  %v3656 = vmax.f32 %v3592, 0.0
  %v3657 = vmax.f32 %v3593, 0.0
  %v3658 = vmax.f32 %v3594, 0.0
  %v3659 = vmax.f32 %v3595, 0.0
  %v3660 = vmax.f32 %v3596, 0.0
  %v3661 = vmax.f32 %v3597, 0.0
  %v3662 = vmax.f32 %v3598, 0.0
  %v3663 = vmax.f32 %v3599, 0.0
  %v3664 = vmax.f32 %v3600, 0.0
  %v3665 = vmax.f32 %v3601, 0.0
  %v3666 = vmax.f32 %v3602, 0.0
  %v3667 = vmax.f32 %v3603, 0.0
  %v3668 = vmax.f32 %v3604, 0.0
  %v3669 = vmax.f32 %v3605, 0.0
  %v3670 = vmax.f32 %v3606, 0.0
  %v3671 = vmax.f32 %v3607, 0.0
  %v3672 = vmax.f32 %v3608, 0.0
  %v3673 = vmax.f32 %v3609, 0.0
  %v3674 = vmax.f32 %v3610, 0.0
  %v3675 = vmax.f32 %v3611, 0.0
  %v3676 = vmax.f32 %v3612, 0.0
  %v3677 = vmax.f32 %v3613, 0.0
  %v3678 = vmax.f32 %v3614, 0.0
  %v3679 = vmax.f32 %v3615, 0.0
  %v3680 = vmax.f32 %v3616, 0.0
  %v3681 = vmax.f32 %v3617, 0.0
  %v3682 = vmax.f32 %v3618, 0.0
  %v3683 = vmax.f32 %v3619, 0.0
  %v3684 = vmax.f32 %v3620, 0.0
  %v3685 = vmax.f32 %v3621, 0.0
  %v3686 = vmax.f32 %v3622, 0.0
  %v3687 = vmax.f32 %v3623, 0.0
  %v3688 = vmax.f32 %v3624, 0.0
  %v3689 = vmax.f32 %v3625, 0.0
  %v3690 = vmax.f32 %v3626, 0.0
  %v3691 = vmax.f32 %v3627, 0.0
  %v3692 = vmax.f32 %v3628, 0.0
  %v3693 = vmax.f32 %v3629, 0.0
  %v3694 = vmax.f32 %v3630, 0.0
  %v3695 = vmax.f32 %v3631, 0.0
  %v3696 = vmax.f32 %v3632, 0.0
  %v3697 = vmax.f32 %v3633, 0.0
  %v3698 = vmax.f32 %v3634, 0.0
  %v3699 = vmax.f32 %v3635, 0.0
  %v3700 = vmax.f32 %v3636, 0.0
  %v3701 = vmax.f32 %v3637, 0.0
  %v3702 = vmax.f32 %v3638, 0.0
  %v3703 = vmax.f32 %v3639, 0.0
  %v3704 = vmax.f32 %v3640, 0.0
  %v3705 = vmax.f32 %v3641, 0.0
  %v3706 = vmax.f32 %v3642, 0.0
  %v3707 = vmax.f32 %v3643, 0.0
  %v3708 = vmax.f32 %v3644, 0.0
  %v3709 = vmax.f32 %v3645, 0.0
  %v3710 = vmul.f32 %v3646, %v876
  %v3711 = vmul.f32 %v3647, %v881
  %v3712 = vmul.f32 %v3648, %v886
  %v3713 = vmul.f32 %v3649, %v891
  %v3714 = vmul.f32 %v3650, %v896
  %v3715 = vmul.f32 %v3651, %v901
  %v3716 = vmul.f32 %v3652, %v906
  %v3717 = vmul.f32 %v3653, %v911
  %v3718 = vmul.f32 %v3654, %v916
  %v3719 = vmul.f32 %v3655, %v921
  %v3720 = vmul.f32 %v3656, %v926
  %v3721 = vmul.f32 %v3657, %v931
  %v3722 = vmul.f32 %v3658, %v936
  %v3723 = vmul.f32 %v3659, %v941
  %v3724 = vmul.f32 %v3660, %v946
  %v3725 = vmul.f32 %v3661, %v951
  %v3726 = vmul.f32 %v3662, %v956
  %v3727 = vmul.f32 %v3663, %v961
  %v3728 = vmul.f32 %v3664, %v966
  %v3729 = vmul.f32 %v3665, %v971
  %v3730 = vmul.f32 %v3666, %v976
  %v3731 = vmul.f32 %v3667, %v981
  %v3732 = vmul.f32 %v3668, %v986
  %v3733 = vmul.f32 %v3669, %v991
  %v3734 = vmul.f32 %v3670, %v996
  %v3735 = vmul.f32 %v3671, %v1001
  %v3736 = vmul.f32 %v3672, %v1006
  %v3737 = vmul.f32 %v3673, %v1011
  %v3738 = vmul.f32 %v3674, %v1016
  %v3739 = vmul.f32 %v3675, %v1021
  %v3740 = vmul.f32 %v3676, %v1026
  %v3741 = vmul.f32 %v3677, %v1031
  %v3742 = vmul.f32 %v3678, %v1036
  %v3743 = vmul.f32 %v3679, %v1041
  %v3744 = vmul.f32 %v3680, %v1046
  %v3745 = vmul.f32 %v3681, %v1051
  %v3746 = vmul.f32 %v3682, %v1056
  %v3747 = vmul.f32 %v3683, %v1061
  %v3748 = vmul.f32 %v3684, %v1066
  %v3749 = vmul.f32 %v3685, %v1071
  %v3750 = vmul.f32 %v3686, %v1076
  %v3751 = vmul.f32 %v3687, %v1081
  %v3752 = vmul.f32 %v3688, %v1086
  %v3753 = vmul.f32 %v3689, %v1091
  %v3754 = vmul.f32 %v3690, %v1096
  %v3755 = vmul.f32 %v3691, %v1101
  %v3756 = vmul.f32 %v3692, %v1106
  %v3757 = vmul.f32 %v3693, %v1111
  %v3758 = vmul.f32 %v3694, %v1116
  %v3759 = vmul.f32 %v3695, %v1121
  %v3760 = vmul.f32 %v3696, %v1126
  %v3761 = vmul.f32 %v3697, %v1131
  %v3762 = vmul.f32 %v3698, %v1136
  %v3763 = vmul.f32 %v3699, %v1141
  %v3764 = vmul.f32 %v3700, %v1146
  %v3765 = vmul.f32 %v3701, %v1151
  %v3766 = vmul.f32 %v3702, %v1156
  %v3767 = vmul.f32 %v3703, %v1161
  %v3768 = vmul.f32 %v3704, %v1166
  %v3769 = vmul.f32 %v3705, %v1171
  %v3770 = vmul.f32 %v3706, %v1176
  %v3771 = vmul.f32 %v3707, %v1181
  %v3772 = vmul.f32 %v3708, %v1186
  %v3773 = vmul.f32 %v3709, %v1191
  %v3774 = vld [vmem:[%s7] sm:$0xff]
  %v3775 = vld [vmem:[%s7 + $0x8] sm:$0xff]
  %v3776 = vld [vmem:[%s7 + $0x10] sm:$0xff]
  %v3777 = vld [vmem:[%s7 + $0x18] sm:$0xff]
  %v3778 = vld [vmem:[%s7 + $0x20] sm:$0xff]
  %v3779 = vld [vmem:[%s7 + $0x28] sm:$0xff]
  %v3780 = vld [vmem:[%s7 + $0x30] sm:$0xff]
  %v3781 = vld [vmem:[%s7 + $0x38] sm:$0xff]
  %v3782 = vld [vmem:[%s7 + $0x40] sm:$0xff]
  %v3783 = vld [vmem:[%s7 + $0x48] sm:$0xff]
  %v3784 = vld [vmem:[%s7 + $0x50] sm:$0xff]
  %v3785 = vld [vmem:[%s7 + $0x58] sm:$0xff]
  %v3786 = vld [vmem:[%s7 + $0x60] sm:$0xff]
  %v3787 = vld [vmem:[%s7 + $0x68] sm:$0xff]
  %v3788 = vld [vmem:[%s7 + $0x70] sm:$0xff]
  %v3789 = vld [vmem:[%s7 + $0x78] sm:$0xff]
  %3790 = vmatprep.subr.mxu0 0.0
  %3791 = vmatpush1.msra.mxu0 %v3789
  %3792 = vmatprep.subr.mxu0 0.0
  %3793 = vmatpush1.msra.mxu0 %v3788
  %3794 = vmatprep.subr.mxu0 0.0
  %3795 = vmatpush1.msra.mxu0 %v3787
  %3796 = vmatprep.subr.mxu0 0.0
  %3797 = vmatpush1.msra.mxu0 %v3786
  %3798 = vmatprep.subr.mxu0 0.0
  %3799 = vmatpush1.msra.mxu0 %v3785
  %3800 = vmatprep.subr.mxu0 0.0
  %3801 = vmatpush1.msra.mxu0 %v3784
  %3802 = vmatprep.subr.mxu0 0.0
  %3803 = vmatpush1.msra.mxu0 %v3783
  %3804 = vmatprep.subr.mxu0 0.0
  %3805 = vmatpush1.msra.mxu0 %v3782
  %3806 = vmatprep.subr.mxu0 0.0
  %3807 = vmatpush1.msra.mxu0 %v3781
  %3808 = vmatprep.subr.mxu0 0.0
  %3809 = vmatpush1.msra.mxu0 %v3780
  %3810 = vmatprep.subr.mxu0 0.0
  %3811 = vmatpush1.msra.mxu0 %v3779
  %3812 = vmatprep.subr.mxu0 0.0
  %3813 = vmatpush1.msra.mxu0 %v3778
  %3814 = vmatprep.subr.mxu0 0.0
  %3815 = vmatpush1.msra.mxu0 %v3777
  %3816 = vmatprep.subr.mxu0 0.0
  %3817 = vmatpush1.msra.mxu0 %v3776
  %3818 = vmatprep.subr.mxu0 0.0
  %3819 = vmatpush1.msra.mxu0 %v3775
  %3820 = vmatprep.subr.mxu0 0.0
  %3821 = vmatpush1.msra.mxu0 %v3774
  %3822 = vmatprep.subr.mxu0 0.0
  %3823 = vmatpush2.msra.mxu0 0.0
  %3824 = vmatprep.subr.mxu0 0.0
  %3825 = vmatpush2.msra.mxu0 0.0
  %3826 = vmatprep.subr.mxu0 0.0
  %3827 = vmatpush2.msra.mxu0 0.0
  %3828 = vmatprep.subr.mxu0 0.0
  %3829 = vmatpush2.msra.mxu0 0.0
  %3830 = vmatprep.subr.mxu0 0.0
  %3831 = vmatpush2.msra.mxu0 0.0
  %3832 = vmatprep.subr.mxu0 0.0
  %3833 = vmatpush2.msra.mxu0 0.0
  %3834 = vmatprep.subr.mxu0 0.0
  %3835 = vmatpush2.msra.mxu0 0.0
  %3836 = vmatprep.subr.mxu0 0.0
  %3837 = vmatpush2.msra.mxu0 0.0
  %3838 = vmatprep.subr.mxu0 0.0
  %3839 = vmatpush2.msra.mxu0 0.0
  %3840 = vmatprep.subr.mxu0 0.0
  %3841 = vmatpush2.msra.mxu0 0.0
  %3842 = vmatprep.subr.mxu0 0.0
  %3843 = vmatpush2.msra.mxu0 0.0
  %3844 = vmatprep.subr.mxu0 0.0
  %3845 = vmatpush2.msra.mxu0 0.0
  %3846 = vmatprep.subr.mxu0 0.0
  %3847 = vmatpush2.msra.mxu0 0.0
  %3848 = vmatprep.subr.mxu0 0.0
  %3849 = vmatpush2.msra.mxu0 0.0
  %3850 = vmatprep.subr.mxu0 0.0
  %3851 = vmatpush2.msra.mxu0 0.0
  %3852 = vmatprep.subr.mxu0 0.0
  %3853 = vmatpush2.msra.mxu0 0.0
  %3854 = vmatprep.mubr.f32.mxu0 0.0
  %3855 = vmatmul.mubr.f32.gmra.mxu0 %v3710
  %v3856 = vpop.f32.mrf.mxu0
  %v3857 = vadd.f32 0.0, %v3856
  %v3858 = vpop.f32.mrf.mxu0
  %3859 = vmatprep.mubr.f32.mxu0 0.0
  %3860 = vmatmul.mubr.f32.gmra.mxu0 %v3711
  %v3861 = vpop.f32.mrf.mxu0
  %v3862 = vadd.f32 0.0, %v3861
  %v3863 = vpop.f32.mrf.mxu0
  %3864 = vmatprep.mubr.f32.mxu0 0.0
  %3865 = vmatmul.mubr.f32.gmra.mxu0 %v3712
  %v3866 = vpop.f32.mrf.mxu0
  %v3867 = vadd.f32 0.0, %v3866
  %v3868 = vpop.f32.mrf.mxu0
  %3869 = vmatprep.mubr.f32.mxu0 0.0
  %3870 = vmatmul.mubr.f32.gmra.mxu0 %v3713
  %v3871 = vpop.f32.mrf.mxu0
  %v3872 = vadd.f32 0.0, %v3871
  %v3873 = vpop.f32.mrf.mxu0
  %3874 = vmatprep.mubr.f32.mxu0 0.0
  %3875 = vmatmul.mubr.f32.gmra.mxu0 %v3714
  %v3876 = vpop.f32.mrf.mxu0
  %v3877 = vadd.f32 0.0, %v3876
  %v3878 = vpop.f32.mrf.mxu0
  %3879 = vmatprep.mubr.f32.mxu0 0.0
  %3880 = vmatmul.mubr.f32.gmra.mxu0 %v3715
  %v3881 = vpop.f32.mrf.mxu0
  %v3882 = vadd.f32 0.0, %v3881
  %v3883 = vpop.f32.mrf.mxu0
  %3884 = vmatprep.mubr.f32.mxu0 0.0
  %3885 = vmatmul.mubr.f32.gmra.mxu0 %v3716
  %v3886 = vpop.f32.mrf.mxu0
  %v3887 = vadd.f32 0.0, %v3886
  %v3888 = vpop.f32.mrf.mxu0
  %3889 = vmatprep.mubr.f32.mxu0 0.0
  %3890 = vmatmul.mubr.f32.gmra.mxu0 %v3717
  %v3891 = vpop.f32.mrf.mxu0
  %v3892 = vadd.f32 0.0, %v3891
  %v3893 = vpop.f32.mrf.mxu0
  %3894 = vmatprep.mubr.f32.mxu0 0.0
  %3895 = vmatmul.mubr.f32.gmra.mxu0 %v3718
  %v3896 = vpop.f32.mrf.mxu0
  %v3897 = vadd.f32 0.0, %v3896
  %v3898 = vpop.f32.mrf.mxu0
  %3899 = vmatprep.mubr.f32.mxu0 0.0
  %3900 = vmatmul.mubr.f32.gmra.mxu0 %v3719
  %v3901 = vpop.f32.mrf.mxu0
  %v3902 = vadd.f32 0.0, %v3901
  %v3903 = vpop.f32.mrf.mxu0
  %3904 = vmatprep.mubr.f32.mxu0 0.0
  %3905 = vmatmul.mubr.f32.gmra.mxu0 %v3720
  %v3906 = vpop.f32.mrf.mxu0
  %v3907 = vadd.f32 0.0, %v3906
  %v3908 = vpop.f32.mrf.mxu0
  %3909 = vmatprep.mubr.f32.mxu0 0.0
  %3910 = vmatmul.mubr.f32.gmra.mxu0 %v3721
  %v3911 = vpop.f32.mrf.mxu0
  %v3912 = vadd.f32 0.0, %v3911
  %v3913 = vpop.f32.mrf.mxu0
  %3914 = vmatprep.mubr.f32.mxu0 0.0
  %3915 = vmatmul.mubr.f32.gmra.mxu0 %v3722
  %v3916 = vpop.f32.mrf.mxu0
  %v3917 = vadd.f32 0.0, %v3916
  %v3918 = vpop.f32.mrf.mxu0
  %3919 = vmatprep.mubr.f32.mxu0 0.0
  %3920 = vmatmul.mubr.f32.gmra.mxu0 %v3723
  %v3921 = vpop.f32.mrf.mxu0
  %v3922 = vadd.f32 0.0, %v3921
  %v3923 = vpop.f32.mrf.mxu0
  %3924 = vmatprep.mubr.f32.mxu0 0.0
  %3925 = vmatmul.mubr.f32.gmra.mxu0 %v3724
  %v3926 = vpop.f32.mrf.mxu0
  %v3927 = vadd.f32 0.0, %v3926
  %v3928 = vpop.f32.mrf.mxu0
  %3929 = vmatprep.mubr.f32.mxu0 0.0
  %3930 = vmatmul.mubr.f32.gmra.mxu0 %v3725
  %v3931 = vpop.f32.mrf.mxu0
  %v3932 = vadd.f32 0.0, %v3931
  %v3933 = vpop.f32.mrf.mxu0
  %3934 = vmatprep.mubr.f32.mxu0 0.0
  %3935 = vmatmul.mubr.f32.gmra.mxu0 %v3726
  %v3936 = vpop.f32.mrf.mxu0
  %v3937 = vadd.f32 0.0, %v3936
  %v3938 = vpop.f32.mrf.mxu0
  %3939 = vmatprep.mubr.f32.mxu0 0.0
  %3940 = vmatmul.mubr.f32.gmra.mxu0 %v3727
  %v3941 = vpop.f32.mrf.mxu0
  %v3942 = vadd.f32 0.0, %v3941
  %v3943 = vpop.f32.mrf.mxu0
  %3944 = vmatprep.mubr.f32.mxu0 0.0
  %3945 = vmatmul.mubr.f32.gmra.mxu0 %v3728
  %v3946 = vpop.f32.mrf.mxu0
  %v3947 = vadd.f32 0.0, %v3946
  %v3948 = vpop.f32.mrf.mxu0
  %3949 = vmatprep.mubr.f32.mxu0 0.0
  %3950 = vmatmul.mubr.f32.gmra.mxu0 %v3729
  %v3951 = vpop.f32.mrf.mxu0
  %v3952 = vadd.f32 0.0, %v3951
  %v3953 = vpop.f32.mrf.mxu0
  %3954 = vmatprep.mubr.f32.mxu0 0.0
  %3955 = vmatmul.mubr.f32.gmra.mxu0 %v3730
  %v3956 = vpop.f32.mrf.mxu0
  %v3957 = vadd.f32 0.0, %v3956
  %v3958 = vpop.f32.mrf.mxu0
  %3959 = vmatprep.mubr.f32.mxu0 0.0
  %3960 = vmatmul.mubr.f32.gmra.mxu0 %v3731
  %v3961 = vpop.f32.mrf.mxu0
  %v3962 = vadd.f32 0.0, %v3961
  %v3963 = vpop.f32.mrf.mxu0
  %3964 = vmatprep.mubr.f32.mxu0 0.0
  %3965 = vmatmul.mubr.f32.gmra.mxu0 %v3732
  %v3966 = vpop.f32.mrf.mxu0
  %v3967 = vadd.f32 0.0, %v3966
  %v3968 = vpop.f32.mrf.mxu0
  %3969 = vmatprep.mubr.f32.mxu0 0.0
  %3970 = vmatmul.mubr.f32.gmra.mxu0 %v3733
  %v3971 = vpop.f32.mrf.mxu0
  %v3972 = vadd.f32 0.0, %v3971
  %v3973 = vpop.f32.mrf.mxu0
  %3974 = vmatprep.mubr.f32.mxu0 0.0
  %3975 = vmatmul.mubr.f32.gmra.mxu0 %v3734
  %v3976 = vpop.f32.mrf.mxu0
  %v3977 = vadd.f32 0.0, %v3976
  %v3978 = vpop.f32.mrf.mxu0
  %3979 = vmatprep.mubr.f32.mxu0 0.0
  %3980 = vmatmul.mubr.f32.gmra.mxu0 %v3735
  %v3981 = vpop.f32.mrf.mxu0
  %v3982 = vadd.f32 0.0, %v3981
  %v3983 = vpop.f32.mrf.mxu0
  %3984 = vmatprep.mubr.f32.mxu0 0.0
  %3985 = vmatmul.mubr.f32.gmra.mxu0 %v3736
  %v3986 = vpop.f32.mrf.mxu0
  %v3987 = vadd.f32 0.0, %v3986
  %v3988 = vpop.f32.mrf.mxu0
  %3989 = vmatprep.mubr.f32.mxu0 0.0
  %3990 = vmatmul.mubr.f32.gmra.mxu0 %v3737
  %v3991 = vpop.f32.mrf.mxu0
  %v3992 = vadd.f32 0.0, %v3991
  %v3993 = vpop.f32.mrf.mxu0
  %3994 = vmatprep.mubr.f32.mxu0 0.0
  %3995 = vmatmul.mubr.f32.gmra.mxu0 %v3738
  %v3996 = vpop.f32.mrf.mxu0
  %v3997 = vadd.f32 0.0, %v3996
  %v3998 = vpop.f32.mrf.mxu0
  %3999 = vmatprep.mubr.f32.mxu0 0.0
  %4000 = vmatmul.mubr.f32.gmra.mxu0 %v3739
  %v4001 = vpop.f32.mrf.mxu0
  %v4002 = vadd.f32 0.0, %v4001
  %v4003 = vpop.f32.mrf.mxu0
  %4004 = vmatprep.mubr.f32.mxu0 0.0
  %4005 = vmatmul.mubr.f32.gmra.mxu0 %v3740
  %v4006 = vpop.f32.mrf.mxu0
  %v4007 = vadd.f32 0.0, %v4006
  %v4008 = vpop.f32.mrf.mxu0
  %4009 = vmatprep.mubr.f32.mxu0 0.0
  %4010 = vmatmul.mubr.f32.gmra.mxu0 %v3741
  %v4011 = vpop.f32.mrf.mxu0
  %v4012 = vadd.f32 0.0, %v4011
  %v4013 = vpop.f32.mrf.mxu0
  %4014 = vmatprep.mubr.f32.mxu0 0.0
  %4015 = vmatmul.mubr.f32.gmra.mxu0 %v3742
  %v4016 = vpop.f32.mrf.mxu0
  %v4017 = vadd.f32 0.0, %v4016
  %v4018 = vpop.f32.mrf.mxu0
  %4019 = vmatprep.mubr.f32.mxu0 0.0
  %4020 = vmatmul.mubr.f32.gmra.mxu0 %v3743
  %v4021 = vpop.f32.mrf.mxu0
  %v4022 = vadd.f32 0.0, %v4021
  %v4023 = vpop.f32.mrf.mxu0
  %4024 = vmatprep.mubr.f32.mxu0 0.0
  %4025 = vmatmul.mubr.f32.gmra.mxu0 %v3744
  %v4026 = vpop.f32.mrf.mxu0
  %v4027 = vadd.f32 0.0, %v4026
  %v4028 = vpop.f32.mrf.mxu0
  %4029 = vmatprep.mubr.f32.mxu0 0.0
  %4030 = vmatmul.mubr.f32.gmra.mxu0 %v3745
  %v4031 = vpop.f32.mrf.mxu0
  %v4032 = vadd.f32 0.0, %v4031
  %v4033 = vpop.f32.mrf.mxu0
  %4034 = vmatprep.mubr.f32.mxu0 0.0
  %4035 = vmatmul.mubr.f32.gmra.mxu0 %v3746
  %v4036 = vpop.f32.mrf.mxu0
  %v4037 = vadd.f32 0.0, %v4036
  %v4038 = vpop.f32.mrf.mxu0
  %4039 = vmatprep.mubr.f32.mxu0 0.0
  %4040 = vmatmul.mubr.f32.gmra.mxu0 %v3747
  %v4041 = vpop.f32.mrf.mxu0
  %v4042 = vadd.f32 0.0, %v4041
  %v4043 = vpop.f32.mrf.mxu0
  %4044 = vmatprep.mubr.f32.mxu0 0.0
  %4045 = vmatmul.mubr.f32.gmra.mxu0 %v3748
  %v4046 = vpop.f32.mrf.mxu0
  %v4047 = vadd.f32 0.0, %v4046
  %v4048 = vpop.f32.mrf.mxu0
  %4049 = vmatprep.mubr.f32.mxu0 0.0
  %4050 = vmatmul.mubr.f32.gmra.mxu0 %v3749
  %v4051 = vpop.f32.mrf.mxu0
  %v4052 = vadd.f32 0.0, %v4051
  %v4053 = vpop.f32.mrf.mxu0
  %4054 = vmatprep.mubr.f32.mxu0 0.0
  %4055 = vmatmul.mubr.f32.gmra.mxu0 %v3750
  %v4056 = vpop.f32.mrf.mxu0
  %v4057 = vadd.f32 0.0, %v4056
  %v4058 = vpop.f32.mrf.mxu0
  %4059 = vmatprep.mubr.f32.mxu0 0.0
  %4060 = vmatmul.mubr.f32.gmra.mxu0 %v3751
  %v4061 = vpop.f32.mrf.mxu0
  %v4062 = vadd.f32 0.0, %v4061
  %v4063 = vpop.f32.mrf.mxu0
  %4064 = vmatprep.mubr.f32.mxu0 0.0
  %4065 = vmatmul.mubr.f32.gmra.mxu0 %v3752
  %v4066 = vpop.f32.mrf.mxu0
  %v4067 = vadd.f32 0.0, %v4066
  %v4068 = vpop.f32.mrf.mxu0
  %4069 = vmatprep.mubr.f32.mxu0 0.0
  %4070 = vmatmul.mubr.f32.gmra.mxu0 %v3753
  %v4071 = vpop.f32.mrf.mxu0
  %v4072 = vadd.f32 0.0, %v4071
  %v4073 = vpop.f32.mrf.mxu0
  %4074 = vmatprep.mubr.f32.mxu0 0.0
  %4075 = vmatmul.mubr.f32.gmra.mxu0 %v3754
  %v4076 = vpop.f32.mrf.mxu0
  %v4077 = vadd.f32 0.0, %v4076
  %v4078 = vpop.f32.mrf.mxu0
  %4079 = vmatprep.mubr.f32.mxu0 0.0
  %4080 = vmatmul.mubr.f32.gmra.mxu0 %v3755
  %v4081 = vpop.f32.mrf.mxu0
  %v4082 = vadd.f32 0.0, %v4081
  %v4083 = vpop.f32.mrf.mxu0
  %4084 = vmatprep.mubr.f32.mxu0 0.0
  %4085 = vmatmul.mubr.f32.gmra.mxu0 %v3756
  %v4086 = vpop.f32.mrf.mxu0
  %v4087 = vadd.f32 0.0, %v4086
  %v4088 = vpop.f32.mrf.mxu0
  %4089 = vmatprep.mubr.f32.mxu0 0.0
  %4090 = vmatmul.mubr.f32.gmra.mxu0 %v3757
  %v4091 = vpop.f32.mrf.mxu0
  %v4092 = vadd.f32 0.0, %v4091
  %v4093 = vpop.f32.mrf.mxu0
  %4094 = vmatprep.mubr.f32.mxu0 0.0
  %4095 = vmatmul.mubr.f32.gmra.mxu0 %v3758
  %v4096 = vpop.f32.mrf.mxu0
  %v4097 = vadd.f32 0.0, %v4096
  %v4098 = vpop.f32.mrf.mxu0
  %4099 = vmatprep.mubr.f32.mxu0 0.0
  %4100 = vmatmul.mubr.f32.gmra.mxu0 %v3759
  %v4101 = vpop.f32.mrf.mxu0
  %v4102 = vadd.f32 0.0, %v4101
  %v4103 = vpop.f32.mrf.mxu0
  %4104 = vmatprep.mubr.f32.mxu0 0.0
  %4105 = vmatmul.mubr.f32.gmra.mxu0 %v3760
  %v4106 = vpop.f32.mrf.mxu0
  %v4107 = vadd.f32 0.0, %v4106
  %v4108 = vpop.f32.mrf.mxu0
  %4109 = vmatprep.mubr.f32.mxu0 0.0
  %4110 = vmatmul.mubr.f32.gmra.mxu0 %v3761
  %v4111 = vpop.f32.mrf.mxu0
  %v4112 = vadd.f32 0.0, %v4111
  %v4113 = vpop.f32.mrf.mxu0
  %4114 = vmatprep.mubr.f32.mxu0 0.0
  %4115 = vmatmul.mubr.f32.gmra.mxu0 %v3762
  %v4116 = vpop.f32.mrf.mxu0
  %v4117 = vadd.f32 0.0, %v4116
  %v4118 = vpop.f32.mrf.mxu0
  %4119 = vmatprep.mubr.f32.mxu0 0.0
  %4120 = vmatmul.mubr.f32.gmra.mxu0 %v3763
  %v4121 = vpop.f32.mrf.mxu0
  %v4122 = vadd.f32 0.0, %v4121
  %v4123 = vpop.f32.mrf.mxu0
  %4124 = vmatprep.mubr.f32.mxu0 0.0
  %4125 = vmatmul.mubr.f32.gmra.mxu0 %v3764
  %v4126 = vpop.f32.mrf.mxu0
  %v4127 = vadd.f32 0.0, %v4126
  %v4128 = vpop.f32.mrf.mxu0
  %4129 = vmatprep.mubr.f32.mxu0 0.0
  %4130 = vmatmul.mubr.f32.gmra.mxu0 %v3765
  %v4131 = vpop.f32.mrf.mxu0
  %v4132 = vadd.f32 0.0, %v4131
  %v4133 = vpop.f32.mrf.mxu0
  %4134 = vmatprep.mubr.f32.mxu0 0.0
  %4135 = vmatmul.mubr.f32.gmra.mxu0 %v3766
  %v4136 = vpop.f32.mrf.mxu0
  %v4137 = vadd.f32 0.0, %v4136
  %v4138 = vpop.f32.mrf.mxu0
  %4139 = vmatprep.mubr.f32.mxu0 0.0
  %4140 = vmatmul.mubr.f32.gmra.mxu0 %v3767
  %v4141 = vpop.f32.mrf.mxu0
  %v4142 = vadd.f32 0.0, %v4141
  %v4143 = vpop.f32.mrf.mxu0
  %4144 = vmatprep.mubr.f32.mxu0 0.0
  %4145 = vmatmul.mubr.f32.gmra.mxu0 %v3768
  %v4146 = vpop.f32.mrf.mxu0
  %v4147 = vadd.f32 0.0, %v4146
  %v4148 = vpop.f32.mrf.mxu0
  %4149 = vmatprep.mubr.f32.mxu0 0.0
  %4150 = vmatmul.mubr.f32.gmra.mxu0 %v3769
  %v4151 = vpop.f32.mrf.mxu0
  %v4152 = vadd.f32 0.0, %v4151
  %v4153 = vpop.f32.mrf.mxu0
  %4154 = vmatprep.mubr.f32.mxu0 0.0
  %4155 = vmatmul.mubr.f32.gmra.mxu0 %v3770
  %v4156 = vpop.f32.mrf.mxu0
  %v4157 = vadd.f32 0.0, %v4156
  %v4158 = vpop.f32.mrf.mxu0
  %4159 = vmatprep.mubr.f32.mxu0 0.0
  %4160 = vmatmul.mubr.f32.gmra.mxu0 %v3771
  %v4161 = vpop.f32.mrf.mxu0
  %v4162 = vadd.f32 0.0, %v4161
  %v4163 = vpop.f32.mrf.mxu0
  %4164 = vmatprep.mubr.f32.mxu0 0.0
  %4165 = vmatmul.mubr.f32.gmra.mxu0 %v3772
  %v4166 = vpop.f32.mrf.mxu0
  %v4167 = vadd.f32 0.0, %v4166
  %v4168 = vpop.f32.mrf.mxu0
  %4169 = vmatprep.mubr.f32.mxu0 0.0
  %4170 = vmatmul.mubr.f32.gmra.mxu0 %v3773
  %v4171 = vpop.f32.mrf.mxu0
  %v4172 = vadd.f32 0.0, %v4171
  %v4173 = vpop.f32.mrf.mxu0
  %4174 = vdwg.mxu0
  %v4175 = vmul.f32 %v3857, %v876
  %v4176 = vmul.f32 %v3862, %v881
  %v4177 = vmul.f32 %v3867, %v886
  %v4178 = vmul.f32 %v3872, %v891
  %v4179 = vmul.f32 %v3877, %v896
  %v4180 = vmul.f32 %v3882, %v901
  %v4181 = vmul.f32 %v3887, %v906
  %v4182 = vmul.f32 %v3892, %v911
  %v4183 = vmul.f32 %v3897, %v916
  %v4184 = vmul.f32 %v3902, %v921
  %v4185 = vmul.f32 %v3907, %v926
  %v4186 = vmul.f32 %v3912, %v931
  %v4187 = vmul.f32 %v3917, %v936
  %v4188 = vmul.f32 %v3922, %v941
  %v4189 = vmul.f32 %v3927, %v946
  %v4190 = vmul.f32 %v3932, %v951
  %v4191 = vmul.f32 %v3937, %v956
  %v4192 = vmul.f32 %v3942, %v961
  %v4193 = vmul.f32 %v3947, %v966
  %v4194 = vmul.f32 %v3952, %v971
  %v4195 = vmul.f32 %v3957, %v976
  %v4196 = vmul.f32 %v3962, %v981
  %v4197 = vmul.f32 %v3967, %v986
  %v4198 = vmul.f32 %v3972, %v991
  %v4199 = vmul.f32 %v3977, %v996
  %v4200 = vmul.f32 %v3982, %v1001
  %v4201 = vmul.f32 %v3987, %v1006
  %v4202 = vmul.f32 %v3992, %v1011
  %v4203 = vmul.f32 %v3997, %v1016
  %v4204 = vmul.f32 %v4002, %v1021
  %v4205 = vmul.f32 %v4007, %v1026
  %v4206 = vmul.f32 %v4012, %v1031
  %v4207 = vmul.f32 %v4017, %v1036
  %v4208 = vmul.f32 %v4022, %v1041
  %v4209 = vmul.f32 %v4027, %v1046
  %v4210 = vmul.f32 %v4032, %v1051
  %v4211 = vmul.f32 %v4037, %v1056
  %v4212 = vmul.f32 %v4042, %v1061
  %v4213 = vmul.f32 %v4047, %v1066
  %v4214 = vmul.f32 %v4052, %v1071
  %v4215 = vmul.f32 %v4057, %v1076
  %v4216 = vmul.f32 %v4062, %v1081
  %v4217 = vmul.f32 %v4067, %v1086
  %v4218 = vmul.f32 %v4072, %v1091
  %v4219 = vmul.f32 %v4077, %v1096
  %v4220 = vmul.f32 %v4082, %v1101
  %v4221 = vmul.f32 %v4087, %v1106
  %v4222 = vmul.f32 %v4092, %v1111
  %v4223 = vmul.f32 %v4097, %v1116
  %v4224 = vmul.f32 %v4102, %v1121
  %v4225 = vmul.f32 %v4107, %v1126
  %v4226 = vmul.f32 %v4112, %v1131
  %v4227 = vmul.f32 %v4117, %v1136
  %v4228 = vmul.f32 %v4122, %v1141
  %v4229 = vmul.f32 %v4127, %v1146
  %v4230 = vmul.f32 %v4132, %v1151
  %v4231 = vmul.f32 %v4137, %v1156
  %v4232 = vmul.f32 %v4142, %v1161
  %v4233 = vmul.f32 %v4147, %v1166
  %v4234 = vmul.f32 %v4152, %v1171
  %v4235 = vmul.f32 %v4157, %v1176
  %v4236 = vmul.f32 %v4162, %v1181
  %v4237 = vmul.f32 %v4167, %v1186
  %v4238 = vmul.f32 %v4172, %v1191
  %v4239 = vadd.f32 %v4175, %v4176
  %v4240 = vadd.f32 %v4239, %v4177
  %v4241 = vadd.f32 %v4240, %v4178
  %v4242 = vadd.f32 %v4241, %v4179
  %v4243 = vadd.f32 %v4242, %v4180
  %v4244 = vadd.f32 %v4243, %v4181
  %v4245 = vadd.f32 %v4244, %v4182
  %v4246 = vadd.f32 %v4245, %v4183
  %v4247 = vadd.f32 %v4246, %v4184
  %v4248 = vadd.f32 %v4247, %v4185
  %v4249 = vadd.f32 %v4248, %v4186
  %v4250 = vadd.f32 %v4249, %v4187
  %v4251 = vadd.f32 %v4250, %v4188
  %v4252 = vadd.f32 %v4251, %v4189
  %v4253 = vadd.f32 %v4252, %v4190
  %v4254 = vadd.f32 %v4253, %v4191
  %v4255 = vadd.f32 %v4254, %v4192
  %v4256 = vadd.f32 %v4255, %v4193
  %v4257 = vadd.f32 %v4256, %v4194
  %v4258 = vadd.f32 %v4257, %v4195
  %v4259 = vadd.f32 %v4258, %v4196
  %v4260 = vadd.f32 %v4259, %v4197
  %v4261 = vadd.f32 %v4260, %v4198
  %v4262 = vadd.f32 %v4261, %v4199
  %v4263 = vadd.f32 %v4262, %v4200
  %v4264 = vadd.f32 %v4263, %v4201
  %v4265 = vadd.f32 %v4264, %v4202
  %v4266 = vadd.f32 %v4265, %v4203
  %v4267 = vadd.f32 %v4266, %v4204
  %v4268 = vadd.f32 %v4267, %v4205
  %v4269 = vadd.f32 %v4268, %v4206
  %v4270 = vadd.f32 %v4269, %v4207
  %v4271 = vadd.f32 %v4270, %v4208
  %v4272 = vadd.f32 %v4271, %v4209
  %v4273 = vadd.f32 %v4272, %v4210
  %v4274 = vadd.f32 %v4273, %v4211
  %v4275 = vadd.f32 %v4274, %v4212
  %v4276 = vadd.f32 %v4275, %v4213
  %v4277 = vadd.f32 %v4276, %v4214
  %v4278 = vadd.f32 %v4277, %v4215
  %v4279 = vadd.f32 %v4278, %v4216
  %v4280 = vadd.f32 %v4279, %v4217
  %v4281 = vadd.f32 %v4280, %v4218
  %v4282 = vadd.f32 %v4281, %v4219
  %v4283 = vadd.f32 %v4282, %v4220
  %v4284 = vadd.f32 %v4283, %v4221
  %v4285 = vadd.f32 %v4284, %v4222
  %v4286 = vadd.f32 %v4285, %v4223
  %v4287 = vadd.f32 %v4286, %v4224
  %v4288 = vadd.f32 %v4287, %v4225
  %v4289 = vadd.f32 %v4288, %v4226
  %v4290 = vadd.f32 %v4289, %v4227
  %v4291 = vadd.f32 %v4290, %v4228
  %v4292 = vadd.f32 %v4291, %v4229
  %v4293 = vadd.f32 %v4292, %v4230
  %v4294 = vadd.f32 %v4293, %v4231
  %v4295 = vadd.f32 %v4294, %v4232
  %v4296 = vadd.f32 %v4295, %v4233
  %v4297 = vadd.f32 %v4296, %v4234
  %v4298 = vadd.f32 %v4297, %v4235
  %v4299 = vadd.f32 %v4298, %v4236
  %v4300 = vadd.f32 %v4299, %v4237
  %v4301 = vadd.f32 %v4300, %v4238
  %v4302 = vrot.slane %v4301, 4
  %v4303 = vadd.f32 %v4301, %v4302
  %v4304 = vrot.slane %v4303, 2
  %v4305 = vadd.f32 %v4303, %v4304
  %v4306 = vrot.slane %v4305, 1
  %v4307 = vadd.f32 %v4305, %v4306
  %v4308 = vmul.f32 %v4307, 0.0025510204
  %v4309 = vsub.f32 %v3857, %v4308
  %v4310 = vsub.f32 %v3862, %v4308
  %v4311 = vsub.f32 %v3867, %v4308
  %v4312 = vsub.f32 %v3872, %v4308
  %v4313 = vsub.f32 %v3877, %v4308
  %v4314 = vsub.f32 %v3882, %v4308
  %v4315 = vsub.f32 %v3887, %v4308
  %v4316 = vsub.f32 %v3892, %v4308
  %v4317 = vsub.f32 %v3897, %v4308
  %v4318 = vsub.f32 %v3902, %v4308
  %v4319 = vsub.f32 %v3907, %v4308
  %v4320 = vsub.f32 %v3912, %v4308
  %v4321 = vsub.f32 %v3917, %v4308
  %v4322 = vsub.f32 %v3922, %v4308
  %v4323 = vsub.f32 %v3927, %v4308
  %v4324 = vsub.f32 %v3932, %v4308
  %v4325 = vsub.f32 %v3937, %v4308
  %v4326 = vsub.f32 %v3942, %v4308
  %v4327 = vsub.f32 %v3947, %v4308
  %v4328 = vsub.f32 %v3952, %v4308
  %v4329 = vsub.f32 %v3957, %v4308
  %v4330 = vsub.f32 %v3962, %v4308
  %v4331 = vsub.f32 %v3967, %v4308
  %v4332 = vsub.f32 %v3972, %v4308
  %v4333 = vsub.f32 %v3977, %v4308
  %v4334 = vsub.f32 %v3982, %v4308
  %v4335 = vsub.f32 %v3987, %v4308
  %v4336 = vsub.f32 %v3992, %v4308
  %v4337 = vsub.f32 %v3997, %v4308
  %v4338 = vsub.f32 %v4002, %v4308
  %v4339 = vsub.f32 %v4007, %v4308
  %v4340 = vsub.f32 %v4012, %v4308
  %v4341 = vsub.f32 %v4017, %v4308
  %v4342 = vsub.f32 %v4022, %v4308
  %v4343 = vsub.f32 %v4027, %v4308
  %v4344 = vsub.f32 %v4032, %v4308
  %v4345 = vsub.f32 %v4037, %v4308
  %v4346 = vsub.f32 %v4042, %v4308
  %v4347 = vsub.f32 %v4047, %v4308
  %v4348 = vsub.f32 %v4052, %v4308
  %v4349 = vsub.f32 %v4057, %v4308
  %v4350 = vsub.f32 %v4062, %v4308
  %v4351 = vsub.f32 %v4067, %v4308
  %v4352 = vsub.f32 %v4072, %v4308
  %v4353 = vsub.f32 %v4077, %v4308
  %v4354 = vsub.f32 %v4082, %v4308
  %v4355 = vsub.f32 %v4087, %v4308
  %v4356 = vsub.f32 %v4092, %v4308
  %v4357 = vsub.f32 %v4097, %v4308
  %v4358 = vsub.f32 %v4102, %v4308
  %v4359 = vsub.f32 %v4107, %v4308
  %v4360 = vsub.f32 %v4112, %v4308
  %v4361 = vsub.f32 %v4117, %v4308
  %v4362 = vsub.f32 %v4122, %v4308
  %v4363 = vsub.f32 %v4127, %v4308
  %v4364 = vsub.f32 %v4132, %v4308
  %v4365 = vsub.f32 %v4137, %v4308
  %v4366 = vsub.f32 %v4142, %v4308
  %v4367 = vsub.f32 %v4147, %v4308
  %v4368 = vsub.f32 %v4152, %v4308
  %v4369 = vsub.f32 %v4157, %v4308
  %v4370 = vsub.f32 %v4162, %v4308
  %v4371 = vsub.f32 %v4167, %v4308
  %v4372 = vsub.f32 %v4172, %v4308
  %v4373 = vmul.f32 %v4309, %v876
  %v4374 = vmul.f32 %v4310, %v881
  %v4375 = vmul.f32 %v4311, %v886
  %v4376 = vmul.f32 %v4312, %v891
  %v4377 = vmul.f32 %v4313, %v896
  %v4378 = vmul.f32 %v4314, %v901
  %v4379 = vmul.f32 %v4315, %v906
  %v4380 = vmul.f32 %v4316, %v911
  %v4381 = vmul.f32 %v4317, %v916
  %v4382 = vmul.f32 %v4318, %v921
  %v4383 = vmul.f32 %v4319, %v926
  %v4384 = vmul.f32 %v4320, %v931
  %v4385 = vmul.f32 %v4321, %v936
  %v4386 = vmul.f32 %v4322, %v941
  %v4387 = vmul.f32 %v4323, %v946
  %v4388 = vmul.f32 %v4324, %v951
  %v4389 = vmul.f32 %v4325, %v956
  %v4390 = vmul.f32 %v4326, %v961
  %v4391 = vmul.f32 %v4327, %v966
  %v4392 = vmul.f32 %v4328, %v971
  %v4393 = vmul.f32 %v4329, %v976
  %v4394 = vmul.f32 %v4330, %v981
  %v4395 = vmul.f32 %v4331, %v986
  %v4396 = vmul.f32 %v4332, %v991
  %v4397 = vmul.f32 %v4333, %v996
  %v4398 = vmul.f32 %v4334, %v1001
  %v4399 = vmul.f32 %v4335, %v1006
  %v4400 = vmul.f32 %v4336, %v1011
  %v4401 = vmul.f32 %v4337, %v1016
  %v4402 = vmul.f32 %v4338, %v1021
  %v4403 = vmul.f32 %v4339, %v1026
  %v4404 = vmul.f32 %v4340, %v1031
  %v4405 = vmul.f32 %v4341, %v1036
  %v4406 = vmul.f32 %v4342, %v1041
  %v4407 = vmul.f32 %v4343, %v1046
  %v4408 = vmul.f32 %v4344, %v1051
  %v4409 = vmul.f32 %v4345, %v1056
  %v4410 = vmul.f32 %v4346, %v1061
  %v4411 = vmul.f32 %v4347, %v1066
  %v4412 = vmul.f32 %v4348, %v1071
  %v4413 = vmul.f32 %v4349, %v1076
  %v4414 = vmul.f32 %v4350, %v1081
  %v4415 = vmul.f32 %v4351, %v1086
  %v4416 = vmul.f32 %v4352, %v1091
  %v4417 = vmul.f32 %v4353, %v1096
  %v4418 = vmul.f32 %v4354, %v1101
  %v4419 = vmul.f32 %v4355, %v1106
  %v4420 = vmul.f32 %v4356, %v1111
  %v4421 = vmul.f32 %v4357, %v1116
  %v4422 = vmul.f32 %v4358, %v1121
  %v4423 = vmul.f32 %v4359, %v1126
  %v4424 = vmul.f32 %v4360, %v1131
  %v4425 = vmul.f32 %v4361, %v1136
  %v4426 = vmul.f32 %v4362, %v1141
  %v4427 = vmul.f32 %v4363, %v1146
  %v4428 = vmul.f32 %v4364, %v1151
  %v4429 = vmul.f32 %v4365, %v1156
  %v4430 = vmul.f32 %v4366, %v1161
  %v4431 = vmul.f32 %v4367, %v1166
  %v4432 = vmul.f32 %v4368, %v1171
  %v4433 = vmul.f32 %v4369, %v1176
  %v4434 = vmul.f32 %v4370, %v1181
  %v4435 = vmul.f32 %v4371, %v1186
  %v4436 = vmul.f32 %v4372, %v1191
  %v4437 = vmul.f32 %v4373, %v4373
  %v4438 = vmul.f32 %v4374, %v4374
  %v4439 = vmul.f32 %v4375, %v4375
  %v4440 = vmul.f32 %v4376, %v4376
  %v4441 = vmul.f32 %v4377, %v4377
  %v4442 = vmul.f32 %v4378, %v4378
  %v4443 = vmul.f32 %v4379, %v4379
  %v4444 = vmul.f32 %v4380, %v4380
  %v4445 = vmul.f32 %v4381, %v4381
  %v4446 = vmul.f32 %v4382, %v4382
  %v4447 = vmul.f32 %v4383, %v4383
  %v4448 = vmul.f32 %v4384, %v4384
  %v4449 = vmul.f32 %v4385, %v4385
  %v4450 = vmul.f32 %v4386, %v4386
  %v4451 = vmul.f32 %v4387, %v4387
  %v4452 = vmul.f32 %v4388, %v4388
  %v4453 = vmul.f32 %v4389, %v4389
  %v4454 = vmul.f32 %v4390, %v4390
  %v4455 = vmul.f32 %v4391, %v4391
  %v4456 = vmul.f32 %v4392, %v4392
  %v4457 = vmul.f32 %v4393, %v4393
  %v4458 = vmul.f32 %v4394, %v4394
  %v4459 = vmul.f32 %v4395, %v4395
  %v4460 = vmul.f32 %v4396, %v4396
  %v4461 = vmul.f32 %v4397, %v4397
  %v4462 = vmul.f32 %v4398, %v4398
  %v4463 = vmul.f32 %v4399, %v4399
  %v4464 = vmul.f32 %v4400, %v4400
  %v4465 = vmul.f32 %v4401, %v4401
  %v4466 = vmul.f32 %v4402, %v4402
  %v4467 = vmul.f32 %v4403, %v4403
  %v4468 = vmul.f32 %v4404, %v4404
  %v4469 = vmul.f32 %v4405, %v4405
  %v4470 = vmul.f32 %v4406, %v4406
  %v4471 = vmul.f32 %v4407, %v4407
  %v4472 = vmul.f32 %v4408, %v4408
  %v4473 = vmul.f32 %v4409, %v4409
  %v4474 = vmul.f32 %v4410, %v4410
  %v4475 = vmul.f32 %v4411, %v4411
  %v4476 = vmul.f32 %v4412, %v4412
  %v4477 = vmul.f32 %v4413, %v4413
  %v4478 = vmul.f32 %v4414, %v4414
  %v4479 = vmul.f32 %v4415, %v4415
  %v4480 = vmul.f32 %v4416, %v4416
  %v4481 = vmul.f32 %v4417, %v4417
  %v4482 = vmul.f32 %v4418, %v4418
  %v4483 = vmul.f32 %v4419, %v4419
  %v4484 = vmul.f32 %v4420, %v4420
  %v4485 = vmul.f32 %v4421, %v4421
  %v4486 = vmul.f32 %v4422, %v4422
  %v4487 = vmul.f32 %v4423, %v4423
  %v4488 = vmul.f32 %v4424, %v4424
  %v4489 = vmul.f32 %v4425, %v4425
  %v4490 = vmul.f32 %v4426, %v4426
  %v4491 = vmul.f32 %v4427, %v4427
  %v4492 = vmul.f32 %v4428, %v4428
  %v4493 = vmul.f32 %v4429, %v4429
  %v4494 = vmul.f32 %v4430, %v4430
  %v4495 = vmul.f32 %v4431, %v4431
  %v4496 = vmul.f32 %v4432, %v4432
  %v4497 = vmul.f32 %v4433, %v4433
  %v4498 = vmul.f32 %v4434, %v4434
  %v4499 = vmul.f32 %v4435, %v4435
  %v4500 = vmul.f32 %v4436, %v4436
  %v4501 = vadd.f32 %v4437, %v4438
  %v4502 = vadd.f32 %v4501, %v4439
  %v4503 = vadd.f32 %v4502, %v4440
  %v4504 = vadd.f32 %v4503, %v4441
  %v4505 = vadd.f32 %v4504, %v4442
  %v4506 = vadd.f32 %v4505, %v4443
  %v4507 = vadd.f32 %v4506, %v4444
  %v4508 = vadd.f32 %v4507, %v4445
  %v4509 = vadd.f32 %v4508, %v4446
  %v4510 = vadd.f32 %v4509, %v4447
  %v4511 = vadd.f32 %v4510, %v4448
  %v4512 = vadd.f32 %v4511, %v4449
  %v4513 = vadd.f32 %v4512, %v4450
  %v4514 = vadd.f32 %v4513, %v4451
  %v4515 = vadd.f32 %v4514, %v4452
  %v4516 = vadd.f32 %v4515, %v4453
  %v4517 = vadd.f32 %v4516, %v4454
  %v4518 = vadd.f32 %v4517, %v4455
  %v4519 = vadd.f32 %v4518, %v4456
  %v4520 = vadd.f32 %v4519, %v4457
  %v4521 = vadd.f32 %v4520, %v4458
  %v4522 = vadd.f32 %v4521, %v4459
  %v4523 = vadd.f32 %v4522, %v4460
  %v4524 = vadd.f32 %v4523, %v4461
  %v4525 = vadd.f32 %v4524, %v4462
  %v4526 = vadd.f32 %v4525, %v4463
  %v4527 = vadd.f32 %v4526, %v4464
  %v4528 = vadd.f32 %v4527, %v4465
  %v4529 = vadd.f32 %v4528, %v4466
  %v4530 = vadd.f32 %v4529, %v4467
  %v4531 = vadd.f32 %v4530, %v4468
  %v4532 = vadd.f32 %v4531, %v4469
  %v4533 = vadd.f32 %v4532, %v4470
  %v4534 = vadd.f32 %v4533, %v4471
  %v4535 = vadd.f32 %v4534, %v4472
  %v4536 = vadd.f32 %v4535, %v4473
  %v4537 = vadd.f32 %v4536, %v4474
  %v4538 = vadd.f32 %v4537, %v4475
  %v4539 = vadd.f32 %v4538, %v4476
  %v4540 = vadd.f32 %v4539, %v4477
  %v4541 = vadd.f32 %v4540, %v4478
  %v4542 = vadd.f32 %v4541, %v4479
  %v4543 = vadd.f32 %v4542, %v4480
  %v4544 = vadd.f32 %v4543, %v4481
  %v4545 = vadd.f32 %v4544, %v4482
  %v4546 = vadd.f32 %v4545, %v4483
  %v4547 = vadd.f32 %v4546, %v4484
  %v4548 = vadd.f32 %v4547, %v4485
  %v4549 = vadd.f32 %v4548, %v4486
  %v4550 = vadd.f32 %v4549, %v4487
  %v4551 = vadd.f32 %v4550, %v4488
  %v4552 = vadd.f32 %v4551, %v4489
  %v4553 = vadd.f32 %v4552, %v4490
  %v4554 = vadd.f32 %v4553, %v4491
  %v4555 = vadd.f32 %v4554, %v4492
  %v4556 = vadd.f32 %v4555, %v4493
  %v4557 = vadd.f32 %v4556, %v4494
  %v4558 = vadd.f32 %v4557, %v4495
  %v4559 = vadd.f32 %v4558, %v4496
  %v4560 = vadd.f32 %v4559, %v4497
  %v4561 = vadd.f32 %v4560, %v4498
  %v4562 = vadd.f32 %v4561, %v4499
  %v4563 = vadd.f32 %v4562, %v4500
  %v4564 = vrot.slane %v4563, 4
  %v4565 = vadd.f32 %v4563, %v4564
  %v4566 = vrot.slane %v4565, 2
  %v4567 = vadd.f32 %v4565, %v4566
  %v4568 = vrot.slane %v4567, 1
  %v4569 = vadd.f32 %v4567, %v4568
  %v4570 = vmul.f32 %v4569, 0.0025510204
  %v4571 = vadd.f32 %v4570, 1e-05
  %v4572 = vrsqrt.pop %v4571
  %v4573 = vmul.f32 %v4309, %v4572
  %v4574 = vmul.f32 %v4310, %v4572
  %v4575 = vmul.f32 %v4311, %v4572
  %v4576 = vmul.f32 %v4312, %v4572
  %v4577 = vmul.f32 %v4313, %v4572
  %v4578 = vmul.f32 %v4314, %v4572
  %v4579 = vmul.f32 %v4315, %v4572
  %v4580 = vmul.f32 %v4316, %v4572
  %v4581 = vmul.f32 %v4317, %v4572
  %v4582 = vmul.f32 %v4318, %v4572
  %v4583 = vmul.f32 %v4319, %v4572
  %v4584 = vmul.f32 %v4320, %v4572
  %v4585 = vmul.f32 %v4321, %v4572
  %v4586 = vmul.f32 %v4322, %v4572
  %v4587 = vmul.f32 %v4323, %v4572
  %v4588 = vmul.f32 %v4324, %v4572
  %v4589 = vmul.f32 %v4325, %v4572
  %v4590 = vmul.f32 %v4326, %v4572
  %v4591 = vmul.f32 %v4327, %v4572
  %v4592 = vmul.f32 %v4328, %v4572
  %v4593 = vmul.f32 %v4329, %v4572
  %v4594 = vmul.f32 %v4330, %v4572
  %v4595 = vmul.f32 %v4331, %v4572
  %v4596 = vmul.f32 %v4332, %v4572
  %v4597 = vmul.f32 %v4333, %v4572
  %v4598 = vmul.f32 %v4334, %v4572
  %v4599 = vmul.f32 %v4335, %v4572
  %v4600 = vmul.f32 %v4336, %v4572
  %v4601 = vmul.f32 %v4337, %v4572
  %v4602 = vmul.f32 %v4338, %v4572
  %v4603 = vmul.f32 %v4339, %v4572
  %v4604 = vmul.f32 %v4340, %v4572
  %v4605 = vmul.f32 %v4341, %v4572
  %v4606 = vmul.f32 %v4342, %v4572
  %v4607 = vmul.f32 %v4343, %v4572
  %v4608 = vmul.f32 %v4344, %v4572
  %v4609 = vmul.f32 %v4345, %v4572
  %v4610 = vmul.f32 %v4346, %v4572
  %v4611 = vmul.f32 %v4347, %v4572
  %v4612 = vmul.f32 %v4348, %v4572
  %v4613 = vmul.f32 %v4349, %v4572
  %v4614 = vmul.f32 %v4350, %v4572
  %v4615 = vmul.f32 %v4351, %v4572
  %v4616 = vmul.f32 %v4352, %v4572
  %v4617 = vmul.f32 %v4353, %v4572
  %v4618 = vmul.f32 %v4354, %v4572
  %v4619 = vmul.f32 %v4355, %v4572
  %v4620 = vmul.f32 %v4356, %v4572
  %v4621 = vmul.f32 %v4357, %v4572
  %v4622 = vmul.f32 %v4358, %v4572
  %v4623 = vmul.f32 %v4359, %v4572
  %v4624 = vmul.f32 %v4360, %v4572
  %v4625 = vmul.f32 %v4361, %v4572
  %v4626 = vmul.f32 %v4362, %v4572
  %v4627 = vmul.f32 %v4363, %v4572
  %v4628 = vmul.f32 %v4364, %v4572
  %v4629 = vmul.f32 %v4365, %v4572
  %v4630 = vmul.f32 %v4366, %v4572
  %v4631 = vmul.f32 %v4367, %v4572
  %v4632 = vmul.f32 %v4368, %v4572
  %v4633 = vmul.f32 %v4369, %v4572
  %v4634 = vmul.f32 %v4370, %v4572
  %v4635 = vmul.f32 %v4371, %v4572
  %v4636 = vmul.f32 %v4372, %v4572
  %v4637 = vmax.f32 %v4573, 0.0
  %v4638 = vmax.f32 %v4574, 0.0
  %v4639 = vmax.f32 %v4575, 0.0
  %v4640 = vmax.f32 %v4576, 0.0
  %v4641 = vmax.f32 %v4577, 0.0
  %v4642 = vmax.f32 %v4578, 0.0
  %v4643 = vmax.f32 %v4579, 0.0
  %v4644 = vmax.f32 %v4580, 0.0
  %v4645 = vmax.f32 %v4581, 0.0
  %v4646 = vmax.f32 %v4582, 0.0
  %v4647 = vmax.f32 %v4583, 0.0
  %v4648 = vmax.f32 %v4584, 0.0
  %v4649 = vmax.f32 %v4585, 0.0
  %v4650 = vmax.f32 %v4586, 0.0
  %v4651 = vmax.f32 %v4587, 0.0
  %v4652 = vmax.f32 %v4588, 0.0
  %v4653 = vmax.f32 %v4589, 0.0
  %v4654 = vmax.f32 %v4590, 0.0
  %v4655 = vmax.f32 %v4591, 0.0
  %v4656 = vmax.f32 %v4592, 0.0
  %v4657 = vmax.f32 %v4593, 0.0
  %v4658 = vmax.f32 %v4594, 0.0
  %v4659 = vmax.f32 %v4595, 0.0
  %v4660 = vmax.f32 %v4596, 0.0
  %v4661 = vmax.f32 %v4597, 0.0
  %v4662 = vmax.f32 %v4598, 0.0
  %v4663 = vmax.f32 %v4599, 0.0
  %v4664 = vmax.f32 %v4600, 0.0
  %v4665 = vmax.f32 %v4601, 0.0
  %v4666 = vmax.f32 %v4602, 0.0
  %v4667 = vmax.f32 %v4603, 0.0
  %v4668 = vmax.f32 %v4604, 0.0
  %v4669 = vmax.f32 %v4605, 0.0
  %v4670 = vmax.f32 %v4606, 0.0
  %v4671 = vmax.f32 %v4607, 0.0
  %v4672 = vmax.f32 %v4608, 0.0
  %v4673 = vmax.f32 %v4609, 0.0
  %v4674 = vmax.f32 %v4610, 0.0
  %v4675 = vmax.f32 %v4611, 0.0
  %v4676 = vmax.f32 %v4612, 0.0
  %v4677 = vmax.f32 %v4613, 0.0
  %v4678 = vmax.f32 %v4614, 0.0
  %v4679 = vmax.f32 %v4615, 0.0
  %v4680 = vmax.f32 %v4616, 0.0
  %v4681 = vmax.f32 %v4617, 0.0
  %v4682 = vmax.f32 %v4618, 0.0
  %v4683 = vmax.f32 %v4619, 0.0
  %v4684 = vmax.f32 %v4620, 0.0
  %v4685 = vmax.f32 %v4621, 0.0
  %v4686 = vmax.f32 %v4622, 0.0
  %v4687 = vmax.f32 %v4623, 0.0
  %v4688 = vmax.f32 %v4624, 0.0
  %v4689 = vmax.f32 %v4625, 0.0
  %v4690 = vmax.f32 %v4626, 0.0
  %v4691 = vmax.f32 %v4627, 0.0
  %v4692 = vmax.f32 %v4628, 0.0
  %v4693 = vmax.f32 %v4629, 0.0
  %v4694 = vmax.f32 %v4630, 0.0
  %v4695 = vmax.f32 %v4631, 0.0
  %v4696 = vmax.f32 %v4632, 0.0
  %v4697 = vmax.f32 %v4633, 0.0
  %v4698 = vmax.f32 %v4634, 0.0
  %v4699 = vmax.f32 %v4635, 0.0
  %v4700 = vmax.f32 %v4636, 0.0
  %v4701 = vmul.f32 %v4637, %v876
  %v4702 = vmul.f32 %v4638, %v881
  %v4703 = vmul.f32 %v4639, %v886
  %v4704 = vmul.f32 %v4640, %v891
  %v4705 = vmul.f32 %v4641, %v896
  %v4706 = vmul.f32 %v4642, %v901
  %v4707 = vmul.f32 %v4643, %v906
  %v4708 = vmul.f32 %v4644, %v911
  %v4709 = vmul.f32 %v4645, %v916
  %v4710 = vmul.f32 %v4646, %v921
  %v4711 = vmul.f32 %v4647, %v926
  %v4712 = vmul.f32 %v4648, %v931
  %v4713 = vmul.f32 %v4649, %v936
  %v4714 = vmul.f32 %v4650, %v941
  %v4715 = vmul.f32 %v4651, %v946
  %v4716 = vmul.f32 %v4652, %v951
  %v4717 = vmul.f32 %v4653, %v956
  %v4718 = vmul.f32 %v4654, %v961
  %v4719 = vmul.f32 %v4655, %v966
  %v4720 = vmul.f32 %v4656, %v971
  %v4721 = vmul.f32 %v4657, %v976
  %v4722 = vmul.f32 %v4658, %v981
  %v4723 = vmul.f32 %v4659, %v986
  %v4724 = vmul.f32 %v4660, %v991
  %v4725 = vmul.f32 %v4661, %v996
  %v4726 = vmul.f32 %v4662, %v1001
  %v4727 = vmul.f32 %v4663, %v1006
  %v4728 = vmul.f32 %v4664, %v1011
  %v4729 = vmul.f32 %v4665, %v1016
  %v4730 = vmul.f32 %v4666, %v1021
  %v4731 = vmul.f32 %v4667, %v1026
  %v4732 = vmul.f32 %v4668, %v1031
  %v4733 = vmul.f32 %v4669, %v1036
  %v4734 = vmul.f32 %v4670, %v1041
  %v4735 = vmul.f32 %v4671, %v1046
  %v4736 = vmul.f32 %v4672, %v1051
  %v4737 = vmul.f32 %v4673, %v1056
  %v4738 = vmul.f32 %v4674, %v1061
  %v4739 = vmul.f32 %v4675, %v1066
  %v4740 = vmul.f32 %v4676, %v1071
  %v4741 = vmul.f32 %v4677, %v1076
  %v4742 = vmul.f32 %v4678, %v1081
  %v4743 = vmul.f32 %v4679, %v1086
  %v4744 = vmul.f32 %v4680, %v1091
  %v4745 = vmul.f32 %v4681, %v1096
  %v4746 = vmul.f32 %v4682, %v1101
  %v4747 = vmul.f32 %v4683, %v1106
  %v4748 = vmul.f32 %v4684, %v1111
  %v4749 = vmul.f32 %v4685, %v1116
  %v4750 = vmul.f32 %v4686, %v1121
  %v4751 = vmul.f32 %v4687, %v1126
  %v4752 = vmul.f32 %v4688, %v1131
  %v4753 = vmul.f32 %v4689, %v1136
  %v4754 = vmul.f32 %v4690, %v1141
  %v4755 = vmul.f32 %v4691, %v1146
  %v4756 = vmul.f32 %v4692, %v1151
  %v4757 = vmul.f32 %v4693, %v1156
  %v4758 = vmul.f32 %v4694, %v1161
  %v4759 = vmul.f32 %v4695, %v1166
  %v4760 = vmul.f32 %v4696, %v1171
  %v4761 = vmul.f32 %v4697, %v1176
  %v4762 = vmul.f32 %v4698, %v1181
  %v4763 = vmul.f32 %v4699, %v1186
  %v4764 = vmul.f32 %v4700, %v1191
  %4765 = vst [vmem:[#allocation2 + $0x18] sm:$0xff] %v4701
  %4766 = vst [vmem:[#allocation2 + $0x20] sm:$0xff] %v4702
  %4767 = vst [vmem:[#allocation2 + $0x28] sm:$0xff] %v4703
  %4768 = vst [vmem:[#allocation2 + $0x30] sm:$0xff] %v4704
  %4769 = vst [vmem:[#allocation2 + $0x38] sm:$0xff] %v4705
  %4770 = vst [vmem:[#allocation2 + $0x40] sm:$0xff] %v4706
  %4771 = vst [vmem:[#allocation2 + $0x48] sm:$0xff] %v4707
  %4772 = vst [vmem:[#allocation2 + $0x50] sm:$0xff] %v4708
  %4773 = vst [vmem:[#allocation2 + $0x58] sm:$0xff] %v4709
  %4774 = vst [vmem:[#allocation2 + $0x60] sm:$0xff] %v4710
  %4775 = vst [vmem:[#allocation2 + $0x68] sm:$0xff] %v4711
  %4776 = vst [vmem:[#allocation2 + $0x70] sm:$0xff] %v4712
  %4777 = vst [vmem:[#allocation2 + $0x78] sm:$0xff] %v4713
  %4778 = vst [vmem:[#allocation2 + $0x80] sm:$0xff] %v4714
  %4779 = vst [vmem:[#allocation2 + $0x88] sm:$0xff] %v4715
  %4780 = vst [vmem:[#allocation2 + $0x90] sm:$0xff] %v4716
  %4781 = vst [vmem:[#allocation2 + $0x98] sm:$0xff] %v4717
  %4782 = vst [vmem:[#allocation2 + $0xa0] sm:$0xff] %v4718
  %4783 = vst [vmem:[#allocation2 + $0xa8] sm:$0xff] %v4719
  %4784 = vst [vmem:[#allocation2 + $0xb0] sm:$0xff] %v4720
  %4785 = vst [vmem:[#allocation2 + $0xb8] sm:$0xff] %v4721
  %4786 = vst [vmem:[#allocation2 + $0xc0] sm:$0xff] %v4722
  %4787 = vst [vmem:[#allocation2 + $0xc8] sm:$0xff] %v4723
  %4788 = vst [vmem:[#allocation2 + $0xd0] sm:$0xff] %v4724
  %4789 = vst [vmem:[#allocation2 + $0xd8] sm:$0xff] %v4725
  %4790 = vst [vmem:[#allocation2 + $0xe0] sm:$0xff] %v4726
  %4791 = vst [vmem:[#allocation2 + $0xe8] sm:$0xff] %v4727
  %4792 = vst [vmem:[#allocation2 + $0xf0] sm:$0xff] %v4728
  %4793 = vst [vmem:[#allocation2 + $0xf8] sm:$0xff] %v4729
  %4794 = vst [vmem:[#allocation2 + $0x100] sm:$0xff] %v4730
  %4795 = vst [vmem:[#allocation2 + $0x108] sm:$0xff] %v4731
  %4796 = vst [vmem:[#allocation2 + $0x110] sm:$0xff] %v4732
  %4797 = vst [vmem:[#allocation2 + $0x118] sm:$0xff] %v4733
  %4798 = vst [vmem:[#allocation2 + $0x120] sm:$0xff] %v4734
  %4799 = vst [vmem:[#allocation2 + $0x128] sm:$0xff] %v4735
  %4800 = vst [vmem:[#allocation2 + $0x130] sm:$0xff] %v4736
  %4801 = vst [vmem:[#allocation2 + $0x138] sm:$0xff] %v4737
  %4802 = vst [vmem:[#allocation2 + $0x140] sm:$0xff] %v4738
  %4803 = vst [vmem:[#allocation2 + $0x148] sm:$0xff] %v4739
  %4804 = vst [vmem:[#allocation2 + $0x150] sm:$0xff] %v4740
  %4805 = vst [vmem:[#allocation2 + $0x158] sm:$0xff] %v4741
  %4806 = vst [vmem:[#allocation2 + $0x160] sm:$0xff] %v4742
  %4807 = vst [vmem:[#allocation2 + $0x168] sm:$0xff] %v4743
  %4808 = vst [vmem:[#allocation2 + $0x170] sm:$0xff] %v4744
  %4809 = vst [vmem:[#allocation2 + $0x178] sm:$0xff] %v4745
  %4810 = vst [vmem:[#allocation2 + $0x180] sm:$0xff] %v4746
  %4811 = vst [vmem:[#allocation2 + $0x188] sm:$0xff] %v4747
  %4812 = vst [vmem:[#allocation2 + $0x190] sm:$0xff] %v4748
  %4813 = vst [vmem:[#allocation2 + $0x198] sm:$0xff] %v4749
  %4814 = vst [vmem:[#allocation2 + $0x1a0] sm:$0xff] %v4750
  %4815 = vst [vmem:[#allocation2 + $0x1a8] sm:$0xff] %v4751
  %4816 = vst [vmem:[#allocation2 + $0x1b0] sm:$0xff] %v4752
  %4817 = vst [vmem:[#allocation2 + $0x1b8] sm:$0xff] %v4753
  %4818 = vst [vmem:[#allocation2 + $0x1c0] sm:$0xff] %v4754
  %4819 = vst [vmem:[#allocation2 + $0x1c8] sm:$0xff] %v4755
  %4820 = vst [vmem:[#allocation2 + $0x1d0] sm:$0xff] %v4756
  %4821 = vst [vmem:[#allocation2 + $0x1d8] sm:$0xff] %v4757
  %4822 = vst [vmem:[#allocation2 + $0x1e0] sm:$0xff] %v4758
  %4823 = vst [vmem:[#allocation2 + $0x1e8] sm:$0xff] %v4759
  %4824 = vst [vmem:[#allocation2 + $0x1f0] sm:$0xff] %v4760
  %4825 = vst [vmem:[#allocation2 + $0x1f8] sm:$0xff] %v4761
  %4826 = vst [vmem:[#allocation2 + $0x200] sm:$0xff] %v4762
  %4827 = vst [vmem:[#allocation2 + $0x208] sm:$0xff] %v4763
  %4828 = vst [vmem:[#allocation2 + $0x210] sm:$0xff] %v4764
  %v4829 = vld [vmem:[#allocation2 + $0x7] sm:$0xff]
  %v4830 = vld [vmem:[#allocation2 + $0xf] sm:$0xff]
  %v4831 = vld [vmem:[#allocation2 + $0x17] sm:$0xff]
  %v4832 = vld [vmem:[#allocation2 + $0x1f] sm:$0xff]
  %v4833 = vld [vmem:[#allocation2 + $0x27] sm:$0xff]
  %v4834 = vld [vmem:[#allocation2 + $0x2f] sm:$0xff]
  %v4835 = vld [vmem:[#allocation2 + $0x37] sm:$0xff]
  %v4836 = vld [vmem:[#allocation2 + $0x3f] sm:$0xff]
  %v4837 = vld [vmem:[#allocation2 + $0x47] sm:$0xff]
  %v4838 = vld [vmem:[#allocation2 + $0x4f] sm:$0xff]
  %v4839 = vld [vmem:[#allocation2 + $0x57] sm:$0xff]
  %v4840 = vld [vmem:[#allocation2 + $0x5f] sm:$0xff]
  %v4841 = vld [vmem:[#allocation2 + $0x67] sm:$0xff]
  %v4842 = vld [vmem:[#allocation2 + $0x6f] sm:$0xff]
  %v4843 = vld [vmem:[#allocation2 + $0x77] sm:$0xff]
  %v4844 = vld [vmem:[#allocation2 + $0x7f] sm:$0xff]
  %v4845 = vld [vmem:[#allocation2 + $0x87] sm:$0xff]
  %v4846 = vld [vmem:[#allocation2 + $0x8f] sm:$0xff]
  %v4847 = vld [vmem:[#allocation2 + $0x97] sm:$0xff]
  %v4848 = vld [vmem:[#allocation2 + $0x9f] sm:$0xff]
  %v4849 = vld [vmem:[#allocation2 + $0xa7] sm:$0xff]
  %v4850 = vld [vmem:[#allocation2 + $0xaf] sm:$0xff]
  %v4851 = vld [vmem:[#allocation2 + $0xb7] sm:$0xff]
  %v4852 = vld [vmem:[#allocation2 + $0xbf] sm:$0xff]
  %v4853 = vld [vmem:[#allocation2 + $0xc7] sm:$0xff]
  %v4854 = vld [vmem:[#allocation2 + $0xcf] sm:$0xff]
  %v4855 = vld [vmem:[#allocation2 + $0xd7] sm:$0xff]
  %v4856 = vld [vmem:[#allocation2 + $0xdf] sm:$0xff]
  %v4857 = vld [vmem:[#allocation2 + $0xe7] sm:$0xff]
  %v4858 = vld [vmem:[#allocation2 + $0xef] sm:$0xff]
  %v4859 = vld [vmem:[#allocation2 + $0xf7] sm:$0xff]
  %v4860 = vld [vmem:[#allocation2 + $0xff] sm:$0xff]
  %v4861 = vld [vmem:[#allocation2 + $0x107] sm:$0xff]
  %v4862 = vld [vmem:[#allocation2 + $0x10f] sm:$0xff]
  %v4863 = vld [vmem:[#allocation2 + $0x117] sm:$0xff]
  %v4864 = vld [vmem:[#allocation2 + $0x11f] sm:$0xff]
  %v4865 = vld [vmem:[#allocation2 + $0x127] sm:$0xff]
  %v4866 = vld [vmem:[#allocation2 + $0x12f] sm:$0xff]
  %v4867 = vld [vmem:[#allocation2 + $0x137] sm:$0xff]
  %v4868 = vld [vmem:[#allocation2 + $0x13f] sm:$0xff]
  %v4869 = vld [vmem:[#allocation2 + $0x147] sm:$0xff]
  %v4870 = vld [vmem:[#allocation2 + $0x14f] sm:$0xff]
  %v4871 = vld [vmem:[#allocation2 + $0x157] sm:$0xff]
  %v4872 = vld [vmem:[#allocation2 + $0x15f] sm:$0xff]
  %v4873 = vld [vmem:[#allocation2 + $0x167] sm:$0xff]
  %v4874 = vld [vmem:[#allocation2 + $0x16f] sm:$0xff]
  %v4875 = vld [vmem:[#allocation2 + $0x177] sm:$0xff]
  %v4876 = vld [vmem:[#allocation2 + $0x17f] sm:$0xff]
  %v4877 = vld [vmem:[#allocation2 + $0x187] sm:$0xff]
  %v4878 = vld [vmem:[#allocation2 + $0x18f] sm:$0xff]
  %v4879 = vld [vmem:[#allocation2 + $0x197] sm:$0xff]
  %v4880 = vld [vmem:[#allocation2 + $0x19f] sm:$0xff]
  %v4881 = vld [vmem:[#allocation2 + $0x1a7] sm:$0xff]
  %v4882 = vld [vmem:[#allocation2 + $0x1af] sm:$0xff]
  %v4883 = vld [vmem:[#allocation2 + $0x1b7] sm:$0xff]
  %v4884 = vld [vmem:[#allocation2 + $0x1bf] sm:$0xff]
  %v4885 = vld [vmem:[#allocation2 + $0x1c7] sm:$0xff]
  %v4886 = vld [vmem:[#allocation2 + $0x1cf] sm:$0xff]
  %v4887 = vld [vmem:[#allocation2 + $0x1d7] sm:$0xff]
  %v4888 = vld [vmem:[#allocation2 + $0x1df] sm:$0xff]
  %v4889 = vld [vmem:[#allocation2 + $0x1e7] sm:$0xff]
  %v4890 = vld [vmem:[#allocation2 + $0x1ef] sm:$0xff]
  %v4891 = vld [vmem:[#allocation2 + $0x1f7] sm:$0xff]
  %v4892 = vld [vmem:[#allocation2 + $0x1ff] sm:$0xff]
  %v4893 = vld [vmem:[%s8] sm:$0x1]
  %v4894 = vlaneseq
  %v4895 = vshrl.u32 %v4894, 7
  %v4896 = vsub.s32 0, %v4895
  %v4897 = vrot.slane %v4893, %v4896
  %v4898 = vmul.f32 %v4829, %v4897
  %v4899 = vmul.f32 %v4830, %v4897
  %v4900 = vmul.f32 %v4831, %v4897
  %v4901 = vmul.f32 %v4832, %v4897
  %v4902 = vmul.f32 %v4833, %v4897
  %v4903 = vmul.f32 %v4834, %v4897
  %v4904 = vmul.f32 %v4835, %v4897
  %v4905 = vmul.f32 %v4836, %v4897
  %v4906 = vmul.f32 %v4837, %v4897
  %v4907 = vmul.f32 %v4838, %v4897
  %v4908 = vmul.f32 %v4839, %v4897
  %v4909 = vmul.f32 %v4840, %v4897
  %v4910 = vmul.f32 %v4841, %v4897
  %v4911 = vmul.f32 %v4842, %v4897
  %v4912 = vmul.f32 %v4843, %v4897
  %v4913 = vmul.f32 %v4844, %v4897
  %v4914 = vmul.f32 %v4845, %v4897
  %v4915 = vmul.f32 %v4846, %v4897
  %v4916 = vmul.f32 %v4847, %v4897
  %v4917 = vmul.f32 %v4848, %v4897
  %v4918 = vmul.f32 %v4849, %v4897
  %v4919 = vmul.f32 %v4850, %v4897
  %v4920 = vmul.f32 %v4851, %v4897
  %v4921 = vmul.f32 %v4852, %v4897
  %v4922 = vmul.f32 %v4853, %v4897
  %v4923 = vmul.f32 %v4854, %v4897
  %v4924 = vmul.f32 %v4855, %v4897
  %v4925 = vmul.f32 %v4856, %v4897
  %v4926 = vmul.f32 %v4857, %v4897
  %v4927 = vmul.f32 %v4858, %v4897
  %v4928 = vmul.f32 %v4859, %v4897
  %v4929 = vmul.f32 %v4860, %v4897
  %v4930 = vmul.f32 %v4861, %v4897
  %v4931 = vmul.f32 %v4862, %v4897
  %v4932 = vmul.f32 %v4863, %v4897
  %v4933 = vmul.f32 %v4864, %v4897
  %v4934 = vmul.f32 %v4865, %v4897
  %v4935 = vmul.f32 %v4866, %v4897
  %v4936 = vmul.f32 %v4867, %v4897
  %v4937 = vmul.f32 %v4868, %v4897
  %v4938 = vmul.f32 %v4869, %v4897
  %v4939 = vmul.f32 %v4870, %v4897
  %v4940 = vmul.f32 %v4871, %v4897
  %v4941 = vmul.f32 %v4872, %v4897
  %v4942 = vmul.f32 %v4873, %v4897
  %v4943 = vmul.f32 %v4874, %v4897
  %v4944 = vmul.f32 %v4875, %v4897
  %v4945 = vmul.f32 %v4876, %v4897
  %v4946 = vmul.f32 %v4877, %v4897
  %v4947 = vmul.f32 %v4878, %v4897
  %v4948 = vmul.f32 %v4879, %v4897
  %v4949 = vmul.f32 %v4880, %v4897
  %v4950 = vmul.f32 %v4881, %v4897
  %v4951 = vmul.f32 %v4882, %v4897
  %v4952 = vmul.f32 %v4883, %v4897
  %v4953 = vmul.f32 %v4884, %v4897
  %v4954 = vmul.f32 %v4885, %v4897
  %v4955 = vmul.f32 %v4886, %v4897
  %v4956 = vmul.f32 %v4887, %v4897
  %v4957 = vmul.f32 %v4888, %v4897
  %v4958 = vmul.f32 %v4889, %v4897
  %v4959 = vmul.f32 %v4890, %v4897
  %v4960 = vmul.f32 %v4891, %v4897
  %v4961 = vmul.f32 %v4892, %v4897
  %v4962 = vld [vmem:[#allocation2 + $0x8] sm:$0xff]
  %v4963 = vld [vmem:[#allocation2 + $0x10] sm:$0xff]
  %v4964 = vld [vmem:[#allocation2 + $0x18] sm:$0xff]
  %v4965 = vld [vmem:[#allocation2 + $0x20] sm:$0xff]
  %v4966 = vld [vmem:[#allocation2 + $0x28] sm:$0xff]
  %v4967 = vld [vmem:[#allocation2 + $0x30] sm:$0xff]
  %v4968 = vld [vmem:[#allocation2 + $0x38] sm:$0xff]
  %v4969 = vld [vmem:[#allocation2 + $0x40] sm:$0xff]
  %v4970 = vld [vmem:[#allocation2 + $0x48] sm:$0xff]
  %v4971 = vld [vmem:[#allocation2 + $0x50] sm:$0xff]
  %v4972 = vld [vmem:[#allocation2 + $0x58] sm:$0xff]
  %v4973 = vld [vmem:[#allocation2 + $0x60] sm:$0xff]
  %v4974 = vld [vmem:[#allocation2 + $0x68] sm:$0xff]
  %v4975 = vld [vmem:[#allocation2 + $0x70] sm:$0xff]
  %v4976 = vld [vmem:[#allocation2 + $0x78] sm:$0xff]
  %v4977 = vld [vmem:[#allocation2 + $0x80] sm:$0xff]
  %v4978 = vld [vmem:[#allocation2 + $0x88] sm:$0xff]
  %v4979 = vld [vmem:[#allocation2 + $0x90] sm:$0xff]
  %v4980 = vld [vmem:[#allocation2 + $0x98] sm:$0xff]
  %v4981 = vld [vmem:[#allocation2 + $0xa0] sm:$0xff]
  %v4982 = vld [vmem:[#allocation2 + $0xa8] sm:$0xff]
  %v4983 = vld [vmem:[#allocation2 + $0xb0] sm:$0xff]
  %v4984 = vld [vmem:[#allocation2 + $0xb8] sm:$0xff]
  %v4985 = vld [vmem:[#allocation2 + $0xc0] sm:$0xff]
  %v4986 = vld [vmem:[#allocation2 + $0xc8] sm:$0xff]
  %v4987 = vld [vmem:[#allocation2 + $0xd0] sm:$0xff]
  %v4988 = vld [vmem:[#allocation2 + $0xd8] sm:$0xff]
  %v4989 = vld [vmem:[#allocation2 + $0xe0] sm:$0xff]
  %v4990 = vld [vmem:[#allocation2 + $0xe8] sm:$0xff]
  %v4991 = vld [vmem:[#allocation2 + $0xf0] sm:$0xff]
  %v4992 = vld [vmem:[#allocation2 + $0xf8] sm:$0xff]
  %v4993 = vld [vmem:[#allocation2 + $0x100] sm:$0xff]
  %v4994 = vld [vmem:[#allocation2 + $0x108] sm:$0xff]
  %v4995 = vld [vmem:[#allocation2 + $0x110] sm:$0xff]
  %v4996 = vld [vmem:[#allocation2 + $0x118] sm:$0xff]
  %v4997 = vld [vmem:[#allocation2 + $0x120] sm:$0xff]
  %v4998 = vld [vmem:[#allocation2 + $0x128] sm:$0xff]
  %v4999 = vld [vmem:[#allocation2 + $0x130] sm:$0xff]
  %v5000 = vld [vmem:[#allocation2 + $0x138] sm:$0xff]
  %v5001 = vld [vmem:[#allocation2 + $0x140] sm:$0xff]
  %v5002 = vld [vmem:[#allocation2 + $0x148] sm:$0xff]
  %v5003 = vld [vmem:[#allocation2 + $0x150] sm:$0xff]
  %v5004 = vld [vmem:[#allocation2 + $0x158] sm:$0xff]
  %v5005 = vld [vmem:[#allocation2 + $0x160] sm:$0xff]
  %v5006 = vld [vmem:[#allocation2 + $0x168] sm:$0xff]
  %v5007 = vld [vmem:[#allocation2 + $0x170] sm:$0xff]
  %v5008 = vld [vmem:[#allocation2 + $0x178] sm:$0xff]
  %v5009 = vld [vmem:[#allocation2 + $0x180] sm:$0xff]
  %v5010 = vld [vmem:[#allocation2 + $0x188] sm:$0xff]
  %v5011 = vld [vmem:[#allocation2 + $0x190] sm:$0xff]
  %v5012 = vld [vmem:[#allocation2 + $0x198] sm:$0xff]
  %v5013 = vld [vmem:[#allocation2 + $0x1a0] sm:$0xff]
  %v5014 = vld [vmem:[#allocation2 + $0x1a8] sm:$0xff]
  %v5015 = vld [vmem:[#allocation2 + $0x1b0] sm:$0xff]
  %v5016 = vld [vmem:[#allocation2 + $0x1b8] sm:$0xff]
  %v5017 = vld [vmem:[#allocation2 + $0x1c0] sm:$0xff]
  %v5018 = vld [vmem:[#allocation2 + $0x1c8] sm:$0xff]
  %v5019 = vld [vmem:[#allocation2 + $0x1d0] sm:$0xff]
  %v5020 = vld [vmem:[#allocation2 + $0x1d8] sm:$0xff]
  %v5021 = vld [vmem:[#allocation2 + $0x1e0] sm:$0xff]
  %v5022 = vld [vmem:[#allocation2 + $0x1e8] sm:$0xff]
  %v5023 = vld [vmem:[#allocation2 + $0x1f0] sm:$0xff]
  %v5024 = vld [vmem:[#allocation2 + $0x1f8] sm:$0xff]
  %v5025 = vld [vmem:[#allocation2 + $0x200] sm:$0xff]
  %v5026 = vld [vmem:[%s8 + $0x1] sm:$0x1]
  %v5027 = vlaneseq
  %v5028 = vshrl.u32 %v5027, 7
  %v5029 = vsub.s32 0, %v5028
  %v5030 = vrot.slane %v5026, %v5029
  %v5031 = vmul.f32 %v4962, %v5030
  %v5032 = vmul.f32 %v4963, %v5030
  %v5033 = vmul.f32 %v4964, %v5030
  %v5034 = vmul.f32 %v4965, %v5030
  %v5035 = vmul.f32 %v4966, %v5030
  %v5036 = vmul.f32 %v4967, %v5030
  %v5037 = vmul.f32 %v4968, %v5030
  %v5038 = vmul.f32 %v4969, %v5030
  %v5039 = vmul.f32 %v4970, %v5030
  %v5040 = vmul.f32 %v4971, %v5030
  %v5041 = vmul.f32 %v4972, %v5030
  %v5042 = vmul.f32 %v4973, %v5030
  %v5043 = vmul.f32 %v4974, %v5030
  %v5044 = vmul.f32 %v4975, %v5030
  %v5045 = vmul.f32 %v4976, %v5030
  %v5046 = vmul.f32 %v4977, %v5030
  %v5047 = vmul.f32 %v4978, %v5030
  %v5048 = vmul.f32 %v4979, %v5030
  %v5049 = vmul.f32 %v4980, %v5030
  %v5050 = vmul.f32 %v4981, %v5030
  %v5051 = vmul.f32 %v4982, %v5030
  %v5052 = vmul.f32 %v4983, %v5030
  %v5053 = vmul.f32 %v4984, %v5030
  %v5054 = vmul.f32 %v4985, %v5030
  %v5055 = vmul.f32 %v4986, %v5030
  %v5056 = vmul.f32 %v4987, %v5030
  %v5057 = vmul.f32 %v4988, %v5030
  %v5058 = vmul.f32 %v4989, %v5030
  %v5059 = vmul.f32 %v4990, %v5030
  %v5060 = vmul.f32 %v4991, %v5030
  %v5061 = vmul.f32 %v4992, %v5030
  %v5062 = vmul.f32 %v4993, %v5030
  %v5063 = vmul.f32 %v4994, %v5030
  %v5064 = vmul.f32 %v4995, %v5030
  %v5065 = vmul.f32 %v4996, %v5030
  %v5066 = vmul.f32 %v4997, %v5030
  %v5067 = vmul.f32 %v4998, %v5030
  %v5068 = vmul.f32 %v4999, %v5030
  %v5069 = vmul.f32 %v5000, %v5030
  %v5070 = vmul.f32 %v5001, %v5030
  %v5071 = vmul.f32 %v5002, %v5030
  %v5072 = vmul.f32 %v5003, %v5030
  %v5073 = vmul.f32 %v5004, %v5030
  %v5074 = vmul.f32 %v5005, %v5030
  %v5075 = vmul.f32 %v5006, %v5030
  %v5076 = vmul.f32 %v5007, %v5030
  %v5077 = vmul.f32 %v5008, %v5030
  %v5078 = vmul.f32 %v5009, %v5030
  %v5079 = vmul.f32 %v5010, %v5030
  %v5080 = vmul.f32 %v5011, %v5030
  %v5081 = vmul.f32 %v5012, %v5030
  %v5082 = vmul.f32 %v5013, %v5030
  %v5083 = vmul.f32 %v5014, %v5030
  %v5084 = vmul.f32 %v5015, %v5030
  %v5085 = vmul.f32 %v5016, %v5030
  %v5086 = vmul.f32 %v5017, %v5030
  %v5087 = vmul.f32 %v5018, %v5030
  %v5088 = vmul.f32 %v5019, %v5030
  %v5089 = vmul.f32 %v5020, %v5030
  %v5090 = vmul.f32 %v5021, %v5030
  %v5091 = vmul.f32 %v5022, %v5030
  %v5092 = vmul.f32 %v5023, %v5030
  %v5093 = vmul.f32 %v5024, %v5030
  %v5094 = vmul.f32 %v5025, %v5030
  %v5095 = vadd.f32 %v4898, %v5031
  %v5096 = vadd.f32 %v4899, %v5032
  %v5097 = vadd.f32 %v4900, %v5033
  %v5098 = vadd.f32 %v4901, %v5034
  %v5099 = vadd.f32 %v4902, %v5035
  %v5100 = vadd.f32 %v4903, %v5036
  %v5101 = vadd.f32 %v4904, %v5037
  %v5102 = vadd.f32 %v4905, %v5038
  %v5103 = vadd.f32 %v4906, %v5039
  %v5104 = vadd.f32 %v4907, %v5040
  %v5105 = vadd.f32 %v4908, %v5041
  %v5106 = vadd.f32 %v4909, %v5042
  %v5107 = vadd.f32 %v4910, %v5043
  %v5108 = vadd.f32 %v4911, %v5044
  %v5109 = vadd.f32 %v4912, %v5045
  %v5110 = vadd.f32 %v4913, %v5046
  %v5111 = vadd.f32 %v4914, %v5047
  %v5112 = vadd.f32 %v4915, %v5048
  %v5113 = vadd.f32 %v4916, %v5049
  %v5114 = vadd.f32 %v4917, %v5050
  %v5115 = vadd.f32 %v4918, %v5051
  %v5116 = vadd.f32 %v4919, %v5052
  %v5117 = vadd.f32 %v4920, %v5053
  %v5118 = vadd.f32 %v4921, %v5054
  %v5119 = vadd.f32 %v4922, %v5055
  %v5120 = vadd.f32 %v4923, %v5056
  %v5121 = vadd.f32 %v4924, %v5057
  %v5122 = vadd.f32 %v4925, %v5058
  %v5123 = vadd.f32 %v4926, %v5059
  %v5124 = vadd.f32 %v4927, %v5060
  %v5125 = vadd.f32 %v4928, %v5061
  %v5126 = vadd.f32 %v4929, %v5062
  %v5127 = vadd.f32 %v4930, %v5063
  %v5128 = vadd.f32 %v4931, %v5064
  %v5129 = vadd.f32 %v4932, %v5065
  %v5130 = vadd.f32 %v4933, %v5066
  %v5131 = vadd.f32 %v4934, %v5067
  %v5132 = vadd.f32 %v4935, %v5068
  %v5133 = vadd.f32 %v4936, %v5069
  %v5134 = vadd.f32 %v4937, %v5070
  %v5135 = vadd.f32 %v4938, %v5071
  %v5136 = vadd.f32 %v4939, %v5072
  %v5137 = vadd.f32 %v4940, %v5073
  %v5138 = vadd.f32 %v4941, %v5074
  %v5139 = vadd.f32 %v4942, %v5075
  %v5140 = vadd.f32 %v4943, %v5076
  %v5141 = vadd.f32 %v4944, %v5077
  %v5142 = vadd.f32 %v4945, %v5078
  %v5143 = vadd.f32 %v4946, %v5079
  %v5144 = vadd.f32 %v4947, %v5080
  %v5145 = vadd.f32 %v4948, %v5081
  %v5146 = vadd.f32 %v4949, %v5082
  %v5147 = vadd.f32 %v4950, %v5083
  %v5148 = vadd.f32 %v4951, %v5084
  %v5149 = vadd.f32 %v4952, %v5085
  %v5150 = vadd.f32 %v4953, %v5086
  %v5151 = vadd.f32 %v4954, %v5087
  %v5152 = vadd.f32 %v4955, %v5088
  %v5153 = vadd.f32 %v4956, %v5089
  %v5154 = vadd.f32 %v4957, %v5090
  %v5155 = vadd.f32 %v4958, %v5091
  %v5156 = vadd.f32 %v4959, %v5092
  %v5157 = vadd.f32 %v4960, %v5093
  %v5158 = vadd.f32 %v4961, %v5094
  %v5159 = vld [vmem:[#allocation2 + $0x9] sm:$0xff]
  %v5160 = vld [vmem:[#allocation2 + $0x11] sm:$0xff]
  %v5161 = vld [vmem:[#allocation2 + $0x19] sm:$0xff]
  %v5162 = vld [vmem:[#allocation2 + $0x21] sm:$0xff]
  %v5163 = vld [vmem:[#allocation2 + $0x29] sm:$0xff]
  %v5164 = vld [vmem:[#allocation2 + $0x31] sm:$0xff]
  %v5165 = vld [vmem:[#allocation2 + $0x39] sm:$0xff]
  %v5166 = vld [vmem:[#allocation2 + $0x41] sm:$0xff]
  %v5167 = vld [vmem:[#allocation2 + $0x49] sm:$0xff]
  %v5168 = vld [vmem:[#allocation2 + $0x51] sm:$0xff]
  %v5169 = vld [vmem:[#allocation2 + $0x59] sm:$0xff]
  %v5170 = vld [vmem:[#allocation2 + $0x61] sm:$0xff]
  %v5171 = vld [vmem:[#allocation2 + $0x69] sm:$0xff]
  %v5172 = vld [vmem:[#allocation2 + $0x71] sm:$0xff]
  %v5173 = vld [vmem:[#allocation2 + $0x79] sm:$0xff]
  %v5174 = vld [vmem:[#allocation2 + $0x81] sm:$0xff]
  %v5175 = vld [vmem:[#allocation2 + $0x89] sm:$0xff]
  %v5176 = vld [vmem:[#allocation2 + $0x91] sm:$0xff]
  %v5177 = vld [vmem:[#allocation2 + $0x99] sm:$0xff]
  %v5178 = vld [vmem:[#allocation2 + $0xa1] sm:$0xff]
  %v5179 = vld [vmem:[#allocation2 + $0xa9] sm:$0xff]
  %v5180 = vld [vmem:[#allocation2 + $0xb1] sm:$0xff]
  %v5181 = vld [vmem:[#allocation2 + $0xb9] sm:$0xff]
  %v5182 = vld [vmem:[#allocation2 + $0xc1] sm:$0xff]
  %v5183 = vld [vmem:[#allocation2 + $0xc9] sm:$0xff]
  %v5184 = vld [vmem:[#allocation2 + $0xd1] sm:$0xff]
  %v5185 = vld [vmem:[#allocation2 + $0xd9] sm:$0xff]
  %v5186 = vld [vmem:[#allocation2 + $0xe1] sm:$0xff]
  %v5187 = vld [vmem:[#allocation2 + $0xe9] sm:$0xff]
  %v5188 = vld [vmem:[#allocation2 + $0xf1] sm:$0xff]
  %v5189 = vld [vmem:[#allocation2 + $0xf9] sm:$0xff]
  %v5190 = vld [vmem:[#allocation2 + $0x101] sm:$0xff]
  %v5191 = vld [vmem:[#allocation2 + $0x109] sm:$0xff]
  %v5192 = vld [vmem:[#allocation2 + $0x111] sm:$0xff]
  %v5193 = vld [vmem:[#allocation2 + $0x119] sm:$0xff]
  %v5194 = vld [vmem:[#allocation2 + $0x121] sm:$0xff]
  %v5195 = vld [vmem:[#allocation2 + $0x129] sm:$0xff]
  %v5196 = vld [vmem:[#allocation2 + $0x131] sm:$0xff]
  %v5197 = vld [vmem:[#allocation2 + $0x139] sm:$0xff]
  %v5198 = vld [vmem:[#allocation2 + $0x141] sm:$0xff]
  %v5199 = vld [vmem:[#allocation2 + $0x149] sm:$0xff]
  %v5200 = vld [vmem:[#allocation2 + $0x151] sm:$0xff]
  %v5201 = vld [vmem:[#allocation2 + $0x159] sm:$0xff]
  %v5202 = vld [vmem:[#allocation2 + $0x161] sm:$0xff]
  %v5203 = vld [vmem:[#allocation2 + $0x169] sm:$0xff]
  %v5204 = vld [vmem:[#allocation2 + $0x171] sm:$0xff]
  %v5205 = vld [vmem:[#allocation2 + $0x179] sm:$0xff]
  %v5206 = vld [vmem:[#allocation2 + $0x181] sm:$0xff]
  %v5207 = vld [vmem:[#allocation2 + $0x189] sm:$0xff]
  %v5208 = vld [vmem:[#allocation2 + $0x191] sm:$0xff]
  %v5209 = vld [vmem:[#allocation2 + $0x199] sm:$0xff]
  %v5210 = vld [vmem:[#allocation2 + $0x1a1] sm:$0xff]
  %v5211 = vld [vmem:[#allocation2 + $0x1a9] sm:$0xff]
  %v5212 = vld [vmem:[#allocation2 + $0x1b1] sm:$0xff]
  %v5213 = vld [vmem:[#allocation2 + $0x1b9] sm:$0xff]
  %v5214 = vld [vmem:[#allocation2 + $0x1c1] sm:$0xff]
  %v5215 = vld [vmem:[#allocation2 + $0x1c9] sm:$0xff]
  %v5216 = vld [vmem:[#allocation2 + $0x1d1] sm:$0xff]
  %v5217 = vld [vmem:[#allocation2 + $0x1d9] sm:$0xff]
  %v5218 = vld [vmem:[#allocation2 + $0x1e1] sm:$0xff]
  %v5219 = vld [vmem:[#allocation2 + $0x1e9] sm:$0xff]
  %v5220 = vld [vmem:[#allocation2 + $0x1f1] sm:$0xff]
  %v5221 = vld [vmem:[#allocation2 + $0x1f9] sm:$0xff]
  %v5222 = vld [vmem:[#allocation2 + $0x201] sm:$0xff]
  %v5223 = vld [vmem:[%s8 + $0x2] sm:$0x1]
  %v5224 = vlaneseq
  %v5225 = vshrl.u32 %v5224, 7
  %v5226 = vsub.s32 0, %v5225
  %v5227 = vrot.slane %v5223, %v5226
  %v5228 = vmul.f32 %v5159, %v5227
  %v5229 = vmul.f32 %v5160, %v5227
  %v5230 = vmul.f32 %v5161, %v5227
  %v5231 = vmul.f32 %v5162, %v5227
  %v5232 = vmul.f32 %v5163, %v5227
  %v5233 = vmul.f32 %v5164, %v5227
  %v5234 = vmul.f32 %v5165, %v5227
  %v5235 = vmul.f32 %v5166, %v5227
  %v5236 = vmul.f32 %v5167, %v5227
  %v5237 = vmul.f32 %v5168, %v5227
  %v5238 = vmul.f32 %v5169, %v5227
  %v5239 = vmul.f32 %v5170, %v5227
  %v5240 = vmul.f32 %v5171, %v5227
  %v5241 = vmul.f32 %v5172, %v5227
  %v5242 = vmul.f32 %v5173, %v5227
  %v5243 = vmul.f32 %v5174, %v5227
  %v5244 = vmul.f32 %v5175, %v5227
  %v5245 = vmul.f32 %v5176, %v5227
  %v5246 = vmul.f32 %v5177, %v5227
  %v5247 = vmul.f32 %v5178, %v5227
  %v5248 = vmul.f32 %v5179, %v5227
  %v5249 = vmul.f32 %v5180, %v5227
  %v5250 = vmul.f32 %v5181, %v5227
  %v5251 = vmul.f32 %v5182, %v5227
  %v5252 = vmul.f32 %v5183, %v5227
  %v5253 = vmul.f32 %v5184, %v5227
  %v5254 = vmul.f32 %v5185, %v5227
  %v5255 = vmul.f32 %v5186, %v5227
  %v5256 = vmul.f32 %v5187, %v5227
  %v5257 = vmul.f32 %v5188, %v5227
  %v5258 = vmul.f32 %v5189, %v5227
  %v5259 = vmul.f32 %v5190, %v5227
  %v5260 = vmul.f32 %v5191, %v5227
  %v5261 = vmul.f32 %v5192, %v5227
  %v5262 = vmul.f32 %v5193, %v5227
  %v5263 = vmul.f32 %v5194, %v5227
  %v5264 = vmul.f32 %v5195, %v5227
  %v5265 = vmul.f32 %v5196, %v5227
  %v5266 = vmul.f32 %v5197, %v5227
  %v5267 = vmul.f32 %v5198, %v5227
  %v5268 = vmul.f32 %v5199, %v5227
  %v5269 = vmul.f32 %v5200, %v5227
  %v5270 = vmul.f32 %v5201, %v5227
  %v5271 = vmul.f32 %v5202, %v5227
  %v5272 = vmul.f32 %v5203, %v5227
  %v5273 = vmul.f32 %v5204, %v5227
  %v5274 = vmul.f32 %v5205, %v5227
  %v5275 = vmul.f32 %v5206, %v5227
  %v5276 = vmul.f32 %v5207, %v5227
  %v5277 = vmul.f32 %v5208, %v5227
  %v5278 = vmul.f32 %v5209, %v5227
  %v5279 = vmul.f32 %v5210, %v5227
  %v5280 = vmul.f32 %v5211, %v5227
  %v5281 = vmul.f32 %v5212, %v5227
  %v5282 = vmul.f32 %v5213, %v5227
  %v5283 = vmul.f32 %v5214, %v5227
  %v5284 = vmul.f32 %v5215, %v5227
  %v5285 = vmul.f32 %v5216, %v5227
  %v5286 = vmul.f32 %v5217, %v5227
  %v5287 = vmul.f32 %v5218, %v5227
  %v5288 = vmul.f32 %v5219, %v5227
  %v5289 = vmul.f32 %v5220, %v5227
  %v5290 = vmul.f32 %v5221, %v5227
  %v5291 = vmul.f32 %v5222, %v5227
  %v5292 = vadd.f32 %v5095, %v5228
  %v5293 = vadd.f32 %v5096, %v5229
  %v5294 = vadd.f32 %v5097, %v5230
  %v5295 = vadd.f32 %v5098, %v5231
  %v5296 = vadd.f32 %v5099, %v5232
  %v5297 = vadd.f32 %v5100, %v5233
  %v5298 = vadd.f32 %v5101, %v5234
  %v5299 = vadd.f32 %v5102, %v5235
  %v5300 = vadd.f32 %v5103, %v5236
  %v5301 = vadd.f32 %v5104, %v5237
  %v5302 = vadd.f32 %v5105, %v5238
  %v5303 = vadd.f32 %v5106, %v5239
  %v5304 = vadd.f32 %v5107, %v5240
  %v5305 = vadd.f32 %v5108, %v5241
  %v5306 = vadd.f32 %v5109, %v5242
  %v5307 = vadd.f32 %v5110, %v5243
  %v5308 = vadd.f32 %v5111, %v5244
  %v5309 = vadd.f32 %v5112, %v5245
  %v5310 = vadd.f32 %v5113, %v5246
  %v5311 = vadd.f32 %v5114, %v5247
  %v5312 = vadd.f32 %v5115, %v5248
  %v5313 = vadd.f32 %v5116, %v5249
  %v5314 = vadd.f32 %v5117, %v5250
  %v5315 = vadd.f32 %v5118, %v5251
  %v5316 = vadd.f32 %v5119, %v5252
  %v5317 = vadd.f32 %v5120, %v5253
  %v5318 = vadd.f32 %v5121, %v5254
  %v5319 = vadd.f32 %v5122, %v5255
  %v5320 = vadd.f32 %v5123, %v5256
  %v5321 = vadd.f32 %v5124, %v5257
  %v5322 = vadd.f32 %v5125, %v5258
  %v5323 = vadd.f32 %v5126, %v5259
  %v5324 = vadd.f32 %v5127, %v5260
  %v5325 = vadd.f32 %v5128, %v5261
  %v5326 = vadd.f32 %v5129, %v5262
  %v5327 = vadd.f32 %v5130, %v5263
  %v5328 = vadd.f32 %v5131, %v5264
  %v5329 = vadd.f32 %v5132, %v5265
  %v5330 = vadd.f32 %v5133, %v5266
  %v5331 = vadd.f32 %v5134, %v5267
  %v5332 = vadd.f32 %v5135, %v5268
  %v5333 = vadd.f32 %v5136, %v5269
  %v5334 = vadd.f32 %v5137, %v5270
  %v5335 = vadd.f32 %v5138, %v5271
  %v5336 = vadd.f32 %v5139, %v5272
  %v5337 = vadd.f32 %v5140, %v5273
  %v5338 = vadd.f32 %v5141, %v5274
  %v5339 = vadd.f32 %v5142, %v5275
  %v5340 = vadd.f32 %v5143, %v5276
  %v5341 = vadd.f32 %v5144, %v5277
  %v5342 = vadd.f32 %v5145, %v5278
  %v5343 = vadd.f32 %v5146, %v5279
  %v5344 = vadd.f32 %v5147, %v5280
  %v5345 = vadd.f32 %v5148, %v5281
  %v5346 = vadd.f32 %v5149, %v5282
  %v5347 = vadd.f32 %v5150, %v5283
  %v5348 = vadd.f32 %v5151, %v5284
  %v5349 = vadd.f32 %v5152, %v5285
  %v5350 = vadd.f32 %v5153, %v5286
  %v5351 = vadd.f32 %v5154, %v5287
  %v5352 = vadd.f32 %v5155, %v5288
  %v5353 = vadd.f32 %v5156, %v5289
  %v5354 = vadd.f32 %v5157, %v5290
  %v5355 = vadd.f32 %v5158, %v5291
  %v5356 = vld [vmem:[#allocation2 + $0x207] sm:$0xff]
  %v5357 = vld [vmem:[#allocation2 + $0x20f] sm:$0xff]
  %v5358 = vld [vmem:[%s8 + $0x3] sm:$0x1]
  %v5359 = vlaneseq
  %v5360 = vshrl.u32 %v5359, 7
  %v5361 = vsub.s32 0, %v5360
  %v5362 = vrot.slane %v5358, %v5361
  %v5363 = vmul.f32 %v4831, %v5362
  %v5364 = vmul.f32 %v4832, %v5362
  %v5365 = vmul.f32 %v4833, %v5362
  %v5366 = vmul.f32 %v4834, %v5362
  %v5367 = vmul.f32 %v4835, %v5362
  %v5368 = vmul.f32 %v4836, %v5362
  %v5369 = vmul.f32 %v4837, %v5362
  %v5370 = vmul.f32 %v4838, %v5362
  %v5371 = vmul.f32 %v4839, %v5362
  %v5372 = vmul.f32 %v4840, %v5362
  %v5373 = vmul.f32 %v4841, %v5362
  %v5374 = vmul.f32 %v4842, %v5362
  %v5375 = vmul.f32 %v4843, %v5362
  %v5376 = vmul.f32 %v4844, %v5362
  %v5377 = vmul.f32 %v4845, %v5362
  %v5378 = vmul.f32 %v4846, %v5362
  %v5379 = vmul.f32 %v4847, %v5362
  %v5380 = vmul.f32 %v4848, %v5362
  %v5381 = vmul.f32 %v4849, %v5362
  %v5382 = vmul.f32 %v4850, %v5362
  %v5383 = vmul.f32 %v4851, %v5362
  %v5384 = vmul.f32 %v4852, %v5362
  %v5385 = vmul.f32 %v4853, %v5362
  %v5386 = vmul.f32 %v4854, %v5362
  %v5387 = vmul.f32 %v4855, %v5362
  %v5388 = vmul.f32 %v4856, %v5362
  %v5389 = vmul.f32 %v4857, %v5362
  %v5390 = vmul.f32 %v4858, %v5362
  %v5391 = vmul.f32 %v4859, %v5362
  %v5392 = vmul.f32 %v4860, %v5362
  %v5393 = vmul.f32 %v4861, %v5362
  %v5394 = vmul.f32 %v4862, %v5362
  %v5395 = vmul.f32 %v4863, %v5362
  %v5396 = vmul.f32 %v4864, %v5362
  %v5397 = vmul.f32 %v4865, %v5362
  %v5398 = vmul.f32 %v4866, %v5362
  %v5399 = vmul.f32 %v4867, %v5362
  %v5400 = vmul.f32 %v4868, %v5362
  %v5401 = vmul.f32 %v4869, %v5362
  %v5402 = vmul.f32 %v4870, %v5362
  %v5403 = vmul.f32 %v4871, %v5362
  %v5404 = vmul.f32 %v4872, %v5362
  %v5405 = vmul.f32 %v4873, %v5362
  %v5406 = vmul.f32 %v4874, %v5362
  %v5407 = vmul.f32 %v4875, %v5362
  %v5408 = vmul.f32 %v4876, %v5362
  %v5409 = vmul.f32 %v4877, %v5362
  %v5410 = vmul.f32 %v4878, %v5362
  %v5411 = vmul.f32 %v4879, %v5362
  %v5412 = vmul.f32 %v4880, %v5362
  %v5413 = vmul.f32 %v4881, %v5362
  %v5414 = vmul.f32 %v4882, %v5362
  %v5415 = vmul.f32 %v4883, %v5362
  %v5416 = vmul.f32 %v4884, %v5362
  %v5417 = vmul.f32 %v4885, %v5362
  %v5418 = vmul.f32 %v4886, %v5362
  %v5419 = vmul.f32 %v4887, %v5362
  %v5420 = vmul.f32 %v4888, %v5362
  %v5421 = vmul.f32 %v4889, %v5362
  %v5422 = vmul.f32 %v4890, %v5362
  %v5423 = vmul.f32 %v4891, %v5362
  %v5424 = vmul.f32 %v4892, %v5362
  %v5425 = vmul.f32 %v5356, %v5362
  %v5426 = vmul.f32 %v5357, %v5362
  %v5427 = vadd.f32 %v5292, %v5363
  %v5428 = vadd.f32 %v5293, %v5364
  %v5429 = vadd.f32 %v5294, %v5365
  %v5430 = vadd.f32 %v5295, %v5366
  %v5431 = vadd.f32 %v5296, %v5367
  %v5432 = vadd.f32 %v5297, %v5368
  %v5433 = vadd.f32 %v5298, %v5369
  %v5434 = vadd.f32 %v5299, %v5370
  %v5435 = vadd.f32 %v5300, %v5371
  %v5436 = vadd.f32 %v5301, %v5372
  %v5437 = vadd.f32 %v5302, %v5373
  %v5438 = vadd.f32 %v5303, %v5374
  %v5439 = vadd.f32 %v5304, %v5375
  %v5440 = vadd.f32 %v5305, %v5376
  %v5441 = vadd.f32 %v5306, %v5377
  %v5442 = vadd.f32 %v5307, %v5378
  %v5443 = vadd.f32 %v5308, %v5379
  %v5444 = vadd.f32 %v5309, %v5380
  %v5445 = vadd.f32 %v5310, %v5381
  %v5446 = vadd.f32 %v5311, %v5382
  %v5447 = vadd.f32 %v5312, %v5383
  %v5448 = vadd.f32 %v5313, %v5384
  %v5449 = vadd.f32 %v5314, %v5385
  %v5450 = vadd.f32 %v5315, %v5386
  %v5451 = vadd.f32 %v5316, %v5387
  %v5452 = vadd.f32 %v5317, %v5388
  %v5453 = vadd.f32 %v5318, %v5389
  %v5454 = vadd.f32 %v5319, %v5390
  %v5455 = vadd.f32 %v5320, %v5391
  %v5456 = vadd.f32 %v5321, %v5392
  %v5457 = vadd.f32 %v5322, %v5393
  %v5458 = vadd.f32 %v5323, %v5394
  %v5459 = vadd.f32 %v5324, %v5395
  %v5460 = vadd.f32 %v5325, %v5396
  %v5461 = vadd.f32 %v5326, %v5397
  %v5462 = vadd.f32 %v5327, %v5398
  %v5463 = vadd.f32 %v5328, %v5399
  %v5464 = vadd.f32 %v5329, %v5400
  %v5465 = vadd.f32 %v5330, %v5401
  %v5466 = vadd.f32 %v5331, %v5402
  %v5467 = vadd.f32 %v5332, %v5403
  %v5468 = vadd.f32 %v5333, %v5404
  %v5469 = vadd.f32 %v5334, %v5405
  %v5470 = vadd.f32 %v5335, %v5406
  %v5471 = vadd.f32 %v5336, %v5407
  %v5472 = vadd.f32 %v5337, %v5408
  %v5473 = vadd.f32 %v5338, %v5409
  %v5474 = vadd.f32 %v5339, %v5410
  %v5475 = vadd.f32 %v5340, %v5411
  %v5476 = vadd.f32 %v5341, %v5412
  %v5477 = vadd.f32 %v5342, %v5413
  %v5478 = vadd.f32 %v5343, %v5414
  %v5479 = vadd.f32 %v5344, %v5415
  %v5480 = vadd.f32 %v5345, %v5416
  %v5481 = vadd.f32 %v5346, %v5417
  %v5482 = vadd.f32 %v5347, %v5418
  %v5483 = vadd.f32 %v5348, %v5419
  %v5484 = vadd.f32 %v5349, %v5420
  %v5485 = vadd.f32 %v5350, %v5421
  %v5486 = vadd.f32 %v5351, %v5422
  %v5487 = vadd.f32 %v5352, %v5423
  %v5488 = vadd.f32 %v5353, %v5424
  %v5489 = vadd.f32 %v5354, %v5425
  %v5490 = vadd.f32 %v5355, %v5426
  %v5491 = vld [vmem:[#allocation2 + $0x208] sm:$0xff]
  %v5492 = vld [vmem:[#allocation2 + $0x210] sm:$0xff]
  %v5493 = vld [vmem:[%s8 + $0x4] sm:$0x1]
  %v5494 = vlaneseq
  %v5495 = vshrl.u32 %v5494, 7
  %v5496 = vsub.s32 0, %v5495
  %v5497 = vrot.slane %v5493, %v5496
  %v5498 = vmul.f32 %v4964, %v5497
  %v5499 = vmul.f32 %v4965, %v5497
  %v5500 = vmul.f32 %v4966, %v5497
  %v5501 = vmul.f32 %v4967, %v5497
  %v5502 = vmul.f32 %v4968, %v5497
  %v5503 = vmul.f32 %v4969, %v5497
  %v5504 = vmul.f32 %v4970, %v5497
  %v5505 = vmul.f32 %v4971, %v5497
  %v5506 = vmul.f32 %v4972, %v5497
  %v5507 = vmul.f32 %v4973, %v5497
  %v5508 = vmul.f32 %v4974, %v5497
  %v5509 = vmul.f32 %v4975, %v5497
  %v5510 = vmul.f32 %v4976, %v5497
  %v5511 = vmul.f32 %v4977, %v5497
  %v5512 = vmul.f32 %v4978, %v5497
  %v5513 = vmul.f32 %v4979, %v5497
  %v5514 = vmul.f32 %v4980, %v5497
  %v5515 = vmul.f32 %v4981, %v5497
  %v5516 = vmul.f32 %v4982, %v5497
  %v5517 = vmul.f32 %v4983, %v5497
  %v5518 = vmul.f32 %v4984, %v5497
  %v5519 = vmul.f32 %v4985, %v5497
  %v5520 = vmul.f32 %v4986, %v5497
  %v5521 = vmul.f32 %v4987, %v5497
  %v5522 = vmul.f32 %v4988, %v5497
  %v5523 = vmul.f32 %v4989, %v5497
  %v5524 = vmul.f32 %v4990, %v5497
  %v5525 = vmul.f32 %v4991, %v5497
  %v5526 = vmul.f32 %v4992, %v5497
  %v5527 = vmul.f32 %v4993, %v5497
  %v5528 = vmul.f32 %v4994, %v5497
  %v5529 = vmul.f32 %v4995, %v5497
  %v5530 = vmul.f32 %v4996, %v5497
  %v5531 = vmul.f32 %v4997, %v5497
  %v5532 = vmul.f32 %v4998, %v5497
  %v5533 = vmul.f32 %v4999, %v5497
  %v5534 = vmul.f32 %v5000, %v5497
  %v5535 = vmul.f32 %v5001, %v5497
  %v5536 = vmul.f32 %v5002, %v5497
  %v5537 = vmul.f32 %v5003, %v5497
  %v5538 = vmul.f32 %v5004, %v5497
  %v5539 = vmul.f32 %v5005, %v5497
  %v5540 = vmul.f32 %v5006, %v5497
  %v5541 = vmul.f32 %v5007, %v5497
  %v5542 = vmul.f32 %v5008, %v5497
  %v5543 = vmul.f32 %v5009, %v5497
  %v5544 = vmul.f32 %v5010, %v5497
  %v5545 = vmul.f32 %v5011, %v5497
  %v5546 = vmul.f32 %v5012, %v5497
  %v5547 = vmul.f32 %v5013, %v5497
  %v5548 = vmul.f32 %v5014, %v5497
  %v5549 = vmul.f32 %v5015, %v5497
  %v5550 = vmul.f32 %v5016, %v5497
  %v5551 = vmul.f32 %v5017, %v5497
  %v5552 = vmul.f32 %v5018, %v5497
  %v5553 = vmul.f32 %v5019, %v5497
  %v5554 = vmul.f32 %v5020, %v5497
  %v5555 = vmul.f32 %v5021, %v5497
  %v5556 = vmul.f32 %v5022, %v5497
  %v5557 = vmul.f32 %v5023, %v5497
  %v5558 = vmul.f32 %v5024, %v5497
  %v5559 = vmul.f32 %v5025, %v5497
  %v5560 = vmul.f32 %v5491, %v5497
  %v5561 = vmul.f32 %v5492, %v5497
  %v5562 = vadd.f32 %v5427, %v5498
  %v5563 = vadd.f32 %v5428, %v5499
  %v5564 = vadd.f32 %v5429, %v5500
  %v5565 = vadd.f32 %v5430, %v5501
  %v5566 = vadd.f32 %v5431, %v5502
  %v5567 = vadd.f32 %v5432, %v5503
  %v5568 = vadd.f32 %v5433, %v5504
  %v5569 = vadd.f32 %v5434, %v5505
  %v5570 = vadd.f32 %v5435, %v5506
  %v5571 = vadd.f32 %v5436, %v5507
  %v5572 = vadd.f32 %v5437, %v5508
  %v5573 = vadd.f32 %v5438, %v5509
  %v5574 = vadd.f32 %v5439, %v5510
  %v5575 = vadd.f32 %v5440, %v5511
  %v5576 = vadd.f32 %v5441, %v5512
  %v5577 = vadd.f32 %v5442, %v5513
  %v5578 = vadd.f32 %v5443, %v5514
  %v5579 = vadd.f32 %v5444, %v5515
  %v5580 = vadd.f32 %v5445, %v5516
  %v5581 = vadd.f32 %v5446, %v5517
  %v5582 = vadd.f32 %v5447, %v5518
  %v5583 = vadd.f32 %v5448, %v5519
  %v5584 = vadd.f32 %v5449, %v5520
  %v5585 = vadd.f32 %v5450, %v5521
  %v5586 = vadd.f32 %v5451, %v5522
  %v5587 = vadd.f32 %v5452, %v5523
  %v5588 = vadd.f32 %v5453, %v5524
  %v5589 = vadd.f32 %v5454, %v5525
  %v5590 = vadd.f32 %v5455, %v5526
  %v5591 = vadd.f32 %v5456, %v5527
  %v5592 = vadd.f32 %v5457, %v5528
  %v5593 = vadd.f32 %v5458, %v5529
  %v5594 = vadd.f32 %v5459, %v5530
  %v5595 = vadd.f32 %v5460, %v5531
  %v5596 = vadd.f32 %v5461, %v5532
  %v5597 = vadd.f32 %v5462, %v5533
  %v5598 = vadd.f32 %v5463, %v5534
  %v5599 = vadd.f32 %v5464, %v5535
  %v5600 = vadd.f32 %v5465, %v5536
  %v5601 = vadd.f32 %v5466, %v5537
  %v5602 = vadd.f32 %v5467, %v5538
  %v5603 = vadd.f32 %v5468, %v5539
  %v5604 = vadd.f32 %v5469, %v5540
  %v5605 = vadd.f32 %v5470, %v5541
  %v5606 = vadd.f32 %v5471, %v5542
  %v5607 = vadd.f32 %v5472, %v5543
  %v5608 = vadd.f32 %v5473, %v5544
  %v5609 = vadd.f32 %v5474, %v5545
  %v5610 = vadd.f32 %v5475, %v5546
  %v5611 = vadd.f32 %v5476, %v5547
  %v5612 = vadd.f32 %v5477, %v5548
  %v5613 = vadd.f32 %v5478, %v5549
  %v5614 = vadd.f32 %v5479, %v5550
  %v5615 = vadd.f32 %v5480, %v5551
  %v5616 = vadd.f32 %v5481, %v5552
  %v5617 = vadd.f32 %v5482, %v5553
  %v5618 = vadd.f32 %v5483, %v5554
  %v5619 = vadd.f32 %v5484, %v5555
  %v5620 = vadd.f32 %v5485, %v5556
  %v5621 = vadd.f32 %v5486, %v5557
  %v5622 = vadd.f32 %v5487, %v5558
  %v5623 = vadd.f32 %v5488, %v5559
  %v5624 = vadd.f32 %v5489, %v5560
  %v5625 = vadd.f32 %v5490, %v5561
  %v5626 = vld [vmem:[#allocation2 + $0x209] sm:$0xff]
  %v5627 = vld [vmem:[#allocation2 + $0x211] sm:$0xff]
  %v5628 = vld [vmem:[%s8 + $0x5] sm:$0x1]
  %v5629 = vlaneseq
  %v5630 = vshrl.u32 %v5629, 7
  %v5631 = vsub.s32 0, %v5630
  %v5632 = vrot.slane %v5628, %v5631
  %v5633 = vmul.f32 %v5161, %v5632
  %v5634 = vmul.f32 %v5162, %v5632
  %v5635 = vmul.f32 %v5163, %v5632
  %v5636 = vmul.f32 %v5164, %v5632
  %v5637 = vmul.f32 %v5165, %v5632
  %v5638 = vmul.f32 %v5166, %v5632
  %v5639 = vmul.f32 %v5167, %v5632
  %v5640 = vmul.f32 %v5168, %v5632
  %v5641 = vmul.f32 %v5169, %v5632
  %v5642 = vmul.f32 %v5170, %v5632
  %v5643 = vmul.f32 %v5171, %v5632
  %v5644 = vmul.f32 %v5172, %v5632
  %v5645 = vmul.f32 %v5173, %v5632
  %v5646 = vmul.f32 %v5174, %v5632
  %v5647 = vmul.f32 %v5175, %v5632
  %v5648 = vmul.f32 %v5176, %v5632
  %v5649 = vmul.f32 %v5177, %v5632
  %v5650 = vmul.f32 %v5178, %v5632
  %v5651 = vmul.f32 %v5179, %v5632
  %v5652 = vmul.f32 %v5180, %v5632
  %v5653 = vmul.f32 %v5181, %v5632
  %v5654 = vmul.f32 %v5182, %v5632
  %v5655 = vmul.f32 %v5183, %v5632
  %v5656 = vmul.f32 %v5184, %v5632
  %v5657 = vmul.f32 %v5185, %v5632
  %v5658 = vmul.f32 %v5186, %v5632
  %v5659 = vmul.f32 %v5187, %v5632
  %v5660 = vmul.f32 %v5188, %v5632
  %v5661 = vmul.f32 %v5189, %v5632
  %v5662 = vmul.f32 %v5190, %v5632
  %v5663 = vmul.f32 %v5191, %v5632
  %v5664 = vmul.f32 %v5192, %v5632
  %v5665 = vmul.f32 %v5193, %v5632
  %v5666 = vmul.f32 %v5194, %v5632
  %v5667 = vmul.f32 %v5195, %v5632
  %v5668 = vmul.f32 %v5196, %v5632
  %v5669 = vmul.f32 %v5197, %v5632
  %v5670 = vmul.f32 %v5198, %v5632
  %v5671 = vmul.f32 %v5199, %v5632
  %v5672 = vmul.f32 %v5200, %v5632
  %v5673 = vmul.f32 %v5201, %v5632
  %v5674 = vmul.f32 %v5202, %v5632
  %v5675 = vmul.f32 %v5203, %v5632
  %v5676 = vmul.f32 %v5204, %v5632
  %v5677 = vmul.f32 %v5205, %v5632
  %v5678 = vmul.f32 %v5206, %v5632
  %v5679 = vmul.f32 %v5207, %v5632
  %v5680 = vmul.f32 %v5208, %v5632
  %v5681 = vmul.f32 %v5209, %v5632
  %v5682 = vmul.f32 %v5210, %v5632
  %v5683 = vmul.f32 %v5211, %v5632
  %v5684 = vmul.f32 %v5212, %v5632
  %v5685 = vmul.f32 %v5213, %v5632
  %v5686 = vmul.f32 %v5214, %v5632
  %v5687 = vmul.f32 %v5215, %v5632
  %v5688 = vmul.f32 %v5216, %v5632
  %v5689 = vmul.f32 %v5217, %v5632
  %v5690 = vmul.f32 %v5218, %v5632
  %v5691 = vmul.f32 %v5219, %v5632
  %v5692 = vmul.f32 %v5220, %v5632
  %v5693 = vmul.f32 %v5221, %v5632
  %v5694 = vmul.f32 %v5222, %v5632
  %v5695 = vmul.f32 %v5626, %v5632
  %v5696 = vmul.f32 %v5627, %v5632
  %v5697 = vadd.f32 %v5562, %v5633
  %v5698 = vadd.f32 %v5563, %v5634
  %v5699 = vadd.f32 %v5564, %v5635
  %v5700 = vadd.f32 %v5565, %v5636
  %v5701 = vadd.f32 %v5566, %v5637
  %v5702 = vadd.f32 %v5567, %v5638
  %v5703 = vadd.f32 %v5568, %v5639
  %v5704 = vadd.f32 %v5569, %v5640
  %v5705 = vadd.f32 %v5570, %v5641
  %v5706 = vadd.f32 %v5571, %v5642
  %v5707 = vadd.f32 %v5572, %v5643
  %v5708 = vadd.f32 %v5573, %v5644
  %v5709 = vadd.f32 %v5574, %v5645
  %v5710 = vadd.f32 %v5575, %v5646
  %v5711 = vadd.f32 %v5576, %v5647
  %v5712 = vadd.f32 %v5577, %v5648
  %v5713 = vadd.f32 %v5578, %v5649
  %v5714 = vadd.f32 %v5579, %v5650
  %v5715 = vadd.f32 %v5580, %v5651
  %v5716 = vadd.f32 %v5581, %v5652
  %v5717 = vadd.f32 %v5582, %v5653
  %v5718 = vadd.f32 %v5583, %v5654
  %v5719 = vadd.f32 %v5584, %v5655
  %v5720 = vadd.f32 %v5585, %v5656
  %v5721 = vadd.f32 %v5586, %v5657
  %v5722 = vadd.f32 %v5587, %v5658
  %v5723 = vadd.f32 %v5588, %v5659
  %v5724 = vadd.f32 %v5589, %v5660
  %v5725 = vadd.f32 %v5590, %v5661
  %v5726 = vadd.f32 %v5591, %v5662
  %v5727 = vadd.f32 %v5592, %v5663
  %v5728 = vadd.f32 %v5593, %v5664
  %v5729 = vadd.f32 %v5594, %v5665
  %v5730 = vadd.f32 %v5595, %v5666
  %v5731 = vadd.f32 %v5596, %v5667
  %v5732 = vadd.f32 %v5597, %v5668
  %v5733 = vadd.f32 %v5598, %v5669
  %v5734 = vadd.f32 %v5599, %v5670
  %v5735 = vadd.f32 %v5600, %v5671
  %v5736 = vadd.f32 %v5601, %v5672
  %v5737 = vadd.f32 %v5602, %v5673
  %v5738 = vadd.f32 %v5603, %v5674
  %v5739 = vadd.f32 %v5604, %v5675
  %v5740 = vadd.f32 %v5605, %v5676
  %v5741 = vadd.f32 %v5606, %v5677
  %v5742 = vadd.f32 %v5607, %v5678
  %v5743 = vadd.f32 %v5608, %v5679
  %v5744 = vadd.f32 %v5609, %v5680
  %v5745 = vadd.f32 %v5610, %v5681
  %v5746 = vadd.f32 %v5611, %v5682
  %v5747 = vadd.f32 %v5612, %v5683
  %v5748 = vadd.f32 %v5613, %v5684
  %v5749 = vadd.f32 %v5614, %v5685
  %v5750 = vadd.f32 %v5615, %v5686
  %v5751 = vadd.f32 %v5616, %v5687
  %v5752 = vadd.f32 %v5617, %v5688
  %v5753 = vadd.f32 %v5618, %v5689
  %v5754 = vadd.f32 %v5619, %v5690
  %v5755 = vadd.f32 %v5620, %v5691
  %v5756 = vadd.f32 %v5621, %v5692
  %v5757 = vadd.f32 %v5622, %v5693
  %v5758 = vadd.f32 %v5623, %v5694
  %v5759 = vadd.f32 %v5624, %v5695
  %v5760 = vadd.f32 %v5625, %v5696
  %v5761 = vld [vmem:[#allocation2 + $0x217] sm:$0xff]
  %v5762 = vld [vmem:[#allocation2 + $0x21f] sm:$0xff]
  %v5763 = vld [vmem:[%s8 + $0x6] sm:$0x1]
  %v5764 = vlaneseq
  %v5765 = vshrl.u32 %v5764, 7
  %v5766 = vsub.s32 0, %v5765
  %v5767 = vrot.slane %v5763, %v5766
  %v5768 = vmul.f32 %v4833, %v5767
  %v5769 = vmul.f32 %v4834, %v5767
  %v5770 = vmul.f32 %v4835, %v5767
  %v5771 = vmul.f32 %v4836, %v5767
  %v5772 = vmul.f32 %v4837, %v5767
  %v5773 = vmul.f32 %v4838, %v5767
  %v5774 = vmul.f32 %v4839, %v5767
  %v5775 = vmul.f32 %v4840, %v5767
  %v5776 = vmul.f32 %v4841, %v5767
  %v5777 = vmul.f32 %v4842, %v5767
  %v5778 = vmul.f32 %v4843, %v5767
  %v5779 = vmul.f32 %v4844, %v5767
  %v5780 = vmul.f32 %v4845, %v5767
  %v5781 = vmul.f32 %v4846, %v5767
  %v5782 = vmul.f32 %v4847, %v5767
  %v5783 = vmul.f32 %v4848, %v5767
  %v5784 = vmul.f32 %v4849, %v5767
  %v5785 = vmul.f32 %v4850, %v5767
  %v5786 = vmul.f32 %v4851, %v5767
  %v5787 = vmul.f32 %v4852, %v5767
  %v5788 = vmul.f32 %v4853, %v5767
  %v5789 = vmul.f32 %v4854, %v5767
  %v5790 = vmul.f32 %v4855, %v5767
  %v5791 = vmul.f32 %v4856, %v5767
  %v5792 = vmul.f32 %v4857, %v5767
  %v5793 = vmul.f32 %v4858, %v5767
  %v5794 = vmul.f32 %v4859, %v5767
  %v5795 = vmul.f32 %v4860, %v5767
  %v5796 = vmul.f32 %v4861, %v5767
  %v5797 = vmul.f32 %v4862, %v5767
  %v5798 = vmul.f32 %v4863, %v5767
  %v5799 = vmul.f32 %v4864, %v5767
  %v5800 = vmul.f32 %v4865, %v5767
  %v5801 = vmul.f32 %v4866, %v5767
  %v5802 = vmul.f32 %v4867, %v5767
  %v5803 = vmul.f32 %v4868, %v5767
  %v5804 = vmul.f32 %v4869, %v5767
  %v5805 = vmul.f32 %v4870, %v5767
  %v5806 = vmul.f32 %v4871, %v5767
  %v5807 = vmul.f32 %v4872, %v5767
  %v5808 = vmul.f32 %v4873, %v5767
  %v5809 = vmul.f32 %v4874, %v5767
  %v5810 = vmul.f32 %v4875, %v5767
  %v5811 = vmul.f32 %v4876, %v5767
  %v5812 = vmul.f32 %v4877, %v5767
  %v5813 = vmul.f32 %v4878, %v5767
  %v5814 = vmul.f32 %v4879, %v5767
  %v5815 = vmul.f32 %v4880, %v5767
  %v5816 = vmul.f32 %v4881, %v5767
  %v5817 = vmul.f32 %v4882, %v5767
  %v5818 = vmul.f32 %v4883, %v5767
  %v5819 = vmul.f32 %v4884, %v5767
  %v5820 = vmul.f32 %v4885, %v5767
  %v5821 = vmul.f32 %v4886, %v5767
  %v5822 = vmul.f32 %v4887, %v5767
  %v5823 = vmul.f32 %v4888, %v5767
  %v5824 = vmul.f32 %v4889, %v5767
  %v5825 = vmul.f32 %v4890, %v5767
  %v5826 = vmul.f32 %v4891, %v5767
  %v5827 = vmul.f32 %v4892, %v5767
  %v5828 = vmul.f32 %v5356, %v5767
  %v5829 = vmul.f32 %v5357, %v5767
  %v5830 = vmul.f32 %v5761, %v5767
  %v5831 = vmul.f32 %v5762, %v5767
  %v5832 = vadd.f32 %v5697, %v5768
  %v5833 = vadd.f32 %v5698, %v5769
  %v5834 = vadd.f32 %v5699, %v5770
  %v5835 = vadd.f32 %v5700, %v5771
  %v5836 = vadd.f32 %v5701, %v5772
  %v5837 = vadd.f32 %v5702, %v5773
  %v5838 = vadd.f32 %v5703, %v5774
  %v5839 = vadd.f32 %v5704, %v5775
  %v5840 = vadd.f32 %v5705, %v5776
  %v5841 = vadd.f32 %v5706, %v5777
  %v5842 = vadd.f32 %v5707, %v5778
  %v5843 = vadd.f32 %v5708, %v5779
  %v5844 = vadd.f32 %v5709, %v5780
  %v5845 = vadd.f32 %v5710, %v5781
  %v5846 = vadd.f32 %v5711, %v5782
  %v5847 = vadd.f32 %v5712, %v5783
  %v5848 = vadd.f32 %v5713, %v5784
  %v5849 = vadd.f32 %v5714, %v5785
  %v5850 = vadd.f32 %v5715, %v5786
  %v5851 = vadd.f32 %v5716, %v5787
  %v5852 = vadd.f32 %v5717, %v5788
  %v5853 = vadd.f32 %v5718, %v5789
  %v5854 = vadd.f32 %v5719, %v5790
  %v5855 = vadd.f32 %v5720, %v5791
  %v5856 = vadd.f32 %v5721, %v5792
  %v5857 = vadd.f32 %v5722, %v5793
  %v5858 = vadd.f32 %v5723, %v5794
  %v5859 = vadd.f32 %v5724, %v5795
  %v5860 = vadd.f32 %v5725, %v5796
  %v5861 = vadd.f32 %v5726, %v5797
  %v5862 = vadd.f32 %v5727, %v5798
  %v5863 = vadd.f32 %v5728, %v5799
  %v5864 = vadd.f32 %v5729, %v5800
  %v5865 = vadd.f32 %v5730, %v5801
  %v5866 = vadd.f32 %v5731, %v5802
  %v5867 = vadd.f32 %v5732, %v5803
  %v5868 = vadd.f32 %v5733, %v5804
  %v5869 = vadd.f32 %v5734, %v5805
  %v5870 = vadd.f32 %v5735, %v5806
  %v5871 = vadd.f32 %v5736, %v5807
  %v5872 = vadd.f32 %v5737, %v5808
  %v5873 = vadd.f32 %v5738, %v5809
  %v5874 = vadd.f32 %v5739, %v5810
  %v5875 = vadd.f32 %v5740, %v5811
  %v5876 = vadd.f32 %v5741, %v5812
  %v5877 = vadd.f32 %v5742, %v5813
  %v5878 = vadd.f32 %v5743, %v5814
  %v5879 = vadd.f32 %v5744, %v5815
  %v5880 = vadd.f32 %v5745, %v5816
  %v5881 = vadd.f32 %v5746, %v5817
  %v5882 = vadd.f32 %v5747, %v5818
  %v5883 = vadd.f32 %v5748, %v5819
  %v5884 = vadd.f32 %v5749, %v5820
  %v5885 = vadd.f32 %v5750, %v5821
  %v5886 = vadd.f32 %v5751, %v5822
  %v5887 = vadd.f32 %v5752, %v5823
  %v5888 = vadd.f32 %v5753, %v5824
  %v5889 = vadd.f32 %v5754, %v5825
  %v5890 = vadd.f32 %v5755, %v5826
  %v5891 = vadd.f32 %v5756, %v5827
  %v5892 = vadd.f32 %v5757, %v5828
  %v5893 = vadd.f32 %v5758, %v5829
  %v5894 = vadd.f32 %v5759, %v5830
  %v5895 = vadd.f32 %v5760, %v5831
  %v5896 = vld [vmem:[#allocation2 + $0x218] sm:$0xff]
  %v5897 = vld [vmem:[#allocation2 + $0x220] sm:$0xff]
  %v5898 = vld [vmem:[%s8 + $0x7] sm:$0x1]
  %v5899 = vlaneseq
  %v5900 = vshrl.u32 %v5899, 7
  %v5901 = vsub.s32 0, %v5900
  %v5902 = vrot.slane %v5898, %v5901
  %v5903 = vmul.f32 %v4966, %v5902
  %v5904 = vmul.f32 %v4967, %v5902
  %v5905 = vmul.f32 %v4968, %v5902
  %v5906 = vmul.f32 %v4969, %v5902
  %v5907 = vmul.f32 %v4970, %v5902
  %v5908 = vmul.f32 %v4971, %v5902
  %v5909 = vmul.f32 %v4972, %v5902
  %v5910 = vmul.f32 %v4973, %v5902
  %v5911 = vmul.f32 %v4974, %v5902
  %v5912 = vmul.f32 %v4975, %v5902
  %v5913 = vmul.f32 %v4976, %v5902
  %v5914 = vmul.f32 %v4977, %v5902
  %v5915 = vmul.f32 %v4978, %v5902
  %v5916 = vmul.f32 %v4979, %v5902
  %v5917 = vmul.f32 %v4980, %v5902
  %v5918 = vmul.f32 %v4981, %v5902
  %v5919 = vmul.f32 %v4982, %v5902
  %v5920 = vmul.f32 %v4983, %v5902
  %v5921 = vmul.f32 %v4984, %v5902
  %v5922 = vmul.f32 %v4985, %v5902
  %v5923 = vmul.f32 %v4986, %v5902
  %v5924 = vmul.f32 %v4987, %v5902
  %v5925 = vmul.f32 %v4988, %v5902
  %v5926 = vmul.f32 %v4989, %v5902
  %v5927 = vmul.f32 %v4990, %v5902
  %v5928 = vmul.f32 %v4991, %v5902
  %v5929 = vmul.f32 %v4992, %v5902
  %v5930 = vmul.f32 %v4993, %v5902
  %v5931 = vmul.f32 %v4994, %v5902
  %v5932 = vmul.f32 %v4995, %v5902
  %v5933 = vmul.f32 %v4996, %v5902
  %v5934 = vmul.f32 %v4997, %v5902
  %v5935 = vmul.f32 %v4998, %v5902
  %v5936 = vmul.f32 %v4999, %v5902
  %v5937 = vmul.f32 %v5000, %v5902
  %v5938 = vmul.f32 %v5001, %v5902
  %v5939 = vmul.f32 %v5002, %v5902
  %v5940 = vmul.f32 %v5003, %v5902
  %v5941 = vmul.f32 %v5004, %v5902
  %v5942 = vmul.f32 %v5005, %v5902
  %v5943 = vmul.f32 %v5006, %v5902
  %v5944 = vmul.f32 %v5007, %v5902
  %v5945 = vmul.f32 %v5008, %v5902
  %v5946 = vmul.f32 %v5009, %v5902
  %v5947 = vmul.f32 %v5010, %v5902
  %v5948 = vmul.f32 %v5011, %v5902
  %v5949 = vmul.f32 %v5012, %v5902
  %v5950 = vmul.f32 %v5013, %v5902
  %v5951 = vmul.f32 %v5014, %v5902
  %v5952 = vmul.f32 %v5015, %v5902
  %v5953 = vmul.f32 %v5016, %v5902
  %v5954 = vmul.f32 %v5017, %v5902
  %v5955 = vmul.f32 %v5018, %v5902
  %v5956 = vmul.f32 %v5019, %v5902
  %v5957 = vmul.f32 %v5020, %v5902
  %v5958 = vmul.f32 %v5021, %v5902
  %v5959 = vmul.f32 %v5022, %v5902
  %v5960 = vmul.f32 %v5023, %v5902
  %v5961 = vmul.f32 %v5024, %v5902
  %v5962 = vmul.f32 %v5025, %v5902
  %v5963 = vmul.f32 %v5491, %v5902
  %v5964 = vmul.f32 %v5492, %v5902
  %v5965 = vmul.f32 %v5896, %v5902
  %v5966 = vmul.f32 %v5897, %v5902
  %v5967 = vadd.f32 %v5832, %v5903
  %v5968 = vadd.f32 %v5833, %v5904
  %v5969 = vadd.f32 %v5834, %v5905
  %v5970 = vadd.f32 %v5835, %v5906
  %v5971 = vadd.f32 %v5836, %v5907
  %v5972 = vadd.f32 %v5837, %v5908
  %v5973 = vadd.f32 %v5838, %v5909
  %v5974 = vadd.f32 %v5839, %v5910
  %v5975 = vadd.f32 %v5840, %v5911
  %v5976 = vadd.f32 %v5841, %v5912
  %v5977 = vadd.f32 %v5842, %v5913
  %v5978 = vadd.f32 %v5843, %v5914
  %v5979 = vadd.f32 %v5844, %v5915
  %v5980 = vadd.f32 %v5845, %v5916
  %v5981 = vadd.f32 %v5846, %v5917
  %v5982 = vadd.f32 %v5847, %v5918
  %v5983 = vadd.f32 %v5848, %v5919
  %v5984 = vadd.f32 %v5849, %v5920
  %v5985 = vadd.f32 %v5850, %v5921
  %v5986 = vadd.f32 %v5851, %v5922
  %v5987 = vadd.f32 %v5852, %v5923
  %v5988 = vadd.f32 %v5853, %v5924
  %v5989 = vadd.f32 %v5854, %v5925
  %v5990 = vadd.f32 %v5855, %v5926
  %v5991 = vadd.f32 %v5856, %v5927
  %v5992 = vadd.f32 %v5857, %v5928
  %v5993 = vadd.f32 %v5858, %v5929
  %v5994 = vadd.f32 %v5859, %v5930
  %v5995 = vadd.f32 %v5860, %v5931
  %v5996 = vadd.f32 %v5861, %v5932
  %v5997 = vadd.f32 %v5862, %v5933
  %v5998 = vadd.f32 %v5863, %v5934
  %v5999 = vadd.f32 %v5864, %v5935
  %v6000 = vadd.f32 %v5865, %v5936
  %v6001 = vadd.f32 %v5866, %v5937
  %v6002 = vadd.f32 %v5867, %v5938
  %v6003 = vadd.f32 %v5868, %v5939
  %v6004 = vadd.f32 %v5869, %v5940
  %v6005 = vadd.f32 %v5870, %v5941
  %v6006 = vadd.f32 %v5871, %v5942
  %v6007 = vadd.f32 %v5872, %v5943
  %v6008 = vadd.f32 %v5873, %v5944
  %v6009 = vadd.f32 %v5874, %v5945
  %v6010 = vadd.f32 %v5875, %v5946
  %v6011 = vadd.f32 %v5876, %v5947
  %v6012 = vadd.f32 %v5877, %v5948
  %v6013 = vadd.f32 %v5878, %v5949
  %v6014 = vadd.f32 %v5879, %v5950
  %v6015 = vadd.f32 %v5880, %v5951
  %v6016 = vadd.f32 %v5881, %v5952
  %v6017 = vadd.f32 %v5882, %v5953
  %v6018 = vadd.f32 %v5883, %v5954
  %v6019 = vadd.f32 %v5884, %v5955
  %v6020 = vadd.f32 %v5885, %v5956
  %v6021 = vadd.f32 %v5886, %v5957
  %v6022 = vadd.f32 %v5887, %v5958
  %v6023 = vadd.f32 %v5888, %v5959
  %v6024 = vadd.f32 %v5889, %v5960
  %v6025 = vadd.f32 %v5890, %v5961
  %v6026 = vadd.f32 %v5891, %v5962
  %v6027 = vadd.f32 %v5892, %v5963
  %v6028 = vadd.f32 %v5893, %v5964
  %v6029 = vadd.f32 %v5894, %v5965
  %v6030 = vadd.f32 %v5895, %v5966
  %v6031 = vld [vmem:[#allocation2 + $0x219] sm:$0xff]
  %v6032 = vld [vmem:[#allocation2 + $0x221] sm:$0xff]
  %v6033 = vld [vmem:[%s8 + $0x8] sm:$0x1]
  %v6034 = vlaneseq
  %v6035 = vshrl.u32 %v6034, 7
  %v6036 = vsub.s32 0, %v6035
  %v6037 = vrot.slane %v6033, %v6036
  %v6038 = vmul.f32 %v5163, %v6037
  %v6039 = vmul.f32 %v5164, %v6037
  %v6040 = vmul.f32 %v5165, %v6037
  %v6041 = vmul.f32 %v5166, %v6037
  %v6042 = vmul.f32 %v5167, %v6037
  %v6043 = vmul.f32 %v5168, %v6037
  %v6044 = vmul.f32 %v5169, %v6037
  %v6045 = vmul.f32 %v5170, %v6037
  %v6046 = vmul.f32 %v5171, %v6037
  %v6047 = vmul.f32 %v5172, %v6037
  %v6048 = vmul.f32 %v5173, %v6037
  %v6049 = vmul.f32 %v5174, %v6037
  %v6050 = vmul.f32 %v5175, %v6037
  %v6051 = vmul.f32 %v5176, %v6037
  %v6052 = vmul.f32 %v5177, %v6037
  %v6053 = vmul.f32 %v5178, %v6037
  %v6054 = vmul.f32 %v5179, %v6037
  %v6055 = vmul.f32 %v5180, %v6037
  %v6056 = vmul.f32 %v5181, %v6037
  %v6057 = vmul.f32 %v5182, %v6037
  %v6058 = vmul.f32 %v5183, %v6037
  %v6059 = vmul.f32 %v5184, %v6037
  %v6060 = vmul.f32 %v5185, %v6037
  %v6061 = vmul.f32 %v5186, %v6037
  %v6062 = vmul.f32 %v5187, %v6037
  %v6063 = vmul.f32 %v5188, %v6037
  %v6064 = vmul.f32 %v5189, %v6037
  %v6065 = vmul.f32 %v5190, %v6037
  %v6066 = vmul.f32 %v5191, %v6037
  %v6067 = vmul.f32 %v5192, %v6037
  %v6068 = vmul.f32 %v5193, %v6037
  %v6069 = vmul.f32 %v5194, %v6037
  %v6070 = vmul.f32 %v5195, %v6037
  %v6071 = vmul.f32 %v5196, %v6037
  %v6072 = vmul.f32 %v5197, %v6037
  %v6073 = vmul.f32 %v5198, %v6037
  %v6074 = vmul.f32 %v5199, %v6037
  %v6075 = vmul.f32 %v5200, %v6037
  %v6076 = vmul.f32 %v5201, %v6037
  %v6077 = vmul.f32 %v5202, %v6037
  %v6078 = vmul.f32 %v5203, %v6037
  %v6079 = vmul.f32 %v5204, %v6037
  %v6080 = vmul.f32 %v5205, %v6037
  %v6081 = vmul.f32 %v5206, %v6037
  %v6082 = vmul.f32 %v5207, %v6037
  %v6083 = vmul.f32 %v5208, %v6037
  %v6084 = vmul.f32 %v5209, %v6037
  %v6085 = vmul.f32 %v5210, %v6037
  %v6086 = vmul.f32 %v5211, %v6037
  %v6087 = vmul.f32 %v5212, %v6037
  %v6088 = vmul.f32 %v5213, %v6037
  %v6089 = vmul.f32 %v5214, %v6037
  %v6090 = vmul.f32 %v5215, %v6037
  %v6091 = vmul.f32 %v5216, %v6037
  %v6092 = vmul.f32 %v5217, %v6037
  %v6093 = vmul.f32 %v5218, %v6037
  %v6094 = vmul.f32 %v5219, %v6037
  %v6095 = vmul.f32 %v5220, %v6037
  %v6096 = vmul.f32 %v5221, %v6037
  %v6097 = vmul.f32 %v5222, %v6037
  %v6098 = vmul.f32 %v5626, %v6037
  %v6099 = vmul.f32 %v5627, %v6037
  %v6100 = vmul.f32 %v6031, %v6037
  %v6101 = vmul.f32 %v6032, %v6037
  %v6102 = vadd.f32 %v5967, %v6038
  %v6103 = vadd.f32 %v5968, %v6039
  %v6104 = vadd.f32 %v5969, %v6040
  %v6105 = vadd.f32 %v5970, %v6041
  %v6106 = vadd.f32 %v5971, %v6042
  %v6107 = vadd.f32 %v5972, %v6043
  %v6108 = vadd.f32 %v5973, %v6044
  %v6109 = vadd.f32 %v5974, %v6045
  %v6110 = vadd.f32 %v5975, %v6046
  %v6111 = vadd.f32 %v5976, %v6047
  %v6112 = vadd.f32 %v5977, %v6048
  %v6113 = vadd.f32 %v5978, %v6049
  %v6114 = vadd.f32 %v5979, %v6050
  %v6115 = vadd.f32 %v5980, %v6051
  %v6116 = vadd.f32 %v5981, %v6052
  %v6117 = vadd.f32 %v5982, %v6053
  %v6118 = vadd.f32 %v5983, %v6054
  %v6119 = vadd.f32 %v5984, %v6055
  %v6120 = vadd.f32 %v5985, %v6056
  %v6121 = vadd.f32 %v5986, %v6057
  %v6122 = vadd.f32 %v5987, %v6058
  %v6123 = vadd.f32 %v5988, %v6059
  %v6124 = vadd.f32 %v5989, %v6060
  %v6125 = vadd.f32 %v5990, %v6061
  %v6126 = vadd.f32 %v5991, %v6062
  %v6127 = vadd.f32 %v5992, %v6063
  %v6128 = vadd.f32 %v5993, %v6064
  %v6129 = vadd.f32 %v5994, %v6065
  %v6130 = vadd.f32 %v5995, %v6066
  %v6131 = vadd.f32 %v5996, %v6067
  %v6132 = vadd.f32 %v5997, %v6068
  %v6133 = vadd.f32 %v5998, %v6069
  %v6134 = vadd.f32 %v5999, %v6070
  %v6135 = vadd.f32 %v6000, %v6071
  %v6136 = vadd.f32 %v6001, %v6072
  %v6137 = vadd.f32 %v6002, %v6073
  %v6138 = vadd.f32 %v6003, %v6074
  %v6139 = vadd.f32 %v6004, %v6075
  %v6140 = vadd.f32 %v6005, %v6076
  %v6141 = vadd.f32 %v6006, %v6077
  %v6142 = vadd.f32 %v6007, %v6078
  %v6143 = vadd.f32 %v6008, %v6079
  %v6144 = vadd.f32 %v6009, %v6080
  %v6145 = vadd.f32 %v6010, %v6081
  %v6146 = vadd.f32 %v6011, %v6082
  %v6147 = vadd.f32 %v6012, %v6083
  %v6148 = vadd.f32 %v6013, %v6084
  %v6149 = vadd.f32 %v6014, %v6085
  %v6150 = vadd.f32 %v6015, %v6086
  %v6151 = vadd.f32 %v6016, %v6087
  %v6152 = vadd.f32 %v6017, %v6088
  %v6153 = vadd.f32 %v6018, %v6089
  %v6154 = vadd.f32 %v6019, %v6090
  %v6155 = vadd.f32 %v6020, %v6091
  %v6156 = vadd.f32 %v6021, %v6092
  %v6157 = vadd.f32 %v6022, %v6093
  %v6158 = vadd.f32 %v6023, %v6094
  %v6159 = vadd.f32 %v6024, %v6095
  %v6160 = vadd.f32 %v6025, %v6096
  %v6161 = vadd.f32 %v6026, %v6097
  %v6162 = vadd.f32 %v6027, %v6098
  %v6163 = vadd.f32 %v6028, %v6099
  %v6164 = vadd.f32 %v6029, %v6100
  %v6165 = vadd.f32 %v6030, %v6101
  %v6166 = vlaneseq
  %v6167 = vand.u32 %v6166, 127
  %v6168 = vadd.s32 %v6167, 128
  %v6169 = vadd.s32 %v6167, 256
  %v6170 = vadd.s32 %v6167, 384
  %v6171 = vld [vmem:[%s4] sm:$0xff]
  %v6172 = vld [vmem:[%s4 + $0x8] sm:$0xff]
  %v6173 = vld [vmem:[%s4 + $0x10] sm:$0xff]
  %v6174 = vld [vmem:[%s4 + $0x18] sm:$0xff]
  %v6175 = vld [vmem:[%s4 + $0x20] sm:$0xff]
  %v6176 = vld [vmem:[%s4 + $0x28] sm:$0xff]
  %v6177 = vld [vmem:[%s4 + $0x30] sm:$0xff]
  %v6178 = vld [vmem:[%s4 + $0x38] sm:$0xff]
  %v6179 = vld [vmem:[%s4 + $0x40] sm:$0xff]
  %v6180 = vld [vmem:[%s4 + $0x48] sm:$0xff]
  %v6181 = vld [vmem:[%s4 + $0x50] sm:$0xff]
  %v6182 = vld [vmem:[%s4 + $0x58] sm:$0xff]
  %v6183 = vld [vmem:[%s4 + $0x60] sm:$0xff]
  %v6184 = vld [vmem:[%s4 + $0x68] sm:$0xff]
  %v6185 = vld [vmem:[%s4 + $0x70] sm:$0xff]
  %v6186 = vld [vmem:[%s4 + $0x78] sm:$0xff]
  %v6187 = vld [vmem:[%s4 + $0x80] sm:$0xff]
  %v6188 = vld [vmem:[%s4 + $0x88] sm:$0xff]
  %v6189 = vld [vmem:[%s4 + $0x90] sm:$0xff]
  %v6190 = vld [vmem:[%s4 + $0x98] sm:$0xff]
  %v6191 = vld [vmem:[%s4 + $0xa0] sm:$0x3]
  %6192 = vset.pattern.permute.xlu0 0
  %6193 = vperm.xlu0 %6192, %v6171
  %v6194 = vpop.permute.xlu0 %6193
  %6195 = vset.pattern.permute.xlu0 0
  %6196 = vperm.xlu0 %6195, %v6172
  %v6197 = vpop.permute.xlu0 %6196
  %6198 = vset.pattern.permute.xlu0 0
  %6199 = vperm.xlu0 %6198, %v6173
  %v6200 = vpop.permute.xlu0 %6199
  %6201 = vset.pattern.permute.xlu0 0
  %6202 = vperm.xlu0 %6201, %v6174
  %v6203 = vpop.permute.xlu0 %6202
  %6204 = vset.pattern.permute.xlu0 0
  %6205 = vperm.xlu0 %6204, %v6175
  %v6206 = vpop.permute.xlu0 %6205
  %6207 = vset.pattern.permute.xlu0 0
  %6208 = vperm.xlu0 %6207, %v6176
  %v6209 = vpop.permute.xlu0 %6208
  %6210 = vset.pattern.permute.xlu0 0
  %6211 = vperm.xlu0 %6210, %v6177
  %v6212 = vpop.permute.xlu0 %6211
  %6213 = vset.pattern.permute.xlu0 0
  %6214 = vperm.xlu0 %6213, %v6178
  %v6215 = vpop.permute.xlu0 %6214
  %6216 = vset.pattern.permute.xlu0 0
  %6217 = vperm.xlu0 %6216, %v6179
  %v6218 = vpop.permute.xlu0 %6217
  %6219 = vset.pattern.permute.xlu0 0
  %6220 = vperm.xlu0 %6219, %v6180
  %v6221 = vpop.permute.xlu0 %6220
  %6222 = vset.pattern.permute.xlu0 0
  %6223 = vperm.xlu0 %6222, %v6181
  %v6224 = vpop.permute.xlu0 %6223
  %6225 = vset.pattern.permute.xlu0 0
  %6226 = vperm.xlu0 %6225, %v6182
  %v6227 = vpop.permute.xlu0 %6226
  %6228 = vset.pattern.permute.xlu0 0
  %6229 = vperm.xlu0 %6228, %v6183
  %v6230 = vpop.permute.xlu0 %6229
  %6231 = vset.pattern.permute.xlu0 0
  %6232 = vperm.xlu0 %6231, %v6184
  %v6233 = vpop.permute.xlu0 %6232
  %6234 = vset.pattern.permute.xlu0 0
  %6235 = vperm.xlu0 %6234, %v6185
  %v6236 = vpop.permute.xlu0 %6235
  %6237 = vset.pattern.permute.xlu0 0
  %6238 = vperm.xlu0 %6237, %v6186
  %v6239 = vpop.permute.xlu0 %6238
  %6240 = vset.pattern.permute.xlu0 0
  %6241 = vperm.xlu0 %6240, %v6187
  %v6242 = vpop.permute.xlu0 %6241
  %6243 = vset.pattern.permute.xlu0 0
  %6244 = vperm.xlu0 %6243, %v6188
  %v6245 = vpop.permute.xlu0 %6244
  %6246 = vset.pattern.permute.xlu0 0
  %6247 = vperm.xlu0 %6246, %v6189
  %v6248 = vpop.permute.xlu0 %6247
  %6249 = vset.pattern.permute.xlu0 0
  %6250 = vperm.xlu0 %6249, %v6190
  %v6251 = vpop.permute.xlu0 %6250
  %6252 = vset.pattern.permute.xlu0 0
  %6253 = vperm.xlu0 %6252, %v6191
  %v6254 = vpop.permute.xlu0 %6253
  %vm6255 = vcmp.eq.s32.totalorder %v6167, %v6194
  %vm6256 = vcmp.eq.s32.totalorder %v6168, %v6194
  %vm6257 = vcmp.eq.s32.totalorder %v6169, %v6194
  %vm6258 = vcmp.eq.s32.totalorder %v6170, %v6194
  %vm6259 = vcmp.eq.s32.totalorder %v6167, %v6197
  %vm6260 = vcmp.eq.s32.totalorder %v6168, %v6197
  %vm6261 = vcmp.eq.s32.totalorder %v6169, %v6197
  %vm6262 = vcmp.eq.s32.totalorder %v6170, %v6197
  %vm6263 = vcmp.eq.s32.totalorder %v6167, %v6200
  %vm6264 = vcmp.eq.s32.totalorder %v6168, %v6200
  %vm6265 = vcmp.eq.s32.totalorder %v6169, %v6200
  %vm6266 = vcmp.eq.s32.totalorder %v6170, %v6200
  %vm6267 = vcmp.eq.s32.totalorder %v6167, %v6203
  %vm6268 = vcmp.eq.s32.totalorder %v6168, %v6203
  %vm6269 = vcmp.eq.s32.totalorder %v6169, %v6203
  %vm6270 = vcmp.eq.s32.totalorder %v6170, %v6203
  %vm6271 = vcmp.eq.s32.totalorder %v6167, %v6206
  %vm6272 = vcmp.eq.s32.totalorder %v6168, %v6206
  %vm6273 = vcmp.eq.s32.totalorder %v6169, %v6206
  %vm6274 = vcmp.eq.s32.totalorder %v6170, %v6206
  %vm6275 = vcmp.eq.s32.totalorder %v6167, %v6209
  %vm6276 = vcmp.eq.s32.totalorder %v6168, %v6209
  %vm6277 = vcmp.eq.s32.totalorder %v6169, %v6209
  %vm6278 = vcmp.eq.s32.totalorder %v6170, %v6209
  %vm6279 = vcmp.eq.s32.totalorder %v6167, %v6212
  %vm6280 = vcmp.eq.s32.totalorder %v6168, %v6212
  %vm6281 = vcmp.eq.s32.totalorder %v6169, %v6212
  %vm6282 = vcmp.eq.s32.totalorder %v6170, %v6212
  %vm6283 = vcmp.eq.s32.totalorder %v6167, %v6215
  %vm6284 = vcmp.eq.s32.totalorder %v6168, %v6215
  %vm6285 = vcmp.eq.s32.totalorder %v6169, %v6215
  %vm6286 = vcmp.eq.s32.totalorder %v6170, %v6215
  %vm6287 = vcmp.eq.s32.totalorder %v6167, %v6218
  %vm6288 = vcmp.eq.s32.totalorder %v6168, %v6218
  %vm6289 = vcmp.eq.s32.totalorder %v6169, %v6218
  %vm6290 = vcmp.eq.s32.totalorder %v6170, %v6218
  %vm6291 = vcmp.eq.s32.totalorder %v6167, %v6221
  %vm6292 = vcmp.eq.s32.totalorder %v6168, %v6221
  %vm6293 = vcmp.eq.s32.totalorder %v6169, %v6221
  %vm6294 = vcmp.eq.s32.totalorder %v6170, %v6221
  %vm6295 = vcmp.eq.s32.totalorder %v6167, %v6224
  %vm6296 = vcmp.eq.s32.totalorder %v6168, %v6224
  %vm6297 = vcmp.eq.s32.totalorder %v6169, %v6224
  %vm6298 = vcmp.eq.s32.totalorder %v6170, %v6224
  %vm6299 = vcmp.eq.s32.totalorder %v6167, %v6227
  %vm6300 = vcmp.eq.s32.totalorder %v6168, %v6227
  %vm6301 = vcmp.eq.s32.totalorder %v6169, %v6227
  %vm6302 = vcmp.eq.s32.totalorder %v6170, %v6227
  %vm6303 = vcmp.eq.s32.totalorder %v6167, %v6230
  %vm6304 = vcmp.eq.s32.totalorder %v6168, %v6230
  %vm6305 = vcmp.eq.s32.totalorder %v6169, %v6230
  %vm6306 = vcmp.eq.s32.totalorder %v6170, %v6230
  %vm6307 = vcmp.eq.s32.totalorder %v6167, %v6233
  %vm6308 = vcmp.eq.s32.totalorder %v6168, %v6233
  %vm6309 = vcmp.eq.s32.totalorder %v6169, %v6233
  %vm6310 = vcmp.eq.s32.totalorder %v6170, %v6233
  %vm6311 = vcmp.eq.s32.totalorder %v6167, %v6236
  %vm6312 = vcmp.eq.s32.totalorder %v6168, %v6236
  %vm6313 = vcmp.eq.s32.totalorder %v6169, %v6236
  %vm6314 = vcmp.eq.s32.totalorder %v6170, %v6236
  %vm6315 = vcmp.eq.s32.totalorder %v6167, %v6239
  %vm6316 = vcmp.eq.s32.totalorder %v6168, %v6239
  %vm6317 = vcmp.eq.s32.totalorder %v6169, %v6239
  %vm6318 = vcmp.eq.s32.totalorder %v6170, %v6239
  %vm6319 = vcmp.eq.s32.totalorder %v6167, %v6242
  %vm6320 = vcmp.eq.s32.totalorder %v6168, %v6242
  %vm6321 = vcmp.eq.s32.totalorder %v6169, %v6242
  %vm6322 = vcmp.eq.s32.totalorder %v6170, %v6242
  %vm6323 = vcmp.eq.s32.totalorder %v6167, %v6245
  %vm6324 = vcmp.eq.s32.totalorder %v6168, %v6245
  %vm6325 = vcmp.eq.s32.totalorder %v6169, %v6245
  %vm6326 = vcmp.eq.s32.totalorder %v6170, %v6245
  %vm6327 = vcmp.eq.s32.totalorder %v6167, %v6248
  %vm6328 = vcmp.eq.s32.totalorder %v6168, %v6248
  %vm6329 = vcmp.eq.s32.totalorder %v6169, %v6248
  %vm6330 = vcmp.eq.s32.totalorder %v6170, %v6248
  %vm6331 = vcmp.eq.s32.totalorder %v6167, %v6251
  %vm6332 = vcmp.eq.s32.totalorder %v6168, %v6251
  %vm6333 = vcmp.eq.s32.totalorder %v6169, %v6251
  %vm6334 = vcmp.eq.s32.totalorder %v6170, %v6251
  %vm6335 = vcmp.eq.s32.totalorder %v6167, %v6254
  %vm6336 = vcmp.eq.s32.totalorder %v6168, %v6254
  %vm6337 = vcmp.eq.s32.totalorder %v6169, %v6254
  %vm6338 = vcmp.eq.s32.totalorder %v6170, %v6254
  %v6339 = vsel %vm6255, 1, 0
  %v6340 = vsel %vm6256, 1, 0
  %v6341 = vsel %vm6257, 1, 0
  %v6342 = vsel %vm6258, 1, 0
  %v6343 = vsel %vm6259, 1, 0
  %v6344 = vsel %vm6260, 1, 0
  %v6345 = vsel %vm6261, 1, 0
  %v6346 = vsel %vm6262, 1, 0
  %v6347 = vsel %vm6263, 1, 0
  %v6348 = vsel %vm6264, 1, 0
  %v6349 = vsel %vm6265, 1, 0
  %v6350 = vsel %vm6266, 1, 0
  %v6351 = vsel %vm6267, 1, 0
  %v6352 = vsel %vm6268, 1, 0
  %v6353 = vsel %vm6269, 1, 0
  %v6354 = vsel %vm6270, 1, 0
  %v6355 = vsel %vm6271, 1, 0
  %v6356 = vsel %vm6272, 1, 0
  %v6357 = vsel %vm6273, 1, 0
  %v6358 = vsel %vm6274, 1, 0
  %v6359 = vsel %vm6275, 1, 0
  %v6360 = vsel %vm6276, 1, 0
  %v6361 = vsel %vm6277, 1, 0
  %v6362 = vsel %vm6278, 1, 0
  %v6363 = vsel %vm6279, 1, 0
  %v6364 = vsel %vm6280, 1, 0
  %v6365 = vsel %vm6281, 1, 0
  %v6366 = vsel %vm6282, 1, 0
  %v6367 = vsel %vm6283, 1, 0
  %v6368 = vsel %vm6284, 1, 0
  %v6369 = vsel %vm6285, 1, 0
  %v6370 = vsel %vm6286, 1, 0
  %v6371 = vsel %vm6287, 1, 0
  %v6372 = vsel %vm6288, 1, 0
  %v6373 = vsel %vm6289, 1, 0
  %v6374 = vsel %vm6290, 1, 0
  %v6375 = vsel %vm6291, 1, 0
  %v6376 = vsel %vm6292, 1, 0
  %v6377 = vsel %vm6293, 1, 0
  %v6378 = vsel %vm6294, 1, 0
  %v6379 = vsel %vm6295, 1, 0
  %v6380 = vsel %vm6296, 1, 0
  %v6381 = vsel %vm6297, 1, 0
  %v6382 = vsel %vm6298, 1, 0
  %v6383 = vsel %vm6299, 1, 0
  %v6384 = vsel %vm6300, 1, 0
  %v6385 = vsel %vm6301, 1, 0
  %v6386 = vsel %vm6302, 1, 0
  %v6387 = vsel %vm6303, 1, 0
  %v6388 = vsel %vm6304, 1, 0
  %v6389 = vsel %vm6305, 1, 0
  %v6390 = vsel %vm6306, 1, 0
  %v6391 = vsel %vm6307, 1, 0
  %v6392 = vsel %vm6308, 1, 0
  %v6393 = vsel %vm6309, 1, 0
  %v6394 = vsel %vm6310, 1, 0
  %v6395 = vsel %vm6311, 1, 0
  %v6396 = vsel %vm6312, 1, 0
  %v6397 = vsel %vm6313, 1, 0
  %v6398 = vsel %vm6314, 1, 0
  %v6399 = vsel %vm6315, 1, 0
  %v6400 = vsel %vm6316, 1, 0
  %v6401 = vsel %vm6317, 1, 0
  %v6402 = vsel %vm6318, 1, 0
  %v6403 = vsel %vm6319, 1, 0
  %v6404 = vsel %vm6320, 1, 0
  %v6405 = vsel %vm6321, 1, 0
  %v6406 = vsel %vm6322, 1, 0
  %v6407 = vsel %vm6323, 1, 0
  %v6408 = vsel %vm6324, 1, 0
  %v6409 = vsel %vm6325, 1, 0
  %v6410 = vsel %vm6326, 1, 0
  %v6411 = vsel %vm6327, 1, 0
  %v6412 = vsel %vm6328, 1, 0
  %v6413 = vsel %vm6329, 1, 0
  %v6414 = vsel %vm6330, 1, 0
  %v6415 = vsel %vm6331, 1, 0
  %v6416 = vsel %vm6332, 1, 0
  %v6417 = vsel %vm6333, 1, 0
  %v6418 = vsel %vm6334, 1, 0
  %v6419 = vsel %vm6335, 1, 0
  %v6420 = vsel %vm6336, 1, 0
  %v6421 = vsel %vm6337, 1, 0
  %v6422 = vsel %vm6338, 1, 0
  %v6423 = vcvt.s32.f32 %v6339
  %v6424 = vcvt.s32.f32 %v6340
  %v6425 = vcvt.s32.f32 %v6341
  %v6426 = vcvt.s32.f32 %v6342
  %v6427 = vcvt.s32.f32 %v6343
  %v6428 = vcvt.s32.f32 %v6344
  %v6429 = vcvt.s32.f32 %v6345
  %v6430 = vcvt.s32.f32 %v6346
  %v6431 = vcvt.s32.f32 %v6347
  %v6432 = vcvt.s32.f32 %v6348
  %v6433 = vcvt.s32.f32 %v6349
  %v6434 = vcvt.s32.f32 %v6350
  %v6435 = vcvt.s32.f32 %v6351
  %v6436 = vcvt.s32.f32 %v6352
  %v6437 = vcvt.s32.f32 %v6353
  %v6438 = vcvt.s32.f32 %v6354
  %v6439 = vcvt.s32.f32 %v6355
  %v6440 = vcvt.s32.f32 %v6356
  %v6441 = vcvt.s32.f32 %v6357
  %v6442 = vcvt.s32.f32 %v6358
  %v6443 = vcvt.s32.f32 %v6359
  %v6444 = vcvt.s32.f32 %v6360
  %v6445 = vcvt.s32.f32 %v6361
  %v6446 = vcvt.s32.f32 %v6362
  %v6447 = vcvt.s32.f32 %v6363
  %v6448 = vcvt.s32.f32 %v6364
  %v6449 = vcvt.s32.f32 %v6365
  %v6450 = vcvt.s32.f32 %v6366
  %v6451 = vcvt.s32.f32 %v6367
  %v6452 = vcvt.s32.f32 %v6368
  %v6453 = vcvt.s32.f32 %v6369
  %v6454 = vcvt.s32.f32 %v6370
  %v6455 = vcvt.s32.f32 %v6371
  %v6456 = vcvt.s32.f32 %v6372
  %v6457 = vcvt.s32.f32 %v6373
  %v6458 = vcvt.s32.f32 %v6374
  %v6459 = vcvt.s32.f32 %v6375
  %v6460 = vcvt.s32.f32 %v6376
  %v6461 = vcvt.s32.f32 %v6377
  %v6462 = vcvt.s32.f32 %v6378
  %v6463 = vcvt.s32.f32 %v6379
  %v6464 = vcvt.s32.f32 %v6380
  %v6465 = vcvt.s32.f32 %v6381
  %v6466 = vcvt.s32.f32 %v6382
  %v6467 = vcvt.s32.f32 %v6383
  %v6468 = vcvt.s32.f32 %v6384
  %v6469 = vcvt.s32.f32 %v6385
  %v6470 = vcvt.s32.f32 %v6386
  %v6471 = vcvt.s32.f32 %v6387
  %v6472 = vcvt.s32.f32 %v6388
  %v6473 = vcvt.s32.f32 %v6389
  %v6474 = vcvt.s32.f32 %v6390
  %v6475 = vcvt.s32.f32 %v6391
  %v6476 = vcvt.s32.f32 %v6392
  %v6477 = vcvt.s32.f32 %v6393
  %v6478 = vcvt.s32.f32 %v6394
  %v6479 = vcvt.s32.f32 %v6395
  %v6480 = vcvt.s32.f32 %v6396
  %v6481 = vcvt.s32.f32 %v6397
  %v6482 = vcvt.s32.f32 %v6398
  %v6483 = vcvt.s32.f32 %v6399
  %v6484 = vcvt.s32.f32 %v6400
  %v6485 = vcvt.s32.f32 %v6401
  %v6486 = vcvt.s32.f32 %v6402
  %v6487 = vcvt.s32.f32 %v6403
  %v6488 = vcvt.s32.f32 %v6404
  %v6489 = vcvt.s32.f32 %v6405
  %v6490 = vcvt.s32.f32 %v6406
  %v6491 = vcvt.s32.f32 %v6407
  %v6492 = vcvt.s32.f32 %v6408
  %v6493 = vcvt.s32.f32 %v6409
  %v6494 = vcvt.s32.f32 %v6410
  %v6495 = vcvt.s32.f32 %v6411
  %v6496 = vcvt.s32.f32 %v6412
  %v6497 = vcvt.s32.f32 %v6413
  %v6498 = vcvt.s32.f32 %v6414
  %v6499 = vcvt.s32.f32 %v6415
  %v6500 = vcvt.s32.f32 %v6416
  %v6501 = vcvt.s32.f32 %v6417
  %v6502 = vcvt.s32.f32 %v6418
  %v6503 = vcvt.s32.f32 %v6419
  %v6504 = vcvt.s32.f32 %v6420
  %v6505 = vcvt.s32.f32 %v6421
  %v6506 = vcvt.s32.f32 %v6422
  %6507 = vmatprep.subr.mxu0 0.0
  %6508 = vmatpush1.msra.mxu0 %v6117
  %6509 = vmatprep.subr.mxu0 0.0
  %6510 = vmatpush1.msra.mxu0 %v6116
  %6511 = vmatprep.subr.mxu0 0.0
  %6512 = vmatpush1.msra.mxu0 %v6115
  %6513 = vmatprep.subr.mxu0 0.0
  %6514 = vmatpush1.msra.mxu0 %v6114
  %6515 = vmatprep.subr.mxu0 0.0
  %6516 = vmatpush1.msra.mxu0 %v6113
  %6517 = vmatprep.subr.mxu0 0.0
  %6518 = vmatpush1.msra.mxu0 %v6112
  %6519 = vmatprep.subr.mxu0 0.0
  %6520 = vmatpush1.msra.mxu0 %v6111
  %6521 = vmatprep.subr.mxu0 0.0
  %6522 = vmatpush1.msra.mxu0 %v6110
  %6523 = vmatprep.subr.mxu0 0.0
  %6524 = vmatpush1.msra.mxu0 %v6109
  %6525 = vmatprep.subr.mxu0 0.0
  %6526 = vmatpush1.msra.mxu0 %v6108
  %6527 = vmatprep.subr.mxu0 0.0
  %6528 = vmatpush1.msra.mxu0 %v6107
  %6529 = vmatprep.subr.mxu0 0.0
  %6530 = vmatpush1.msra.mxu0 %v6106
  %6531 = vmatprep.subr.mxu0 0.0
  %6532 = vmatpush1.msra.mxu0 %v6105
  %6533 = vmatprep.subr.mxu0 0.0
  %6534 = vmatpush1.msra.mxu0 %v6104
  %6535 = vmatprep.subr.mxu0 0.0
  %6536 = vmatpush1.msra.mxu0 %v6103
  %6537 = vmatprep.subr.mxu0 0.0
  %6538 = vmatpush1.msra.mxu0 %v6102
  %6539 = vmatprep.subr.mxu0 0.0
  %6540 = vmatpush2.msra.mxu0 %v6133
  %6541 = vmatprep.subr.mxu0 0.0
  %6542 = vmatpush2.msra.mxu0 %v6132
  %6543 = vmatprep.subr.mxu0 0.0
  %6544 = vmatpush2.msra.mxu0 %v6131
  %6545 = vmatprep.subr.mxu0 0.0
  %6546 = vmatpush2.msra.mxu0 %v6130
  %6547 = vmatprep.subr.mxu0 0.0
  %6548 = vmatpush2.msra.mxu0 %v6129
  %6549 = vmatprep.subr.mxu0 0.0
  %6550 = vmatpush2.msra.mxu0 %v6128
  %6551 = vmatprep.subr.mxu0 0.0
  %6552 = vmatpush2.msra.mxu0 %v6127
  %6553 = vmatprep.subr.mxu0 0.0
  %6554 = vmatpush2.msra.mxu0 %v6126
  %6555 = vmatprep.subr.mxu0 0.0
  %6556 = vmatpush2.msra.mxu0 %v6125
  %6557 = vmatprep.subr.mxu0 0.0
  %6558 = vmatpush2.msra.mxu0 %v6124
  %6559 = vmatprep.subr.mxu0 0.0
  %6560 = vmatpush2.msra.mxu0 %v6123
  %6561 = vmatprep.subr.mxu0 0.0
  %6562 = vmatpush2.msra.mxu0 %v6122
  %6563 = vmatprep.subr.mxu0 0.0
  %6564 = vmatpush2.msra.mxu0 %v6121
  %6565 = vmatprep.subr.mxu0 0.0
  %6566 = vmatpush2.msra.mxu0 %v6120
  %6567 = vmatprep.subr.mxu0 0.0
  %6568 = vmatpush2.msra.mxu0 %v6119
  %6569 = vmatprep.subr.mxu0 0.0
  %6570 = vmatpush2.msra.mxu0 %v6118
  %6571 = vmatprep.mubr.f32.mxu0 %v6424
  %6572 = vmatmul.mubr.f32.gmra.mxu0 %v6423
  %v6573 = vpop.f32.mrf.mxu0
  %v6574 = vadd.f32 0.0, %v6573
  %v6575 = vpop.f32.mrf.mxu0
  %6576 = vmatprep.mubr.f32.mxu0 %v6428
  %6577 = vmatmul.mubr.f32.gmra.mxu0 %v6427
  %v6578 = vpop.f32.mrf.mxu0
  %v6579 = vadd.f32 0.0, %v6578
  %v6580 = vpop.f32.mrf.mxu0
  %6581 = vmatprep.mubr.f32.mxu0 %v6432
  %6582 = vmatmul.mubr.f32.gmra.mxu0 %v6431
  %v6583 = vpop.f32.mrf.mxu0
  %v6584 = vadd.f32 0.0, %v6583
  %v6585 = vpop.f32.mrf.mxu0
  %6586 = vmatprep.mubr.f32.mxu0 %v6436
  %6587 = vmatmul.mubr.f32.gmra.mxu0 %v6435
  %v6588 = vpop.f32.mrf.mxu0
  %v6589 = vadd.f32 0.0, %v6588
  %v6590 = vpop.f32.mrf.mxu0
  %6591 = vmatprep.mubr.f32.mxu0 %v6440
  %6592 = vmatmul.mubr.f32.gmra.mxu0 %v6439
  %v6593 = vpop.f32.mrf.mxu0
  %v6594 = vadd.f32 0.0, %v6593
  %v6595 = vpop.f32.mrf.mxu0
  %6596 = vmatprep.mubr.f32.mxu0 %v6444
  %6597 = vmatmul.mubr.f32.gmra.mxu0 %v6443
  %v6598 = vpop.f32.mrf.mxu0
  %v6599 = vadd.f32 0.0, %v6598
  %v6600 = vpop.f32.mrf.mxu0
  %6601 = vmatprep.mubr.f32.mxu0 %v6448
  %6602 = vmatmul.mubr.f32.gmra.mxu0 %v6447
  %v6603 = vpop.f32.mrf.mxu0
  %v6604 = vadd.f32 0.0, %v6603
  %v6605 = vpop.f32.mrf.mxu0
  %6606 = vmatprep.mubr.f32.mxu0 %v6452
  %6607 = vmatmul.mubr.f32.gmra.mxu0 %v6451
  %v6608 = vpop.f32.mrf.mxu0
  %v6609 = vadd.f32 0.0, %v6608
  %v6610 = vpop.f32.mrf.mxu0
  %6611 = vmatprep.mubr.f32.mxu0 %v6456
  %6612 = vmatmul.mubr.f32.gmra.mxu0 %v6455
  %v6613 = vpop.f32.mrf.mxu0
  %v6614 = vadd.f32 0.0, %v6613
  %v6615 = vpop.f32.mrf.mxu0
  %6616 = vmatprep.mubr.f32.mxu0 %v6460
  %6617 = vmatmul.mubr.f32.gmra.mxu0 %v6459
  %v6618 = vpop.f32.mrf.mxu0
  %v6619 = vadd.f32 0.0, %v6618
  %v6620 = vpop.f32.mrf.mxu0
  %6621 = vmatprep.mubr.f32.mxu0 %v6464
  %6622 = vmatmul.mubr.f32.gmra.mxu0 %v6463
  %v6623 = vpop.f32.mrf.mxu0
  %v6624 = vadd.f32 0.0, %v6623
  %v6625 = vpop.f32.mrf.mxu0
  %6626 = vmatprep.mubr.f32.mxu0 %v6468
  %6627 = vmatmul.mubr.f32.gmra.mxu0 %v6467
  %v6628 = vpop.f32.mrf.mxu0
  %v6629 = vadd.f32 0.0, %v6628
  %v6630 = vpop.f32.mrf.mxu0
  %6631 = vmatprep.mubr.f32.mxu0 %v6472
  %6632 = vmatmul.mubr.f32.gmra.mxu0 %v6471
  %v6633 = vpop.f32.mrf.mxu0
  %v6634 = vadd.f32 0.0, %v6633
  %v6635 = vpop.f32.mrf.mxu0
  %6636 = vmatprep.mubr.f32.mxu0 %v6476
  %6637 = vmatmul.mubr.f32.gmra.mxu0 %v6475
  %v6638 = vpop.f32.mrf.mxu0
  %v6639 = vadd.f32 0.0, %v6638
  %v6640 = vpop.f32.mrf.mxu0
  %6641 = vmatprep.mubr.f32.mxu0 %v6480
  %6642 = vmatmul.mubr.f32.gmra.mxu0 %v6479
  %v6643 = vpop.f32.mrf.mxu0
  %v6644 = vadd.f32 0.0, %v6643
  %v6645 = vpop.f32.mrf.mxu0
  %6646 = vmatprep.mubr.f32.mxu0 %v6484
  %6647 = vmatmul.mubr.f32.gmra.mxu0 %v6483
  %v6648 = vpop.f32.mrf.mxu0
  %v6649 = vadd.f32 0.0, %v6648
  %v6650 = vpop.f32.mrf.mxu0
  %6651 = vmatprep.mubr.f32.mxu0 %v6488
  %6652 = vmatmul.mubr.f32.gmra.mxu0 %v6487
  %v6653 = vpop.f32.mrf.mxu0
  %v6654 = vadd.f32 0.0, %v6653
  %v6655 = vpop.f32.mrf.mxu0
  %6656 = vmatprep.mubr.f32.mxu0 %v6492
  %6657 = vmatmul.mubr.f32.gmra.mxu0 %v6491
  %v6658 = vpop.f32.mrf.mxu0
  %v6659 = vadd.f32 0.0, %v6658
  %v6660 = vpop.f32.mrf.mxu0
  %6661 = vmatprep.mubr.f32.mxu0 %v6496
  %6662 = vmatmul.mubr.f32.gmra.mxu0 %v6495
  %v6663 = vpop.f32.mrf.mxu0
  %v6664 = vadd.f32 0.0, %v6663
  %v6665 = vpop.f32.mrf.mxu0
  %6666 = vmatprep.mubr.f32.mxu0 %v6500
  %6667 = vmatmul.mubr.f32.gmra.mxu0 %v6499
  %v6668 = vpop.f32.mrf.mxu0
  %v6669 = vadd.f32 0.0, %v6668
  %v6670 = vpop.f32.mrf.mxu0
  %6671 = vmatprep.mubr.f32.mxu0 %v6504
  %6672 = vmatmul.mubr.f32.gmra.mxu0 %v6503
  %v6673 = vpop.f32.mrf.mxu0
  %v6674 = vadd.f32 0.0, %v6673
  %v6675 = vpop.f32.mrf.mxu0
  %6676 = vdwg.mxu0
  %6677 = vmatprep.subr.mxu0 0.0
  %6678 = vmatpush1.msra.mxu0 %v6149
  %6679 = vmatprep.subr.mxu0 0.0
  %6680 = vmatpush1.msra.mxu0 %v6148
  %6681 = vmatprep.subr.mxu0 0.0
  %6682 = vmatpush1.msra.mxu0 %v6147
  %6683 = vmatprep.subr.mxu0 0.0
  %6684 = vmatpush1.msra.mxu0 %v6146
  %6685 = vmatprep.subr.mxu0 0.0
  %6686 = vmatpush1.msra.mxu0 %v6145
  %6687 = vmatprep.subr.mxu0 0.0
  %6688 = vmatpush1.msra.mxu0 %v6144
  %6689 = vmatprep.subr.mxu0 0.0
  %6690 = vmatpush1.msra.mxu0 %v6143
  %6691 = vmatprep.subr.mxu0 0.0
  %6692 = vmatpush1.msra.mxu0 %v6142
  %6693 = vmatprep.subr.mxu0 0.0
  %6694 = vmatpush1.msra.mxu0 %v6141
  %6695 = vmatprep.subr.mxu0 0.0
  %6696 = vmatpush1.msra.mxu0 %v6140
  %6697 = vmatprep.subr.mxu0 0.0
  %6698 = vmatpush1.msra.mxu0 %v6139
  %6699 = vmatprep.subr.mxu0 0.0
  %6700 = vmatpush1.msra.mxu0 %v6138
  %6701 = vmatprep.subr.mxu0 0.0
  %6702 = vmatpush1.msra.mxu0 %v6137
  %6703 = vmatprep.subr.mxu0 0.0
  %6704 = vmatpush1.msra.mxu0 %v6136
  %6705 = vmatprep.subr.mxu0 0.0
  %6706 = vmatpush1.msra.mxu0 %v6135
  %6707 = vmatprep.subr.mxu0 0.0
  %6708 = vmatpush1.msra.mxu0 %v6134
  %6709 = vmatprep.subr.mxu0 0.0
  %6710 = vmatpush2.msra.mxu0 %v6165
  %6711 = vmatprep.subr.mxu0 0.0
  %6712 = vmatpush2.msra.mxu0 %v6164
  %6713 = vmatprep.subr.mxu0 0.0
  %6714 = vmatpush2.msra.mxu0 %v6163
  %6715 = vmatprep.subr.mxu0 0.0
  %6716 = vmatpush2.msra.mxu0 %v6162
  %6717 = vmatprep.subr.mxu0 0.0
  %6718 = vmatpush2.msra.mxu0 %v6161
  %6719 = vmatprep.subr.mxu0 0.0
  %6720 = vmatpush2.msra.mxu0 %v6160
  %6721 = vmatprep.subr.mxu0 0.0
  %6722 = vmatpush2.msra.mxu0 %v6159
  %6723 = vmatprep.subr.mxu0 0.0
  %6724 = vmatpush2.msra.mxu0 %v6158
  %6725 = vmatprep.subr.mxu0 0.0
  %6726 = vmatpush2.msra.mxu0 %v6157
  %6727 = vmatprep.subr.mxu0 0.0
  %6728 = vmatpush2.msra.mxu0 %v6156
  %6729 = vmatprep.subr.mxu0 0.0
  %6730 = vmatpush2.msra.mxu0 %v6155
  %6731 = vmatprep.subr.mxu0 0.0
  %6732 = vmatpush2.msra.mxu0 %v6154
  %6733 = vmatprep.subr.mxu0 0.0
  %6734 = vmatpush2.msra.mxu0 %v6153
  %6735 = vmatprep.subr.mxu0 0.0
  %6736 = vmatpush2.msra.mxu0 %v6152
  %6737 = vmatprep.subr.mxu0 0.0
  %6738 = vmatpush2.msra.mxu0 %v6151
  %6739 = vmatprep.subr.mxu0 0.0
  %6740 = vmatpush2.msra.mxu0 %v6150
  %6741 = vmatprep.mubr.f32.mxu0 %v6426
  %6742 = vmatmul.mubr.f32.gmra.mxu0 %v6425
  %v6743 = vpop.f32.mrf.mxu0
  %v6744 = vadd.f32 %v6574, %v6743
  %v6745 = vpop.f32.mrf.mxu0
  %6746 = vmatprep.mubr.f32.mxu0 %v6430
  %6747 = vmatmul.mubr.f32.gmra.mxu0 %v6429
  %v6748 = vpop.f32.mrf.mxu0
  %v6749 = vadd.f32 %v6579, %v6748
  %v6750 = vpop.f32.mrf.mxu0
  %6751 = vmatprep.mubr.f32.mxu0 %v6434
  %6752 = vmatmul.mubr.f32.gmra.mxu0 %v6433
  %v6753 = vpop.f32.mrf.mxu0
  %v6754 = vadd.f32 %v6584, %v6753
  %v6755 = vpop.f32.mrf.mxu0
  %6756 = vmatprep.mubr.f32.mxu0 %v6438
  %6757 = vmatmul.mubr.f32.gmra.mxu0 %v6437
  %v6758 = vpop.f32.mrf.mxu0
  %v6759 = vadd.f32 %v6589, %v6758
  %v6760 = vpop.f32.mrf.mxu0
  %6761 = vmatprep.mubr.f32.mxu0 %v6442
  %6762 = vmatmul.mubr.f32.gmra.mxu0 %v6441
  %v6763 = vpop.f32.mrf.mxu0
  %v6764 = vadd.f32 %v6594, %v6763
  %v6765 = vpop.f32.mrf.mxu0
  %6766 = vmatprep.mubr.f32.mxu0 %v6446
  %6767 = vmatmul.mubr.f32.gmra.mxu0 %v6445
  %v6768 = vpop.f32.mrf.mxu0
  %v6769 = vadd.f32 %v6599, %v6768
  %v6770 = vpop.f32.mrf.mxu0
  %6771 = vmatprep.mubr.f32.mxu0 %v6450
  %6772 = vmatmul.mubr.f32.gmra.mxu0 %v6449
  %v6773 = vpop.f32.mrf.mxu0
  %v6774 = vadd.f32 %v6604, %v6773
  %v6775 = vpop.f32.mrf.mxu0
  %6776 = vmatprep.mubr.f32.mxu0 %v6454
  %6777 = vmatmul.mubr.f32.gmra.mxu0 %v6453
  %v6778 = vpop.f32.mrf.mxu0
  %v6779 = vadd.f32 %v6609, %v6778
  %v6780 = vpop.f32.mrf.mxu0
  %6781 = vmatprep.mubr.f32.mxu0 %v6458
  %6782 = vmatmul.mubr.f32.gmra.mxu0 %v6457
  %v6783 = vpop.f32.mrf.mxu0
  %v6784 = vadd.f32 %v6614, %v6783
  %v6785 = vpop.f32.mrf.mxu0
  %6786 = vmatprep.mubr.f32.mxu0 %v6462
  %6787 = vmatmul.mubr.f32.gmra.mxu0 %v6461
  %v6788 = vpop.f32.mrf.mxu0
  %v6789 = vadd.f32 %v6619, %v6788
  %v6790 = vpop.f32.mrf.mxu0
  %6791 = vmatprep.mubr.f32.mxu0 %v6466
  %6792 = vmatmul.mubr.f32.gmra.mxu0 %v6465
  %v6793 = vpop.f32.mrf.mxu0
  %v6794 = vadd.f32 %v6624, %v6793
  %v6795 = vpop.f32.mrf.mxu0
  %6796 = vmatprep.mubr.f32.mxu0 %v6470
  %6797 = vmatmul.mubr.f32.gmra.mxu0 %v6469
  %v6798 = vpop.f32.mrf.mxu0
  %v6799 = vadd.f32 %v6629, %v6798
  %v6800 = vpop.f32.mrf.mxu0
  %6801 = vmatprep.mubr.f32.mxu0 %v6474
  %6802 = vmatmul.mubr.f32.gmra.mxu0 %v6473
  %v6803 = vpop.f32.mrf.mxu0
  %v6804 = vadd.f32 %v6634, %v6803
  %v6805 = vpop.f32.mrf.mxu0
  %6806 = vmatprep.mubr.f32.mxu0 %v6478
  %6807 = vmatmul.mubr.f32.gmra.mxu0 %v6477
  %v6808 = vpop.f32.mrf.mxu0
  %v6809 = vadd.f32 %v6639, %v6808
  %v6810 = vpop.f32.mrf.mxu0
  %6811 = vmatprep.mubr.f32.mxu0 %v6482
  %6812 = vmatmul.mubr.f32.gmra.mxu0 %v6481
  %v6813 = vpop.f32.mrf.mxu0
  %v6814 = vadd.f32 %v6644, %v6813
  %v6815 = vpop.f32.mrf.mxu0
  %6816 = vmatprep.mubr.f32.mxu0 %v6486
  %6817 = vmatmul.mubr.f32.gmra.mxu0 %v6485
  %v6818 = vpop.f32.mrf.mxu0
  %v6819 = vadd.f32 %v6649, %v6818
  %v6820 = vpop.f32.mrf.mxu0
  %6821 = vmatprep.mubr.f32.mxu0 %v6490
  %6822 = vmatmul.mubr.f32.gmra.mxu0 %v6489
  %v6823 = vpop.f32.mrf.mxu0
  %v6824 = vadd.f32 %v6654, %v6823
  %v6825 = vpop.f32.mrf.mxu0
  %6826 = vmatprep.mubr.f32.mxu0 %v6494
  %6827 = vmatmul.mubr.f32.gmra.mxu0 %v6493
  %v6828 = vpop.f32.mrf.mxu0
  %v6829 = vadd.f32 %v6659, %v6828
  %v6830 = vpop.f32.mrf.mxu0
  %6831 = vmatprep.mubr.f32.mxu0 %v6498
  %6832 = vmatmul.mubr.f32.gmra.mxu0 %v6497
  %v6833 = vpop.f32.mrf.mxu0
  %v6834 = vadd.f32 %v6664, %v6833
  %v6835 = vpop.f32.mrf.mxu0
  %6836 = vmatprep.mubr.f32.mxu0 %v6502
  %6837 = vmatmul.mubr.f32.gmra.mxu0 %v6501
  %v6838 = vpop.f32.mrf.mxu0
  %v6839 = vadd.f32 %v6669, %v6838
  %v6840 = vpop.f32.mrf.mxu0
  %6841 = vmatprep.mubr.f32.mxu0 %v6506
  %6842 = vmatmul.mubr.f32.gmra.mxu0 %v6505
  %v6843 = vpop.f32.mrf.mxu0
  %v6844 = vadd.f32 %v6674, %v6843
  %v6845 = vpop.f32.mrf.mxu0
  %6846 = vdwg.mxu0
  %6848 = vset.pattern.permute.xlu0 0
  %6849 = vperm.xlu0 %6848, %v206
  %v6850 = vpop.permute.xlu0 %6849
  %6853 = vset.pattern.permute.xlu0 0
  %6854 = vperm.xlu0 %6853, %v207
  %v6855 = vpop.permute.xlu0 %6854
  %6858 = vset.pattern.permute.xlu0 0
  %6859 = vperm.xlu0 %6858, %v208
  %v6860 = vpop.permute.xlu0 %6859
  %6863 = vset.pattern.permute.xlu0 0
  %6864 = vperm.xlu0 %6863, %v209
  %v6865 = vpop.permute.xlu0 %6864
  %6868 = vset.pattern.permute.xlu0 0
  %6869 = vperm.xlu0 %6868, %v210
  %v6870 = vpop.permute.xlu0 %6869
  %6873 = vset.pattern.permute.xlu0 0
  %6874 = vperm.xlu0 %6873, %v211
  %v6875 = vpop.permute.xlu0 %6874
  %6878 = vset.pattern.permute.xlu0 0
  %6879 = vperm.xlu0 %6878, %v212
  %v6880 = vpop.permute.xlu0 %6879
  %6883 = vset.pattern.permute.xlu0 0
  %6884 = vperm.xlu0 %6883, %v213
  %v6885 = vpop.permute.xlu0 %6884
  %6888 = vset.pattern.permute.xlu0 0
  %6889 = vperm.xlu0 %6888, %v214
  %v6890 = vpop.permute.xlu0 %6889
  %6893 = vset.pattern.permute.xlu0 0
  %6894 = vperm.xlu0 %6893, %v215
  %v6895 = vpop.permute.xlu0 %6894
  %6898 = vset.pattern.permute.xlu0 0
  %6899 = vperm.xlu0 %6898, %v216
  %v6900 = vpop.permute.xlu0 %6899
  %6903 = vset.pattern.permute.xlu0 0
  %6904 = vperm.xlu0 %6903, %v217
  %v6905 = vpop.permute.xlu0 %6904
  %6908 = vset.pattern.permute.xlu0 0
  %6909 = vperm.xlu0 %6908, %v218
  %v6910 = vpop.permute.xlu0 %6909
  %6913 = vset.pattern.permute.xlu0 0
  %6914 = vperm.xlu0 %6913, %v219
  %v6915 = vpop.permute.xlu0 %6914
  %6918 = vset.pattern.permute.xlu0 0
  %6919 = vperm.xlu0 %6918, %v220
  %v6920 = vpop.permute.xlu0 %6919
  %6923 = vset.pattern.permute.xlu0 0
  %6924 = vperm.xlu0 %6923, %v221
  %v6925 = vpop.permute.xlu0 %6924
  %6928 = vset.pattern.permute.xlu0 0
  %6929 = vperm.xlu0 %6928, %v222
  %v6930 = vpop.permute.xlu0 %6929
  %6933 = vset.pattern.permute.xlu0 0
  %6934 = vperm.xlu0 %6933, %v223
  %v6935 = vpop.permute.xlu0 %6934
  %6938 = vset.pattern.permute.xlu0 0
  %6939 = vperm.xlu0 %6938, %v224
  %v6940 = vpop.permute.xlu0 %6939
  %6943 = vset.pattern.permute.xlu0 0
  %6944 = vperm.xlu0 %6943, %v225
  %v6945 = vpop.permute.xlu0 %6944
  %6948 = vset.pattern.permute.xlu0 0
  %6949 = vperm.xlu0 %6948, %v226
  %v6950 = vpop.permute.xlu0 %6949
  %v6952 = vmul.f32 %v6744, %v6850
  %v6953 = vmul.f32 %v6749, %v6855
  %v6954 = vmul.f32 %v6754, %v6860
  %v6955 = vmul.f32 %v6759, %v6865
  %v6956 = vmul.f32 %v6764, %v6870
  %v6957 = vmul.f32 %v6769, %v6875
  %v6958 = vmul.f32 %v6774, %v6880
  %v6959 = vmul.f32 %v6779, %v6885
  %v6960 = vmul.f32 %v6784, %v6890
  %v6961 = vmul.f32 %v6789, %v6895
  %v6962 = vmul.f32 %v6794, %v6900
  %v6963 = vmul.f32 %v6799, %v6905
  %v6964 = vmul.f32 %v6804, %v6910
  %v6965 = vmul.f32 %v6809, %v6915
  %v6966 = vmul.f32 %v6814, %v6920
  %v6967 = vmul.f32 %v6819, %v6925
  %v6968 = vmul.f32 %v6824, %v6930
  %v6969 = vmul.f32 %v6829, %v6935
  %v6970 = vmul.f32 %v6834, %v6940
  %v6971 = vmul.f32 %v6839, %v6945
  %v6972 = vmul.f32 %v6844, %v6950
  %v6973 = vadd.f32 %v6952, %v6953
  %v6974 = vadd.f32 %v6973, %v6954
  %v6975 = vadd.f32 %v6974, %v6955
  %v6976 = vadd.f32 %v6975, %v6956
  %v6977 = vadd.f32 %v6976, %v6957
  %v6978 = vadd.f32 %v6977, %v6958
  %v6979 = vadd.f32 %v6978, %v6959
  %v6980 = vadd.f32 %v6979, %v6960
  %v6981 = vadd.f32 %v6980, %v6961
  %v6982 = vadd.f32 %v6981, %v6962
  %v6983 = vadd.f32 %v6982, %v6963
  %v6984 = vadd.f32 %v6983, %v6964
  %v6985 = vadd.f32 %v6984, %v6965
  %v6986 = vadd.f32 %v6985, %v6966
  %v6987 = vadd.f32 %v6986, %v6967
  %v6988 = vadd.f32 %v6987, %v6968
  %v6989 = vadd.f32 %v6988, %v6969
  %v6990 = vadd.f32 %v6989, %v6970
  %v6991 = vadd.f32 %v6990, %v6971
  %vm6992 = vcmask 1041408
  %v6993 = vsel %vm6992, %v6972, 0.0
  %v6994 = vadd.f32 %v6991, %v6993
  %v6995 = vrot.slane %v6994, 4
  %v6996 = vadd.f32 %v6994, %v6995
  %v6997 = vrot.slane %v6996, 2
  %v6998 = vadd.f32 %v6996, %v6997
  %v6999 = vrot.slane %v6998, 1
  %v7000 = vadd.f32 %v6998, %v6999
  %v7001 = vmul.f32 %v7000, 0.010204081
  %v7002 = vsub.f32 %v6744, %v7001
  %v7003 = vsub.f32 %v6749, %v7001
  %v7004 = vsub.f32 %v6754, %v7001
  %v7005 = vsub.f32 %v6759, %v7001
  %v7006 = vsub.f32 %v6764, %v7001
  %v7007 = vsub.f32 %v6769, %v7001
  %v7008 = vsub.f32 %v6774, %v7001
  %v7009 = vsub.f32 %v6779, %v7001
  %v7010 = vsub.f32 %v6784, %v7001
  %v7011 = vsub.f32 %v6789, %v7001
  %v7012 = vsub.f32 %v6794, %v7001
  %v7013 = vsub.f32 %v6799, %v7001
  %v7014 = vsub.f32 %v6804, %v7001
  %v7015 = vsub.f32 %v6809, %v7001
  %v7016 = vsub.f32 %v6814, %v7001
  %v7017 = vsub.f32 %v6819, %v7001
  %v7018 = vsub.f32 %v6824, %v7001
  %v7019 = vsub.f32 %v6829, %v7001
  %v7020 = vsub.f32 %v6834, %v7001
  %v7021 = vsub.f32 %v6839, %v7001
  %v7022 = vsub.f32 %v6844, %v7001
  %v7023 = vmul.f32 %v7002, %v6850
  %v7024 = vmul.f32 %v7003, %v6855
  %v7025 = vmul.f32 %v7004, %v6860
  %v7026 = vmul.f32 %v7005, %v6865
  %v7027 = vmul.f32 %v7006, %v6870
  %v7028 = vmul.f32 %v7007, %v6875
  %v7029 = vmul.f32 %v7008, %v6880
  %v7030 = vmul.f32 %v7009, %v6885
  %v7031 = vmul.f32 %v7010, %v6890
  %v7032 = vmul.f32 %v7011, %v6895
  %v7033 = vmul.f32 %v7012, %v6900
  %v7034 = vmul.f32 %v7013, %v6905
  %v7035 = vmul.f32 %v7014, %v6910
  %v7036 = vmul.f32 %v7015, %v6915
  %v7037 = vmul.f32 %v7016, %v6920
  %v7038 = vmul.f32 %v7017, %v6925
  %v7039 = vmul.f32 %v7018, %v6930
  %v7040 = vmul.f32 %v7019, %v6935
  %v7041 = vmul.f32 %v7020, %v6940
  %v7042 = vmul.f32 %v7021, %v6945
  %v7043 = vmul.f32 %v7022, %v6950
  %v7044 = vmul.f32 %v7023, %v7023
  %v7045 = vmul.f32 %v7024, %v7024
  %v7046 = vmul.f32 %v7025, %v7025
  %v7047 = vmul.f32 %v7026, %v7026
  %v7048 = vmul.f32 %v7027, %v7027
  %v7049 = vmul.f32 %v7028, %v7028
  %v7050 = vmul.f32 %v7029, %v7029
  %v7051 = vmul.f32 %v7030, %v7030
  %v7052 = vmul.f32 %v7031, %v7031
  %v7053 = vmul.f32 %v7032, %v7032
  %v7054 = vmul.f32 %v7033, %v7033
  %v7055 = vmul.f32 %v7034, %v7034
  %v7056 = vmul.f32 %v7035, %v7035
  %v7057 = vmul.f32 %v7036, %v7036
  %v7058 = vmul.f32 %v7037, %v7037
  %v7059 = vmul.f32 %v7038, %v7038
  %v7060 = vmul.f32 %v7039, %v7039
  %v7061 = vmul.f32 %v7040, %v7040
  %v7062 = vmul.f32 %v7041, %v7041
  %v7063 = vmul.f32 %v7042, %v7042
  %v7064 = vmul.f32 %v7043, %v7043
  %v7065 = vadd.f32 %v7044, %v7045
  %v7066 = vadd.f32 %v7065, %v7046
  %v7067 = vadd.f32 %v7066, %v7047
  %v7068 = vadd.f32 %v7067, %v7048
  %v7069 = vadd.f32 %v7068, %v7049
  %v7070 = vadd.f32 %v7069, %v7050
  %v7071 = vadd.f32 %v7070, %v7051
  %v7072 = vadd.f32 %v7071, %v7052
  %v7073 = vadd.f32 %v7072, %v7053
  %v7074 = vadd.f32 %v7073, %v7054
  %v7075 = vadd.f32 %v7074, %v7055
  %v7076 = vadd.f32 %v7075, %v7056
  %v7077 = vadd.f32 %v7076, %v7057
  %v7078 = vadd.f32 %v7077, %v7058
  %v7079 = vadd.f32 %v7078, %v7059
  %v7080 = vadd.f32 %v7079, %v7060
  %v7081 = vadd.f32 %v7080, %v7061
  %v7082 = vadd.f32 %v7081, %v7062
  %v7083 = vadd.f32 %v7082, %v7063
  %v7084 = vsel %vm6992, %v7064, 0.0
  %v7085 = vadd.f32 %v7083, %v7084
  %v7086 = vrot.slane %v7085, 4
  %v7087 = vadd.f32 %v7085, %v7086
  %v7088 = vrot.slane %v7087, 2
  %v7089 = vadd.f32 %v7087, %v7088
  %v7090 = vrot.slane %v7089, 1
  %v7091 = vadd.f32 %v7089, %v7090
  %v7092 = vmul.f32 %v7091, 0.010204081
  %v7093 = vadd.f32 %v7092, 1e-05
  %v7094 = vrsqrt.pop %v7093
  %v7095 = vmul.f32 %v7002, %v7094
  %v7096 = vmul.f32 %v7003, %v7094
  %v7097 = vmul.f32 %v7004, %v7094
  %v7098 = vmul.f32 %v7005, %v7094
  %v7099 = vmul.f32 %v7006, %v7094
  %v7100 = vmul.f32 %v7007, %v7094
  %v7101 = vmul.f32 %v7008, %v7094
  %v7102 = vmul.f32 %v7009, %v7094
  %v7103 = vmul.f32 %v7010, %v7094
  %v7104 = vmul.f32 %v7011, %v7094
  %v7105 = vmul.f32 %v7012, %v7094
  %v7106 = vmul.f32 %v7013, %v7094
  %v7107 = vmul.f32 %v7014, %v7094
  %v7108 = vmul.f32 %v7015, %v7094
  %v7109 = vmul.f32 %v7016, %v7094
  %v7110 = vmul.f32 %v7017, %v7094
  %v7111 = vmul.f32 %v7018, %v7094
  %v7112 = vmul.f32 %v7019, %v7094
  %v7113 = vmul.f32 %v7020, %v7094
  %v7114 = vmul.f32 %v7021, %v7094
  %v7115 = vmul.f32 %v7022, %v7094
  %v7116 = vmax.f32 %v7095, 0.0
  %v7117 = vmax.f32 %v7096, 0.0
  %v7118 = vmax.f32 %v7097, 0.0
  %v7119 = vmax.f32 %v7098, 0.0
  %v7120 = vmax.f32 %v7099, 0.0
  %v7121 = vmax.f32 %v7100, 0.0
  %v7122 = vmax.f32 %v7101, 0.0
  %v7123 = vmax.f32 %v7102, 0.0
  %v7124 = vmax.f32 %v7103, 0.0
  %v7125 = vmax.f32 %v7104, 0.0
  %v7126 = vmax.f32 %v7105, 0.0
  %v7127 = vmax.f32 %v7106, 0.0
  %v7128 = vmax.f32 %v7107, 0.0
  %v7129 = vmax.f32 %v7108, 0.0
  %v7130 = vmax.f32 %v7109, 0.0
  %v7131 = vmax.f32 %v7110, 0.0
  %v7132 = vmax.f32 %v7111, 0.0
  %v7133 = vmax.f32 %v7112, 0.0
  %v7134 = vmax.f32 %v7113, 0.0
  %v7135 = vmax.f32 %v7114, 0.0
  %v7136 = vmax.f32 %v7115, 0.0
  %v7137 = vmul.f32 %v7116, %v6850
  %v7138 = vmul.f32 %v7117, %v6855
  %v7139 = vmul.f32 %v7118, %v6860
  %v7140 = vmul.f32 %v7119, %v6865
  %v7141 = vmul.f32 %v7120, %v6870
  %v7142 = vmul.f32 %v7121, %v6875
  %v7143 = vmul.f32 %v7122, %v6880
  %v7144 = vmul.f32 %v7123, %v6885
  %v7145 = vmul.f32 %v7124, %v6890
  %v7146 = vmul.f32 %v7125, %v6895
  %v7147 = vmul.f32 %v7126, %v6900
  %v7148 = vmul.f32 %v7127, %v6905
  %v7149 = vmul.f32 %v7128, %v6910
  %v7150 = vmul.f32 %v7129, %v6915
  %v7151 = vmul.f32 %v7130, %v6920
  %v7152 = vmul.f32 %v7131, %v6925
  %v7153 = vmul.f32 %v7132, %v6930
  %v7154 = vmul.f32 %v7133, %v6935
  %v7155 = vmul.f32 %v7134, %v6940
  %v7156 = vmul.f32 %v7135, %v6945
  %v7157 = vmul.f32 %v7136, %v6950
  %v7158 = vld [vmem:[%s9] sm:$0xff]
  %v7159 = vld [vmem:[%s9 + $0x8] sm:$0xff]
  %v7160 = vld [vmem:[%s9 + $0x10] sm:$0xff]
  %v7161 = vld [vmem:[%s9 + $0x18] sm:$0xff]
  %v7162 = vld [vmem:[%s9 + $0x20] sm:$0xff]
  %v7163 = vld [vmem:[%s9 + $0x28] sm:$0xff]
  %v7164 = vld [vmem:[%s9 + $0x30] sm:$0xff]
  %v7165 = vld [vmem:[%s9 + $0x38] sm:$0xff]
  %v7166 = vld [vmem:[%s9 + $0x40] sm:$0xff]
  %v7167 = vld [vmem:[%s9 + $0x48] sm:$0xff]
  %v7168 = vld [vmem:[%s9 + $0x50] sm:$0xff]
  %v7169 = vld [vmem:[%s9 + $0x58] sm:$0xff]
  %v7170 = vld [vmem:[%s9 + $0x60] sm:$0xff]
  %v7171 = vld [vmem:[%s9 + $0x68] sm:$0xff]
  %v7172 = vld [vmem:[%s9 + $0x70] sm:$0xff]
  %v7173 = vld [vmem:[%s9 + $0x78] sm:$0xff]
  %7174 = vmatprep.subr.mxu0 0.0
  %7175 = vmatpush1.msra.mxu0 %v7173
  %7176 = vmatprep.subr.mxu0 0.0
  %7177 = vmatpush1.msra.mxu0 %v7172
  %7178 = vmatprep.subr.mxu0 0.0
  %7179 = vmatpush1.msra.mxu0 %v7171
  %7180 = vmatprep.subr.mxu0 0.0
  %7181 = vmatpush1.msra.mxu0 %v7170
  %7182 = vmatprep.subr.mxu0 0.0
  %7183 = vmatpush1.msra.mxu0 %v7169
  %7184 = vmatprep.subr.mxu0 0.0
  %7185 = vmatpush1.msra.mxu0 %v7168
  %7186 = vmatprep.subr.mxu0 0.0
  %7187 = vmatpush1.msra.mxu0 %v7167
  %7188 = vmatprep.subr.mxu0 0.0
  %7189 = vmatpush1.msra.mxu0 %v7166
  %7190 = vmatprep.subr.mxu0 0.0
  %7191 = vmatpush1.msra.mxu0 %v7165
  %7192 = vmatprep.subr.mxu0 0.0
  %7193 = vmatpush1.msra.mxu0 %v7164
  %7194 = vmatprep.subr.mxu0 0.0
  %7195 = vmatpush1.msra.mxu0 %v7163
  %7196 = vmatprep.subr.mxu0 0.0
  %7197 = vmatpush1.msra.mxu0 %v7162
  %7198 = vmatprep.subr.mxu0 0.0
  %7199 = vmatpush1.msra.mxu0 %v7161
  %7200 = vmatprep.subr.mxu0 0.0
  %7201 = vmatpush1.msra.mxu0 %v7160
  %7202 = vmatprep.subr.mxu0 0.0
  %7203 = vmatpush1.msra.mxu0 %v7159
  %7204 = vmatprep.subr.mxu0 0.0
  %7205 = vmatpush1.msra.mxu0 %v7158
  %7206 = vmatprep.subr.mxu0 0.0
  %7207 = vmatpush2.msra.mxu0 0.0
  %7208 = vmatprep.subr.mxu0 0.0
  %7209 = vmatpush2.msra.mxu0 0.0
  %7210 = vmatprep.subr.mxu0 0.0
  %7211 = vmatpush2.msra.mxu0 0.0
  %7212 = vmatprep.subr.mxu0 0.0
  %7213 = vmatpush2.msra.mxu0 0.0
  %7214 = vmatprep.subr.mxu0 0.0
  %7215 = vmatpush2.msra.mxu0 0.0
  %7216 = vmatprep.subr.mxu0 0.0
  %7217 = vmatpush2.msra.mxu0 0.0
  %7218 = vmatprep.subr.mxu0 0.0
  %7219 = vmatpush2.msra.mxu0 0.0
  %7220 = vmatprep.subr.mxu0 0.0
  %7221 = vmatpush2.msra.mxu0 0.0
  %7222 = vmatprep.subr.mxu0 0.0
  %7223 = vmatpush2.msra.mxu0 0.0
  %7224 = vmatprep.subr.mxu0 0.0
  %7225 = vmatpush2.msra.mxu0 0.0
  %7226 = vmatprep.subr.mxu0 0.0
  %7227 = vmatpush2.msra.mxu0 0.0
  %7228 = vmatprep.subr.mxu0 0.0
  %7229 = vmatpush2.msra.mxu0 0.0
  %7230 = vmatprep.subr.mxu0 0.0
  %7231 = vmatpush2.msra.mxu0 0.0
  %7232 = vmatprep.subr.mxu0 0.0
  %7233 = vmatpush2.msra.mxu0 0.0
  %7234 = vmatprep.subr.mxu0 0.0
  %7235 = vmatpush2.msra.mxu0 0.0
  %7236 = vmatprep.subr.mxu0 0.0
  %7237 = vmatpush2.msra.mxu0 0.0
  %7238 = vmatprep.mubr.f32.mxu0 0.0
  %7239 = vmatmul.mubr.f32.gmra.mxu0 %v7137
  %v7240 = vpop.f32.mrf.mxu0
  %v7241 = vadd.f32 0.0, %v7240
  %v7242 = vpop.f32.mrf.mxu0
  %7243 = vmatprep.mubr.f32.mxu0 0.0
  %7244 = vmatmul.mubr.f32.gmra.mxu0 %v7138
  %v7245 = vpop.f32.mrf.mxu0
  %v7246 = vadd.f32 0.0, %v7245
  %v7247 = vpop.f32.mrf.mxu0
  %7248 = vmatprep.mubr.f32.mxu0 0.0
  %7249 = vmatmul.mubr.f32.gmra.mxu0 %v7139
  %v7250 = vpop.f32.mrf.mxu0
  %v7251 = vadd.f32 0.0, %v7250
  %v7252 = vpop.f32.mrf.mxu0
  %7253 = vmatprep.mubr.f32.mxu0 0.0
  %7254 = vmatmul.mubr.f32.gmra.mxu0 %v7140
  %v7255 = vpop.f32.mrf.mxu0
  %v7256 = vadd.f32 0.0, %v7255
  %v7257 = vpop.f32.mrf.mxu0
  %7258 = vmatprep.mubr.f32.mxu0 0.0
  %7259 = vmatmul.mubr.f32.gmra.mxu0 %v7141
  %v7260 = vpop.f32.mrf.mxu0
  %v7261 = vadd.f32 0.0, %v7260
  %v7262 = vpop.f32.mrf.mxu0
  %7263 = vmatprep.mubr.f32.mxu0 0.0
  %7264 = vmatmul.mubr.f32.gmra.mxu0 %v7142
  %v7265 = vpop.f32.mrf.mxu0
  %v7266 = vadd.f32 0.0, %v7265
  %v7267 = vpop.f32.mrf.mxu0
  %7268 = vmatprep.mubr.f32.mxu0 0.0
  %7269 = vmatmul.mubr.f32.gmra.mxu0 %v7143
  %v7270 = vpop.f32.mrf.mxu0
  %v7271 = vadd.f32 0.0, %v7270
  %v7272 = vpop.f32.mrf.mxu0
  %7273 = vmatprep.mubr.f32.mxu0 0.0
  %7274 = vmatmul.mubr.f32.gmra.mxu0 %v7144
  %v7275 = vpop.f32.mrf.mxu0
  %v7276 = vadd.f32 0.0, %v7275
  %v7277 = vpop.f32.mrf.mxu0
  %7278 = vmatprep.mubr.f32.mxu0 0.0
  %7279 = vmatmul.mubr.f32.gmra.mxu0 %v7145
  %v7280 = vpop.f32.mrf.mxu0
  %v7281 = vadd.f32 0.0, %v7280
  %v7282 = vpop.f32.mrf.mxu0
  %7283 = vmatprep.mubr.f32.mxu0 0.0
  %7284 = vmatmul.mubr.f32.gmra.mxu0 %v7146
  %v7285 = vpop.f32.mrf.mxu0
  %v7286 = vadd.f32 0.0, %v7285
  %v7287 = vpop.f32.mrf.mxu0
  %7288 = vmatprep.mubr.f32.mxu0 0.0
  %7289 = vmatmul.mubr.f32.gmra.mxu0 %v7147
  %v7290 = vpop.f32.mrf.mxu0
  %v7291 = vadd.f32 0.0, %v7290
  %v7292 = vpop.f32.mrf.mxu0
  %7293 = vmatprep.mubr.f32.mxu0 0.0
  %7294 = vmatmul.mubr.f32.gmra.mxu0 %v7148
  %v7295 = vpop.f32.mrf.mxu0
  %v7296 = vadd.f32 0.0, %v7295
  %v7297 = vpop.f32.mrf.mxu0
  %7298 = vmatprep.mubr.f32.mxu0 0.0
  %7299 = vmatmul.mubr.f32.gmra.mxu0 %v7149
  %v7300 = vpop.f32.mrf.mxu0
  %v7301 = vadd.f32 0.0, %v7300
  %v7302 = vpop.f32.mrf.mxu0
  %7303 = vmatprep.mubr.f32.mxu0 0.0
  %7304 = vmatmul.mubr.f32.gmra.mxu0 %v7150
  %v7305 = vpop.f32.mrf.mxu0
  %v7306 = vadd.f32 0.0, %v7305
  %v7307 = vpop.f32.mrf.mxu0
  %7308 = vmatprep.mubr.f32.mxu0 0.0
  %7309 = vmatmul.mubr.f32.gmra.mxu0 %v7151
  %v7310 = vpop.f32.mrf.mxu0
  %v7311 = vadd.f32 0.0, %v7310
  %v7312 = vpop.f32.mrf.mxu0
  %7313 = vmatprep.mubr.f32.mxu0 0.0
  %7314 = vmatmul.mubr.f32.gmra.mxu0 %v7152
  %v7315 = vpop.f32.mrf.mxu0
  %v7316 = vadd.f32 0.0, %v7315
  %v7317 = vpop.f32.mrf.mxu0
  %7318 = vmatprep.mubr.f32.mxu0 0.0
  %7319 = vmatmul.mubr.f32.gmra.mxu0 %v7153
  %v7320 = vpop.f32.mrf.mxu0
  %v7321 = vadd.f32 0.0, %v7320
  %v7322 = vpop.f32.mrf.mxu0
  %7323 = vmatprep.mubr.f32.mxu0 0.0
  %7324 = vmatmul.mubr.f32.gmra.mxu0 %v7154
  %v7325 = vpop.f32.mrf.mxu0
  %v7326 = vadd.f32 0.0, %v7325
  %v7327 = vpop.f32.mrf.mxu0
  %7328 = vmatprep.mubr.f32.mxu0 0.0
  %7329 = vmatmul.mubr.f32.gmra.mxu0 %v7155
  %v7330 = vpop.f32.mrf.mxu0
  %v7331 = vadd.f32 0.0, %v7330
  %v7332 = vpop.f32.mrf.mxu0
  %7333 = vmatprep.mubr.f32.mxu0 0.0
  %7334 = vmatmul.mubr.f32.gmra.mxu0 %v7156
  %v7335 = vpop.f32.mrf.mxu0
  %v7336 = vadd.f32 0.0, %v7335
  %v7337 = vpop.f32.mrf.mxu0
  %7338 = vmatprep.mubr.f32.mxu0 0.0
  %7339 = vmatmul.mubr.f32.gmra.mxu0 %v7157
  %v7340 = vpop.f32.mrf.mxu0
  %v7341 = vadd.f32 0.0, %v7340
  %v7342 = vpop.f32.mrf.mxu0
  %7343 = vdwg.mxu0
  %v7344 = vmul.f32 %v7241, %v6850
  %v7345 = vmul.f32 %v7246, %v6855
  %v7346 = vmul.f32 %v7251, %v6860
  %v7347 = vmul.f32 %v7256, %v6865
  %v7348 = vmul.f32 %v7261, %v6870
  %v7349 = vmul.f32 %v7266, %v6875
  %v7350 = vmul.f32 %v7271, %v6880
  %v7351 = vmul.f32 %v7276, %v6885
  %v7352 = vmul.f32 %v7281, %v6890
  %v7353 = vmul.f32 %v7286, %v6895
  %v7354 = vmul.f32 %v7291, %v6900
  %v7355 = vmul.f32 %v7296, %v6905
  %v7356 = vmul.f32 %v7301, %v6910
  %v7357 = vmul.f32 %v7306, %v6915
  %v7358 = vmul.f32 %v7311, %v6920
  %v7359 = vmul.f32 %v7316, %v6925
  %v7360 = vmul.f32 %v7321, %v6930
  %v7361 = vmul.f32 %v7326, %v6935
  %v7362 = vmul.f32 %v7331, %v6940
  %v7363 = vmul.f32 %v7336, %v6945
  %v7364 = vmul.f32 %v7341, %v6950
  %v7365 = vadd.f32 %v7344, %v7345
  %v7366 = vadd.f32 %v7365, %v7346
  %v7367 = vadd.f32 %v7366, %v7347
  %v7368 = vadd.f32 %v7367, %v7348
  %v7369 = vadd.f32 %v7368, %v7349
  %v7370 = vadd.f32 %v7369, %v7350
  %v7371 = vadd.f32 %v7370, %v7351
  %v7372 = vadd.f32 %v7371, %v7352
  %v7373 = vadd.f32 %v7372, %v7353
  %v7374 = vadd.f32 %v7373, %v7354
  %v7375 = vadd.f32 %v7374, %v7355
  %v7376 = vadd.f32 %v7375, %v7356
  %v7377 = vadd.f32 %v7376, %v7357
  %v7378 = vadd.f32 %v7377, %v7358
  %v7379 = vadd.f32 %v7378, %v7359
  %v7380 = vadd.f32 %v7379, %v7360
  %v7381 = vadd.f32 %v7380, %v7361
  %v7382 = vadd.f32 %v7381, %v7362
  %v7383 = vadd.f32 %v7382, %v7363
  %v7384 = vsel %vm6992, %v7364, 0.0
  %v7385 = vadd.f32 %v7383, %v7384
  %v7386 = vrot.slane %v7385, 4
  %v7387 = vadd.f32 %v7385, %v7386
  %v7388 = vrot.slane %v7387, 2
  %v7389 = vadd.f32 %v7387, %v7388
  %v7390 = vrot.slane %v7389, 1
  %v7391 = vadd.f32 %v7389, %v7390
  %v7392 = vmul.f32 %v7391, 0.010204081
  %v7393 = vsub.f32 %v7241, %v7392
  %v7394 = vsub.f32 %v7246, %v7392
  %v7395 = vsub.f32 %v7251, %v7392
  %v7396 = vsub.f32 %v7256, %v7392
  %v7397 = vsub.f32 %v7261, %v7392
  %v7398 = vsub.f32 %v7266, %v7392
  %v7399 = vsub.f32 %v7271, %v7392
  %v7400 = vsub.f32 %v7276, %v7392
  %v7401 = vsub.f32 %v7281, %v7392
  %v7402 = vsub.f32 %v7286, %v7392
  %v7403 = vsub.f32 %v7291, %v7392
  %v7404 = vsub.f32 %v7296, %v7392
  %v7405 = vsub.f32 %v7301, %v7392
  %v7406 = vsub.f32 %v7306, %v7392
  %v7407 = vsub.f32 %v7311, %v7392
  %v7408 = vsub.f32 %v7316, %v7392
  %v7409 = vsub.f32 %v7321, %v7392
  %v7410 = vsub.f32 %v7326, %v7392
  %v7411 = vsub.f32 %v7331, %v7392
  %v7412 = vsub.f32 %v7336, %v7392
  %v7413 = vsub.f32 %v7341, %v7392
  %v7414 = vmul.f32 %v7393, %v6850
  %v7415 = vmul.f32 %v7394, %v6855
  %v7416 = vmul.f32 %v7395, %v6860
  %v7417 = vmul.f32 %v7396, %v6865
  %v7418 = vmul.f32 %v7397, %v6870
  %v7419 = vmul.f32 %v7398, %v6875
  %v7420 = vmul.f32 %v7399, %v6880
  %v7421 = vmul.f32 %v7400, %v6885
  %v7422 = vmul.f32 %v7401, %v6890
  %v7423 = vmul.f32 %v7402, %v6895
  %v7424 = vmul.f32 %v7403, %v6900
  %v7425 = vmul.f32 %v7404, %v6905
  %v7426 = vmul.f32 %v7405, %v6910
  %v7427 = vmul.f32 %v7406, %v6915
  %v7428 = vmul.f32 %v7407, %v6920
  %v7429 = vmul.f32 %v7408, %v6925
  %v7430 = vmul.f32 %v7409, %v6930
  %v7431 = vmul.f32 %v7410, %v6935
  %v7432 = vmul.f32 %v7411, %v6940
  %v7433 = vmul.f32 %v7412, %v6945
  %v7434 = vmul.f32 %v7413, %v6950
  %v7435 = vmul.f32 %v7414, %v7414
  %v7436 = vmul.f32 %v7415, %v7415
  %v7437 = vmul.f32 %v7416, %v7416
  %v7438 = vmul.f32 %v7417, %v7417
  %v7439 = vmul.f32 %v7418, %v7418
  %v7440 = vmul.f32 %v7419, %v7419
  %v7441 = vmul.f32 %v7420, %v7420
  %v7442 = vmul.f32 %v7421, %v7421
  %v7443 = vmul.f32 %v7422, %v7422
  %v7444 = vmul.f32 %v7423, %v7423
  %v7445 = vmul.f32 %v7424, %v7424
  %v7446 = vmul.f32 %v7425, %v7425
  %v7447 = vmul.f32 %v7426, %v7426
  %v7448 = vmul.f32 %v7427, %v7427
  %v7449 = vmul.f32 %v7428, %v7428
  %v7450 = vmul.f32 %v7429, %v7429
  %v7451 = vmul.f32 %v7430, %v7430
  %v7452 = vmul.f32 %v7431, %v7431
  %v7453 = vmul.f32 %v7432, %v7432
  %v7454 = vmul.f32 %v7433, %v7433
  %v7455 = vmul.f32 %v7434, %v7434
  %v7456 = vadd.f32 %v7435, %v7436
  %v7457 = vadd.f32 %v7456, %v7437
  %v7458 = vadd.f32 %v7457, %v7438
  %v7459 = vadd.f32 %v7458, %v7439
  %v7460 = vadd.f32 %v7459, %v7440
  %v7461 = vadd.f32 %v7460, %v7441
  %v7462 = vadd.f32 %v7461, %v7442
  %v7463 = vadd.f32 %v7462, %v7443
  %v7464 = vadd.f32 %v7463, %v7444
  %v7465 = vadd.f32 %v7464, %v7445
  %v7466 = vadd.f32 %v7465, %v7446
  %v7467 = vadd.f32 %v7466, %v7447
  %v7468 = vadd.f32 %v7467, %v7448
  %v7469 = vadd.f32 %v7468, %v7449
  %v7470 = vadd.f32 %v7469, %v7450
  %v7471 = vadd.f32 %v7470, %v7451
  %v7472 = vadd.f32 %v7471, %v7452
  %v7473 = vadd.f32 %v7472, %v7453
  %v7474 = vadd.f32 %v7473, %v7454
  %v7475 = vsel %vm6992, %v7455, 0.0
  %v7476 = vadd.f32 %v7474, %v7475
  %v7477 = vrot.slane %v7476, 4
  %v7478 = vadd.f32 %v7476, %v7477
  %v7479 = vrot.slane %v7478, 2
  %v7480 = vadd.f32 %v7478, %v7479
  %v7481 = vrot.slane %v7480, 1
  %v7482 = vadd.f32 %v7480, %v7481
  %v7483 = vmul.f32 %v7482, 0.010204081
  %v7484 = vadd.f32 %v7483, 1e-05
  %v7485 = vrsqrt.pop %v7484
  %v7486 = vmul.f32 %v7393, %v7485
  %v7487 = vmul.f32 %v7394, %v7485
  %v7488 = vmul.f32 %v7395, %v7485
  %v7489 = vmul.f32 %v7396, %v7485
  %v7490 = vmul.f32 %v7397, %v7485
  %v7491 = vmul.f32 %v7398, %v7485
  %v7492 = vmul.f32 %v7399, %v7485
  %v7493 = vmul.f32 %v7400, %v7485
  %v7494 = vmul.f32 %v7401, %v7485
  %v7495 = vmul.f32 %v7402, %v7485
  %v7496 = vmul.f32 %v7403, %v7485
  %v7497 = vmul.f32 %v7404, %v7485
  %v7498 = vmul.f32 %v7405, %v7485
  %v7499 = vmul.f32 %v7406, %v7485
  %v7500 = vmul.f32 %v7407, %v7485
  %v7501 = vmul.f32 %v7408, %v7485
  %v7502 = vmul.f32 %v7409, %v7485
  %v7503 = vmul.f32 %v7410, %v7485
  %v7504 = vmul.f32 %v7411, %v7485
  %v7505 = vmul.f32 %v7412, %v7485
  %v7506 = vmul.f32 %v7413, %v7485
  %v7507 = vmax.f32 %v7486, 0.0
  %v7508 = vmax.f32 %v7487, 0.0
  %v7509 = vmax.f32 %v7488, 0.0
  %v7510 = vmax.f32 %v7489, 0.0
  %v7511 = vmax.f32 %v7490, 0.0
  %v7512 = vmax.f32 %v7491, 0.0
  %v7513 = vmax.f32 %v7492, 0.0
  %v7514 = vmax.f32 %v7493, 0.0
  %v7515 = vmax.f32 %v7494, 0.0
  %v7516 = vmax.f32 %v7495, 0.0
  %v7517 = vmax.f32 %v7496, 0.0
  %v7518 = vmax.f32 %v7497, 0.0
  %v7519 = vmax.f32 %v7498, 0.0
  %v7520 = vmax.f32 %v7499, 0.0
  %v7521 = vmax.f32 %v7500, 0.0
  %v7522 = vmax.f32 %v7501, 0.0
  %v7523 = vmax.f32 %v7502, 0.0
  %v7524 = vmax.f32 %v7503, 0.0
  %v7525 = vmax.f32 %v7504, 0.0
  %v7526 = vmax.f32 %v7505, 0.0
  %v7527 = vmax.f32 %v7506, 0.0
  %v7528 = vmul.f32 %v7507, %v6850
  %v7529 = vmul.f32 %v7508, %v6855
  %v7530 = vmul.f32 %v7509, %v6860
  %v7531 = vmul.f32 %v7510, %v6865
  %v7532 = vmul.f32 %v7511, %v6870
  %v7533 = vmul.f32 %v7512, %v6875
  %v7534 = vmul.f32 %v7513, %v6880
  %v7535 = vmul.f32 %v7514, %v6885
  %v7536 = vmul.f32 %v7515, %v6890
  %v7537 = vmul.f32 %v7516, %v6895
  %v7538 = vmul.f32 %v7517, %v6900
  %v7539 = vmul.f32 %v7518, %v6905
  %v7540 = vmul.f32 %v7519, %v6910
  %v7541 = vmul.f32 %v7520, %v6915
  %v7542 = vmul.f32 %v7521, %v6920
  %v7543 = vmul.f32 %v7522, %v6925
  %v7544 = vmul.f32 %v7523, %v6930
  %v7545 = vmul.f32 %v7524, %v6935
  %v7546 = vmul.f32 %v7525, %v6940
  %v7547 = vmul.f32 %v7526, %v6945
  %v7548 = vmul.f32 %v7527, %v6950
  %7549 = vst [vmem:[#allocation3 + $0x10] sm:$0xff] %v7528
  %7550 = vst [vmem:[#allocation3 + $0x18] sm:$0xff] %v7529
  %7551 = vst [vmem:[#allocation3 + $0x20] sm:$0xff] %v7530
  %7552 = vst [vmem:[#allocation3 + $0x28] sm:$0xff] %v7531
  %7553 = vst [vmem:[#allocation3 + $0x30] sm:$0xff] %v7532
  %7554 = vst [vmem:[#allocation3 + $0x38] sm:$0xff] %v7533
  %7555 = vst [vmem:[#allocation3 + $0x40] sm:$0xff] %v7534
  %7556 = vst [vmem:[#allocation3 + $0x48] sm:$0xff] %v7535
  %7557 = vst [vmem:[#allocation3 + $0x50] sm:$0xff] %v7536
  %7558 = vst [vmem:[#allocation3 + $0x58] sm:$0xff] %v7537
  %7559 = vst [vmem:[#allocation3 + $0x60] sm:$0xff] %v7538
  %7560 = vst [vmem:[#allocation3 + $0x68] sm:$0xff] %v7539
  %7561 = vst [vmem:[#allocation3 + $0x70] sm:$0xff] %v7540
  %7562 = vst [vmem:[#allocation3 + $0x78] sm:$0xff] %v7541
  %7563 = vst [vmem:[#allocation3 + $0x80] sm:$0xff] %v7542
  %7564 = vst [vmem:[#allocation3 + $0x88] sm:$0xff] %v7543
  %7565 = vst [vmem:[#allocation3 + $0x90] sm:$0xff] %v7544
  %7566 = vst [vmem:[#allocation3 + $0x98] sm:$0xff] %v7545
  %7567 = vst [vmem:[#allocation3 + $0xa0] sm:$0xff] %v7546
  %7568 = vst [vmem:[#allocation3 + $0xa8] sm:$0xff] %v7547
  %7569 = vst [vmem:[#allocation3 + $0xb0] sm:$0x3] %v7548
  %v7570 = vld [vmem:[#allocation3 + $0x6] sm:$0xff]
  %v7571 = vld [vmem:[#allocation3 + $0xe] sm:$0xff]
  %v7572 = vld [vmem:[#allocation3 + $0x16] sm:$0xff]
  %v7573 = vld [vmem:[#allocation3 + $0x1e] sm:$0xff]
  %v7574 = vld [vmem:[#allocation3 + $0x26] sm:$0xff]
  %v7575 = vld [vmem:[#allocation3 + $0x2e] sm:$0xff]
  %v7576 = vld [vmem:[#allocation3 + $0x36] sm:$0xff]
  %v7577 = vld [vmem:[#allocation3 + $0x3e] sm:$0xff]
  %v7578 = vld [vmem:[#allocation3 + $0x46] sm:$0xff]
  %v7579 = vld [vmem:[#allocation3 + $0x4e] sm:$0xff]
  %v7580 = vld [vmem:[#allocation3 + $0x56] sm:$0xff]
  %v7581 = vld [vmem:[#allocation3 + $0x5e] sm:$0xff]
  %v7582 = vld [vmem:[#allocation3 + $0x66] sm:$0xff]
  %v7583 = vld [vmem:[#allocation3 + $0x6e] sm:$0xff]
  %v7584 = vld [vmem:[#allocation3 + $0x76] sm:$0xff]
  %v7585 = vld [vmem:[#allocation3 + $0x7e] sm:$0xff]
  %v7586 = vld [vmem:[#allocation3 + $0x86] sm:$0xff]
  %v7587 = vld [vmem:[#allocation3 + $0x8e] sm:$0xff]
  %v7588 = vld [vmem:[#allocation3 + $0x96] sm:$0xff]
  %v7589 = vld [vmem:[#allocation3 + $0x9e] sm:$0xff]
  %v7590 = vld [vmem:[#allocation3 + $0xa6] sm:$0x3]
  %v7591 = vld [vmem:[%s10] sm:$0x1]
  %v7592 = vlaneseq
  %v7593 = vshrl.u32 %v7592, 7
  %v7594 = vsub.s32 0, %v7593
  %v7595 = vrot.slane %v7591, %v7594
  %v7596 = vmul.f32 %v7570, %v7595
  %v7597 = vmul.f32 %v7571, %v7595
  %v7598 = vmul.f32 %v7572, %v7595
  %v7599 = vmul.f32 %v7573, %v7595
  %v7600 = vmul.f32 %v7574, %v7595
  %v7601 = vmul.f32 %v7575, %v7595
  %v7602 = vmul.f32 %v7576, %v7595
  %v7603 = vmul.f32 %v7577, %v7595
  %v7604 = vmul.f32 %v7578, %v7595
  %v7605 = vmul.f32 %v7579, %v7595
  %v7606 = vmul.f32 %v7580, %v7595
  %v7607 = vmul.f32 %v7581, %v7595
  %v7608 = vmul.f32 %v7582, %v7595
  %v7609 = vmul.f32 %v7583, %v7595
  %v7610 = vmul.f32 %v7584, %v7595
  %v7611 = vmul.f32 %v7585, %v7595
  %v7612 = vmul.f32 %v7586, %v7595
  %v7613 = vmul.f32 %v7587, %v7595
  %v7614 = vmul.f32 %v7588, %v7595
  %v7615 = vmul.f32 %v7589, %v7595
  %v7616 = vmul.f32 %v7590, %v7595
  %v7617 = vld [vmem:[#allocation3 + $0x7] sm:$0xff]
  %v7618 = vld [vmem:[#allocation3 + $0xf] sm:$0xff]
  %v7619 = vld [vmem:[#allocation3 + $0x17] sm:$0xff]
  %v7620 = vld [vmem:[#allocation3 + $0x1f] sm:$0xff]
  %v7621 = vld [vmem:[#allocation3 + $0x27] sm:$0xff]
  %v7622 = vld [vmem:[#allocation3 + $0x2f] sm:$0xff]
  %v7623 = vld [vmem:[#allocation3 + $0x37] sm:$0xff]
  %v7624 = vld [vmem:[#allocation3 + $0x3f] sm:$0xff]
  %v7625 = vld [vmem:[#allocation3 + $0x47] sm:$0xff]
  %v7626 = vld [vmem:[#allocation3 + $0x4f] sm:$0xff]
  %v7627 = vld [vmem:[#allocation3 + $0x57] sm:$0xff]
  %v7628 = vld [vmem:[#allocation3 + $0x5f] sm:$0xff]
  %v7629 = vld [vmem:[#allocation3 + $0x67] sm:$0xff]
  %v7630 = vld [vmem:[#allocation3 + $0x6f] sm:$0xff]
  %v7631 = vld [vmem:[#allocation3 + $0x77] sm:$0xff]
  %v7632 = vld [vmem:[#allocation3 + $0x7f] sm:$0xff]
  %v7633 = vld [vmem:[#allocation3 + $0x87] sm:$0xff]
  %v7634 = vld [vmem:[#allocation3 + $0x8f] sm:$0xff]
  %v7635 = vld [vmem:[#allocation3 + $0x97] sm:$0xff]
  %v7636 = vld [vmem:[#allocation3 + $0x9f] sm:$0xff]
  %v7637 = vld [vmem:[#allocation3 + $0xa7] sm:$0x3]
  %v7638 = vld [vmem:[%s10 + $0x1] sm:$0x1]
  %v7639 = vlaneseq
  %v7640 = vshrl.u32 %v7639, 7
  %v7641 = vsub.s32 0, %v7640
  %v7642 = vrot.slane %v7638, %v7641
  %v7643 = vmul.f32 %v7617, %v7642
  %v7644 = vmul.f32 %v7618, %v7642
  %v7645 = vmul.f32 %v7619, %v7642
  %v7646 = vmul.f32 %v7620, %v7642
  %v7647 = vmul.f32 %v7621, %v7642
  %v7648 = vmul.f32 %v7622, %v7642
  %v7649 = vmul.f32 %v7623, %v7642
  %v7650 = vmul.f32 %v7624, %v7642
  %v7651 = vmul.f32 %v7625, %v7642
  %v7652 = vmul.f32 %v7626, %v7642
  %v7653 = vmul.f32 %v7627, %v7642
  %v7654 = vmul.f32 %v7628, %v7642
  %v7655 = vmul.f32 %v7629, %v7642
  %v7656 = vmul.f32 %v7630, %v7642
  %v7657 = vmul.f32 %v7631, %v7642
  %v7658 = vmul.f32 %v7632, %v7642
  %v7659 = vmul.f32 %v7633, %v7642
  %v7660 = vmul.f32 %v7634, %v7642
  %v7661 = vmul.f32 %v7635, %v7642
  %v7662 = vmul.f32 %v7636, %v7642
  %v7663 = vmul.f32 %v7637, %v7642
  %v7664 = vadd.f32 %v7596, %v7643
  %v7665 = vadd.f32 %v7597, %v7644
  %v7666 = vadd.f32 %v7598, %v7645
  %v7667 = vadd.f32 %v7599, %v7646
  %v7668 = vadd.f32 %v7600, %v7647
  %v7669 = vadd.f32 %v7601, %v7648
  %v7670 = vadd.f32 %v7602, %v7649
  %v7671 = vadd.f32 %v7603, %v7650
  %v7672 = vadd.f32 %v7604, %v7651
  %v7673 = vadd.f32 %v7605, %v7652
  %v7674 = vadd.f32 %v7606, %v7653
  %v7675 = vadd.f32 %v7607, %v7654
  %v7676 = vadd.f32 %v7608, %v7655
  %v7677 = vadd.f32 %v7609, %v7656
  %v7678 = vadd.f32 %v7610, %v7657
  %v7679 = vadd.f32 %v7611, %v7658
  %v7680 = vadd.f32 %v7612, %v7659
  %v7681 = vadd.f32 %v7613, %v7660
  %v7682 = vadd.f32 %v7614, %v7661
  %v7683 = vadd.f32 %v7615, %v7662
  %v7684 = vadd.f32 %v7616, %v7663
  %v7685 = vld [vmem:[#allocation3 + $0x8] sm:$0xff]
  %v7686 = vld [vmem:[#allocation3 + $0x10] sm:$0xff]
  %v7687 = vld [vmem:[#allocation3 + $0x18] sm:$0xff]
  %v7688 = vld [vmem:[#allocation3 + $0x20] sm:$0xff]
  %v7689 = vld [vmem:[#allocation3 + $0x28] sm:$0xff]
  %v7690 = vld [vmem:[#allocation3 + $0x30] sm:$0xff]
  %v7691 = vld [vmem:[#allocation3 + $0x38] sm:$0xff]
  %v7692 = vld [vmem:[#allocation3 + $0x40] sm:$0xff]
  %v7693 = vld [vmem:[#allocation3 + $0x48] sm:$0xff]
  %v7694 = vld [vmem:[#allocation3 + $0x50] sm:$0xff]
  %v7695 = vld [vmem:[#allocation3 + $0x58] sm:$0xff]
  %v7696 = vld [vmem:[#allocation3 + $0x60] sm:$0xff]
  %v7697 = vld [vmem:[#allocation3 + $0x68] sm:$0xff]
  %v7698 = vld [vmem:[#allocation3 + $0x70] sm:$0xff]
  %v7699 = vld [vmem:[#allocation3 + $0x78] sm:$0xff]
  %v7700 = vld [vmem:[#allocation3 + $0x80] sm:$0xff]
  %v7701 = vld [vmem:[#allocation3 + $0x88] sm:$0xff]
  %v7702 = vld [vmem:[#allocation3 + $0x90] sm:$0xff]
  %v7703 = vld [vmem:[#allocation3 + $0x98] sm:$0xff]
  %v7704 = vld [vmem:[#allocation3 + $0xa0] sm:$0xff]
  %v7705 = vld [vmem:[#allocation3 + $0xa8] sm:$0x3]
  %v7706 = vld [vmem:[%s10 + $0x2] sm:$0x1]
  %v7707 = vlaneseq
  %v7708 = vshrl.u32 %v7707, 7
  %v7709 = vsub.s32 0, %v7708
  %v7710 = vrot.slane %v7706, %v7709
  %v7711 = vmul.f32 %v7685, %v7710
  %v7712 = vmul.f32 %v7686, %v7710
  %v7713 = vmul.f32 %v7687, %v7710
  %v7714 = vmul.f32 %v7688, %v7710
  %v7715 = vmul.f32 %v7689, %v7710
  %v7716 = vmul.f32 %v7690, %v7710
  %v7717 = vmul.f32 %v7691, %v7710
  %v7718 = vmul.f32 %v7692, %v7710
  %v7719 = vmul.f32 %v7693, %v7710
  %v7720 = vmul.f32 %v7694, %v7710
  %v7721 = vmul.f32 %v7695, %v7710
  %v7722 = vmul.f32 %v7696, %v7710
  %v7723 = vmul.f32 %v7697, %v7710
  %v7724 = vmul.f32 %v7698, %v7710
  %v7725 = vmul.f32 %v7699, %v7710
  %v7726 = vmul.f32 %v7700, %v7710
  %v7727 = vmul.f32 %v7701, %v7710
  %v7728 = vmul.f32 %v7702, %v7710
  %v7729 = vmul.f32 %v7703, %v7710
  %v7730 = vmul.f32 %v7704, %v7710
  %v7731 = vmul.f32 %v7705, %v7710
  %v7732 = vadd.f32 %v7664, %v7711
  %v7733 = vadd.f32 %v7665, %v7712
  %v7734 = vadd.f32 %v7666, %v7713
  %v7735 = vadd.f32 %v7667, %v7714
  %v7736 = vadd.f32 %v7668, %v7715
  %v7737 = vadd.f32 %v7669, %v7716
  %v7738 = vadd.f32 %v7670, %v7717
  %v7739 = vadd.f32 %v7671, %v7718
  %v7740 = vadd.f32 %v7672, %v7719
  %v7741 = vadd.f32 %v7673, %v7720
  %v7742 = vadd.f32 %v7674, %v7721
  %v7743 = vadd.f32 %v7675, %v7722
  %v7744 = vadd.f32 %v7676, %v7723
  %v7745 = vadd.f32 %v7677, %v7724
  %v7746 = vadd.f32 %v7678, %v7725
  %v7747 = vadd.f32 %v7679, %v7726
  %v7748 = vadd.f32 %v7680, %v7727
  %v7749 = vadd.f32 %v7681, %v7728
  %v7750 = vadd.f32 %v7682, %v7729
  %v7751 = vadd.f32 %v7683, %v7730
  %v7752 = vadd.f32 %v7684, %v7731
  %v7753 = vld [vmem:[#allocation3 + $0xa7] sm:$0xff]
  %v7754 = vld [vmem:[#allocation3 + $0xaf] sm:$0x3]
  %v7755 = vld [vmem:[%s10 + $0x3] sm:$0x1]
  %v7756 = vlaneseq
  %v7757 = vshrl.u32 %v7756, 7
  %v7758 = vsub.s32 0, %v7757
  %v7759 = vrot.slane %v7755, %v7758
  %v7760 = vmul.f32 %v7618, %v7759
  %v7761 = vmul.f32 %v7619, %v7759
  %v7762 = vmul.f32 %v7620, %v7759
  %v7763 = vmul.f32 %v7621, %v7759
  %v7764 = vmul.f32 %v7622, %v7759
  %v7765 = vmul.f32 %v7623, %v7759
  %v7766 = vmul.f32 %v7624, %v7759
  %v7767 = vmul.f32 %v7625, %v7759
  %v7768 = vmul.f32 %v7626, %v7759
  %v7769 = vmul.f32 %v7627, %v7759
  %v7770 = vmul.f32 %v7628, %v7759
  %v7771 = vmul.f32 %v7629, %v7759
  %v7772 = vmul.f32 %v7630, %v7759
  %v7773 = vmul.f32 %v7631, %v7759
  %v7774 = vmul.f32 %v7632, %v7759
  %v7775 = vmul.f32 %v7633, %v7759
  %v7776 = vmul.f32 %v7634, %v7759
  %v7777 = vmul.f32 %v7635, %v7759
  %v7778 = vmul.f32 %v7636, %v7759
  %v7779 = vmul.f32 %v7753, %v7759
  %v7780 = vmul.f32 %v7754, %v7759
  %v7781 = vadd.f32 %v7732, %v7760
  %v7782 = vadd.f32 %v7733, %v7761
  %v7783 = vadd.f32 %v7734, %v7762
  %v7784 = vadd.f32 %v7735, %v7763
  %v7785 = vadd.f32 %v7736, %v7764
  %v7786 = vadd.f32 %v7737, %v7765
  %v7787 = vadd.f32 %v7738, %v7766
  %v7788 = vadd.f32 %v7739, %v7767
  %v7789 = vadd.f32 %v7740, %v7768
  %v7790 = vadd.f32 %v7741, %v7769
  %v7791 = vadd.f32 %v7742, %v7770
  %v7792 = vadd.f32 %v7743, %v7771
  %v7793 = vadd.f32 %v7744, %v7772
  %v7794 = vadd.f32 %v7745, %v7773
  %v7795 = vadd.f32 %v7746, %v7774
  %v7796 = vadd.f32 %v7747, %v7775
  %v7797 = vadd.f32 %v7748, %v7776
  %v7798 = vadd.f32 %v7749, %v7777
  %v7799 = vadd.f32 %v7750, %v7778
  %v7800 = vadd.f32 %v7751, %v7779
  %v7801 = vadd.f32 %v7752, %v7780
  %v7802 = vld [vmem:[#allocation3 + $0xa8] sm:$0xff]
  %v7803 = vld [vmem:[#allocation3 + $0xb0] sm:$0x3]
  %v7804 = vld [vmem:[%s10 + $0x4] sm:$0x1]
  %v7805 = vlaneseq
  %v7806 = vshrl.u32 %v7805, 7
  %v7807 = vsub.s32 0, %v7806
  %v7808 = vrot.slane %v7804, %v7807
  %v7809 = vmul.f32 %v7686, %v7808
  %v7810 = vmul.f32 %v7687, %v7808
  %v7811 = vmul.f32 %v7688, %v7808
  %v7812 = vmul.f32 %v7689, %v7808
  %v7813 = vmul.f32 %v7690, %v7808
  %v7814 = vmul.f32 %v7691, %v7808
  %v7815 = vmul.f32 %v7692, %v7808
  %v7816 = vmul.f32 %v7693, %v7808
  %v7817 = vmul.f32 %v7694, %v7808
  %v7818 = vmul.f32 %v7695, %v7808
  %v7819 = vmul.f32 %v7696, %v7808
  %v7820 = vmul.f32 %v7697, %v7808
  %v7821 = vmul.f32 %v7698, %v7808
  %v7822 = vmul.f32 %v7699, %v7808
  %v7823 = vmul.f32 %v7700, %v7808
  %v7824 = vmul.f32 %v7701, %v7808
  %v7825 = vmul.f32 %v7702, %v7808
  %v7826 = vmul.f32 %v7703, %v7808
  %v7827 = vmul.f32 %v7704, %v7808
  %v7828 = vmul.f32 %v7802, %v7808
  %v7829 = vmul.f32 %v7803, %v7808
  %v7830 = vadd.f32 %v7781, %v7809
  %v7831 = vadd.f32 %v7782, %v7810
  %v7832 = vadd.f32 %v7783, %v7811
  %v7833 = vadd.f32 %v7784, %v7812
  %v7834 = vadd.f32 %v7785, %v7813
  %v7835 = vadd.f32 %v7786, %v7814
  %v7836 = vadd.f32 %v7787, %v7815
  %v7837 = vadd.f32 %v7788, %v7816
  %v7838 = vadd.f32 %v7789, %v7817
  %v7839 = vadd.f32 %v7790, %v7818
  %v7840 = vadd.f32 %v7791, %v7819
  %v7841 = vadd.f32 %v7792, %v7820
  %v7842 = vadd.f32 %v7793, %v7821
  %v7843 = vadd.f32 %v7794, %v7822
  %v7844 = vadd.f32 %v7795, %v7823
  %v7845 = vadd.f32 %v7796, %v7824
  %v7846 = vadd.f32 %v7797, %v7825
  %v7847 = vadd.f32 %v7798, %v7826
  %v7848 = vadd.f32 %v7799, %v7827
  %v7849 = vadd.f32 %v7800, %v7828
  %v7850 = vadd.f32 %v7801, %v7829
  %v7851 = vld [vmem:[#allocation3 + $0x11] sm:$0xff]
  %v7852 = vld [vmem:[#allocation3 + $0x19] sm:$0xff]
  %v7853 = vld [vmem:[#allocation3 + $0x21] sm:$0xff]
  %v7854 = vld [vmem:[#allocation3 + $0x29] sm:$0xff]
  %v7855 = vld [vmem:[#allocation3 + $0x31] sm:$0xff]
  %v7856 = vld [vmem:[#allocation3 + $0x39] sm:$0xff]
  %v7857 = vld [vmem:[#allocation3 + $0x41] sm:$0xff]
  %v7858 = vld [vmem:[#allocation3 + $0x49] sm:$0xff]
  %v7859 = vld [vmem:[#allocation3 + $0x51] sm:$0xff]
  %v7860 = vld [vmem:[#allocation3 + $0x59] sm:$0xff]
  %v7861 = vld [vmem:[#allocation3 + $0x61] sm:$0xff]
  %v7862 = vld [vmem:[#allocation3 + $0x69] sm:$0xff]
  %v7863 = vld [vmem:[#allocation3 + $0x71] sm:$0xff]
  %v7864 = vld [vmem:[#allocation3 + $0x79] sm:$0xff]
  %v7865 = vld [vmem:[#allocation3 + $0x81] sm:$0xff]
  %v7866 = vld [vmem:[#allocation3 + $0x89] sm:$0xff]
  %v7867 = vld [vmem:[#allocation3 + $0x91] sm:$0xff]
  %v7868 = vld [vmem:[#allocation3 + $0x99] sm:$0xff]
  %v7869 = vld [vmem:[#allocation3 + $0xa1] sm:$0xff]
  %v7870 = vld [vmem:[#allocation3 + $0xa9] sm:$0xff]
  %v7871 = vld [vmem:[#allocation3 + $0xb1] sm:$0x3]
  %v7872 = vld [vmem:[%s10 + $0x5] sm:$0x1]
  %v7873 = vlaneseq
  %v7874 = vshrl.u32 %v7873, 7
  %v7875 = vsub.s32 0, %v7874
  %v7876 = vrot.slane %v7872, %v7875
  %v7877 = vmul.f32 %v7851, %v7876
  %v7878 = vmul.f32 %v7852, %v7876
  %v7879 = vmul.f32 %v7853, %v7876
  %v7880 = vmul.f32 %v7854, %v7876
  %v7881 = vmul.f32 %v7855, %v7876
  %v7882 = vmul.f32 %v7856, %v7876
  %v7883 = vmul.f32 %v7857, %v7876
  %v7884 = vmul.f32 %v7858, %v7876
  %v7885 = vmul.f32 %v7859, %v7876
  %v7886 = vmul.f32 %v7860, %v7876
  %v7887 = vmul.f32 %v7861, %v7876
  %v7888 = vmul.f32 %v7862, %v7876
  %v7889 = vmul.f32 %v7863, %v7876
  %v7890 = vmul.f32 %v7864, %v7876
  %v7891 = vmul.f32 %v7865, %v7876
  %v7892 = vmul.f32 %v7866, %v7876
  %v7893 = vmul.f32 %v7867, %v7876
  %v7894 = vmul.f32 %v7868, %v7876
  %v7895 = vmul.f32 %v7869, %v7876
  %v7896 = vmul.f32 %v7870, %v7876
  %v7897 = vmul.f32 %v7871, %v7876
  %v7898 = vadd.f32 %v7830, %v7877
  %v7899 = vadd.f32 %v7831, %v7878
  %v7900 = vadd.f32 %v7832, %v7879
  %v7901 = vadd.f32 %v7833, %v7880
  %v7902 = vadd.f32 %v7834, %v7881
  %v7903 = vadd.f32 %v7835, %v7882
  %v7904 = vadd.f32 %v7836, %v7883
  %v7905 = vadd.f32 %v7837, %v7884
  %v7906 = vadd.f32 %v7838, %v7885
  %v7907 = vadd.f32 %v7839, %v7886
  %v7908 = vadd.f32 %v7840, %v7887
  %v7909 = vadd.f32 %v7841, %v7888
  %v7910 = vadd.f32 %v7842, %v7889
  %v7911 = vadd.f32 %v7843, %v7890
  %v7912 = vadd.f32 %v7844, %v7891
  %v7913 = vadd.f32 %v7845, %v7892
  %v7914 = vadd.f32 %v7846, %v7893
  %v7915 = vadd.f32 %v7847, %v7894
  %v7916 = vadd.f32 %v7848, %v7895
  %v7917 = vadd.f32 %v7849, %v7896
  %v7918 = vadd.f32 %v7850, %v7897
  %v7919 = vld [vmem:[#allocation3 + $0xb0] sm:$0xff]
  %v7920 = vld [vmem:[#allocation3 + $0xb8] sm:$0x3]
  %v7921 = vld [vmem:[%s10 + $0x6] sm:$0x1]
  %v7922 = vlaneseq
  %v7923 = vshrl.u32 %v7922, 7
  %v7924 = vsub.s32 0, %v7923
  %v7925 = vrot.slane %v7921, %v7924
  %v7926 = vmul.f32 %v7687, %v7925
  %v7927 = vmul.f32 %v7688, %v7925
  %v7928 = vmul.f32 %v7689, %v7925
  %v7929 = vmul.f32 %v7690, %v7925
  %v7930 = vmul.f32 %v7691, %v7925
  %v7931 = vmul.f32 %v7692, %v7925
  %v7932 = vmul.f32 %v7693, %v7925
  %v7933 = vmul.f32 %v7694, %v7925
  %v7934 = vmul.f32 %v7695, %v7925
  %v7935 = vmul.f32 %v7696, %v7925
  %v7936 = vmul.f32 %v7697, %v7925
  %v7937 = vmul.f32 %v7698, %v7925
  %v7938 = vmul.f32 %v7699, %v7925
  %v7939 = vmul.f32 %v7700, %v7925
  %v7940 = vmul.f32 %v7701, %v7925
  %v7941 = vmul.f32 %v7702, %v7925
  %v7942 = vmul.f32 %v7703, %v7925
  %v7943 = vmul.f32 %v7704, %v7925
  %v7944 = vmul.f32 %v7802, %v7925
  %v7945 = vmul.f32 %v7919, %v7925
  %v7946 = vmul.f32 %v7920, %v7925
  %v7947 = vadd.f32 %v7898, %v7926
  %v7948 = vadd.f32 %v7899, %v7927
  %v7949 = vadd.f32 %v7900, %v7928
  %v7950 = vadd.f32 %v7901, %v7929
  %v7951 = vadd.f32 %v7902, %v7930
  %v7952 = vadd.f32 %v7903, %v7931
  %v7953 = vadd.f32 %v7904, %v7932
  %v7954 = vadd.f32 %v7905, %v7933
  %v7955 = vadd.f32 %v7906, %v7934
  %v7956 = vadd.f32 %v7907, %v7935
  %v7957 = vadd.f32 %v7908, %v7936
  %v7958 = vadd.f32 %v7909, %v7937
  %v7959 = vadd.f32 %v7910, %v7938
  %v7960 = vadd.f32 %v7911, %v7939
  %v7961 = vadd.f32 %v7912, %v7940
  %v7962 = vadd.f32 %v7913, %v7941
  %v7963 = vadd.f32 %v7914, %v7942
  %v7964 = vadd.f32 %v7915, %v7943
  %v7965 = vadd.f32 %v7916, %v7944
  %v7966 = vadd.f32 %v7917, %v7945
  %v7967 = vadd.f32 %v7918, %v7946
  %v7968 = vld [vmem:[#allocation3 + $0xb1] sm:$0xff]
  %v7969 = vld [vmem:[#allocation3 + $0xb9] sm:$0x3]
  %v7970 = vld [vmem:[%s10 + $0x7] sm:$0x1]
  %v7971 = vlaneseq
  %v7972 = vshrl.u32 %v7971, 7
  %v7973 = vsub.s32 0, %v7972
  %v7974 = vrot.slane %v7970, %v7973
  %v7975 = vmul.f32 %v7852, %v7974
  %v7976 = vmul.f32 %v7853, %v7974
  %v7977 = vmul.f32 %v7854, %v7974
  %v7978 = vmul.f32 %v7855, %v7974
  %v7979 = vmul.f32 %v7856, %v7974
  %v7980 = vmul.f32 %v7857, %v7974
  %v7981 = vmul.f32 %v7858, %v7974
  %v7982 = vmul.f32 %v7859, %v7974
  %v7983 = vmul.f32 %v7860, %v7974
  %v7984 = vmul.f32 %v7861, %v7974
  %v7985 = vmul.f32 %v7862, %v7974
  %v7986 = vmul.f32 %v7863, %v7974
  %v7987 = vmul.f32 %v7864, %v7974
  %v7988 = vmul.f32 %v7865, %v7974
  %v7989 = vmul.f32 %v7866, %v7974
  %v7990 = vmul.f32 %v7867, %v7974
  %v7991 = vmul.f32 %v7868, %v7974
  %v7992 = vmul.f32 %v7869, %v7974
  %v7993 = vmul.f32 %v7870, %v7974
  %v7994 = vmul.f32 %v7968, %v7974
  %v7995 = vmul.f32 %v7969, %v7974
  %v7996 = vadd.f32 %v7947, %v7975
  %v7997 = vadd.f32 %v7948, %v7976
  %v7998 = vadd.f32 %v7949, %v7977
  %v7999 = vadd.f32 %v7950, %v7978
  %v8000 = vadd.f32 %v7951, %v7979
  %v8001 = vadd.f32 %v7952, %v7980
  %v8002 = vadd.f32 %v7953, %v7981
  %v8003 = vadd.f32 %v7954, %v7982
  %v8004 = vadd.f32 %v7955, %v7983
  %v8005 = vadd.f32 %v7956, %v7984
  %v8006 = vadd.f32 %v7957, %v7985
  %v8007 = vadd.f32 %v7958, %v7986
  %v8008 = vadd.f32 %v7959, %v7987
  %v8009 = vadd.f32 %v7960, %v7988
  %v8010 = vadd.f32 %v7961, %v7989
  %v8011 = vadd.f32 %v7962, %v7990
  %v8012 = vadd.f32 %v7963, %v7991
  %v8013 = vadd.f32 %v7964, %v7992
  %v8014 = vadd.f32 %v7965, %v7993
  %v8015 = vadd.f32 %v7966, %v7994
  %v8016 = vadd.f32 %v7967, %v7995
  %v8017 = vld [vmem:[#allocation3 + $0x1a] sm:$0xff]
  %v8018 = vld [vmem:[#allocation3 + $0x22] sm:$0xff]
  %v8019 = vld [vmem:[#allocation3 + $0x2a] sm:$0xff]
  %v8020 = vld [vmem:[#allocation3 + $0x32] sm:$0xff]
  %v8021 = vld [vmem:[#allocation3 + $0x3a] sm:$0xff]
  %v8022 = vld [vmem:[#allocation3 + $0x42] sm:$0xff]
  %v8023 = vld [vmem:[#allocation3 + $0x4a] sm:$0xff]
  %v8024 = vld [vmem:[#allocation3 + $0x52] sm:$0xff]
  %v8025 = vld [vmem:[#allocation3 + $0x5a] sm:$0xff]
  %v8026 = vld [vmem:[#allocation3 + $0x62] sm:$0xff]
  %v8027 = vld [vmem:[#allocation3 + $0x6a] sm:$0xff]
  %v8028 = vld [vmem:[#allocation3 + $0x72] sm:$0xff]
  %v8029 = vld [vmem:[#allocation3 + $0x7a] sm:$0xff]
  %v8030 = vld [vmem:[#allocation3 + $0x82] sm:$0xff]
  %v8031 = vld [vmem:[#allocation3 + $0x8a] sm:$0xff]
  %v8032 = vld [vmem:[#allocation3 + $0x92] sm:$0xff]
  %v8033 = vld [vmem:[#allocation3 + $0x9a] sm:$0xff]
  %v8034 = vld [vmem:[#allocation3 + $0xa2] sm:$0xff]
  %v8035 = vld [vmem:[#allocation3 + $0xaa] sm:$0xff]
  %v8036 = vld [vmem:[#allocation3 + $0xb2] sm:$0xff]
  %v8037 = vld [vmem:[#allocation3 + $0xba] sm:$0x3]
  %v8038 = vld [vmem:[%s10 + $0x8] sm:$0x1]
  %v8039 = vlaneseq
  %v8040 = vshrl.u32 %v8039, 7
  %v8041 = vsub.s32 0, %v8040
  %v8042 = vrot.slane %v8038, %v8041
  %v8043 = vmul.f32 %v8017, %v8042
  %v8044 = vmul.f32 %v8018, %v8042
  %v8045 = vmul.f32 %v8019, %v8042
  %v8046 = vmul.f32 %v8020, %v8042
  %v8047 = vmul.f32 %v8021, %v8042
  %v8048 = vmul.f32 %v8022, %v8042
  %v8049 = vmul.f32 %v8023, %v8042
  %v8050 = vmul.f32 %v8024, %v8042
  %v8051 = vmul.f32 %v8025, %v8042
  %v8052 = vmul.f32 %v8026, %v8042
  %v8053 = vmul.f32 %v8027, %v8042
  %v8054 = vmul.f32 %v8028, %v8042
  %v8055 = vmul.f32 %v8029, %v8042
  %v8056 = vmul.f32 %v8030, %v8042
  %v8057 = vmul.f32 %v8031, %v8042
  %v8058 = vmul.f32 %v8032, %v8042
  %v8059 = vmul.f32 %v8033, %v8042
  %v8060 = vmul.f32 %v8034, %v8042
  %v8061 = vmul.f32 %v8035, %v8042
  %v8062 = vmul.f32 %v8036, %v8042
  %v8063 = vmul.f32 %v8037, %v8042
  %v8064 = vadd.f32 %v7996, %v8043
  %v8065 = vadd.f32 %v7997, %v8044
  %v8066 = vadd.f32 %v7998, %v8045
  %v8067 = vadd.f32 %v7999, %v8046
  %v8068 = vadd.f32 %v8000, %v8047
  %v8069 = vadd.f32 %v8001, %v8048
  %v8070 = vadd.f32 %v8002, %v8049
  %v8071 = vadd.f32 %v8003, %v8050
  %v8072 = vadd.f32 %v8004, %v8051
  %v8073 = vadd.f32 %v8005, %v8052
  %v8074 = vadd.f32 %v8006, %v8053
  %v8075 = vadd.f32 %v8007, %v8054
  %v8076 = vadd.f32 %v8008, %v8055
  %v8077 = vadd.f32 %v8009, %v8056
  %v8078 = vadd.f32 %v8010, %v8057
  %v8079 = vadd.f32 %v8011, %v8058
  %v8080 = vadd.f32 %v8012, %v8059
  %v8081 = vadd.f32 %v8013, %v8060
  %v8082 = vadd.f32 %v8014, %v8061
  %v8083 = vadd.f32 %v8015, %v8062
  %v8084 = vadd.f32 %v8016, %v8063
  %v8085 = vmul.f32 %v8064, %v6850
  %v8086 = vmul.f32 %v8065, %v6855
  %v8087 = vmul.f32 %v8066, %v6860
  %v8088 = vmul.f32 %v8067, %v6865
  %v8089 = vmul.f32 %v8068, %v6870
  %v8090 = vmul.f32 %v8069, %v6875
  %v8091 = vmul.f32 %v8070, %v6880
  %v8092 = vmul.f32 %v8071, %v6885
  %v8093 = vmul.f32 %v8072, %v6890
  %v8094 = vmul.f32 %v8073, %v6895
  %v8095 = vmul.f32 %v8074, %v6900
  %v8096 = vmul.f32 %v8075, %v6905
  %v8097 = vmul.f32 %v8076, %v6910
  %v8098 = vmul.f32 %v8077, %v6915
  %v8099 = vmul.f32 %v8078, %v6920
  %v8100 = vmul.f32 %v8079, %v6925
  %v8101 = vmul.f32 %v8080, %v6930
  %v8102 = vmul.f32 %v8081, %v6935
  %v8103 = vmul.f32 %v8082, %v6940
  %v8104 = vmul.f32 %v8083, %v6945
  %v8105 = vmul.f32 %v8084, %v6950
  %v8106 = vadd.f32 %v8085, %v8086
  %v8107 = vadd.f32 %v8106, %v8087
  %v8108 = vadd.f32 %v8107, %v8088
  %v8109 = vadd.f32 %v8108, %v8089
  %v8110 = vadd.f32 %v8109, %v8090
  %v8111 = vadd.f32 %v8110, %v8091
  %v8112 = vadd.f32 %v8111, %v8092
  %v8113 = vadd.f32 %v8112, %v8093
  %v8114 = vadd.f32 %v8113, %v8094
  %v8115 = vadd.f32 %v8114, %v8095
  %v8116 = vadd.f32 %v8115, %v8096
  %v8117 = vadd.f32 %v8116, %v8097
  %v8118 = vadd.f32 %v8117, %v8098
  %v8119 = vadd.f32 %v8118, %v8099
  %v8120 = vadd.f32 %v8119, %v8100
  %v8121 = vadd.f32 %v8120, %v8101
  %v8122 = vadd.f32 %v8121, %v8102
  %v8123 = vadd.f32 %v8122, %v8103
  %v8124 = vadd.f32 %v8123, %v8104
  %v8125 = vsel %vm6992, %v8105, 0.0
  %v8126 = vadd.f32 %v8124, %v8125
  %v8127 = vrot.slane %v8126, 4
  %v8128 = vadd.f32 %v8126, %v8127
  %v8129 = vrot.slane %v8128, 2
  %v8130 = vadd.f32 %v8128, %v8129
  %v8131 = vrot.slane %v8130, 1
  %v8132 = vadd.f32 %v8130, %v8131
  %v8133 = vmul.f32 %v8132, 0.010204081
  %v8134 = vsub.f32 %v8064, %v8133
  %v8135 = vsub.f32 %v8065, %v8133
  %v8136 = vsub.f32 %v8066, %v8133
  %v8137 = vsub.f32 %v8067, %v8133
  %v8138 = vsub.f32 %v8068, %v8133
  %v8139 = vsub.f32 %v8069, %v8133
  %v8140 = vsub.f32 %v8070, %v8133
  %v8141 = vsub.f32 %v8071, %v8133
  %v8142 = vsub.f32 %v8072, %v8133
  %v8143 = vsub.f32 %v8073, %v8133
  %v8144 = vsub.f32 %v8074, %v8133
  %v8145 = vsub.f32 %v8075, %v8133
  %v8146 = vsub.f32 %v8076, %v8133
  %v8147 = vsub.f32 %v8077, %v8133
  %v8148 = vsub.f32 %v8078, %v8133
  %v8149 = vsub.f32 %v8079, %v8133
  %v8150 = vsub.f32 %v8080, %v8133
  %v8151 = vsub.f32 %v8081, %v8133
  %v8152 = vsub.f32 %v8082, %v8133
  %v8153 = vsub.f32 %v8083, %v8133
  %v8154 = vsub.f32 %v8084, %v8133
  %v8155 = vmul.f32 %v8134, %v6850
  %v8156 = vmul.f32 %v8135, %v6855
  %v8157 = vmul.f32 %v8136, %v6860
  %v8158 = vmul.f32 %v8137, %v6865
  %v8159 = vmul.f32 %v8138, %v6870
  %v8160 = vmul.f32 %v8139, %v6875
  %v8161 = vmul.f32 %v8140, %v6880
  %v8162 = vmul.f32 %v8141, %v6885
  %v8163 = vmul.f32 %v8142, %v6890
  %v8164 = vmul.f32 %v8143, %v6895
  %v8165 = vmul.f32 %v8144, %v6900
  %v8166 = vmul.f32 %v8145, %v6905
  %v8167 = vmul.f32 %v8146, %v6910
  %v8168 = vmul.f32 %v8147, %v6915
  %v8169 = vmul.f32 %v8148, %v6920
  %v8170 = vmul.f32 %v8149, %v6925
  %v8171 = vmul.f32 %v8150, %v6930
  %v8172 = vmul.f32 %v8151, %v6935
  %v8173 = vmul.f32 %v8152, %v6940
  %v8174 = vmul.f32 %v8153, %v6945
  %v8175 = vmul.f32 %v8154, %v6950
  %v8176 = vmul.f32 %v8155, %v8155
  %v8177 = vmul.f32 %v8156, %v8156
  %v8178 = vmul.f32 %v8157, %v8157
  %v8179 = vmul.f32 %v8158, %v8158
  %v8180 = vmul.f32 %v8159, %v8159
  %v8181 = vmul.f32 %v8160, %v8160
  %v8182 = vmul.f32 %v8161, %v8161
  %v8183 = vmul.f32 %v8162, %v8162
  %v8184 = vmul.f32 %v8163, %v8163
  %v8185 = vmul.f32 %v8164, %v8164
  %v8186 = vmul.f32 %v8165, %v8165
  %v8187 = vmul.f32 %v8166, %v8166
  %v8188 = vmul.f32 %v8167, %v8167
  %v8189 = vmul.f32 %v8168, %v8168
  %v8190 = vmul.f32 %v8169, %v8169
  %v8191 = vmul.f32 %v8170, %v8170
  %v8192 = vmul.f32 %v8171, %v8171
  %v8193 = vmul.f32 %v8172, %v8172
  %v8194 = vmul.f32 %v8173, %v8173
  %v8195 = vmul.f32 %v8174, %v8174
  %v8196 = vmul.f32 %v8175, %v8175
  %v8197 = vadd.f32 %v8176, %v8177
  %v8198 = vadd.f32 %v8197, %v8178
  %v8199 = vadd.f32 %v8198, %v8179
  %v8200 = vadd.f32 %v8199, %v8180
  %v8201 = vadd.f32 %v8200, %v8181
  %v8202 = vadd.f32 %v8201, %v8182
  %v8203 = vadd.f32 %v8202, %v8183
  %v8204 = vadd.f32 %v8203, %v8184
  %v8205 = vadd.f32 %v8204, %v8185
  %v8206 = vadd.f32 %v8205, %v8186
  %v8207 = vadd.f32 %v8206, %v8187
  %v8208 = vadd.f32 %v8207, %v8188
  %v8209 = vadd.f32 %v8208, %v8189
  %v8210 = vadd.f32 %v8209, %v8190
  %v8211 = vadd.f32 %v8210, %v8191
  %v8212 = vadd.f32 %v8211, %v8192
  %v8213 = vadd.f32 %v8212, %v8193
  %v8214 = vadd.f32 %v8213, %v8194
  %v8215 = vadd.f32 %v8214, %v8195
  %v8216 = vsel %vm6992, %v8196, 0.0
  %v8217 = vadd.f32 %v8215, %v8216
  %v8218 = vrot.slane %v8217, 4
  %v8219 = vadd.f32 %v8217, %v8218
  %v8220 = vrot.slane %v8219, 2
  %v8221 = vadd.f32 %v8219, %v8220
  %v8222 = vrot.slane %v8221, 1
  %v8223 = vadd.f32 %v8221, %v8222
  %v8224 = vmul.f32 %v8223, 0.010204081
  %v8225 = vadd.f32 %v8224, 1e-05
  %v8226 = vrsqrt.pop %v8225
  %v8227 = vmul.f32 %v8134, %v8226
  %v8228 = vmul.f32 %v8135, %v8226
  %v8229 = vmul.f32 %v8136, %v8226
  %v8230 = vmul.f32 %v8137, %v8226
  %v8231 = vmul.f32 %v8138, %v8226
  %v8232 = vmul.f32 %v8139, %v8226
  %v8233 = vmul.f32 %v8140, %v8226
  %v8234 = vmul.f32 %v8141, %v8226
  %v8235 = vmul.f32 %v8142, %v8226
  %v8236 = vmul.f32 %v8143, %v8226
  %v8237 = vmul.f32 %v8144, %v8226
  %v8238 = vmul.f32 %v8145, %v8226
  %v8239 = vmul.f32 %v8146, %v8226
  %v8240 = vmul.f32 %v8147, %v8226
  %v8241 = vmul.f32 %v8148, %v8226
  %v8242 = vmul.f32 %v8149, %v8226
  %v8243 = vmul.f32 %v8150, %v8226
  %v8244 = vmul.f32 %v8151, %v8226
  %v8245 = vmul.f32 %v8152, %v8226
  %v8246 = vmul.f32 %v8153, %v8226
  %v8247 = vmul.f32 %v8154, %v8226
  %v8248 = vmax.f32 %v8227, 0.0
  %v8249 = vmax.f32 %v8228, 0.0
  %v8250 = vmax.f32 %v8229, 0.0
  %v8251 = vmax.f32 %v8230, 0.0
  %v8252 = vmax.f32 %v8231, 0.0
  %v8253 = vmax.f32 %v8232, 0.0
  %v8254 = vmax.f32 %v8233, 0.0
  %v8255 = vmax.f32 %v8234, 0.0
  %v8256 = vmax.f32 %v8235, 0.0
  %v8257 = vmax.f32 %v8236, 0.0
  %v8258 = vmax.f32 %v8237, 0.0
  %v8259 = vmax.f32 %v8238, 0.0
  %v8260 = vmax.f32 %v8239, 0.0
  %v8261 = vmax.f32 %v8240, 0.0
  %v8262 = vmax.f32 %v8241, 0.0
  %v8263 = vmax.f32 %v8242, 0.0
  %v8264 = vmax.f32 %v8243, 0.0
  %v8265 = vmax.f32 %v8244, 0.0
  %v8266 = vmax.f32 %v8245, 0.0
  %v8267 = vmax.f32 %v8246, 0.0
  %v8268 = vmax.f32 %v8247, 0.0
  %v8269 = vmul.f32 %v8248, %v6850
  %v8270 = vmul.f32 %v8249, %v6855
  %v8271 = vmul.f32 %v8250, %v6860
  %v8272 = vmul.f32 %v8251, %v6865
  %v8273 = vmul.f32 %v8252, %v6870
  %v8274 = vmul.f32 %v8253, %v6875
  %v8275 = vmul.f32 %v8254, %v6880
  %v8276 = vmul.f32 %v8255, %v6885
  %v8277 = vmul.f32 %v8256, %v6890
  %v8278 = vmul.f32 %v8257, %v6895
  %v8279 = vmul.f32 %v8258, %v6900
  %v8280 = vmul.f32 %v8259, %v6905
  %v8281 = vmul.f32 %v8260, %v6910
  %v8282 = vmul.f32 %v8261, %v6915
  %v8283 = vmul.f32 %v8262, %v6920
  %v8284 = vmul.f32 %v8263, %v6925
  %v8285 = vmul.f32 %v8264, %v6930
  %v8286 = vmul.f32 %v8265, %v6935
  %v8287 = vmul.f32 %v8266, %v6940
  %v8288 = vmul.f32 %v8267, %v6945
  %v8289 = vmul.f32 %v8268, %v6950
  %v8290 = vld [vmem:[%s11] sm:$0xff]
  %v8291 = vld [vmem:[%s11 + $0x8] sm:$0xff]
  %v8292 = vld [vmem:[%s11 + $0x10] sm:$0xff]
  %v8293 = vld [vmem:[%s11 + $0x18] sm:$0xff]
  %v8294 = vld [vmem:[%s11 + $0x20] sm:$0xff]
  %v8295 = vld [vmem:[%s11 + $0x28] sm:$0xff]
  %v8296 = vld [vmem:[%s11 + $0x30] sm:$0xff]
  %v8297 = vld [vmem:[%s11 + $0x38] sm:$0xff]
  %v8298 = vld [vmem:[%s11 + $0x40] sm:$0xff]
  %v8299 = vld [vmem:[%s11 + $0x48] sm:$0xff]
  %v8300 = vld [vmem:[%s11 + $0x50] sm:$0xff]
  %v8301 = vld [vmem:[%s11 + $0x58] sm:$0xff]
  %v8302 = vld [vmem:[%s11 + $0x60] sm:$0xff]
  %v8303 = vld [vmem:[%s11 + $0x68] sm:$0xff]
  %v8304 = vld [vmem:[%s11 + $0x70] sm:$0xff]
  %v8305 = vld [vmem:[%s11 + $0x78] sm:$0xff]
  %8306 = vmatprep.subr.mxu0 0.0
  %8307 = vmatpush1.msra.mxu0 %v8305
  %8308 = vmatprep.subr.mxu0 0.0
  %8309 = vmatpush1.msra.mxu0 %v8304
  %8310 = vmatprep.subr.mxu0 0.0
  %8311 = vmatpush1.msra.mxu0 %v8303
  %8312 = vmatprep.subr.mxu0 0.0
  %8313 = vmatpush1.msra.mxu0 %v8302
  %8314 = vmatprep.subr.mxu0 0.0
  %8315 = vmatpush1.msra.mxu0 %v8301
  %8316 = vmatprep.subr.mxu0 0.0
  %8317 = vmatpush1.msra.mxu0 %v8300
  %8318 = vmatprep.subr.mxu0 0.0
  %8319 = vmatpush1.msra.mxu0 %v8299
  %8320 = vmatprep.subr.mxu0 0.0
  %8321 = vmatpush1.msra.mxu0 %v8298
  %8322 = vmatprep.subr.mxu0 0.0
  %8323 = vmatpush1.msra.mxu0 %v8297
  %8324 = vmatprep.subr.mxu0 0.0
  %8325 = vmatpush1.msra.mxu0 %v8296
  %8326 = vmatprep.subr.mxu0 0.0
  %8327 = vmatpush1.msra.mxu0 %v8295
  %8328 = vmatprep.subr.mxu0 0.0
  %8329 = vmatpush1.msra.mxu0 %v8294
  %8330 = vmatprep.subr.mxu0 0.0
  %8331 = vmatpush1.msra.mxu0 %v8293
  %8332 = vmatprep.subr.mxu0 0.0
  %8333 = vmatpush1.msra.mxu0 %v8292
  %8334 = vmatprep.subr.mxu0 0.0
  %8335 = vmatpush1.msra.mxu0 %v8291
  %8336 = vmatprep.subr.mxu0 0.0
  %8337 = vmatpush1.msra.mxu0 %v8290
  %8338 = vmatprep.subr.mxu0 0.0
  %8339 = vmatpush2.msra.mxu0 0.0
  %8340 = vmatprep.subr.mxu0 0.0
  %8341 = vmatpush2.msra.mxu0 0.0
  %8342 = vmatprep.subr.mxu0 0.0
  %8343 = vmatpush2.msra.mxu0 0.0
  %8344 = vmatprep.subr.mxu0 0.0
  %8345 = vmatpush2.msra.mxu0 0.0
  %8346 = vmatprep.subr.mxu0 0.0
  %8347 = vmatpush2.msra.mxu0 0.0
  %8348 = vmatprep.subr.mxu0 0.0
  %8349 = vmatpush2.msra.mxu0 0.0
  %8350 = vmatprep.subr.mxu0 0.0
  %8351 = vmatpush2.msra.mxu0 0.0
  %8352 = vmatprep.subr.mxu0 0.0
  %8353 = vmatpush2.msra.mxu0 0.0
  %8354 = vmatprep.subr.mxu0 0.0
  %8355 = vmatpush2.msra.mxu0 0.0
  %8356 = vmatprep.subr.mxu0 0.0
  %8357 = vmatpush2.msra.mxu0 0.0
  %8358 = vmatprep.subr.mxu0 0.0
  %8359 = vmatpush2.msra.mxu0 0.0
  %8360 = vmatprep.subr.mxu0 0.0
  %8361 = vmatpush2.msra.mxu0 0.0
  %8362 = vmatprep.subr.mxu0 0.0
  %8363 = vmatpush2.msra.mxu0 0.0
  %8364 = vmatprep.subr.mxu0 0.0
  %8365 = vmatpush2.msra.mxu0 0.0
  %8366 = vmatprep.subr.mxu0 0.0
  %8367 = vmatpush2.msra.mxu0 0.0
  %8368 = vmatprep.subr.mxu0 0.0
  %8369 = vmatpush2.msra.mxu0 0.0
  %8370 = vmatprep.mubr.f32.mxu0 0.0
  %8371 = vmatmul.mubr.f32.gmra.mxu0 %v8269
  %v8372 = vpop.f32.mrf.mxu0
  %v8373 = vadd.f32 0.0, %v8372
  %v8374 = vpop.f32.mrf.mxu0
  %8375 = vmatprep.mubr.f32.mxu0 0.0
  %8376 = vmatmul.mubr.f32.gmra.mxu0 %v8270
  %v8377 = vpop.f32.mrf.mxu0
  %v8378 = vadd.f32 0.0, %v8377
  %v8379 = vpop.f32.mrf.mxu0
  %8380 = vmatprep.mubr.f32.mxu0 0.0
  %8381 = vmatmul.mubr.f32.gmra.mxu0 %v8271
  %v8382 = vpop.f32.mrf.mxu0
  %v8383 = vadd.f32 0.0, %v8382
  %v8384 = vpop.f32.mrf.mxu0
  %8385 = vmatprep.mubr.f32.mxu0 0.0
  %8386 = vmatmul.mubr.f32.gmra.mxu0 %v8272
  %v8387 = vpop.f32.mrf.mxu0
  %v8388 = vadd.f32 0.0, %v8387
  %v8389 = vpop.f32.mrf.mxu0
  %8390 = vmatprep.mubr.f32.mxu0 0.0
  %8391 = vmatmul.mubr.f32.gmra.mxu0 %v8273
  %v8392 = vpop.f32.mrf.mxu0
  %v8393 = vadd.f32 0.0, %v8392
  %v8394 = vpop.f32.mrf.mxu0
  %8395 = vmatprep.mubr.f32.mxu0 0.0
  %8396 = vmatmul.mubr.f32.gmra.mxu0 %v8274
  %v8397 = vpop.f32.mrf.mxu0
  %v8398 = vadd.f32 0.0, %v8397
  %v8399 = vpop.f32.mrf.mxu0
  %8400 = vmatprep.mubr.f32.mxu0 0.0
  %8401 = vmatmul.mubr.f32.gmra.mxu0 %v8275
  %v8402 = vpop.f32.mrf.mxu0
  %v8403 = vadd.f32 0.0, %v8402
  %v8404 = vpop.f32.mrf.mxu0
  %8405 = vmatprep.mubr.f32.mxu0 0.0
  %8406 = vmatmul.mubr.f32.gmra.mxu0 %v8276
  %v8407 = vpop.f32.mrf.mxu0
  %v8408 = vadd.f32 0.0, %v8407
  %v8409 = vpop.f32.mrf.mxu0
  %8410 = vmatprep.mubr.f32.mxu0 0.0
  %8411 = vmatmul.mubr.f32.gmra.mxu0 %v8277
  %v8412 = vpop.f32.mrf.mxu0
  %v8413 = vadd.f32 0.0, %v8412
  %v8414 = vpop.f32.mrf.mxu0
  %8415 = vmatprep.mubr.f32.mxu0 0.0
  %8416 = vmatmul.mubr.f32.gmra.mxu0 %v8278
  %v8417 = vpop.f32.mrf.mxu0
  %v8418 = vadd.f32 0.0, %v8417
  %v8419 = vpop.f32.mrf.mxu0
  %8420 = vmatprep.mubr.f32.mxu0 0.0
  %8421 = vmatmul.mubr.f32.gmra.mxu0 %v8279
  %v8422 = vpop.f32.mrf.mxu0
  %v8423 = vadd.f32 0.0, %v8422
  %v8424 = vpop.f32.mrf.mxu0
  %8425 = vmatprep.mubr.f32.mxu0 0.0
  %8426 = vmatmul.mubr.f32.gmra.mxu0 %v8280
  %v8427 = vpop.f32.mrf.mxu0
  %v8428 = vadd.f32 0.0, %v8427
  %v8429 = vpop.f32.mrf.mxu0
  %8430 = vmatprep.mubr.f32.mxu0 0.0
  %8431 = vmatmul.mubr.f32.gmra.mxu0 %v8281
  %v8432 = vpop.f32.mrf.mxu0
  %v8433 = vadd.f32 0.0, %v8432
  %v8434 = vpop.f32.mrf.mxu0
  %8435 = vmatprep.mubr.f32.mxu0 0.0
  %8436 = vmatmul.mubr.f32.gmra.mxu0 %v8282
  %v8437 = vpop.f32.mrf.mxu0
  %v8438 = vadd.f32 0.0, %v8437
  %v8439 = vpop.f32.mrf.mxu0
  %8440 = vmatprep.mubr.f32.mxu0 0.0
  %8441 = vmatmul.mubr.f32.gmra.mxu0 %v8283
  %v8442 = vpop.f32.mrf.mxu0
  %v8443 = vadd.f32 0.0, %v8442
  %v8444 = vpop.f32.mrf.mxu0
  %8445 = vmatprep.mubr.f32.mxu0 0.0
  %8446 = vmatmul.mubr.f32.gmra.mxu0 %v8284
  %v8447 = vpop.f32.mrf.mxu0
  %v8448 = vadd.f32 0.0, %v8447
  %v8449 = vpop.f32.mrf.mxu0
  %8450 = vmatprep.mubr.f32.mxu0 0.0
  %8451 = vmatmul.mubr.f32.gmra.mxu0 %v8285
  %v8452 = vpop.f32.mrf.mxu0
  %v8453 = vadd.f32 0.0, %v8452
  %v8454 = vpop.f32.mrf.mxu0
  %8455 = vmatprep.mubr.f32.mxu0 0.0
  %8456 = vmatmul.mubr.f32.gmra.mxu0 %v8286
  %v8457 = vpop.f32.mrf.mxu0
  %v8458 = vadd.f32 0.0, %v8457
  %v8459 = vpop.f32.mrf.mxu0
  %8460 = vmatprep.mubr.f32.mxu0 0.0
  %8461 = vmatmul.mubr.f32.gmra.mxu0 %v8287
  %v8462 = vpop.f32.mrf.mxu0
  %v8463 = vadd.f32 0.0, %v8462
  %v8464 = vpop.f32.mrf.mxu0
  %8465 = vmatprep.mubr.f32.mxu0 0.0
  %8466 = vmatmul.mubr.f32.gmra.mxu0 %v8288
  %v8467 = vpop.f32.mrf.mxu0
  %v8468 = vadd.f32 0.0, %v8467
  %v8469 = vpop.f32.mrf.mxu0
  %8470 = vmatprep.mubr.f32.mxu0 0.0
  %8471 = vmatmul.mubr.f32.gmra.mxu0 %v8289
  %v8472 = vpop.f32.mrf.mxu0
  %v8473 = vadd.f32 0.0, %v8472
  %v8474 = vpop.f32.mrf.mxu0
  %8475 = vdwg.mxu0
  %v8476 = vmul.f32 %v8373, %v6850
  %v8477 = vmul.f32 %v8378, %v6855
  %v8478 = vmul.f32 %v8383, %v6860
  %v8479 = vmul.f32 %v8388, %v6865
  %v8480 = vmul.f32 %v8393, %v6870
  %v8481 = vmul.f32 %v8398, %v6875
  %v8482 = vmul.f32 %v8403, %v6880
  %v8483 = vmul.f32 %v8408, %v6885
  %v8484 = vmul.f32 %v8413, %v6890
  %v8485 = vmul.f32 %v8418, %v6895
  %v8486 = vmul.f32 %v8423, %v6900
  %v8487 = vmul.f32 %v8428, %v6905
  %v8488 = vmul.f32 %v8433, %v6910
  %v8489 = vmul.f32 %v8438, %v6915
  %v8490 = vmul.f32 %v8443, %v6920
  %v8491 = vmul.f32 %v8448, %v6925
  %v8492 = vmul.f32 %v8453, %v6930
  %v8493 = vmul.f32 %v8458, %v6935
  %v8494 = vmul.f32 %v8463, %v6940
  %v8495 = vmul.f32 %v8468, %v6945
  %v8496 = vmul.f32 %v8473, %v6950
  %v8497 = vadd.f32 %v8476, %v8477
  %v8498 = vadd.f32 %v8497, %v8478
  %v8499 = vadd.f32 %v8498, %v8479
  %v8500 = vadd.f32 %v8499, %v8480
  %v8501 = vadd.f32 %v8500, %v8481
  %v8502 = vadd.f32 %v8501, %v8482
  %v8503 = vadd.f32 %v8502, %v8483
  %v8504 = vadd.f32 %v8503, %v8484
  %v8505 = vadd.f32 %v8504, %v8485
  %v8506 = vadd.f32 %v8505, %v8486
  %v8507 = vadd.f32 %v8506, %v8487
  %v8508 = vadd.f32 %v8507, %v8488
  %v8509 = vadd.f32 %v8508, %v8489
  %v8510 = vadd.f32 %v8509, %v8490
  %v8511 = vadd.f32 %v8510, %v8491
  %v8512 = vadd.f32 %v8511, %v8492
  %v8513 = vadd.f32 %v8512, %v8493
  %v8514 = vadd.f32 %v8513, %v8494
  %v8515 = vadd.f32 %v8514, %v8495
  %v8516 = vsel %vm6992, %v8496, 0.0
  %v8517 = vadd.f32 %v8515, %v8516
  %v8518 = vrot.slane %v8517, 4
  %v8519 = vadd.f32 %v8517, %v8518
  %v8520 = vrot.slane %v8519, 2
  %v8521 = vadd.f32 %v8519, %v8520
  %v8522 = vrot.slane %v8521, 1
  %v8523 = vadd.f32 %v8521, %v8522
  %v8524 = vmul.f32 %v8523, 0.010204081
  %v8525 = vsub.f32 %v8373, %v8524
  %v8526 = vsub.f32 %v8378, %v8524
  %v8527 = vsub.f32 %v8383, %v8524
  %v8528 = vsub.f32 %v8388, %v8524
  %v8529 = vsub.f32 %v8393, %v8524
  %v8530 = vsub.f32 %v8398, %v8524
  %v8531 = vsub.f32 %v8403, %v8524
  %v8532 = vsub.f32 %v8408, %v8524
  %v8533 = vsub.f32 %v8413, %v8524
  %v8534 = vsub.f32 %v8418, %v8524
  %v8535 = vsub.f32 %v8423, %v8524
  %v8536 = vsub.f32 %v8428, %v8524
  %v8537 = vsub.f32 %v8433, %v8524
  %v8538 = vsub.f32 %v8438, %v8524
  %v8539 = vsub.f32 %v8443, %v8524
  %v8540 = vsub.f32 %v8448, %v8524
  %v8541 = vsub.f32 %v8453, %v8524
  %v8542 = vsub.f32 %v8458, %v8524
  %v8543 = vsub.f32 %v8463, %v8524
  %v8544 = vsub.f32 %v8468, %v8524
  %v8545 = vsub.f32 %v8473, %v8524
  %v8546 = vmul.f32 %v8525, %v6850
  %v8547 = vmul.f32 %v8526, %v6855
  %v8548 = vmul.f32 %v8527, %v6860
  %v8549 = vmul.f32 %v8528, %v6865
  %v8550 = vmul.f32 %v8529, %v6870
  %v8551 = vmul.f32 %v8530, %v6875
  %v8552 = vmul.f32 %v8531, %v6880
  %v8553 = vmul.f32 %v8532, %v6885
  %v8554 = vmul.f32 %v8533, %v6890
  %v8555 = vmul.f32 %v8534, %v6895
  %v8556 = vmul.f32 %v8535, %v6900
  %v8557 = vmul.f32 %v8536, %v6905
  %v8558 = vmul.f32 %v8537, %v6910
  %v8559 = vmul.f32 %v8538, %v6915
  %v8560 = vmul.f32 %v8539, %v6920
  %v8561 = vmul.f32 %v8540, %v6925
  %v8562 = vmul.f32 %v8541, %v6930
  %v8563 = vmul.f32 %v8542, %v6935
  %v8564 = vmul.f32 %v8543, %v6940
  %v8565 = vmul.f32 %v8544, %v6945
  %v8566 = vmul.f32 %v8545, %v6950
  %v8567 = vmul.f32 %v8546, %v8546
  %v8568 = vmul.f32 %v8547, %v8547
  %v8569 = vmul.f32 %v8548, %v8548
  %v8570 = vmul.f32 %v8549, %v8549
  %v8571 = vmul.f32 %v8550, %v8550
  %v8572 = vmul.f32 %v8551, %v8551
  %v8573 = vmul.f32 %v8552, %v8552
  %v8574 = vmul.f32 %v8553, %v8553
  %v8575 = vmul.f32 %v8554, %v8554
  %v8576 = vmul.f32 %v8555, %v8555
  %v8577 = vmul.f32 %v8556, %v8556
  %v8578 = vmul.f32 %v8557, %v8557
  %v8579 = vmul.f32 %v8558, %v8558
  %v8580 = vmul.f32 %v8559, %v8559
  %v8581 = vmul.f32 %v8560, %v8560
  %v8582 = vmul.f32 %v8561, %v8561
  %v8583 = vmul.f32 %v8562, %v8562
  %v8584 = vmul.f32 %v8563, %v8563
  %v8585 = vmul.f32 %v8564, %v8564
  %v8586 = vmul.f32 %v8565, %v8565
  %v8587 = vmul.f32 %v8566, %v8566
  %v8588 = vadd.f32 %v8567, %v8568
  %v8589 = vadd.f32 %v8588, %v8569
  %v8590 = vadd.f32 %v8589, %v8570
  %v8591 = vadd.f32 %v8590, %v8571
  %v8592 = vadd.f32 %v8591, %v8572
  %v8593 = vadd.f32 %v8592, %v8573
  %v8594 = vadd.f32 %v8593, %v8574
  %v8595 = vadd.f32 %v8594, %v8575
  %v8596 = vadd.f32 %v8595, %v8576
  %v8597 = vadd.f32 %v8596, %v8577
  %v8598 = vadd.f32 %v8597, %v8578
  %v8599 = vadd.f32 %v8598, %v8579
  %v8600 = vadd.f32 %v8599, %v8580
  %v8601 = vadd.f32 %v8600, %v8581
  %v8602 = vadd.f32 %v8601, %v8582
  %v8603 = vadd.f32 %v8602, %v8583
  %v8604 = vadd.f32 %v8603, %v8584
  %v8605 = vadd.f32 %v8604, %v8585
  %v8606 = vadd.f32 %v8605, %v8586
  %v8607 = vsel %vm6992, %v8587, 0.0
  %v8608 = vadd.f32 %v8606, %v8607
  %v8609 = vrot.slane %v8608, 4
  %v8610 = vadd.f32 %v8608, %v8609
  %v8611 = vrot.slane %v8610, 2
  %v8612 = vadd.f32 %v8610, %v8611
  %v8613 = vrot.slane %v8612, 1
  %v8614 = vadd.f32 %v8612, %v8613
  %v8615 = vmul.f32 %v8614, 0.010204081
  %v8616 = vadd.f32 %v8615, 1e-05
  %v8617 = vrsqrt.pop %v8616
  %v8618 = vmul.f32 %v8525, %v8617
  %v8619 = vmul.f32 %v8526, %v8617
  %v8620 = vmul.f32 %v8527, %v8617
  %v8621 = vmul.f32 %v8528, %v8617
  %v8622 = vmul.f32 %v8529, %v8617
  %v8623 = vmul.f32 %v8530, %v8617
  %v8624 = vmul.f32 %v8531, %v8617
  %v8625 = vmul.f32 %v8532, %v8617
  %v8626 = vmul.f32 %v8533, %v8617
  %v8627 = vmul.f32 %v8534, %v8617
  %v8628 = vmul.f32 %v8535, %v8617
  %v8629 = vmul.f32 %v8536, %v8617
  %v8630 = vmul.f32 %v8537, %v8617
  %v8631 = vmul.f32 %v8538, %v8617
  %v8632 = vmul.f32 %v8539, %v8617
  %v8633 = vmul.f32 %v8540, %v8617
  %v8634 = vmul.f32 %v8541, %v8617
  %v8635 = vmul.f32 %v8542, %v8617
  %v8636 = vmul.f32 %v8543, %v8617
  %v8637 = vmul.f32 %v8544, %v8617
  %v8638 = vmul.f32 %v8545, %v8617
  %v8639 = vmax.f32 %v8618, 0.0
  %v8640 = vmax.f32 %v8619, 0.0
  %v8641 = vmax.f32 %v8620, 0.0
  %v8642 = vmax.f32 %v8621, 0.0
  %v8643 = vmax.f32 %v8622, 0.0
  %v8644 = vmax.f32 %v8623, 0.0
  %v8645 = vmax.f32 %v8624, 0.0
  %v8646 = vmax.f32 %v8625, 0.0
  %v8647 = vmax.f32 %v8626, 0.0
  %v8648 = vmax.f32 %v8627, 0.0
  %v8649 = vmax.f32 %v8628, 0.0
  %v8650 = vmax.f32 %v8629, 0.0
  %v8651 = vmax.f32 %v8630, 0.0
  %v8652 = vmax.f32 %v8631, 0.0
  %v8653 = vmax.f32 %v8632, 0.0
  %v8654 = vmax.f32 %v8633, 0.0
  %v8655 = vmax.f32 %v8634, 0.0
  %v8656 = vmax.f32 %v8635, 0.0
  %v8657 = vmax.f32 %v8636, 0.0
  %v8658 = vmax.f32 %v8637, 0.0
  %v8659 = vmax.f32 %v8638, 0.0
  %v8660 = vmul.f32 %v8639, %v6850
  %v8661 = vmul.f32 %v8640, %v6855
  %v8662 = vmul.f32 %v8641, %v6860
  %v8663 = vmul.f32 %v8642, %v6865
  %v8664 = vmul.f32 %v8643, %v6870
  %v8665 = vmul.f32 %v8644, %v6875
  %v8666 = vmul.f32 %v8645, %v6880
  %v8667 = vmul.f32 %v8646, %v6885
  %v8668 = vmul.f32 %v8647, %v6890
  %v8669 = vmul.f32 %v8648, %v6895
  %v8670 = vmul.f32 %v8649, %v6900
  %v8671 = vmul.f32 %v8650, %v6905
  %v8672 = vmul.f32 %v8651, %v6910
  %v8673 = vmul.f32 %v8652, %v6915
  %v8674 = vmul.f32 %v8653, %v6920
  %v8675 = vmul.f32 %v8654, %v6925
  %v8676 = vmul.f32 %v8655, %v6930
  %v8677 = vmul.f32 %v8656, %v6935
  %v8678 = vmul.f32 %v8657, %v6940
  %v8679 = vmul.f32 %v8658, %v6945
  %v8680 = vmul.f32 %v8659, %v6950
  %v8681 = vlaneseq
  %v8682 = vshrl.u32 %v8681, 7
  %v8683 = vld [vmem:[%s5] sm:$0x3]
  %v8684 = vlaneseq
  %v8685 = vshrl.u32 %v8684, 7
  %v8686 = vsub.s32 0, %v8685
  %v8687 = vrot.slane %v8683, %v8686
  %v8688 = vlaneseq
  %v8689 = vshrl.u32 %v8688, 7
  %v8690 = vsub.s32 1, %v8689
  %v8691 = vrot.slane %v8683, %v8690
  %vm8692 = vcmp.eq.s32.totalorder %v8682, %v8687
  %vm8693 = vcmp.eq.s32.totalorder %v8682, %v8691
  %v8694 = vsel %vm8692, 0.020408163, 0.0
  %v8695 = vsel %vm8693, 0.020408163, 0.0
  %vm8696 = vcmask 277504
  %v8698 = vsel %vm8696, %v8695, 0
  %v8701 = vsel %vm6992, %v8680, 0
  %8703 = vmatprep.subr.mxu0 0.0
  %8704 = vmatpush1.msra.mxu0 %v8675
  %8705 = vmatprep.subr.mxu0 0.0
  %8706 = vmatpush1.msra.mxu0 %v8674
  %8707 = vmatprep.subr.mxu0 0.0
  %8708 = vmatpush1.msra.mxu0 %v8673
  %8709 = vmatprep.subr.mxu0 0.0
  %8710 = vmatpush1.msra.mxu0 %v8672
  %8711 = vmatprep.subr.mxu0 0.0
  %8712 = vmatpush1.msra.mxu0 %v8671
  %8713 = vmatprep.subr.mxu0 0.0
  %8714 = vmatpush1.msra.mxu0 %v8670
  %8715 = vmatprep.subr.mxu0 0.0
  %8716 = vmatpush1.msra.mxu0 %v8669
  %8717 = vmatprep.subr.mxu0 0.0
  %8718 = vmatpush1.msra.mxu0 %v8668
  %8719 = vmatprep.subr.mxu0 0.0
  %8720 = vmatpush1.msra.mxu0 %v8667
  %8721 = vmatprep.subr.mxu0 0.0
  %8722 = vmatpush1.msra.mxu0 %v8666
  %8723 = vmatprep.subr.mxu0 0.0
  %8724 = vmatpush1.msra.mxu0 %v8665
  %8725 = vmatprep.subr.mxu0 0.0
  %8726 = vmatpush1.msra.mxu0 %v8664
  %8727 = vmatprep.subr.mxu0 0.0
  %8728 = vmatpush1.msra.mxu0 %v8663
  %8729 = vmatprep.subr.mxu0 0.0
  %8730 = vmatpush1.msra.mxu0 %v8662
  %8731 = vmatprep.subr.mxu0 0.0
  %8732 = vmatpush1.msra.mxu0 %v8661
  %8733 = vmatprep.subr.mxu0 0.0
  %8734 = vmatpush1.msra.mxu0 %v8660
  %8735 = vmatprep.subr.mxu0 0.0
  %8736 = vmatpush2.msra.mxu0 0.0
  %8737 = vmatprep.subr.mxu0 0.0
  %8738 = vmatpush2.msra.mxu0 0.0
  %8739 = vmatprep.subr.mxu0 0.0
  %8740 = vmatpush2.msra.mxu0 0.0
  %8741 = vmatprep.subr.mxu0 0.0
  %8742 = vmatpush2.msra.mxu0 0.0
  %8743 = vmatprep.subr.mxu0 0.0
  %8744 = vmatpush2.msra.mxu0 0.0
  %8745 = vmatprep.subr.mxu0 0.0
  %8746 = vmatpush2.msra.mxu0 0.0
  %8747 = vmatprep.subr.mxu0 0.0
  %8748 = vmatpush2.msra.mxu0 0.0
  %8749 = vmatprep.subr.mxu0 0.0
  %8750 = vmatpush2.msra.mxu0 0.0
  %8751 = vmatprep.subr.mxu0 0.0
  %8752 = vmatpush2.msra.mxu0 0.0
  %8753 = vmatprep.subr.mxu0 0.0
  %8754 = vmatpush2.msra.mxu0 0.0
  %8755 = vmatprep.subr.mxu0 0.0
  %8756 = vmatpush2.msra.mxu0 0.0
  %8757 = vmatprep.subr.mxu0 0.0
  %8758 = vmatpush2.msra.mxu0 %v8701
  %8759 = vmatprep.subr.mxu0 0.0
  %8760 = vmatpush2.msra.mxu0 %v8679
  %8761 = vmatprep.subr.mxu0 0.0
  %8762 = vmatpush2.msra.mxu0 %v8678
  %8763 = vmatprep.subr.mxu0 0.0
  %8764 = vmatpush2.msra.mxu0 %v8677
  %8765 = vmatprep.subr.mxu0 0.0
  %8766 = vmatpush2.msra.mxu0 %v8676
  %8767 = vmatprep.mubr.f32.mxu0 %v8698
  %8768 = vmatmul.mubr.f32.gmra.mxu0 %v8694
  %v8769 = vpop.f32.mrf.mxu0
  %v8770 = vadd.f32 0.0, %v8769
  %v8771 = vpop.f32.mrf.mxu0
  %8772 = vdwg.mxu0
  %v8773 = vld [vmem:[%s12] sm:$0xff]
  %v8774 = vld [vmem:[%s12 + $0x8] sm:$0xff]
  %v8775 = vld [vmem:[%s12 + $0x10] sm:$0xff]
  %v8776 = vld [vmem:[%s12 + $0x18] sm:$0xff]
  %v8777 = vld [vmem:[%s12 + $0x20] sm:$0xff]
  %v8778 = vld [vmem:[%s12 + $0x28] sm:$0xff]
  %v8779 = vld [vmem:[%s12 + $0x30] sm:$0xff]
  %v8780 = vld [vmem:[%s12 + $0x38] sm:$0xff]
  %v8781 = vld [vmem:[%s12 + $0x40] sm:$0xff]
  %v8782 = vld [vmem:[%s12 + $0x48] sm:$0xff]
  %v8783 = vld [vmem:[%s12 + $0x50] sm:$0xff]
  %v8784 = vld [vmem:[%s12 + $0x58] sm:$0xff]
  %v8785 = vld [vmem:[%s12 + $0x60] sm:$0xff]
  %v8786 = vld [vmem:[%s12 + $0x68] sm:$0xff]
  %v8787 = vld [vmem:[%s12 + $0x70] sm:$0xff]
  %v8788 = vld [vmem:[%s12 + $0x78] sm:$0xff]
  %v8789 = vld [vmem:[%s13] sm:$0x1]
  %v8791 = vlaneseq
  %v8792 = vshrl.u32 %v8791, 7
  %v8793 = vsub.s32 0, %v8792
  %v8794 = vrot.slane %v8789, %v8793
  %8796 = vmatprep.subr.mxu0 0.0
  %8797 = vmatpush1.msra.mxu0 %v8788
  %8798 = vmatprep.subr.mxu0 0.0
  %8799 = vmatpush1.msra.mxu0 %v8787
  %8800 = vmatprep.subr.mxu0 0.0
  %8801 = vmatpush1.msra.mxu0 %v8786
  %8802 = vmatprep.subr.mxu0 0.0
  %8803 = vmatpush1.msra.mxu0 %v8785
  %8804 = vmatprep.subr.mxu0 0.0
  %8805 = vmatpush1.msra.mxu0 %v8784
  %8806 = vmatprep.subr.mxu0 0.0
  %8807 = vmatpush1.msra.mxu0 %v8783
  %8808 = vmatprep.subr.mxu0 0.0
  %8809 = vmatpush1.msra.mxu0 %v8782
  %8810 = vmatprep.subr.mxu0 0.0
  %8811 = vmatpush1.msra.mxu0 %v8781
  %8812 = vmatprep.subr.mxu0 0.0
  %8813 = vmatpush1.msra.mxu0 %v8780
  %8814 = vmatprep.subr.mxu0 0.0
  %8815 = vmatpush1.msra.mxu0 %v8779
  %8816 = vmatprep.subr.mxu0 0.0
  %8817 = vmatpush1.msra.mxu0 %v8778
  %8818 = vmatprep.subr.mxu0 0.0
  %8819 = vmatpush1.msra.mxu0 %v8777
  %8820 = vmatprep.subr.mxu0 0.0
  %8821 = vmatpush1.msra.mxu0 %v8776
  %8822 = vmatprep.subr.mxu0 0.0
  %8823 = vmatpush1.msra.mxu0 %v8775
  %8824 = vmatprep.subr.mxu0 0.0
  %8825 = vmatpush1.msra.mxu0 %v8774
  %8826 = vmatprep.subr.mxu0 0.0
  %8827 = vmatpush1.msra.mxu0 %v8773
  %8828 = vmatprep.subr.mxu0 0.0
  %8829 = vmatpush2.msra.mxu0 0.0
  %8830 = vmatprep.subr.mxu0 0.0
  %8831 = vmatpush2.msra.mxu0 0.0
  %8832 = vmatprep.subr.mxu0 0.0
  %8833 = vmatpush2.msra.mxu0 0.0
  %8834 = vmatprep.subr.mxu0 0.0
  %8835 = vmatpush2.msra.mxu0 0.0
  %8836 = vmatprep.subr.mxu0 0.0
  %8837 = vmatpush2.msra.mxu0 0.0
  %8838 = vmatprep.subr.mxu0 0.0
  %8839 = vmatpush2.msra.mxu0 0.0
  %8840 = vmatprep.subr.mxu0 0.0
  %8841 = vmatpush2.msra.mxu0 0.0
  %8842 = vmatprep.subr.mxu0 0.0
  %8843 = vmatpush2.msra.mxu0 0.0
  %8844 = vmatprep.subr.mxu0 0.0
  %8845 = vmatpush2.msra.mxu0 0.0
  %8846 = vmatprep.subr.mxu0 0.0
  %8847 = vmatpush2.msra.mxu0 0.0
  %8848 = vmatprep.subr.mxu0 0.0
  %8849 = vmatpush2.msra.mxu0 0.0
  %8850 = vmatprep.subr.mxu0 0.0
  %8851 = vmatpush2.msra.mxu0 0.0
  %8852 = vmatprep.subr.mxu0 0.0
  %8853 = vmatpush2.msra.mxu0 0.0
  %8854 = vmatprep.subr.mxu0 0.0
  %8855 = vmatpush2.msra.mxu0 0.0
  %8856 = vmatprep.subr.mxu0 0.0
  %8857 = vmatpush2.msra.mxu0 0.0
  %8858 = vmatprep.subr.mxu0 0.0
  %8859 = vmatpush2.msra.mxu0 0.0
  %8860 = vmatprep.mubr.f32.mxu0 0.0
  %8861 = vmatmul.mubr.f32.gmra.mxu0 %v8770
  %v8862 = vpop.f32.mrf.mxu0
  %v8863 = vadd.f32 %v8794, %v8862
  %v8864 = vpop.f32.mrf.mxu0
  %8865 = vdwg.mxu0
  %8866 = vst [vmem:[%s14] sm:$0xff] %v8863
  // Predicated region
  $region58: #{mobilenet_forward.1} parent=0 // pred_check
    _
  $region59: #{mobilenet_forward.1} parent=0 // pred_check_branch
    %8868 = sbr.rel (0) target = $region61
  $region60: #{mobilenet_forward.1} parent=0 // pred_region
    _
  $region61: #{mobilenet_forward.1} parent=0 // pred_fallthru
    _
  // Predicated region
  $region62: #{mobilenet_forward.1} parent=0 // pred_check
    _
  $region63: #{mobilenet_forward.1} parent=0 // pred_check_branch
    %8870 = sbr.rel (0) target = $region65
  $region64: #{mobilenet_forward.1} parent=0 // pred_region
    _
  $region65: #{mobilenet_forward.1} parent=0 // pred_fallthru
    _

</llo_original>
